<compile_context>
chip_gen: v6e
topology: v6e:2x2x1
jax: 0.10.0
libtpu: 0.0.40
codegen_flags: <defaults>
</compile_context>

<pallas_src>
import functools

import numpy as np

import jax
import jax.numpy as jnp
from jax.experimental import pallas as pl
from jax.experimental.pallas import tpu as pltpu


# ---------------------------------------------------------------------------
# Fused GEFM kernel: front convs + both non-local refinements + Second_reduce,
# all in one grid step (one or more batch elements per step).
# ---------------------------------------------------------------------------
def _gefm_kernel(x_ref, y_ref, mask_ref, wx_ref, wy_ref, w2_ref, bia_ref,
                 gamma_ref, o_ref, pa_ref, pb_ref, *, H, W, a_tile):
    # x_ref / y_ref : (bs, C, HW) f32      inputs (lane-dense, HW on lanes)
    # mask_ref      : (9, 1, HW)  f32      3x3-tap border validity masks (0/1)
    # wx_ref        : (3, C, 9C)  bf16     rows = [Q_x, RGB_K, RGB_V] (BN scale folded)
    # wy_ref        : (3, C, 9C)  bf16     rows = [Q_y, INF_K, INF_V]
    # w2_ref        : (2, C, 9C)  bf16     Second_reduce split weights [rgb, inf]
    # bia_ref       : (6, C, 1)   f32      biases [Q, RGB_K, RGB_V, INF_K, INF_V, SR]
    # gamma_ref     : (2,)        f32 SMEM [gamma1, gamma2]
    # o_ref         : (bs, C, HW) f32      output
    # pa_ref/pb_ref : (9C, HW)    f32 VMEM scratch patch matrices (reused)
    C = o_ref.shape[1]
    bs = o_ref.shape[0]
    HW = H * W

    masks = [mask_ref[t] for t in range(9)]          # each (1, HW) f32

    def build_patches(v, patch_ref):
        """v: (C, HW) f32 -> (9C, HW) bf16 im2col patches (tap-major rows),
        built with lane rolls + border masks, staged through a VMEM scratch."""
        t = 0
        for dy in (-1, 0, 1):
            for dx in (-1, 0, 1):
                d = dy * W + dx
                if d == 0:
                    tap = v
                else:
                    tap = pltpu.roll(v, shift=(-d) % HW, axis=1) * masks[t]
                patch_ref[pl.ds(t * C, C), :] = tap
                t += 1
        return patch_ref[...].astype(jnp.bfloat16)

    def bias_relu(acc, i):                            # acc: (C, HW) f32
        return jnp.maximum(acc + bia_ref[i], 0.0)

    for b in range(bs):                               # static unroll (bs is 1 or B)
        x = x_ref[b]                                  # (C, HW) f32
        y = y_ref[b]

        px = build_patches(x, pa_ref)                 # (9C, HW) bf16
        py = build_patches(y, pb_ref)

        # conv(cat([x, y])) == Wq_x @ px + Wq_y @ py  (split weights, no concat)
        q = bias_relu(jnp.dot(wx_ref[0], px, preferred_element_type=jnp.float32)
                      + jnp.dot(wy_ref[0], py, preferred_element_type=jnp.float32), 0)
        rgb_k = bias_relu(jnp.dot(wx_ref[1], px, preferred_element_type=jnp.float32), 1)
        rgb_v = bias_relu(jnp.dot(wx_ref[2], px, preferred_element_type=jnp.float32), 2)
        inf_k = bias_relu(jnp.dot(wy_ref[1], py, preferred_element_type=jnp.float32), 3)
        inf_v = bias_relu(jnp.dot(wy_ref[2], py, preferred_element_type=jnp.float32), 4)

        q_b = q.astype(jnp.bfloat16)

        def refine(kmat, vmat, res, gamma):
            k_b = kmat.astype(jnp.bfloat16)
            v_b = vmat.astype(jnp.bfloat16)
            pieces = []
            for a0 in range(0, HW, a_tile):           # a-axis (query) tiling
                # logits[a, e] = sum_c K[c, a0+a] * Q[c, e]   -> (a_tile, HW)
                logits = jax.lax.dot_general(
                    k_b[:, a0:a0 + a_tile], q_b,
                    (((0,), (0,)), ((), ())),
                    preferred_element_type=jnp.float32)
                m = jnp.max(logits, axis=-1, keepdims=True)
                e = jnp.exp(logits - m)
                p = e * pl.reciprocal(jnp.sum(e, axis=-1, keepdims=True), approx=True)
                # ref[c, a] = sum_e V[c, e] * mask[a, e]  == V @ mask^T -> (C, a_tile)
                pieces.append(jax.lax.dot_general(
                    v_b, p.astype(jnp.bfloat16),
                    (((1,), (1,)), ((), ())),
                    preferred_element_type=jnp.float32))
            ref = pieces[0] if len(pieces) == 1 else jnp.concatenate(pieces, axis=1)
            return gamma * ref + res

        rgb_refine = refine(rgb_k, rgb_v, y, gamma_ref[0])   # (C, HW) f32
        inf_refine = refine(inf_k, inf_v, x, gamma_ref[1])

        # Second_reduce on cat([rgb_refine, inf_refine]) — split weights, patches
        # built in-kernel (scratch buffers reused), nothing goes back to HBM.
        pr = build_patches(rgb_refine, pa_ref)
        pi = build_patches(inf_refine, pb_ref)
        out = bias_relu(jnp.dot(w2_ref[0], pr, preferred_element_type=jnp.float32)
                        + jnp.dot(w2_ref[1], pi, preferred_element_type=jnp.float32), 5)
        o_ref[b] = out.astype(o_ref.dtype)


# ---------------------------------------------------------------------------
# One-time weight preprocessing (hoisted out of the per-call path)
# ---------------------------------------------------------------------------
def _w_to_mat(w, dtype=jnp.bfloat16):
    """(Cout, Cin, 3, 3) -> (Cout, 9*Cin), tap-major rows (ky, kx, cin)."""
    Cout, Cin = w.shape[0], w.shape[1]
    return jnp.transpose(w, (0, 2, 3, 1)).reshape(Cout, 9 * Cin).astype(dtype)


def prepare_params(params):
    """Fold BN scale into the conv weights (f32, before bf16 cast), reshape to
    matmul form, and stack.  Run once per parameter set, outside the jitted
    forward."""
    def fold(p):
        w, scale, bias = p
        return w * scale[:, None, None, None], bias

    wq, bq = fold(params["Q"])                     # (C, 2C, 3, 3)
    wrk, brk = fold(params["RGB_K"])
    wrv, brv = fold(params["RGB_V"])
    wik, bik = fold(params["INF_K"])
    wiv, biv = fold(params["INF_V"])
    wsr, bsr = fold(params["Second_reduce"])       # (C, 2C, 3, 3)
    C = wrk.shape[0]

    wx = jnp.stack([_w_to_mat(wq[:, :C]), _w_to_mat(wrk), _w_to_mat(wrv)])   # (3, C, 9C)
    wy = jnp.stack([_w_to_mat(wq[:, C:]), _w_to_mat(wik), _w_to_mat(wiv)])   # (3, C, 9C)
    w2 = jnp.stack([_w_to_mat(wsr[:, :C]), _w_to_mat(wsr[:, C:])])           # (2, C, 9C)
    bia = jnp.stack([bq, brk, brv, bik, biv, bsr]).reshape(6, C, 1).astype(jnp.float32)
    gamma = jnp.concatenate([params["gamma1"], params["gamma2"]]).astype(jnp.float32)
    return {"wx": wx, "wy": wy, "w2": w2, "bias": bia, "gamma": gamma}


def _default_batch_block(B):
    """Dual-TC v7x: one batch element per grid step (megacore sharding).
    Single-TC v5e/v6e: fold the batch into one grid step (no per-step overhead)."""
    try:
        kind = jax.devices()[0].device_kind.lower()
    except Exception:
        kind = ""
    if "v7" in kind and B > 1:
        return 1
    return B if B <= 8 else 1


# ---------------------------------------------------------------------------
# GEFM forward
# ---------------------------------------------------------------------------
def gefm_forward(x, y, prep, *, batch_block=None, a_tile=None):
    # x, y: (B, out_C, H, W) NCHW float32
    B, C, H, W = x.shape
    HW = H * W

    bs = batch_block if batch_block is not None else _default_batch_block(B)
    if B % bs != 0:
        bs = 1
    nb = B // bs

    if a_tile is None:
        a_tile = HW if HW <= 1024 else 1024
    if HW % a_tile != 0:
        a_tile = HW                      # fall back to a single query tile

    # 3x3-tap border validity masks (static, trace-time numpy -> tiny constant).
    p = np.arange(HW)
    hh, ww = p // W, p % W
    tap_mask = np.stack([
        ((hh + dy >= 0) & (hh + dy < H) & (ww + dx >= 0) & (ww + dx < W))
        .astype(np.float32)
        for dy in (-1, 0, 1) for dx in (-1, 0, 1)
    ]).reshape(9, 1, HW)
    tap_mask = jnp.asarray(tap_mask)

    x_flat = x.reshape(B, C, HW)
    y_flat = y.reshape(B, C, HW)

    kernel = functools.partial(_gefm_kernel, H=H, W=W, a_tile=a_tile)

    out_flat = pl.pallas_call(
        kernel,
        out_shape=jax.ShapeDtypeStruct((B, C, HW), x.dtype),
        grid=(nb,),
        in_specs=[
            pl.BlockSpec((bs, C, HW), lambda i: (i, 0, 0)),        # x
            pl.BlockSpec((bs, C, HW), lambda i: (i, 0, 0)),        # y
            pl.BlockSpec((9, 1, HW), lambda i: (0, 0, 0)),         # tap masks
            pl.BlockSpec((3, C, 9 * C), lambda i: (0, 0, 0)),      # wx
            pl.BlockSpec((3, C, 9 * C), lambda i: (0, 0, 0)),      # wy
            pl.BlockSpec((2, C, 9 * C), lambda i: (0, 0, 0)),      # w2
            pl.BlockSpec((6, C, 1), lambda i: (0, 0, 0)),          # biases
            pl.BlockSpec(memory_space=pltpu.MemorySpace.SMEM),     # gamma
        ],
        out_specs=pl.BlockSpec((bs, C, HW), lambda i: (i, 0, 0)),
        scratch_shapes=[
            pltpu.VMEM((9 * C, HW), jnp.float32),                  # patch scratch A
            pltpu.VMEM((9 * C, HW), jnp.float32),                  # patch scratch B
        ],
        compiler_params=pltpu.CompilerParams(dimension_semantics=("parallel",)),
    )(x_flat, y_flat, tap_mask, prep["wx"], prep["wy"], prep["w2"],
      prep["bias"], prep["gamma"])

    return out_flat.reshape(B, C, H, W)


# ---------------------------------------------------------------------------
# Deterministic parameter initialization (BN folded into scale/bias, eval mode)
# ---------------------------------------------------------------------------
def init_params(key, in_C, out_C):
    def conv_bn(k, cin, cout):
        k1, k2, k3, k4, k5 = jax.random.split(k, 5)
        w = 0.1 * jax.random.normal(k1, (cout, cin, 3, 3), jnp.float32)
        bn_w = 1.0 + 0.1 * jax.random.normal(k2, (cout,), jnp.float32)
        bn_b = 0.1 * jax.random.normal(k3, (cout,), jnp.float32)
        running_mean = 0.1 * jax.random.normal(k4, (cout,), jnp.float32)
        running_var = jnp.abs(jax.random.normal(k5, (cout,), jnp.float32)) + 1.0
        eps = 1e-5
        scale = bn_w / jnp.sqrt(running_var + eps)
        bias = bn_b - running_mean * scale
        return (w, scale, bias)

    keys = jax.random.split(key, 6)
    return {
        "Q": conv_bn(keys[0], in_C, out_C),
        "RGB_K": conv_bn(keys[1], out_C, out_C),
        "RGB_V": conv_bn(keys[2], out_C, out_C),
        "INF_K": conv_bn(keys[3], out_C, out_C),
        "INF_V": conv_bn(keys[4], out_C, out_C),
        "Second_reduce": conv_bn(keys[5], in_C, out_C),
        # PyTorch inits these to zeros(1); nonzero here so the attention branch
        # is actually exercised (intentional divergence, flagged).
        "gamma1": jnp.array([0.5], jnp.float32),
        "gamma2": jnp.array([-0.3], jnp.float32),
    }


# ---------------------------------------------------------------------------
# Pure-JAX f32 reference (correctness check)
# ---------------------------------------------------------------------------
def _ref_conv_bn_relu(x, params):
    w, scale, bias = params
    out = jax.lax.conv_general_dilated(
        x, w, window_strides=(1, 1), padding=((1, 1), (1, 1)),
        dimension_numbers=("NCHW", "OIHW", "NCHW"))
    out = out * scale[None, :, None, None] + bias[None, :, None, None]
    return jnp.maximum(out, 0.0)


def _ref_gefm(x, y, params):
    q = _ref_conv_bn_relu(jnp.concatenate([x, y], axis=1), params["Q"])
    rgb_k = _ref_conv_bn_relu(x, params["RGB_K"])
    rgb_v = _ref_conv_bn_relu(x, params["RGB_V"])
    inf_k = _ref_conv_bn_relu(y, params["INF_K"])
    inf_v = _ref_conv_bn_relu(y, params["INF_V"])
    B, C, H, W = rgb_v.shape
    HW = H * W

    def refine(kk, vv, qq, res, gamma):
        kk = kk.reshape(B, C, HW)
        vv = vv.reshape(B, C, HW)
        qq = qq.reshape(B, C, HW)
        mask = jax.nn.softmax(jnp.einsum("bca,bce->bae", kk, qq), axis=-1)
        ref = jnp.einsum("bce,bae->bca", vv, mask).reshape(B, C, H, W)
        return gamma[0] * ref + res

    rgb_refine = refine(rgb_k, rgb_v, q, y, params["gamma1"])
    inf_refine = refine(inf_k, inf_v, q, x, params["gamma2"])
    return _ref_conv_bn_relu(jnp.concatenate([rgb_refine, inf_refine], axis=1),
                             params["Second_reduce"])


# ---------------------------------------------------------------------------
if __name__ == "__main__":
    B, out_C, H, W = 2, 4, 16, 16
    in_C = 2 * out_C  # Q / Second_reduce consume cat([x, y]) on channels

    key = jax.random.PRNGKey(0)
    kx, ky, kp = jax.random.split(key, 3)
    x = jax.random.normal(kx, (B, out_C, H, W), jnp.float32)
    y = jax.random.normal(ky, (B, out_C, H, W), jnp.float32)
    params = init_params(kp, in_C, out_C)

    prep = prepare_params(params)            # one-time weight preprocessing
    gefm_fn = jax.jit(gefm_forward)
    out = jax.block_until_ready(gefm_fn(x, y, prep))

    ref = _ref_gefm(x, y, params)
    # Tolerance covers bf16 MXU operands + approx softmax reciprocal vs the
    # all-f32 XLA reference; structural errors would be O(1).
    if not bool(jnp.allclose(out, ref, rtol=5e-2, atol=5e-2)):
        max_err = float(jnp.max(jnp.abs(out - ref)))
        raise AssertionError(f"Pallas GEFM output mismatch vs JAX reference "
                             f"(max abs err = {max_err:.4f})")

    print("KERNEL_OK")
</pallas_src>

<mosaic_0001>
module attributes {stable_mosaic.version = 11 : i64} {
  func.func @_gefm_kernel(%arg0: i32, %arg1: memref<2x4x256xf32, #tpu.memory_space<vmem>>, %arg2: memref<2x4x256xf32, #tpu.memory_space<vmem>>, %arg3: memref<9x1x256xf32, #tpu.memory_space<vmem>>, %arg4: memref<3x4x36xbf16, #tpu.memory_space<vmem>>, %arg5: memref<3x4x36xbf16, #tpu.memory_space<vmem>>, %arg6: memref<2x4x36xbf16, #tpu.memory_space<vmem>>, %arg7: memref<6x4x1xf32, #tpu.memory_space<vmem>>, %arg8: memref<2xf32, #tpu.memory_space<smem>>, %arg9: memref<2x4x256xf32, #tpu.memory_space<vmem>>, %arg10: memref<36x256xf32, #tpu.memory_space<vmem>>, %arg11: memref<36x256xf32, #tpu.memory_space<vmem>>) attributes {dimension_semantics = [#tpu.dimension_semantics<parallel>], iteration_bounds = array<i64: 1>, scalar_prefetch = 0 : i64, scratch_operands = 2 : i64, tpu.core_type = #tpu.core_type<tc>, window_params = [{transform_indices = @transform_0, window_bounds = array<i64: 2, 4, 256>}, {transform_indices = @transform_1, window_bounds = array<i64: 2, 4, 256>}, {pipeline_mode = #tpu.pipeline_mode<synchronous>, transform_indices = @transform_2, window_bounds = array<i64: 9, 1, 256>}, {pipeline_mode = #tpu.pipeline_mode<synchronous>, transform_indices = @transform_3, window_bounds = array<i64: 3, 4, 36>}, {pipeline_mode = #tpu.pipeline_mode<synchronous>, transform_indices = @transform_4, window_bounds = array<i64: 3, 4, 36>}, {pipeline_mode = #tpu.pipeline_mode<synchronous>, transform_indices = @transform_5, window_bounds = array<i64: 2, 4, 36>}, {pipeline_mode = #tpu.pipeline_mode<synchronous>, transform_indices = @transform_6, window_bounds = array<i64: 6, 4, 1>}, {transform_indices = @transform_7, window_bounds = array<i64: 2>}, {transform_indices = @transform_8, window_bounds = array<i64: 2, 4, 256>}]} {
    %c0 = arith.constant 0 : index
    %c0_0 = arith.constant 0 : index
    %c0_1 = arith.constant 0 : index
    %0 = vector.load %arg3[%c0, %c0_0, %c0_1] : memref<9x1x256xf32, #tpu.memory_space<vmem>>, vector<1x1x256xf32>
    %1 = vector.shape_cast %0 : vector<1x1x256xf32> to vector<1x256xf32>
    %c1 = arith.constant 1 : index
    %c0_2 = arith.constant 0 : index
    %c0_3 = arith.constant 0 : index
    %2 = vector.load %arg3[%c1, %c0_2, %c0_3] : memref<9x1x256xf32, #tpu.memory_space<vmem>>, vector<1x1x256xf32>
    %3 = vector.shape_cast %2 : vector<1x1x256xf32> to vector<1x256xf32>
    %c2 = arith.constant 2 : index
    %c0_4 = arith.constant 0 : index
    %c0_5 = arith.constant 0 : index
    %4 = vector.load %arg3[%c2, %c0_4, %c0_5] : memref<9x1x256xf32, #tpu.memory_space<vmem>>, vector<1x1x256xf32>
    %5 = vector.shape_cast %4 : vector<1x1x256xf32> to vector<1x256xf32>
    %c3 = arith.constant 3 : index
    %c0_6 = arith.constant 0 : index
    %c0_7 = arith.constant 0 : index
    %6 = vector.load %arg3[%c3, %c0_6, %c0_7] : memref<9x1x256xf32, #tpu.memory_space<vmem>>, vector<1x1x256xf32>
    %7 = vector.shape_cast %6 : vector<1x1x256xf32> to vector<1x256xf32>
    %c5 = arith.constant 5 : index
    %c0_8 = arith.constant 0 : index
    %c0_9 = arith.constant 0 : index
    %8 = vector.load %arg3[%c5, %c0_8, %c0_9] : memref<9x1x256xf32, #tpu.memory_space<vmem>>, vector<1x1x256xf32>
    %9 = vector.shape_cast %8 : vector<1x1x256xf32> to vector<1x256xf32>
    %c6 = arith.constant 6 : index
    %c0_10 = arith.constant 0 : index
    %c0_11 = arith.constant 0 : index
    %10 = vector.load %arg3[%c6, %c0_10, %c0_11] : memref<9x1x256xf32, #tpu.memory_space<vmem>>, vector<1x1x256xf32>
    %11 = vector.shape_cast %10 : vector<1x1x256xf32> to vector<1x256xf32>
    %c7 = arith.constant 7 : index
    %c0_12 = arith.constant 0 : index
    %c0_13 = arith.constant 0 : index
    %12 = vector.load %arg3[%c7, %c0_12, %c0_13] : memref<9x1x256xf32, #tpu.memory_space<vmem>>, vector<1x1x256xf32>
    %13 = vector.shape_cast %12 : vector<1x1x256xf32> to vector<1x256xf32>
    %c8 = arith.constant 8 : index
    %c0_14 = arith.constant 0 : index
    %c0_15 = arith.constant 0 : index
    %14 = vector.load %arg3[%c8, %c0_14, %c0_15] : memref<9x1x256xf32, #tpu.memory_space<vmem>>, vector<1x1x256xf32>
    %15 = vector.shape_cast %14 : vector<1x1x256xf32> to vector<1x256xf32>
    %c0_16 = arith.constant 0 : index
    %c0_17 = arith.constant 0 : index
    %c0_18 = arith.constant 0 : index
    %16 = vector.load %arg1[%c0_16, %c0_17, %c0_18] : memref<2x4x256xf32, #tpu.memory_space<vmem>>, vector<1x4x256xf32>
    %17 = vector.shape_cast %16 : vector<1x4x256xf32> to vector<4x256xf32>
    %c0_19 = arith.constant 0 : index
    %c0_20 = arith.constant 0 : index
    %c0_21 = arith.constant 0 : index
    %18 = vector.load %arg2[%c0_19, %c0_20, %c0_21] : memref<2x4x256xf32, #tpu.memory_space<vmem>>, vector<1x4x256xf32>
    %19 = vector.shape_cast %18 : vector<1x4x256xf32> to vector<4x256xf32>
    %c17_i32 = arith.constant 17 : i32
    %20 = tpu.dynamic_rotate %17 by %c17_i32 dim 1 : vector<4x256xf32>, i32 -> vector<4x256xf32>
    %21 = vector.broadcast %1 : vector<1x256xf32> to vector<4x256xf32>
    %22 = arith.mulf %20, %21 : vector<4x256xf32>
    %c0_22 = arith.constant 0 : index
    %c0_23 = arith.constant 0 : index
    %23 = vector.load %arg10[%c0_22, %c0_23] : memref<36x256xf32, #tpu.memory_space<vmem>>, vector<4x256xf32>
    tpu.vector_store %arg10[%c0_22, %c0_23], %22 {strides = array<i32>} : memref<36x256xf32, #tpu.memory_space<vmem>>, vector<4x256xf32>,
    %c16_i32 = arith.constant 16 : i32
    %24 = tpu.dynamic_rotate %17 by %c16_i32 dim 1 : vector<4x256xf32>, i32 -> vector<4x256xf32>
    %25 = vector.broadcast %3 : vector<1x256xf32> to vector<4x256xf32>
    %26 = arith.mulf %24, %25 : vector<4x256xf32>
    %c4 = arith.constant 4 : index
    %c0_24 = arith.constant 0 : index
    %27 = vector.load %arg10[%c4, %c0_24] : memref<36x256xf32, #tpu.memory_space<vmem>>, vector<4x256xf32>
    tpu.vector_store %arg10[%c4, %c0_24], %26 {strides = array<i32>} : memref<36x256xf32, #tpu.memory_space<vmem>>, vector<4x256xf32>,
    %c15_i32 = arith.constant 15 : i32
    %28 = tpu.dynamic_rotate %17 by %c15_i32 dim 1 : vector<4x256xf32>, i32 -> vector<4x256xf32>
    %29 = vector.broadcast %5 : vector<1x256xf32> to vector<4x256xf32>
    %30 = arith.mulf %28, %29 : vector<4x256xf32>
    %c8_25 = arith.constant 8 : index
    %c0_26 = arith.constant 0 : index
    %31 = vector.load %arg10[%c8_25, %c0_26] : memref<36x256xf32, #tpu.memory_space<vmem>>, vector<4x256xf32>
    tpu.vector_store %arg10[%c8_25, %c0_26], %30 {strides = array<i32>} : memref<36x256xf32, #tpu.memory_space<vmem>>, vector<4x256xf32>,
    %c1_i32 = arith.constant 1 : i32
    %32 = tpu.dynamic_rotate %17 by %c1_i32 dim 1 : vector<4x256xf32>, i32 -> vector<4x256xf32>
    %33 = vector.broadcast %7 : vector<1x256xf32> to vector<4x256xf32>
    %34 = arith.mulf %32, %33 : vector<4x256xf32>
    %c12 = arith.constant 12 : index
    %c0_27 = arith.constant 0 : index
    %35 = vector.load %arg10[%c12, %c0_27] : memref<36x256xf32, #tpu.memory_space<vmem>>, vector<4x256xf32>
    tpu.vector_store %arg10[%c12, %c0_27], %34 {strides = array<i32>} : memref<36x256xf32, #tpu.memory_space<vmem>>, vector<4x256xf32>,
    %c16 = arith.constant 16 : index
    %c0_28 = arith.constant 0 : index
    %36 = vector.load %arg10[%c16, %c0_28] : memref<36x256xf32, #tpu.memory_space<vmem>>, vector<4x256xf32>
    tpu.vector_store %arg10[%c16, %c0_28], %17 {strides = array<i32>} : memref<36x256xf32, #tpu.memory_space<vmem>>, vector<4x256xf32>,
    %c255_i32 = arith.constant 255 : i32
    %37 = tpu.dynamic_rotate %17 by %c255_i32 dim 1 : vector<4x256xf32>, i32 -> vector<4x256xf32>
    %38 = vector.broadcast %9 : vector<1x256xf32> to vector<4x256xf32>
    %39 = arith.mulf %37, %38 : vector<4x256xf32>
    %c20 = arith.constant 20 : index
    %c0_29 = arith.constant 0 : index
    %40 = vector.load %arg10[%c20, %c0_29] : memref<36x256xf32, #tpu.memory_space<vmem>>, vector<4x256xf32>
    tpu.vector_store %arg10[%c20, %c0_29], %39 {strides = array<i32>} : memref<36x256xf32, #tpu.memory_space<vmem>>, vector<4x256xf32>,
    %c241_i32 = arith.constant 241 : i32
    %41 = tpu.dynamic_rotate %17 by %c241_i32 dim 1 : vector<4x256xf32>, i32 -> vector<4x256xf32>
    %42 = vector.broadcast %11 : vector<1x256xf32> to vector<4x256xf32>
    %43 = arith.mulf %41, %42 : vector<4x256xf32>
    %c24 = arith.constant 24 : index
    %c0_30 = arith.constant 0 : index
    %44 = vector.load %arg10[%c24, %c0_30] : memref<36x256xf32, #tpu.memory_space<vmem>>, vector<4x256xf32>
    tpu.vector_store %arg10[%c24, %c0_30], %43 {strides = array<i32>} : memref<36x256xf32, #tpu.memory_space<vmem>>, vector<4x256xf32>,
    %c240_i32 = arith.constant 240 : i32
    %45 = tpu.dynamic_rotate %17 by %c240_i32 dim 1 : vector<4x256xf32>, i32 -> vector<4x256xf32>
    %46 = vector.broadcast %13 : vector<1x256xf32> to vector<4x256xf32>
    %47 = arith.mulf %45, %46 : vector<4x256xf32>
    %c28 = arith.constant 28 : index
    %c0_31 = arith.constant 0 : index
    %48 = vector.load %arg10[%c28, %c0_31] : memref<36x256xf32, #tpu.memory_space<vmem>>, vector<4x256xf32>
    tpu.vector_store %arg10[%c28, %c0_31], %47 {strides = array<i32>} : memref<36x256xf32, #tpu.memory_space<vmem>>, vector<4x256xf32>,
    %c239_i32 = arith.constant 239 : i32
    %49 = tpu.dynamic_rotate %17 by %c239_i32 dim 1 : vector<4x256xf32>, i32 -> vector<4x256xf32>
    %50 = vector.broadcast %15 : vector<1x256xf32> to vector<4x256xf32>
    %51 = arith.mulf %49, %50 : vector<4x256xf32>
    %c32 = arith.constant 32 : index
    %c0_32 = arith.constant 0 : index
    %52 = vector.load %arg10[%c32, %c0_32] : memref<36x256xf32, #tpu.memory_space<vmem>>, vector<4x256xf32>
    tpu.vector_store %arg10[%c32, %c0_32], %51 {strides = array<i32>} : memref<36x256xf32, #tpu.memory_space<vmem>>, vector<4x256xf32>,
    %c0_33 = arith.constant 0 : index
    %c0_34 = arith.constant 0 : index
    %53 = vector.load %arg10[%c0_33, %c0_34] : memref<36x256xf32, #tpu.memory_space<vmem>>, vector<36x256xf32>
    %54 = arith.truncf %53 : vector<36x256xf32> to vector<36x256xbf16>
    %c17_i32_35 = arith.constant 17 : i32
    %55 = tpu.dynamic_rotate %19 by %c17_i32_35 dim 1 : vector<4x256xf32>, i32 -> vector<4x256xf32>
    %56 = vector.broadcast %1 : vector<1x256xf32> to vector<4x256xf32>
    %57 = arith.mulf %55, %56 : vector<4x256xf32>
    %c0_36 = arith.constant 0 : index
    %c0_37 = arith.constant 0 : index
    %58 = vector.load %arg11[%c0_36, %c0_37] : memref<36x256xf32, #tpu.memory_space<vmem>>, vector<4x256xf32>
    tpu.vector_store %arg11[%c0_36, %c0_37], %57 {strides = array<i32>} : memref<36x256xf32, #tpu.memory_space<vmem>>, vector<4x256xf32>,
    %c16_i32_38 = arith.constant 16 : i32
    %59 = tpu.dynamic_rotate %19 by %c16_i32_38 dim 1 : vector<4x256xf32>, i32 -> vector<4x256xf32>
    %60 = vector.broadcast %3 : vector<1x256xf32> to vector<4x256xf32>
    %61 = arith.mulf %59, %60 : vector<4x256xf32>
    %c4_39 = arith.constant 4 : index
    %c0_40 = arith.constant 0 : index
    %62 = vector.load %arg11[%c4_39, %c0_40] : memref<36x256xf32, #tpu.memory_space<vmem>>, vector<4x256xf32>
    tpu.vector_store %arg11[%c4_39, %c0_40], %61 {strides = array<i32>} : memref<36x256xf32, #tpu.memory_space<vmem>>, vector<4x256xf32>,
    %c15_i32_41 = arith.constant 15 : i32
    %63 = tpu.dynamic_rotate %19 by %c15_i32_41 dim 1 : vector<4x256xf32>, i32 -> vector<4x256xf32>
    %64 = vector.broadcast %5 : vector<1x256xf32> to vector<4x256xf32>
    %65 = arith.mulf %63, %64 : vector<4x256xf32>
    %c8_42 = arith.constant 8 : index
    %c0_43 = arith.constant 0 : index
    %66 = vector.load %arg11[%c8_42, %c0_43] : memref<36x256xf32, #tpu.memory_space<vmem>>, vector<4x256xf32>
    tpu.vector_store %arg11[%c8_42, %c0_43], %65 {strides = array<i32>} : memref<36x256xf32, #tpu.memory_space<vmem>>, vector<4x256xf32>,
    %c1_i32_44 = arith.constant 1 : i32
    %67 = tpu.dynamic_rotate %19 by %c1_i32_44 dim 1 : vector<4x256xf32>, i32 -> vector<4x256xf32>
    %68 = vector.broadcast %7 : vector<1x256xf32> to vector<4x256xf32>
    %69 = arith.mulf %67, %68 : vector<4x256xf32>
    %c12_45 = arith.constant 12 : index
    %c0_46 = arith.constant 0 : index
    %70 = vector.load %arg11[%c12_45, %c0_46] : memref<36x256xf32, #tpu.memory_space<vmem>>, vector<4x256xf32>
    tpu.vector_store %arg11[%c12_45, %c0_46], %69 {strides = array<i32>} : memref<36x256xf32, #tpu.memory_space<vmem>>, vector<4x256xf32>,
    %c16_47 = arith.constant 16 : index
    %c0_48 = arith.constant 0 : index
    %71 = vector.load %arg11[%c16_47, %c0_48] : memref<36x256xf32, #tpu.memory_space<vmem>>, vector<4x256xf32>
    tpu.vector_store %arg11[%c16_47, %c0_48], %19 {strides = array<i32>} : memref<36x256xf32, #tpu.memory_space<vmem>>, vector<4x256xf32>,
    %c255_i32_49 = arith.constant 255 : i32
    %72 = tpu.dynamic_rotate %19 by %c255_i32_49 dim 1 : vector<4x256xf32>, i32 -> vector<4x256xf32>
    %73 = vector.broadcast %9 : vector<1x256xf32> to vector<4x256xf32>
    %74 = arith.mulf %72, %73 : vector<4x256xf32>
    %c20_50 = arith.constant 20 : index
    %c0_51 = arith.constant 0 : index
    %75 = vector.load %arg11[%c20_50, %c0_51] : memref<36x256xf32, #tpu.memory_space<vmem>>, vector<4x256xf32>
    tpu.vector_store %arg11[%c20_50, %c0_51], %74 {strides = array<i32>} : memref<36x256xf32, #tpu.memory_space<vmem>>, vector<4x256xf32>,
    %c241_i32_52 = arith.constant 241 : i32
    %76 = tpu.dynamic_rotate %19 by %c241_i32_52 dim 1 : vector<4x256xf32>, i32 -> vector<4x256xf32>
    %77 = vector.broadcast %11 : vector<1x256xf32> to vector<4x256xf32>
    %78 = arith.mulf %76, %77 : vector<4x256xf32>
    %c24_53 = arith.constant 24 : index
    %c0_54 = arith.constant 0 : index
    %79 = vector.load %arg11[%c24_53, %c0_54] : memref<36x256xf32, #tpu.memory_space<vmem>>, vector<4x256xf32>
    tpu.vector_store %arg11[%c24_53, %c0_54], %78 {strides = array<i32>} : memref<36x256xf32, #tpu.memory_space<vmem>>, vector<4x256xf32>,
    %c240_i32_55 = arith.constant 240 : i32
    %80 = tpu.dynamic_rotate %19 by %c240_i32_55 dim 1 : vector<4x256xf32>, i32 -> vector<4x256xf32>
    %81 = vector.broadcast %13 : vector<1x256xf32> to vector<4x256xf32>
    %82 = arith.mulf %80, %81 : vector<4x256xf32>
    %c28_56 = arith.constant 28 : index
    %c0_57 = arith.constant 0 : index
    %83 = vector.load %arg11[%c28_56, %c0_57] : memref<36x256xf32, #tpu.memory_space<vmem>>, vector<4x256xf32>
    tpu.vector_store %arg11[%c28_56, %c0_57], %82 {strides = array<i32>} : memref<36x256xf32, #tpu.memory_space<vmem>>, vector<4x256xf32>,
    %c239_i32_58 = arith.constant 239 : i32
    %84 = tpu.dynamic_rotate %19 by %c239_i32_58 dim 1 : vector<4x256xf32>, i32 -> vector<4x256xf32>
    %85 = vector.broadcast %15 : vector<1x256xf32> to vector<4x256xf32>
    %86 = arith.mulf %84, %85 : vector<4x256xf32>
    %c32_59 = arith.constant 32 : index
    %c0_60 = arith.constant 0 : index
    %87 = vector.load %arg11[%c32_59, %c0_60] : memref<36x256xf32, #tpu.memory_space<vmem>>, vector<4x256xf32>
    tpu.vector_store %arg11[%c32_59, %c0_60], %86 {strides = array<i32>} : memref<36x256xf32, #tpu.memory_space<vmem>>, vector<4x256xf32>,
    %c0_61 = arith.constant 0 : index
    %c0_62 = arith.constant 0 : index
    %88 = vector.load %arg11[%c0_61, %c0_62] : memref<36x256xf32, #tpu.memory_space<vmem>>, vector<36x256xf32>
    %89 = arith.truncf %88 : vector<36x256xf32> to vector<36x256xbf16>
    %c0_63 = arith.constant 0 : index
    %c0_64 = arith.constant 0 : index
    %c0_65 = arith.constant 0 : index
    %90 = vector.load %arg4[%c0_63, %c0_64, %c0_65] : memref<3x4x36xbf16, #tpu.memory_space<vmem>>, vector<1x4x36xbf16>
    %91 = vector.shape_cast %90 : vector<1x4x36xbf16> to vector<4x36xbf16>
    %cst = arith.constant dense<0.000000e+00> : vector<4x256xf32>
    %92 = tpu.matmul %91, %54, %cst {dimension_numbers = #tpu.dot_dimension_numbers<[1], [0], [0], [1], [0, 0, 1, 1], [], []>} : vector<4x36xbf16>, vector<36x256xbf16>, vector<4x256xf32> -> vector<4x256xf32>
    %c0_66 = arith.constant 0 : index
    %c0_67 = arith.constant 0 : index
    %c0_68 = arith.constant 0 : index
    %93 = vector.load %arg5[%c0_66, %c0_67, %c0_68] : memref<3x4x36xbf16, #tpu.memory_space<vmem>>, vector<1x4x36xbf16>
    %94 = vector.shape_cast %93 : vector<1x4x36xbf16> to vector<4x36xbf16>
    %cst_69 = arith.constant dense<0.000000e+00> : vector<4x256xf32>
    %95 = tpu.matmul %94, %89, %cst_69 {dimension_numbers = #tpu.dot_dimension_numbers<[1], [0], [0], [1], [0, 0, 1, 1], [], []>} : vector<4x36xbf16>, vector<36x256xbf16>, vector<4x256xf32> -> vector<4x256xf32>
    %96 = arith.addf %92, %95 : vector<4x256xf32>
    %c0_70 = arith.constant 0 : index
    %c0_71 = arith.constant 0 : index
    %c0_72 = arith.constant 0 : index
    %97 = vector.load %arg7[%c0_70, %c0_71, %c0_72] : memref<6x4x1xf32, #tpu.memory_space<vmem>>, vector<1x4x1xf32>
    %98 = vector.shape_cast %97 : vector<1x4x1xf32> to vector<4x1xf32>
    %99 = vector.broadcast %98 : vector<4x1xf32> to vector<4x256xf32>
    %100 = arith.addf %96, %99 : vector<4x256xf32>
    %cst_73 = arith.constant 0.000000e+00 : f32
    %101 = vector.broadcast %cst_73 : f32 to vector<4x256xf32>
    %102 = arith.maximumf %100, %101 : vector<4x256xf32>
    %c1_74 = arith.constant 1 : index
    %c0_75 = arith.constant 0 : index
    %c0_76 = arith.constant 0 : index
    %103 = vector.load %arg4[%c1_74, %c0_75, %c0_76] : memref<3x4x36xbf16, #tpu.memory_space<vmem>>, vector<1x4x36xbf16>
    %104 = vector.shape_cast %103 : vector<1x4x36xbf16> to vector<4x36xbf16>
    %cst_77 = arith.constant dense<0.000000e+00> : vector<4x256xf32>
    %105 = tpu.matmul %104, %54, %cst_77 {dimension_numbers = #tpu.dot_dimension_numbers<[1], [0], [0], [1], [0, 0, 1, 1], [], []>} : vector<4x36xbf16>, vector<36x256xbf16>, vector<4x256xf32> -> vector<4x256xf32>
    %c1_78 = arith.constant 1 : index
    %c0_79 = arith.constant 0 : index
    %c0_80 = arith.constant 0 : index
    %106 = vector.load %arg7[%c1_78, %c0_79, %c0_80] : memref<6x4x1xf32, #tpu.memory_space<vmem>>, vector<1x4x1xf32>
    %107 = vector.shape_cast %106 : vector<1x4x1xf32> to vector<4x1xf32>
    %108 = vector.broadcast %107 : vector<4x1xf32> to vector<4x256xf32>
    %109 = arith.addf %105, %108 : vector<4x256xf32>
    %cst_81 = arith.constant 0.000000e+00 : f32
    %110 = vector.broadcast %cst_81 : f32 to vector<4x256xf32>
    %111 = arith.maximumf %109, %110 : vector<4x256xf32>
    %c2_82 = arith.constant 2 : index
    %c0_83 = arith.constant 0 : index
    %c0_84 = arith.constant 0 : index
    %112 = vector.load %arg4[%c2_82, %c0_83, %c0_84] : memref<3x4x36xbf16, #tpu.memory_space<vmem>>, vector<1x4x36xbf16>
    %113 = vector.shape_cast %112 : vector<1x4x36xbf16> to vector<4x36xbf16>
    %cst_85 = arith.constant dense<0.000000e+00> : vector<4x256xf32>
    %114 = tpu.matmul %113, %54, %cst_85 {dimension_numbers = #tpu.dot_dimension_numbers<[1], [0], [0], [1], [0, 0, 1, 1], [], []>} : vector<4x36xbf16>, vector<36x256xbf16>, vector<4x256xf32> -> vector<4x256xf32>
    %c2_86 = arith.constant 2 : index
    %c0_87 = arith.constant 0 : index
    %c0_88 = arith.constant 0 : index
    %115 = vector.load %arg7[%c2_86, %c0_87, %c0_88] : memref<6x4x1xf32, #tpu.memory_space<vmem>>, vector<1x4x1xf32>
    %116 = vector.shape_cast %115 : vector<1x4x1xf32> to vector<4x1xf32>
    %117 = vector.broadcast %116 : vector<4x1xf32> to vector<4x256xf32>
    %118 = arith.addf %114, %117 : vector<4x256xf32>
    %cst_89 = arith.constant 0.000000e+00 : f32
    %119 = vector.broadcast %cst_89 : f32 to vector<4x256xf32>
    %120 = arith.maximumf %118, %119 : vector<4x256xf32>
    %c1_90 = arith.constant 1 : index
    %c0_91 = arith.constant 0 : index
    %c0_92 = arith.constant 0 : index
    %121 = vector.load %arg5[%c1_90, %c0_91, %c0_92] : memref<3x4x36xbf16, #tpu.memory_space<vmem>>, vector<1x4x36xbf16>
    %122 = vector.shape_cast %121 : vector<1x4x36xbf16> to vector<4x36xbf16>
    %cst_93 = arith.constant dense<0.000000e+00> : vector<4x256xf32>
    %123 = tpu.matmul %122, %89, %cst_93 {dimension_numbers = #tpu.dot_dimension_numbers<[1], [0], [0], [1], [0, 0, 1, 1], [], []>} : vector<4x36xbf16>, vector<36x256xbf16>, vector<4x256xf32> -> vector<4x256xf32>
    %c3_94 = arith.constant 3 : index
    %c0_95 = arith.constant 0 : index
    %c0_96 = arith.constant 0 : index
    %124 = vector.load %arg7[%c3_94, %c0_95, %c0_96] : memref<6x4x1xf32, #tpu.memory_space<vmem>>, vector<1x4x1xf32>
    %125 = vector.shape_cast %124 : vector<1x4x1xf32> to vector<4x1xf32>
    %126 = vector.broadcast %125 : vector<4x1xf32> to vector<4x256xf32>
    %127 = arith.addf %123, %126 : vector<4x256xf32>
    %cst_97 = arith.constant 0.000000e+00 : f32
    %128 = vector.broadcast %cst_97 : f32 to vector<4x256xf32>
    %129 = arith.maximumf %127, %128 : vector<4x256xf32>
    %c2_98 = arith.constant 2 : index
    %c0_99 = arith.constant 0 : index
    %c0_100 = arith.constant 0 : index
    %130 = vector.load %arg5[%c2_98, %c0_99, %c0_100] : memref<3x4x36xbf16, #tpu.memory_space<vmem>>, vector<1x4x36xbf16>
    %131 = vector.shape_cast %130 : vector<1x4x36xbf16> to vector<4x36xbf16>
    %cst_101 = arith.constant dense<0.000000e+00> : vector<4x256xf32>
    %132 = tpu.matmul %131, %89, %cst_101 {dimension_numbers = #tpu.dot_dimension_numbers<[1], [0], [0], [1], [0, 0, 1, 1], [], []>} : vector<4x36xbf16>, vector<36x256xbf16>, vector<4x256xf32> -> vector<4x256xf32>
    %c4_102 = arith.constant 4 : index
    %c0_103 = arith.constant 0 : index
    %c0_104 = arith.constant 0 : index
    %133 = vector.load %arg7[%c4_102, %c0_103, %c0_104] : memref<6x4x1xf32, #tpu.memory_space<vmem>>, vector<1x4x1xf32>
    %134 = vector.shape_cast %133 : vector<1x4x1xf32> to vector<4x1xf32>
    %135 = vector.broadcast %134 : vector<4x1xf32> to vector<4x256xf32>
    %136 = arith.addf %132, %135 : vector<4x256xf32>
    %cst_105 = arith.constant 0.000000e+00 : f32
    %137 = vector.broadcast %cst_105 : f32 to vector<4x256xf32>
    %138 = arith.maximumf %136, %137 : vector<4x256xf32>
    %139 = arith.truncf %102 : vector<4x256xf32> to vector<4x256xbf16>
    %c0_106 = arith.constant 0 : index
    %140 = memref.load %arg8[%c0_106] : memref<2xf32, #tpu.memory_space<smem>>
    %141 = arith.truncf %111 : vector<4x256xf32> to vector<4x256xbf16>
    %142 = arith.truncf %120 : vector<4x256xf32> to vector<4x256xbf16>
    %cst_107 = arith.constant dense<0.000000e+00> : vector<256x256xf32>
    %143 = tpu.matmul %141, %139, %cst_107 {dimension_numbers = #tpu.dot_dimension_numbers<[0], [0], [1], [1], [0, 1, 1, 1], [], []>} : vector<4x256xbf16>, vector<4x256xbf16>, vector<256x256xf32> -> vector<256x256xf32>
    %cst_108 = arith.constant dense<0xFF800000> : vector<256xf32>
    %144 = vector.multi_reduction <maximumf>, %143, %cst_108 [1] : vector<256x256xf32> to vector<256xf32>
    %145 = vector.shape_cast %144 : vector<256xf32> to vector<256x1xf32>
    %146 = vector.broadcast %145 : vector<256x1xf32> to vector<256x256xf32>
    %147 = arith.subf %143, %146 : vector<256x256xf32>
    %148 = math.exp %147 : vector<256x256xf32>
    %cst_109 = arith.constant dense<0.000000e+00> : vector<256xf32>
    %149 = vector.multi_reduction <add>, %148, %cst_109 [1] : vector<256x256xf32> to vector<256xf32>
    %150 = vector.shape_cast %149 : vector<256xf32> to vector<256x1xf32>
    %151 = tpu.reciprocal %150 {approx = true} : vector<256x1xf32> -> vector<256x1xf32>
    %152 = vector.broadcast %151 : vector<256x1xf32> to vector<256x256xf32>
    %153 = arith.mulf %148, %152 : vector<256x256xf32>
    %154 = arith.truncf %153 : vector<256x256xf32> to vector<256x256xbf16>
    %cst_110 = arith.constant dense<0.000000e+00> : vector<4x256xf32>
    %155 = tpu.matmul %142, %154, %cst_110 {dimension_numbers = #tpu.dot_dimension_numbers<[1], [1], [0], [0], [0, 0, 1, 0], [], []>} : vector<4x256xbf16>, vector<256x256xbf16>, vector<4x256xf32> -> vector<4x256xf32>
    %156 = vector.broadcast %140 : f32 to vector<4x256xf32>
    %157 = arith.mulf %156, %155 : vector<4x256xf32>
    %158 = arith.addf %157, %19 : vector<4x256xf32>
    %c1_111 = arith.constant 1 : index
    %159 = memref.load %arg8[%c1_111] : memref<2xf32, #tpu.memory_space<smem>>
    %160 = arith.truncf %129 : vector<4x256xf32> to vector<4x256xbf16>
    %161 = arith.truncf %138 : vector<4x256xf32> to vector<4x256xbf16>
    %cst_112 = arith.constant dense<0.000000e+00> : vector<256x256xf32>
    %162 = tpu.matmul %160, %139, %cst_112 {dimension_numbers = #tpu.dot_dimension_numbers<[0], [0], [1], [1], [0, 1, 1, 1], [], []>} : vector<4x256xbf16>, vector<4x256xbf16>, vector<256x256xf32> -> vector<256x256xf32>
    %cst_113 = arith.constant dense<0xFF800000> : vector<256xf32>
    %163 = vector.multi_reduction <maximumf>, %162, %cst_113 [1] : vector<256x256xf32> to vector<256xf32>
    %164 = vector.shape_cast %163 : vector<256xf32> to vector<256x1xf32>
    %165 = vector.broadcast %164 : vector<256x1xf32> to vector<256x256xf32>
    %166 = arith.subf %162, %165 : vector<256x256xf32>
    %167 = math.exp %166 : vector<256x256xf32>
    %cst_114 = arith.constant dense<0.000000e+00> : vector<256xf32>
    %168 = vector.multi_reduction <add>, %167, %cst_114 [1] : vector<256x256xf32> to vector<256xf32>
    %169 = vector.shape_cast %168 : vector<256xf32> to vector<256x1xf32>
    %170 = tpu.reciprocal %169 {approx = true} : vector<256x1xf32> -> vector<256x1xf32>
    %171 = vector.broadcast %170 : vector<256x1xf32> to vector<256x256xf32>
    %172 = arith.mulf %167, %171 : vector<256x256xf32>
    %173 = arith.truncf %172 : vector<256x256xf32> to vector<256x256xbf16>
    %cst_115 = arith.constant dense<0.000000e+00> : vector<4x256xf32>
    %174 = tpu.matmul %161, %173, %cst_115 {dimension_numbers = #tpu.dot_dimension_numbers<[1], [1], [0], [0], [0, 0, 1, 0], [], []>} : vector<4x256xbf16>, vector<256x256xbf16>, vector<4x256xf32> -> vector<4x256xf32>
    %175 = vector.broadcast %159 : f32 to vector<4x256xf32>
    %176 = arith.mulf %175, %174 : vector<4x256xf32>
    %177 = arith.addf %176, %17 : vector<4x256xf32>
    %c17_i32_116 = arith.constant 17 : i32
    %178 = tpu.dynamic_rotate %158 by %c17_i32_116 dim 1 : vector<4x256xf32>, i32 -> vector<4x256xf32>
    %179 = vector.broadcast %1 : vector<1x256xf32> to vector<4x256xf32>
    %180 = arith.mulf %178, %179 : vector<4x256xf32>
    %c0_117 = arith.constant 0 : index
    %c0_118 = arith.constant 0 : index
    %181 = vector.load %arg10[%c0_117, %c0_118] : memref<36x256xf32, #tpu.memory_space<vmem>>, vector<4x256xf32>
    tpu.vector_store %arg10[%c0_117, %c0_118], %180 {strides = array<i32>} : memref<36x256xf32, #tpu.memory_space<vmem>>, vector<4x256xf32>,
    %c16_i32_119 = arith.constant 16 : i32
    %182 = tpu.dynamic_rotate %158 by %c16_i32_119 dim 1 : vector<4x256xf32>, i32 -> vector<4x256xf32>
    %183 = vector.broadcast %3 : vector<1x256xf32> to vector<4x256xf32>
    %184 = arith.mulf %182, %183 : vector<4x256xf32>
    %c4_120 = arith.constant 4 : index
    %c0_121 = arith.constant 0 : index
    %185 = vector.load %arg10[%c4_120, %c0_121] : memref<36x256xf32, #tpu.memory_space<vmem>>, vector<4x256xf32>
    tpu.vector_store %arg10[%c4_120, %c0_121], %184 {strides = array<i32>} : memref<36x256xf32, #tpu.memory_space<vmem>>, vector<4x256xf32>,
    %c15_i32_122 = arith.constant 15 : i32
    %186 = tpu.dynamic_rotate %158 by %c15_i32_122 dim 1 : vector<4x256xf32>, i32 -> vector<4x256xf32>
    %187 = vector.broadcast %5 : vector<1x256xf32> to vector<4x256xf32>
    %188 = arith.mulf %186, %187 : vector<4x256xf32>
    %c8_123 = arith.constant 8 : index
    %c0_124 = arith.constant 0 : index
    %189 = vector.load %arg10[%c8_123, %c0_124] : memref<36x256xf32, #tpu.memory_space<vmem>>, vector<4x256xf32>
    tpu.vector_store %arg10[%c8_123, %c0_124], %188 {strides = array<i32>} : memref<36x256xf32, #tpu.memory_space<vmem>>, vector<4x256xf32>,
    %c1_i32_125 = arith.constant 1 : i32
    %190 = tpu.dynamic_rotate %158 by %c1_i32_125 dim 1 : vector<4x256xf32>, i32 -> vector<4x256xf32>
    %191 = vector.broadcast %7 : vector<1x256xf32> to vector<4x256xf32>
    %192 = arith.mulf %190, %191 : vector<4x256xf32>
    %c12_126 = arith.constant 12 : index
    %c0_127 = arith.constant 0 : index
    %193 = vector.load %arg10[%c12_126, %c0_127] : memref<36x256xf32, #tpu.memory_space<vmem>>, vector<4x256xf32>
    tpu.vector_store %arg10[%c12_126, %c0_127], %192 {strides = array<i32>} : memref<36x256xf32, #tpu.memory_space<vmem>>, vector<4x256xf32>,
    %c16_128 = arith.constant 16 : index
    %c0_129 = arith.constant 0 : index
    %194 = vector.load %arg10[%c16_128, %c0_129] : memref<36x256xf32, #tpu.memory_space<vmem>>, vector<4x256xf32>
    tpu.vector_store %arg10[%c16_128, %c0_129], %158 {strides = array<i32>} : memref<36x256xf32, #tpu.memory_space<vmem>>, vector<4x256xf32>,
    %c255_i32_130 = arith.constant 255 : i32
    %195 = tpu.dynamic_rotate %158 by %c255_i32_130 dim 1 : vector<4x256xf32>, i32 -> vector<4x256xf32>
    %196 = vector.broadcast %9 : vector<1x256xf32> to vector<4x256xf32>
    %197 = arith.mulf %195, %196 : vector<4x256xf32>
    %c20_131 = arith.constant 20 : index
    %c0_132 = arith.constant 0 : index
    %198 = vector.load %arg10[%c20_131, %c0_132] : memref<36x256xf32, #tpu.memory_space<vmem>>, vector<4x256xf32>
    tpu.vector_store %arg10[%c20_131, %c0_132], %197 {strides = array<i32>} : memref<36x256xf32, #tpu.memory_space<vmem>>, vector<4x256xf32>,
    %c241_i32_133 = arith.constant 241 : i32
    %199 = tpu.dynamic_rotate %158 by %c241_i32_133 dim 1 : vector<4x256xf32>, i32 -> vector<4x256xf32>
    %200 = vector.broadcast %11 : vector<1x256xf32> to vector<4x256xf32>
    %201 = arith.mulf %199, %200 : vector<4x256xf32>
    %c24_134 = arith.constant 24 : index
    %c0_135 = arith.constant 0 : index
    %202 = vector.load %arg10[%c24_134, %c0_135] : memref<36x256xf32, #tpu.memory_space<vmem>>, vector<4x256xf32>
    tpu.vector_store %arg10[%c24_134, %c0_135], %201 {strides = array<i32>} : memref<36x256xf32, #tpu.memory_space<vmem>>, vector<4x256xf32>,
    %c240_i32_136 = arith.constant 240 : i32
    %203 = tpu.dynamic_rotate %158 by %c240_i32_136 dim 1 : vector<4x256xf32>, i32 -> vector<4x256xf32>
    %204 = vector.broadcast %13 : vector<1x256xf32> to vector<4x256xf32>
    %205 = arith.mulf %203, %204 : vector<4x256xf32>
    %c28_137 = arith.constant 28 : index
    %c0_138 = arith.constant 0 : index
    %206 = vector.load %arg10[%c28_137, %c0_138] : memref<36x256xf32, #tpu.memory_space<vmem>>, vector<4x256xf32>
    tpu.vector_store %arg10[%c28_137, %c0_138], %205 {strides = array<i32>} : memref<36x256xf32, #tpu.memory_space<vmem>>, vector<4x256xf32>,
    %c239_i32_139 = arith.constant 239 : i32
    %207 = tpu.dynamic_rotate %158 by %c239_i32_139 dim 1 : vector<4x256xf32>, i32 -> vector<4x256xf32>
    %208 = vector.broadcast %15 : vector<1x256xf32> to vector<4x256xf32>
    %209 = arith.mulf %207, %208 : vector<4x256xf32>
    %c32_140 = arith.constant 32 : index
    %c0_141 = arith.constant 0 : index
    %210 = vector.load %arg10[%c32_140, %c0_141] : memref<36x256xf32, #tpu.memory_space<vmem>>, vector<4x256xf32>
    tpu.vector_store %arg10[%c32_140, %c0_141], %209 {strides = array<i32>} : memref<36x256xf32, #tpu.memory_space<vmem>>, vector<4x256xf32>,
    %c0_142 = arith.constant 0 : index
    %c0_143 = arith.constant 0 : index
    %211 = vector.load %arg10[%c0_142, %c0_143] : memref<36x256xf32, #tpu.memory_space<vmem>>, vector<36x256xf32>
    %212 = arith.truncf %211 : vector<36x256xf32> to vector<36x256xbf16>
    %c17_i32_144 = arith.constant 17 : i32
    %213 = tpu.dynamic_rotate %177 by %c17_i32_144 dim 1 : vector<4x256xf32>, i32 -> vector<4x256xf32>
    %214 = vector.broadcast %1 : vector<1x256xf32> to vector<4x256xf32>
    %215 = arith.mulf %213, %214 : vector<4x256xf32>
    %c0_145 = arith.constant 0 : index
    %c0_146 = arith.constant 0 : index
    %216 = vector.load %arg11[%c0_145, %c0_146] : memref<36x256xf32, #tpu.memory_space<vmem>>, vector<4x256xf32>
    tpu.vector_store %arg11[%c0_145, %c0_146], %215 {strides = array<i32>} : memref<36x256xf32, #tpu.memory_space<vmem>>, vector<4x256xf32>,
    %c16_i32_147 = arith.constant 16 : i32
    %217 = tpu.dynamic_rotate %177 by %c16_i32_147 dim 1 : vector<4x256xf32>, i32 -> vector<4x256xf32>
    %218 = vector.broadcast %3 : vector<1x256xf32> to vector<4x256xf32>
    %219 = arith.mulf %217, %218 : vector<4x256xf32>
    %c4_148 = arith.constant 4 : index
    %c0_149 = arith.constant 0 : index
    %220 = vector.load %arg11[%c4_148, %c0_149] : memref<36x256xf32, #tpu.memory_space<vmem>>, vector<4x256xf32>
    tpu.vector_store %arg11[%c4_148, %c0_149], %219 {strides = array<i32>} : memref<36x256xf32, #tpu.memory_space<vmem>>, vector<4x256xf32>,
    %c15_i32_150 = arith.constant 15 : i32
    %221 = tpu.dynamic_rotate %177 by %c15_i32_150 dim 1 : vector<4x256xf32>, i32 -> vector<4x256xf32>
    %222 = vector.broadcast %5 : vector<1x256xf32> to vector<4x256xf32>
    %223 = arith.mulf %221, %222 : vector<4x256xf32>
    %c8_151 = arith.constant 8 : index
    %c0_152 = arith.constant 0 : index
    %224 = vector.load %arg11[%c8_151, %c0_152] : memref<36x256xf32, #tpu.memory_space<vmem>>, vector<4x256xf32>
    tpu.vector_store %arg11[%c8_151, %c0_152], %223 {strides = array<i32>} : memref<36x256xf32, #tpu.memory_space<vmem>>, vector<4x256xf32>,
    %c1_i32_153 = arith.constant 1 : i32
    %225 = tpu.dynamic_rotate %177 by %c1_i32_153 dim 1 : vector<4x256xf32>, i32 -> vector<4x256xf32>
    %226 = vector.broadcast %7 : vector<1x256xf32> to vector<4x256xf32>
    %227 = arith.mulf %225, %226 : vector<4x256xf32>
    %c12_154 = arith.constant 12 : index
    %c0_155 = arith.constant 0 : index
    %228 = vector.load %arg11[%c12_154, %c0_155] : memref<36x256xf32, #tpu.memory_space<vmem>>, vector<4x256xf32>
    tpu.vector_store %arg11[%c12_154, %c0_155], %227 {strides = array<i32>} : memref<36x256xf32, #tpu.memory_space<vmem>>, vector<4x256xf32>,
    %c16_156 = arith.constant 16 : index
    %c0_157 = arith.constant 0 : index
    %229 = vector.load %arg11[%c16_156, %c0_157] : memref<36x256xf32, #tpu.memory_space<vmem>>, vector<4x256xf32>
    tpu.vector_store %arg11[%c16_156, %c0_157], %177 {strides = array<i32>} : memref<36x256xf32, #tpu.memory_space<vmem>>, vector<4x256xf32>,
    %c255_i32_158 = arith.constant 255 : i32
    %230 = tpu.dynamic_rotate %177 by %c255_i32_158 dim 1 : vector<4x256xf32>, i32 -> vector<4x256xf32>
    %231 = vector.broadcast %9 : vector<1x256xf32> to vector<4x256xf32>
    %232 = arith.mulf %230, %231 : vector<4x256xf32>
    %c20_159 = arith.constant 20 : index
    %c0_160 = arith.constant 0 : index
    %233 = vector.load %arg11[%c20_159, %c0_160] : memref<36x256xf32, #tpu.memory_space<vmem>>, vector<4x256xf32>
    tpu.vector_store %arg11[%c20_159, %c0_160], %232 {strides = array<i32>} : memref<36x256xf32, #tpu.memory_space<vmem>>, vector<4x256xf32>,
    %c241_i32_161 = arith.constant 241 : i32
    %234 = tpu.dynamic_rotate %177 by %c241_i32_161 dim 1 : vector<4x256xf32>, i32 -> vector<4x256xf32>
    %235 = vector.broadcast %11 : vector<1x256xf32> to vector<4x256xf32>
    %236 = arith.mulf %234, %235 : vector<4x256xf32>
    %c24_162 = arith.constant 24 : index
    %c0_163 = arith.constant 0 : index
    %237 = vector.load %arg11[%c24_162, %c0_163] : memref<36x256xf32, #tpu.memory_space<vmem>>, vector<4x256xf32>
    tpu.vector_store %arg11[%c24_162, %c0_163], %236 {strides = array<i32>} : memref<36x256xf32, #tpu.memory_space<vmem>>, vector<4x256xf32>,
    %c240_i32_164 = arith.constant 240 : i32
    %238 = tpu.dynamic_rotate %177 by %c240_i32_164 dim 1 : vector<4x256xf32>, i32 -> vector<4x256xf32>
    %239 = vector.broadcast %13 : vector<1x256xf32> to vector<4x256xf32>
    %240 = arith.mulf %238, %239 : vector<4x256xf32>
    %c28_165 = arith.constant 28 : index
    %c0_166 = arith.constant 0 : index
    %241 = vector.load %arg11[%c28_165, %c0_166] : memref<36x256xf32, #tpu.memory_space<vmem>>, vector<4x256xf32>
    tpu.vector_store %arg11[%c28_165, %c0_166], %240 {strides = array<i32>} : memref<36x256xf32, #tpu.memory_space<vmem>>, vector<4x256xf32>,
    %c239_i32_167 = arith.constant 239 : i32
    %242 = tpu.dynamic_rotate %177 by %c239_i32_167 dim 1 : vector<4x256xf32>, i32 -> vector<4x256xf32>
    %243 = vector.broadcast %15 : vector<1x256xf32> to vector<4x256xf32>
    %244 = arith.mulf %242, %243 : vector<4x256xf32>
    %c32_168 = arith.constant 32 : index
    %c0_169 = arith.constant 0 : index
    %245 = vector.load %arg11[%c32_168, %c0_169] : memref<36x256xf32, #tpu.memory_space<vmem>>, vector<4x256xf32>
    tpu.vector_store %arg11[%c32_168, %c0_169], %244 {strides = array<i32>} : memref<36x256xf32, #tpu.memory_space<vmem>>, vector<4x256xf32>,
    %c0_170 = arith.constant 0 : index
    %c0_171 = arith.constant 0 : index
    %246 = vector.load %arg11[%c0_170, %c0_171] : memref<36x256xf32, #tpu.memory_space<vmem>>, vector<36x256xf32>
    %247 = arith.truncf %246 : vector<36x256xf32> to vector<36x256xbf16>
    %c0_172 = arith.constant 0 : index
    %c0_173 = arith.constant 0 : index
    %c0_174 = arith.constant 0 : index
    %248 = vector.load %arg6[%c0_172, %c0_173, %c0_174] : memref<2x4x36xbf16, #tpu.memory_space<vmem>>, vector<1x4x36xbf16>
    %249 = vector.shape_cast %248 : vector<1x4x36xbf16> to vector<4x36xbf16>
    %cst_175 = arith.constant dense<0.000000e+00> : vector<4x256xf32>
    %250 = tpu.matmul %249, %212, %cst_175 {dimension_numbers = #tpu.dot_dimension_numbers<[1], [0], [0], [1], [0, 0, 1, 1], [], []>} : vector<4x36xbf16>, vector<36x256xbf16>, vector<4x256xf32> -> vector<4x256xf32>
    %c1_176 = arith.constant 1 : index
    %c0_177 = arith.constant 0 : index
    %c0_178 = arith.constant 0 : index
    %251 = vector.load %arg6[%c1_176, %c0_177, %c0_178] : memref<2x4x36xbf16, #tpu.memory_space<vmem>>, vector<1x4x36xbf16>
    %252 = vector.shape_cast %251 : vector<1x4x36xbf16> to vector<4x36xbf16>
    %cst_179 = arith.constant dense<0.000000e+00> : vector<4x256xf32>
    %253 = tpu.matmul %252, %247, %cst_179 {dimension_numbers = #tpu.dot_dimension_numbers<[1], [0], [0], [1], [0, 0, 1, 1], [], []>} : vector<4x36xbf16>, vector<36x256xbf16>, vector<4x256xf32> -> vector<4x256xf32>
    %254 = arith.addf %250, %253 : vector<4x256xf32>
    %c5_180 = arith.constant 5 : index
    %c0_181 = arith.constant 0 : index
    %c0_182 = arith.constant 0 : index
    %255 = vector.load %arg7[%c5_180, %c0_181, %c0_182] : memref<6x4x1xf32, #tpu.memory_space<vmem>>, vector<1x4x1xf32>
    %256 = vector.shape_cast %255 : vector<1x4x1xf32> to vector<4x1xf32>
    %257 = vector.broadcast %256 : vector<4x1xf32> to vector<4x256xf32>
    %258 = arith.addf %254, %257 : vector<4x256xf32>
    %cst_183 = arith.constant 0.000000e+00 : f32
    %259 = vector.broadcast %cst_183 : f32 to vector<4x256xf32>
    %260 = arith.maximumf %258, %259 : vector<4x256xf32>
    %c0_184 = arith.constant 0 : index
    %c0_185 = arith.constant 0 : index
    %c0_186 = arith.constant 0 : index
    %261 = vector.load %arg9[%c0_184, %c0_185, %c0_186] : memref<2x4x256xf32, #tpu.memory_space<vmem>>, vector<1x4x256xf32>
    %262 = vector.shape_cast %261 : vector<1x4x256xf32> to vector<4x256xf32>
    %263 = vector.shape_cast %260 : vector<4x256xf32> to vector<1x4x256xf32>
    tpu.vector_store %arg9[%c0_184, %c0_185, %c0_186], %263 {strides = array<i32>} : memref<2x4x256xf32, #tpu.memory_space<vmem>>, vector<1x4x256xf32>,
    %c1_187 = arith.constant 1 : index
    %c0_188 = arith.constant 0 : index
    %c0_189 = arith.constant 0 : index
    %264 = vector.load %arg1[%c1_187, %c0_188, %c0_189] : memref<2x4x256xf32, #tpu.memory_space<vmem>>, vector<1x4x256xf32>
    %265 = vector.shape_cast %264 : vector<1x4x256xf32> to vector<4x256xf32>
    %c1_190 = arith.constant 1 : index
    %c0_191 = arith.constant 0 : index
    %c0_192 = arith.constant 0 : index
    %266 = vector.load %arg2[%c1_190, %c0_191, %c0_192] : memref<2x4x256xf32, #tpu.memory_space<vmem>>, vector<1x4x256xf32>
    %267 = vector.shape_cast %266 : vector<1x4x256xf32> to vector<4x256xf32>
    %c17_i32_193 = arith.constant 17 : i32
    %268 = tpu.dynamic_rotate %265 by %c17_i32_193 dim 1 : vector<4x256xf32>, i32 -> vector<4x256xf32>
    %269 = vector.broadcast %1 : vector<1x256xf32> to vector<4x256xf32>
    %270 = arith.mulf %268, %269 : vector<4x256xf32>
    %c0_194 = arith.constant 0 : index
    %c0_195 = arith.constant 0 : index
    %271 = vector.load %arg10[%c0_194, %c0_195] : memref<36x256xf32, #tpu.memory_space<vmem>>, vector<4x256xf32>
    tpu.vector_store %arg10[%c0_194, %c0_195], %270 {strides = array<i32>} : memref<36x256xf32, #tpu.memory_space<vmem>>, vector<4x256xf32>,
    %c16_i32_196 = arith.constant 16 : i32
    %272 = tpu.dynamic_rotate %265 by %c16_i32_196 dim 1 : vector<4x256xf32>, i32 -> vector<4x256xf32>
    %273 = vector.broadcast %3 : vector<1x256xf32> to vector<4x256xf32>
    %274 = arith.mulf %272, %273 : vector<4x256xf32>
    %c4_197 = arith.constant 4 : index
    %c0_198 = arith.constant 0 : index
    %275 = vector.load %arg10[%c4_197, %c0_198] : memref<36x256xf32, #tpu.memory_space<vmem>>, vector<4x256xf32>
    tpu.vector_store %arg10[%c4_197, %c0_198], %274 {strides = array<i32>} : memref<36x256xf32, #tpu.memory_space<vmem>>, vector<4x256xf32>,
    %c15_i32_199 = arith.constant 15 : i32
    %276 = tpu.dynamic_rotate %265 by %c15_i32_199 dim 1 : vector<4x256xf32>, i32 -> vector<4x256xf32>
    %277 = vector.broadcast %5 : vector<1x256xf32> to vector<4x256xf32>
    %278 = arith.mulf %276, %277 : vector<4x256xf32>
    %c8_200 = arith.constant 8 : index
    %c0_201 = arith.constant 0 : index
    %279 = vector.load %arg10[%c8_200, %c0_201] : memref<36x256xf32, #tpu.memory_space<vmem>>, vector<4x256xf32>
    tpu.vector_store %arg10[%c8_200, %c0_201], %278 {strides = array<i32>} : memref<36x256xf32, #tpu.memory_space<vmem>>, vector<4x256xf32>,
    %c1_i32_202 = arith.constant 1 : i32
    %280 = tpu.dynamic_rotate %265 by %c1_i32_202 dim 1 : vector<4x256xf32>, i32 -> vector<4x256xf32>
    %281 = vector.broadcast %7 : vector<1x256xf32> to vector<4x256xf32>
    %282 = arith.mulf %280, %281 : vector<4x256xf32>
    %c12_203 = arith.constant 12 : index
    %c0_204 = arith.constant 0 : index
    %283 = vector.load %arg10[%c12_203, %c0_204] : memref<36x256xf32, #tpu.memory_space<vmem>>, vector<4x256xf32>
    tpu.vector_store %arg10[%c12_203, %c0_204], %282 {strides = array<i32>} : memref<36x256xf32, #tpu.memory_space<vmem>>, vector<4x256xf32>,
    %c16_205 = arith.constant 16 : index
    %c0_206 = arith.constant 0 : index
    %284 = vector.load %arg10[%c16_205, %c0_206] : memref<36x256xf32, #tpu.memory_space<vmem>>, vector<4x256xf32>
    tpu.vector_store %arg10[%c16_205, %c0_206], %265 {strides = array<i32>} : memref<36x256xf32, #tpu.memory_space<vmem>>, vector<4x256xf32>,
    %c255_i32_207 = arith.constant 255 : i32
    %285 = tpu.dynamic_rotate %265 by %c255_i32_207 dim 1 : vector<4x256xf32>, i32 -> vector<4x256xf32>
    %286 = vector.broadcast %9 : vector<1x256xf32> to vector<4x256xf32>
    %287 = arith.mulf %285, %286 : vector<4x256xf32>
    %c20_208 = arith.constant 20 : index
    %c0_209 = arith.constant 0 : index
    %288 = vector.load %arg10[%c20_208, %c0_209] : memref<36x256xf32, #tpu.memory_space<vmem>>, vector<4x256xf32>
    tpu.vector_store %arg10[%c20_208, %c0_209], %287 {strides = array<i32>} : memref<36x256xf32, #tpu.memory_space<vmem>>, vector<4x256xf32>,
    %c241_i32_210 = arith.constant 241 : i32
    %289 = tpu.dynamic_rotate %265 by %c241_i32_210 dim 1 : vector<4x256xf32>, i32 -> vector<4x256xf32>
    %290 = vector.broadcast %11 : vector<1x256xf32> to vector<4x256xf32>
    %291 = arith.mulf %289, %290 : vector<4x256xf32>
    %c24_211 = arith.constant 24 : index
    %c0_212 = arith.constant 0 : index
    %292 = vector.load %arg10[%c24_211, %c0_212] : memref<36x256xf32, #tpu.memory_space<vmem>>, vector<4x256xf32>
    tpu.vector_store %arg10[%c24_211, %c0_212], %291 {strides = array<i32>} : memref<36x256xf32, #tpu.memory_space<vmem>>, vector<4x256xf32>,
    %c240_i32_213 = arith.constant 240 : i32
    %293 = tpu.dynamic_rotate %265 by %c240_i32_213 dim 1 : vector<4x256xf32>, i32 -> vector<4x256xf32>
    %294 = vector.broadcast %13 : vector<1x256xf32> to vector<4x256xf32>
    %295 = arith.mulf %293, %294 : vector<4x256xf32>
    %c28_214 = arith.constant 28 : index
    %c0_215 = arith.constant 0 : index
    %296 = vector.load %arg10[%c28_214, %c0_215] : memref<36x256xf32, #tpu.memory_space<vmem>>, vector<4x256xf32>
    tpu.vector_store %arg10[%c28_214, %c0_215], %295 {strides = array<i32>} : memref<36x256xf32, #tpu.memory_space<vmem>>, vector<4x256xf32>,
    %c239_i32_216 = arith.constant 239 : i32
    %297 = tpu.dynamic_rotate %265 by %c239_i32_216 dim 1 : vector<4x256xf32>, i32 -> vector<4x256xf32>
    %298 = vector.broadcast %15 : vector<1x256xf32> to vector<4x256xf32>
    %299 = arith.mulf %297, %298 : vector<4x256xf32>
    %c32_217 = arith.constant 32 : index
    %c0_218 = arith.constant 0 : index
    %300 = vector.load %arg10[%c32_217, %c0_218] : memref<36x256xf32, #tpu.memory_space<vmem>>, vector<4x256xf32>
    tpu.vector_store %arg10[%c32_217, %c0_218], %299 {strides = array<i32>} : memref<36x256xf32, #tpu.memory_space<vmem>>, vector<4x256xf32>,
    %c0_219 = arith.constant 0 : index
    %c0_220 = arith.constant 0 : index
    %301 = vector.load %arg10[%c0_219, %c0_220] : memref<36x256xf32, #tpu.memory_space<vmem>>, vector<36x256xf32>
    %302 = arith.truncf %301 : vector<36x256xf32> to vector<36x256xbf16>
    %c17_i32_221 = arith.constant 17 : i32
    %303 = tpu.dynamic_rotate %267 by %c17_i32_221 dim 1 : vector<4x256xf32>, i32 -> vector<4x256xf32>
    %304 = vector.broadcast %1 : vector<1x256xf32> to vector<4x256xf32>
    %305 = arith.mulf %303, %304 : vector<4x256xf32>
    %c0_222 = arith.constant 0 : index
    %c0_223 = arith.constant 0 : index
    %306 = vector.load %arg11[%c0_222, %c0_223] : memref<36x256xf32, #tpu.memory_space<vmem>>, vector<4x256xf32>
    tpu.vector_store %arg11[%c0_222, %c0_223], %305 {strides = array<i32>} : memref<36x256xf32, #tpu.memory_space<vmem>>, vector<4x256xf32>,
    %c16_i32_224 = arith.constant 16 : i32
    %307 = tpu.dynamic_rotate %267 by %c16_i32_224 dim 1 : vector<4x256xf32>, i32 -> vector<4x256xf32>
    %308 = vector.broadcast %3 : vector<1x256xf32> to vector<4x256xf32>
    %309 = arith.mulf %307, %308 : vector<4x256xf32>
    %c4_225 = arith.constant 4 : index
    %c0_226 = arith.constant 0 : index
    %310 = vector.load %arg11[%c4_225, %c0_226] : memref<36x256xf32, #tpu.memory_space<vmem>>, vector<4x256xf32>
    tpu.vector_store %arg11[%c4_225, %c0_226], %309 {strides = array<i32>} : memref<36x256xf32, #tpu.memory_space<vmem>>, vector<4x256xf32>,
    %c15_i32_227 = arith.constant 15 : i32
    %311 = tpu.dynamic_rotate %267 by %c15_i32_227 dim 1 : vector<4x256xf32>, i32 -> vector<4x256xf32>
    %312 = vector.broadcast %5 : vector<1x256xf32> to vector<4x256xf32>
    %313 = arith.mulf %311, %312 : vector<4x256xf32>
    %c8_228 = arith.constant 8 : index
    %c0_229 = arith.constant 0 : index
    %314 = vector.load %arg11[%c8_228, %c0_229] : memref<36x256xf32, #tpu.memory_space<vmem>>, vector<4x256xf32>
    tpu.vector_store %arg11[%c8_228, %c0_229], %313 {strides = array<i32>} : memref<36x256xf32, #tpu.memory_space<vmem>>, vector<4x256xf32>,
    %c1_i32_230 = arith.constant 1 : i32
    %315 = tpu.dynamic_rotate %267 by %c1_i32_230 dim 1 : vector<4x256xf32>, i32 -> vector<4x256xf32>
    %316 = vector.broadcast %7 : vector<1x256xf32> to vector<4x256xf32>
    %317 = arith.mulf %315, %316 : vector<4x256xf32>
    %c12_231 = arith.constant 12 : index
    %c0_232 = arith.constant 0 : index
    %318 = vector.load %arg11[%c12_231, %c0_232] : memref<36x256xf32, #tpu.memory_space<vmem>>, vector<4x256xf32>
    tpu.vector_store %arg11[%c12_231, %c0_232], %317 {strides = array<i32>} : memref<36x256xf32, #tpu.memory_space<vmem>>, vector<4x256xf32>,
    %c16_233 = arith.constant 16 : index
    %c0_234 = arith.constant 0 : index
    %319 = vector.load %arg11[%c16_233, %c0_234] : memref<36x256xf32, #tpu.memory_space<vmem>>, vector<4x256xf32>
    tpu.vector_store %arg11[%c16_233, %c0_234], %267 {strides = array<i32>} : memref<36x256xf32, #tpu.memory_space<vmem>>, vector<4x256xf32>,
    %c255_i32_235 = arith.constant 255 : i32
    %320 = tpu.dynamic_rotate %267 by %c255_i32_235 dim 1 : vector<4x256xf32>, i32 -> vector<4x256xf32>
    %321 = vector.broadcast %9 : vector<1x256xf32> to vector<4x256xf32>
    %322 = arith.mulf %320, %321 : vector<4x256xf32>
    %c20_236 = arith.constant 20 : index
    %c0_237 = arith.constant 0 : index
    %323 = vector.load %arg11[%c20_236, %c0_237] : memref<36x256xf32, #tpu.memory_space<vmem>>, vector<4x256xf32>
    tpu.vector_store %arg11[%c20_236, %c0_237], %322 {strides = array<i32>} : memref<36x256xf32, #tpu.memory_space<vmem>>, vector<4x256xf32>,
    %c241_i32_238 = arith.constant 241 : i32
    %324 = tpu.dynamic_rotate %267 by %c241_i32_238 dim 1 : vector<4x256xf32>, i32 -> vector<4x256xf32>
    %325 = vector.broadcast %11 : vector<1x256xf32> to vector<4x256xf32>
    %326 = arith.mulf %324, %325 : vector<4x256xf32>
    %c24_239 = arith.constant 24 : index
    %c0_240 = arith.constant 0 : index
    %327 = vector.load %arg11[%c24_239, %c0_240] : memref<36x256xf32, #tpu.memory_space<vmem>>, vector<4x256xf32>
    tpu.vector_store %arg11[%c24_239, %c0_240], %326 {strides = array<i32>} : memref<36x256xf32, #tpu.memory_space<vmem>>, vector<4x256xf32>,
    %c240_i32_241 = arith.constant 240 : i32
    %328 = tpu.dynamic_rotate %267 by %c240_i32_241 dim 1 : vector<4x256xf32>, i32 -> vector<4x256xf32>
    %329 = vector.broadcast %13 : vector<1x256xf32> to vector<4x256xf32>
    %330 = arith.mulf %328, %329 : vector<4x256xf32>
    %c28_242 = arith.constant 28 : index
    %c0_243 = arith.constant 0 : index
    %331 = vector.load %arg11[%c28_242, %c0_243] : memref<36x256xf32, #tpu.memory_space<vmem>>, vector<4x256xf32>
    tpu.vector_store %arg11[%c28_242, %c0_243], %330 {strides = array<i32>} : memref<36x256xf32, #tpu.memory_space<vmem>>, vector<4x256xf32>,
    %c239_i32_244 = arith.constant 239 : i32
    %332 = tpu.dynamic_rotate %267 by %c239_i32_244 dim 1 : vector<4x256xf32>, i32 -> vector<4x256xf32>
    %333 = vector.broadcast %15 : vector<1x256xf32> to vector<4x256xf32>
    %334 = arith.mulf %332, %333 : vector<4x256xf32>
    %c32_245 = arith.constant 32 : index
    %c0_246 = arith.constant 0 : index
    %335 = vector.load %arg11[%c32_245, %c0_246] : memref<36x256xf32, #tpu.memory_space<vmem>>, vector<4x256xf32>
    tpu.vector_store %arg11[%c32_245, %c0_246], %334 {strides = array<i32>} : memref<36x256xf32, #tpu.memory_space<vmem>>, vector<4x256xf32>,
    %c0_247 = arith.constant 0 : index
    %c0_248 = arith.constant 0 : index
    %336 = vector.load %arg11[%c0_247, %c0_248] : memref<36x256xf32, #tpu.memory_space<vmem>>, vector<36x256xf32>
    %337 = arith.truncf %336 : vector<36x256xf32> to vector<36x256xbf16>
    %c0_249 = arith.constant 0 : index
    %c0_250 = arith.constant 0 : index
    %c0_251 = arith.constant 0 : index
    %338 = vector.load %arg4[%c0_249, %c0_250, %c0_251] : memref<3x4x36xbf16, #tpu.memory_space<vmem>>, vector<1x4x36xbf16>
    %339 = vector.shape_cast %338 : vector<1x4x36xbf16> to vector<4x36xbf16>
    %cst_252 = arith.constant dense<0.000000e+00> : vector<4x256xf32>
    %340 = tpu.matmul %339, %302, %cst_252 {dimension_numbers = #tpu.dot_dimension_numbers<[1], [0], [0], [1], [0, 0, 1, 1], [], []>} : vector<4x36xbf16>, vector<36x256xbf16>, vector<4x256xf32> -> vector<4x256xf32>
    %c0_253 = arith.constant 0 : index
    %c0_254 = arith.constant 0 : index
    %c0_255 = arith.constant 0 : index
    %341 = vector.load %arg5[%c0_253, %c0_254, %c0_255] : memref<3x4x36xbf16, #tpu.memory_space<vmem>>, vector<1x4x36xbf16>
    %342 = vector.shape_cast %341 : vector<1x4x36xbf16> to vector<4x36xbf16>
    %cst_256 = arith.constant dense<0.000000e+00> : vector<4x256xf32>
    %343 = tpu.matmul %342, %337, %cst_256 {dimension_numbers = #tpu.dot_dimension_numbers<[1], [0], [0], [1], [0, 0, 1, 1], [], []>} : vector<4x36xbf16>, vector<36x256xbf16>, vector<4x256xf32> -> vector<4x256xf32>
    %344 = arith.addf %340, %343 : vector<4x256xf32>
    %c0_257 = arith.constant 0 : index
    %c0_258 = arith.constant 0 : index
    %c0_259 = arith.constant 0 : index
    %345 = vector.load %arg7[%c0_257, %c0_258, %c0_259] : memref<6x4x1xf32, #tpu.memory_space<vmem>>, vector<1x4x1xf32>
    %346 = vector.shape_cast %345 : vector<1x4x1xf32> to vector<4x1xf32>
    %347 = vector.broadcast %346 : vector<4x1xf32> to vector<4x256xf32>
    %348 = arith.addf %344, %347 : vector<4x256xf32>
    %cst_260 = arith.constant 0.000000e+00 : f32
    %349 = vector.broadcast %cst_260 : f32 to vector<4x256xf32>
    %350 = arith.maximumf %348, %349 : vector<4x256xf32>
    %c1_261 = arith.constant 1 : index
    %c0_262 = arith.constant 0 : index
    %c0_263 = arith.constant 0 : index
    %351 = vector.load %arg4[%c1_261, %c0_262, %c0_263] : memref<3x4x36xbf16, #tpu.memory_space<vmem>>, vector<1x4x36xbf16>
    %352 = vector.shape_cast %351 : vector<1x4x36xbf16> to vector<4x36xbf16>
    %cst_264 = arith.constant dense<0.000000e+00> : vector<4x256xf32>
    %353 = tpu.matmul %352, %302, %cst_264 {dimension_numbers = #tpu.dot_dimension_numbers<[1], [0], [0], [1], [0, 0, 1, 1], [], []>} : vector<4x36xbf16>, vector<36x256xbf16>, vector<4x256xf32> -> vector<4x256xf32>
    %c1_265 = arith.constant 1 : index
    %c0_266 = arith.constant 0 : index
    %c0_267 = arith.constant 0 : index
    %354 = vector.load %arg7[%c1_265, %c0_266, %c0_267] : memref<6x4x1xf32, #tpu.memory_space<vmem>>, vector<1x4x1xf32>
    %355 = vector.shape_cast %354 : vector<1x4x1xf32> to vector<4x1xf32>
    %356 = vector.broadcast %355 : vector<4x1xf32> to vector<4x256xf32>
    %357 = arith.addf %353, %356 : vector<4x256xf32>
    %cst_268 = arith.constant 0.000000e+00 : f32
    %358 = vector.broadcast %cst_268 : f32 to vector<4x256xf32>
    %359 = arith.maximumf %357, %358 : vector<4x256xf32>
    %c2_269 = arith.constant 2 : index
    %c0_270 = arith.constant 0 : index
    %c0_271 = arith.constant 0 : index
    %360 = vector.load %arg4[%c2_269, %c0_270, %c0_271] : memref<3x4x36xbf16, #tpu.memory_space<vmem>>, vector<1x4x36xbf16>
    %361 = vector.shape_cast %360 : vector<1x4x36xbf16> to vector<4x36xbf16>
    %cst_272 = arith.constant dense<0.000000e+00> : vector<4x256xf32>
    %362 = tpu.matmul %361, %302, %cst_272 {dimension_numbers = #tpu.dot_dimension_numbers<[1], [0], [0], [1], [0, 0, 1, 1], [], []>} : vector<4x36xbf16>, vector<36x256xbf16>, vector<4x256xf32> -> vector<4x256xf32>
    %c2_273 = arith.constant 2 : index
    %c0_274 = arith.constant 0 : index
    %c0_275 = arith.constant 0 : index
    %363 = vector.load %arg7[%c2_273, %c0_274, %c0_275] : memref<6x4x1xf32, #tpu.memory_space<vmem>>, vector<1x4x1xf32>
    %364 = vector.shape_cast %363 : vector<1x4x1xf32> to vector<4x1xf32>
    %365 = vector.broadcast %364 : vector<4x1xf32> to vector<4x256xf32>
    %366 = arith.addf %362, %365 : vector<4x256xf32>
    %cst_276 = arith.constant 0.000000e+00 : f32
    %367 = vector.broadcast %cst_276 : f32 to vector<4x256xf32>
    %368 = arith.maximumf %366, %367 : vector<4x256xf32>
    %c1_277 = arith.constant 1 : index
    %c0_278 = arith.constant 0 : index
    %c0_279 = arith.constant 0 : index
    %369 = vector.load %arg5[%c1_277, %c0_278, %c0_279] : memref<3x4x36xbf16, #tpu.memory_space<vmem>>, vector<1x4x36xbf16>
    %370 = vector.shape_cast %369 : vector<1x4x36xbf16> to vector<4x36xbf16>
    %cst_280 = arith.constant dense<0.000000e+00> : vector<4x256xf32>
    %371 = tpu.matmul %370, %337, %cst_280 {dimension_numbers = #tpu.dot_dimension_numbers<[1], [0], [0], [1], [0, 0, 1, 1], [], []>} : vector<4x36xbf16>, vector<36x256xbf16>, vector<4x256xf32> -> vector<4x256xf32>
    %c3_281 = arith.constant 3 : index
    %c0_282 = arith.constant 0 : index
    %c0_283 = arith.constant 0 : index
    %372 = vector.load %arg7[%c3_281, %c0_282, %c0_283] : memref<6x4x1xf32, #tpu.memory_space<vmem>>, vector<1x4x1xf32>
    %373 = vector.shape_cast %372 : vector<1x4x1xf32> to vector<4x1xf32>
    %374 = vector.broadcast %373 : vector<4x1xf32> to vector<4x256xf32>
    %375 = arith.addf %371, %374 : vector<4x256xf32>
    %cst_284 = arith.constant 0.000000e+00 : f32
    %376 = vector.broadcast %cst_284 : f32 to vector<4x256xf32>
    %377 = arith.maximumf %375, %376 : vector<4x256xf32>
    %c2_285 = arith.constant 2 : index
    %c0_286 = arith.constant 0 : index
    %c0_287 = arith.constant 0 : index
    %378 = vector.load %arg5[%c2_285, %c0_286, %c0_287] : memref<3x4x36xbf16, #tpu.memory_space<vmem>>, vector<1x4x36xbf16>
    %379 = vector.shape_cast %378 : vector<1x4x36xbf16> to vector<4x36xbf16>
    %cst_288 = arith.constant dense<0.000000e+00> : vector<4x256xf32>
    %380 = tpu.matmul %379, %337, %cst_288 {dimension_numbers = #tpu.dot_dimension_numbers<[1], [0], [0], [1], [0, 0, 1, 1], [], []>} : vector<4x36xbf16>, vector<36x256xbf16>, vector<4x256xf32> -> vector<4x256xf32>
    %c4_289 = arith.constant 4 : index
    %c0_290 = arith.constant 0 : index
    %c0_291 = arith.constant 0 : index
    %381 = vector.load %arg7[%c4_289, %c0_290, %c0_291] : memref<6x4x1xf32, #tpu.memory_space<vmem>>, vector<1x4x1xf32>
    %382 = vector.shape_cast %381 : vector<1x4x1xf32> to vector<4x1xf32>
    %383 = vector.broadcast %382 : vector<4x1xf32> to vector<4x256xf32>
    %384 = arith.addf %380, %383 : vector<4x256xf32>
    %cst_292 = arith.constant 0.000000e+00 : f32
    %385 = vector.broadcast %cst_292 : f32 to vector<4x256xf32>
    %386 = arith.maximumf %384, %385 : vector<4x256xf32>
    %387 = arith.truncf %350 : vector<4x256xf32> to vector<4x256xbf16>
    %c0_293 = arith.constant 0 : index
    %388 = memref.load %arg8[%c0_293] : memref<2xf32, #tpu.memory_space<smem>>
    %389 = arith.truncf %359 : vector<4x256xf32> to vector<4x256xbf16>
    %390 = arith.truncf %368 : vector<4x256xf32> to vector<4x256xbf16>
    %cst_294 = arith.constant dense<0.000000e+00> : vector<256x256xf32>
    %391 = tpu.matmul %389, %387, %cst_294 {dimension_numbers = #tpu.dot_dimension_numbers<[0], [0], [1], [1], [0, 1, 1, 1], [], []>} : vector<4x256xbf16>, vector<4x256xbf16>, vector<256x256xf32> -> vector<256x256xf32>
    %cst_295 = arith.constant dense<0xFF800000> : vector<256xf32>
    %392 = vector.multi_reduction <maximumf>, %391, %cst_295 [1] : vector<256x256xf32> to vector<256xf32>
    %393 = vector.shape_cast %392 : vector<256xf32> to vector<256x1xf32>
    %394 = vector.broadcast %393 : vector<256x1xf32> to vector<256x256xf32>
    %395 = arith.subf %391, %394 : vector<256x256xf32>
    %396 = math.exp %395 : vector<256x256xf32>
    %cst_296 = arith.constant dense<0.000000e+00> : vector<256xf32>
    %397 = vector.multi_reduction <add>, %396, %cst_296 [1] : vector<256x256xf32> to vector<256xf32>
    %398 = vector.shape_cast %397 : vector<256xf32> to vector<256x1xf32>
    %399 = tpu.reciprocal %398 {approx = true} : vector<256x1xf32> -> vector<256x1xf32>
    %400 = vector.broadcast %399 : vector<256x1xf32> to vector<256x256xf32>
    %401 = arith.mulf %396, %400 : vector<256x256xf32>
    %402 = arith.truncf %401 : vector<256x256xf32> to vector<256x256xbf16>
    %cst_297 = arith.constant dense<0.000000e+00> : vector<4x256xf32>
    %403 = tpu.matmul %390, %402, %cst_297 {dimension_numbers = #tpu.dot_dimension_numbers<[1], [1], [0], [0], [0, 0, 1, 0], [], []>} : vector<4x256xbf16>, vector<256x256xbf16>, vector<4x256xf32> -> vector<4x256xf32>
    %404 = vector.broadcast %388 : f32 to vector<4x256xf32>
    %405 = arith.mulf %404, %403 : vector<4x256xf32>
    %406 = arith.addf %405, %267 : vector<4x256xf32>
    %c1_298 = arith.constant 1 : index
    %407 = memref.load %arg8[%c1_298] : memref<2xf32, #tpu.memory_space<smem>>
    %408 = arith.truncf %377 : vector<4x256xf32> to vector<4x256xbf16>
    %409 = arith.truncf %386 : vector<4x256xf32> to vector<4x256xbf16>
    %cst_299 = arith.constant dense<0.000000e+00> : vector<256x256xf32>
    %410 = tpu.matmul %408, %387, %cst_299 {dimension_numbers = #tpu.dot_dimension_numbers<[0], [0], [1], [1], [0, 1, 1, 1], [], []>} : vector<4x256xbf16>, vector<4x256xbf16>, vector<256x256xf32> -> vector<256x256xf32>
    %cst_300 = arith.constant dense<0xFF800000> : vector<256xf32>
    %411 = vector.multi_reduction <maximumf>, %410, %cst_300 [1] : vector<256x256xf32> to vector<256xf32>
    %412 = vector.shape_cast %411 : vector<256xf32> to vector<256x1xf32>
    %413 = vector.broadcast %412 : vector<256x1xf32> to vector<256x256xf32>
    %414 = arith.subf %410, %413 : vector<256x256xf32>
    %415 = math.exp %414 : vector<256x256xf32>
    %cst_301 = arith.constant dense<0.000000e+00> : vector<256xf32>
    %416 = vector.multi_reduction <add>, %415, %cst_301 [1] : vector<256x256xf32> to vector<256xf32>
    %417 = vector.shape_cast %416 : vector<256xf32> to vector<256x1xf32>
    %418 = tpu.reciprocal %417 {approx = true} : vector<256x1xf32> -> vector<256x1xf32>
    %419 = vector.broadcast %418 : vector<256x1xf32> to vector<256x256xf32>
    %420 = arith.mulf %415, %419 : vector<256x256xf32>
    %421 = arith.truncf %420 : vector<256x256xf32> to vector<256x256xbf16>
    %cst_302 = arith.constant dense<0.000000e+00> : vector<4x256xf32>
    %422 = tpu.matmul %409, %421, %cst_302 {dimension_numbers = #tpu.dot_dimension_numbers<[1], [1], [0], [0], [0, 0, 1, 0], [], []>} : vector<4x256xbf16>, vector<256x256xbf16>, vector<4x256xf32> -> vector<4x256xf32>
    %423 = vector.broadcast %407 : f32 to vector<4x256xf32>
    %424 = arith.mulf %423, %422 : vector<4x256xf32>
    %425 = arith.addf %424, %265 : vector<4x256xf32>
    %c17_i32_303 = arith.constant 17 : i32
    %426 = tpu.dynamic_rotate %406 by %c17_i32_303 dim 1 : vector<4x256xf32>, i32 -> vector<4x256xf32>
    %427 = vector.broadcast %1 : vector<1x256xf32> to vector<4x256xf32>
    %428 = arith.mulf %426, %427 : vector<4x256xf32>
    %c0_304 = arith.constant 0 : index
    %c0_305 = arith.constant 0 : index
    %429 = vector.load %arg10[%c0_304, %c0_305] : memref<36x256xf32, #tpu.memory_space<vmem>>, vector<4x256xf32>
    tpu.vector_store %arg10[%c0_304, %c0_305], %428 {strides = array<i32>} : memref<36x256xf32, #tpu.memory_space<vmem>>, vector<4x256xf32>,
    %c16_i32_306 = arith.constant 16 : i32
    %430 = tpu.dynamic_rotate %406 by %c16_i32_306 dim 1 : vector<4x256xf32>, i32 -> vector<4x256xf32>
    %431 = vector.broadcast %3 : vector<1x256xf32> to vector<4x256xf32>
    %432 = arith.mulf %430, %431 : vector<4x256xf32>
    %c4_307 = arith.constant 4 : index
    %c0_308 = arith.constant 0 : index
    %433 = vector.load %arg10[%c4_307, %c0_308] : memref<36x256xf32, #tpu.memory_space<vmem>>, vector<4x256xf32>
    tpu.vector_store %arg10[%c4_307, %c0_308], %432 {strides = array<i32>} : memref<36x256xf32, #tpu.memory_space<vmem>>, vector<4x256xf32>,
    %c15_i32_309 = arith.constant 15 : i32
    %434 = tpu.dynamic_rotate %406 by %c15_i32_309 dim 1 : vector<4x256xf32>, i32 -> vector<4x256xf32>
    %435 = vector.broadcast %5 : vector<1x256xf32> to vector<4x256xf32>
    %436 = arith.mulf %434, %435 : vector<4x256xf32>
    %c8_310 = arith.constant 8 : index
    %c0_311 = arith.constant 0 : index
    %437 = vector.load %arg10[%c8_310, %c0_311] : memref<36x256xf32, #tpu.memory_space<vmem>>, vector<4x256xf32>
    tpu.vector_store %arg10[%c8_310, %c0_311], %436 {strides = array<i32>} : memref<36x256xf32, #tpu.memory_space<vmem>>, vector<4x256xf32>,
    %c1_i32_312 = arith.constant 1 : i32
    %438 = tpu.dynamic_rotate %406 by %c1_i32_312 dim 1 : vector<4x256xf32>, i32 -> vector<4x256xf32>
    %439 = vector.broadcast %7 : vector<1x256xf32> to vector<4x256xf32>
    %440 = arith.mulf %438, %439 : vector<4x256xf32>
    %c12_313 = arith.constant 12 : index
    %c0_314 = arith.constant 0 : index
    %441 = vector.load %arg10[%c12_313, %c0_314] : memref<36x256xf32, #tpu.memory_space<vmem>>, vector<4x256xf32>
    tpu.vector_store %arg10[%c12_313, %c0_314], %440 {strides = array<i32>} : memref<36x256xf32, #tpu.memory_space<vmem>>, vector<4x256xf32>,
    %c16_315 = arith.constant 16 : index
    %c0_316 = arith.constant 0 : index
    %442 = vector.load %arg10[%c16_315, %c0_316] : memref<36x256xf32, #tpu.memory_space<vmem>>, vector<4x256xf32>
    tpu.vector_store %arg10[%c16_315, %c0_316], %406 {strides = array<i32>} : memref<36x256xf32, #tpu.memory_space<vmem>>, vector<4x256xf32>,
    %c255_i32_317 = arith.constant 255 : i32
    %443 = tpu.dynamic_rotate %406 by %c255_i32_317 dim 1 : vector<4x256xf32>, i32 -> vector<4x256xf32>
    %444 = vector.broadcast %9 : vector<1x256xf32> to vector<4x256xf32>
    %445 = arith.mulf %443, %444 : vector<4x256xf32>
    %c20_318 = arith.constant 20 : index
    %c0_319 = arith.constant 0 : index
    %446 = vector.load %arg10[%c20_318, %c0_319] : memref<36x256xf32, #tpu.memory_space<vmem>>, vector<4x256xf32>
    tpu.vector_store %arg10[%c20_318, %c0_319], %445 {strides = array<i32>} : memref<36x256xf32, #tpu.memory_space<vmem>>, vector<4x256xf32>,
    %c241_i32_320 = arith.constant 241 : i32
    %447 = tpu.dynamic_rotate %406 by %c241_i32_320 dim 1 : vector<4x256xf32>, i32 -> vector<4x256xf32>
    %448 = vector.broadcast %11 : vector<1x256xf32> to vector<4x256xf32>
    %449 = arith.mulf %447, %448 : vector<4x256xf32>
    %c24_321 = arith.constant 24 : index
    %c0_322 = arith.constant 0 : index
    %450 = vector.load %arg10[%c24_321, %c0_322] : memref<36x256xf32, #tpu.memory_space<vmem>>, vector<4x256xf32>
    tpu.vector_store %arg10[%c24_321, %c0_322], %449 {strides = array<i32>} : memref<36x256xf32, #tpu.memory_space<vmem>>, vector<4x256xf32>,
    %c240_i32_323 = arith.constant 240 : i32
    %451 = tpu.dynamic_rotate %406 by %c240_i32_323 dim 1 : vector<4x256xf32>, i32 -> vector<4x256xf32>
    %452 = vector.broadcast %13 : vector<1x256xf32> to vector<4x256xf32>
    %453 = arith.mulf %451, %452 : vector<4x256xf32>
    %c28_324 = arith.constant 28 : index
    %c0_325 = arith.constant 0 : index
    %454 = vector.load %arg10[%c28_324, %c0_325] : memref<36x256xf32, #tpu.memory_space<vmem>>, vector<4x256xf32>
    tpu.vector_store %arg10[%c28_324, %c0_325], %453 {strides = array<i32>} : memref<36x256xf32, #tpu.memory_space<vmem>>, vector<4x256xf32>,
    %c239_i32_326 = arith.constant 239 : i32
    %455 = tpu.dynamic_rotate %406 by %c239_i32_326 dim 1 : vector<4x256xf32>, i32 -> vector<4x256xf32>
    %456 = vector.broadcast %15 : vector<1x256xf32> to vector<4x256xf32>
    %457 = arith.mulf %455, %456 : vector<4x256xf32>
    %c32_327 = arith.constant 32 : index
    %c0_328 = arith.constant 0 : index
    %458 = vector.load %arg10[%c32_327, %c0_328] : memref<36x256xf32, #tpu.memory_space<vmem>>, vector<4x256xf32>
    tpu.vector_store %arg10[%c32_327, %c0_328], %457 {strides = array<i32>} : memref<36x256xf32, #tpu.memory_space<vmem>>, vector<4x256xf32>,
    %c0_329 = arith.constant 0 : index
    %c0_330 = arith.constant 0 : index
    %459 = vector.load %arg10[%c0_329, %c0_330] : memref<36x256xf32, #tpu.memory_space<vmem>>, vector<36x256xf32>
    %460 = arith.truncf %459 : vector<36x256xf32> to vector<36x256xbf16>
    %c17_i32_331 = arith.constant 17 : i32
    %461 = tpu.dynamic_rotate %425 by %c17_i32_331 dim 1 : vector<4x256xf32>, i32 -> vector<4x256xf32>
    %462 = vector.broadcast %1 : vector<1x256xf32> to vector<4x256xf32>
    %463 = arith.mulf %461, %462 : vector<4x256xf32>
    %c0_332 = arith.constant 0 : index
    %c0_333 = arith.constant 0 : index
    %464 = vector.load %arg11[%c0_332, %c0_333] : memref<36x256xf32, #tpu.memory_space<vmem>>, vector<4x256xf32>
    tpu.vector_store %arg11[%c0_332, %c0_333], %463 {strides = array<i32>} : memref<36x256xf32, #tpu.memory_space<vmem>>, vector<4x256xf32>,
    %c16_i32_334 = arith.constant 16 : i32
    %465 = tpu.dynamic_rotate %425 by %c16_i32_334 dim 1 : vector<4x256xf32>, i32 -> vector<4x256xf32>
    %466 = vector.broadcast %3 : vector<1x256xf32> to vector<4x256xf32>
    %467 = arith.mulf %465, %466 : vector<4x256xf32>
    %c4_335 = arith.constant 4 : index
    %c0_336 = arith.constant 0 : index
    %468 = vector.load %arg11[%c4_335, %c0_336] : memref<36x256xf32, #tpu.memory_space<vmem>>, vector<4x256xf32>
    tpu.vector_store %arg11[%c4_335, %c0_336], %467 {strides = array<i32>} : memref<36x256xf32, #tpu.memory_space<vmem>>, vector<4x256xf32>,
    %c15_i32_337 = arith.constant 15 : i32
    %469 = tpu.dynamic_rotate %425 by %c15_i32_337 dim 1 : vector<4x256xf32>, i32 -> vector<4x256xf32>
    %470 = vector.broadcast %5 : vector<1x256xf32> to vector<4x256xf32>
    %471 = arith.mulf %469, %470 : vector<4x256xf32>
    %c8_338 = arith.constant 8 : index
    %c0_339 = arith.constant 0 : index
    %472 = vector.load %arg11[%c8_338, %c0_339] : memref<36x256xf32, #tpu.memory_space<vmem>>, vector<4x256xf32>
    tpu.vector_store %arg11[%c8_338, %c0_339], %471 {strides = array<i32>} : memref<36x256xf32, #tpu.memory_space<vmem>>, vector<4x256xf32>,
    %c1_i32_340 = arith.constant 1 : i32
    %473 = tpu.dynamic_rotate %425 by %c1_i32_340 dim 1 : vector<4x256xf32>, i32 -> vector<4x256xf32>
    %474 = vector.broadcast %7 : vector<1x256xf32> to vector<4x256xf32>
    %475 = arith.mulf %473, %474 : vector<4x256xf32>
    %c12_341 = arith.constant 12 : index
    %c0_342 = arith.constant 0 : index
    %476 = vector.load %arg11[%c12_341, %c0_342] : memref<36x256xf32, #tpu.memory_space<vmem>>, vector<4x256xf32>
    tpu.vector_store %arg11[%c12_341, %c0_342], %475 {strides = array<i32>} : memref<36x256xf32, #tpu.memory_space<vmem>>, vector<4x256xf32>,
    %c16_343 = arith.constant 16 : index
    %c0_344 = arith.constant 0 : index
    %477 = vector.load %arg11[%c16_343, %c0_344] : memref<36x256xf32, #tpu.memory_space<vmem>>, vector<4x256xf32>
    tpu.vector_store %arg11[%c16_343, %c0_344], %425 {strides = array<i32>} : memref<36x256xf32, #tpu.memory_space<vmem>>, vector<4x256xf32>,
    %c255_i32_345 = arith.constant 255 : i32
    %478 = tpu.dynamic_rotate %425 by %c255_i32_345 dim 1 : vector<4x256xf32>, i32 -> vector<4x256xf32>
    %479 = vector.broadcast %9 : vector<1x256xf32> to vector<4x256xf32>
    %480 = arith.mulf %478, %479 : vector<4x256xf32>
    %c20_346 = arith.constant 20 : index
    %c0_347 = arith.constant 0 : index
    %481 = vector.load %arg11[%c20_346, %c0_347] : memref<36x256xf32, #tpu.memory_space<vmem>>, vector<4x256xf32>
    tpu.vector_store %arg11[%c20_346, %c0_347], %480 {strides = array<i32>} : memref<36x256xf32, #tpu.memory_space<vmem>>, vector<4x256xf32>,
    %c241_i32_348 = arith.constant 241 : i32
    %482 = tpu.dynamic_rotate %425 by %c241_i32_348 dim 1 : vector<4x256xf32>, i32 -> vector<4x256xf32>
    %483 = vector.broadcast %11 : vector<1x256xf32> to vector<4x256xf32>
    %484 = arith.mulf %482, %483 : vector<4x256xf32>
    %c24_349 = arith.constant 24 : index
    %c0_350 = arith.constant 0 : index
    %485 = vector.load %arg11[%c24_349, %c0_350] : memref<36x256xf32, #tpu.memory_space<vmem>>, vector<4x256xf32>
    tpu.vector_store %arg11[%c24_349, %c0_350], %484 {strides = array<i32>} : memref<36x256xf32, #tpu.memory_space<vmem>>, vector<4x256xf32>,
    %c240_i32_351 = arith.constant 240 : i32
    %486 = tpu.dynamic_rotate %425 by %c240_i32_351 dim 1 : vector<4x256xf32>, i32 -> vector<4x256xf32>
    %487 = vector.broadcast %13 : vector<1x256xf32> to vector<4x256xf32>
    %488 = arith.mulf %486, %487 : vector<4x256xf32>
    %c28_352 = arith.constant 28 : index
    %c0_353 = arith.constant 0 : index
    %489 = vector.load %arg11[%c28_352, %c0_353] : memref<36x256xf32, #tpu.memory_space<vmem>>, vector<4x256xf32>
    tpu.vector_store %arg11[%c28_352, %c0_353], %488 {strides = array<i32>} : memref<36x256xf32, #tpu.memory_space<vmem>>, vector<4x256xf32>,
    %c239_i32_354 = arith.constant 239 : i32
    %490 = tpu.dynamic_rotate %425 by %c239_i32_354 dim 1 : vector<4x256xf32>, i32 -> vector<4x256xf32>
    %491 = vector.broadcast %15 : vector<1x256xf32> to vector<4x256xf32>
    %492 = arith.mulf %490, %491 : vector<4x256xf32>
    %c32_355 = arith.constant 32 : index
    %c0_356 = arith.constant 0 : index
    %493 = vector.load %arg11[%c32_355, %c0_356] : memref<36x256xf32, #tpu.memory_space<vmem>>, vector<4x256xf32>
    tpu.vector_store %arg11[%c32_355, %c0_356], %492 {strides = array<i32>} : memref<36x256xf32, #tpu.memory_space<vmem>>, vector<4x256xf32>,
    %c0_357 = arith.constant 0 : index
    %c0_358 = arith.constant 0 : index
    %494 = vector.load %arg11[%c0_357, %c0_358] : memref<36x256xf32, #tpu.memory_space<vmem>>, vector<36x256xf32>
    %495 = arith.truncf %494 : vector<36x256xf32> to vector<36x256xbf16>
    %c0_359 = arith.constant 0 : index
    %c0_360 = arith.constant 0 : index
    %c0_361 = arith.constant 0 : index
    %496 = vector.load %arg6[%c0_359, %c0_360, %c0_361] : memref<2x4x36xbf16, #tpu.memory_space<vmem>>, vector<1x4x36xbf16>
    %497 = vector.shape_cast %496 : vector<1x4x36xbf16> to vector<4x36xbf16>
    %cst_362 = arith.constant dense<0.000000e+00> : vector<4x256xf32>
    %498 = tpu.matmul %497, %460, %cst_362 {dimension_numbers = #tpu.dot_dimension_numbers<[1], [0], [0], [1], [0, 0, 1, 1], [], []>} : vector<4x36xbf16>, vector<36x256xbf16>, vector<4x256xf32> -> vector<4x256xf32>
    %c1_363 = arith.constant 1 : index
    %c0_364 = arith.constant 0 : index
    %c0_365 = arith.constant 0 : index
    %499 = vector.load %arg6[%c1_363, %c0_364, %c0_365] : memref<2x4x36xbf16, #tpu.memory_space<vmem>>, vector<1x4x36xbf16>
    %500 = vector.shape_cast %499 : vector<1x4x36xbf16> to vector<4x36xbf16>
    %cst_366 = arith.constant dense<0.000000e+00> : vector<4x256xf32>
    %501 = tpu.matmul %500, %495, %cst_366 {dimension_numbers = #tpu.dot_dimension_numbers<[1], [0], [0], [1], [0, 0, 1, 1], [], []>} : vector<4x36xbf16>, vector<36x256xbf16>, vector<4x256xf32> -> vector<4x256xf32>
    %502 = arith.addf %498, %501 : vector<4x256xf32>
    %c5_367 = arith.constant 5 : index
    %c0_368 = arith.constant 0 : index
    %c0_369 = arith.constant 0 : index
    %503 = vector.load %arg7[%c5_367, %c0_368, %c0_369] : memref<6x4x1xf32, #tpu.memory_space<vmem>>, vector<1x4x1xf32>
    %504 = vector.shape_cast %503 : vector<1x4x1xf32> to vector<4x1xf32>
    %505 = vector.broadcast %504 : vector<4x1xf32> to vector<4x256xf32>
    %506 = arith.addf %502, %505 : vector<4x256xf32>
    %cst_370 = arith.constant 0.000000e+00 : f32
    %507 = vector.broadcast %cst_370 : f32 to vector<4x256xf32>
    %508 = arith.maximumf %506, %507 : vector<4x256xf32>
    %c1_371 = arith.constant 1 : index
    %c0_372 = arith.constant 0 : index
    %c0_373 = arith.constant 0 : index
    %509 = vector.load %arg9[%c1_371, %c0_372, %c0_373] : memref<2x4x256xf32, #tpu.memory_space<vmem>>, vector<1x4x256xf32>
    %510 = vector.shape_cast %509 : vector<1x4x256xf32> to vector<4x256xf32>
    %511 = vector.shape_cast %508 : vector<4x256xf32> to vector<1x4x256xf32>
    tpu.vector_store %arg9[%c1_371, %c0_372, %c0_373], %511 {strides = array<i32>} : memref<2x4x256xf32, #tpu.memory_space<vmem>>, vector<1x4x256xf32>,
    return
  }
  func.func @transform_0(%arg0: i32) -> (i32, i32, i32) {
    %c0_i32 = arith.constant 0 : i32
    %c0_i32_0 = arith.constant 0 : i32
    %c0_i32_1 = arith.constant 0 : i32
    return %arg0, %c0_i32, %c0_i32_0 : i32, i32, i32
  }
  func.func @transform_1(%arg0: i32) -> (i32, i32, i32) {
    %c0_i32 = arith.constant 0 : i32
    %c0_i32_0 = arith.constant 0 : i32
    %c0_i32_1 = arith.constant 0 : i32
    return %arg0, %c0_i32, %c0_i32_0 : i32, i32, i32
  }
  func.func @transform_2(%arg0: i32) -> (i32, i32, i32) {
    %c0_i32 = arith.constant 0 : i32
    %c0_i32_0 = arith.constant 0 : i32
    %c0_i32_1 = arith.constant 0 : i32
    %c0_i32_2 = arith.constant 0 : i32
    return %c0_i32, %c0_i32_0, %c0_i32_1 : i32, i32, i32
  }
  func.func @transform_3(%arg0: i32) -> (i32, i32, i32) {
    %c0_i32 = arith.constant 0 : i32
    %c0_i32_0 = arith.constant 0 : i32
    %c0_i32_1 = arith.constant 0 : i32
    %c0_i32_2 = arith.constant 0 : i32
    return %c0_i32, %c0_i32_0, %c0_i32_1 : i32, i32, i32
  }
  func.func @transform_4(%arg0: i32) -> (i32, i32, i32) {
    %c0_i32 = arith.constant 0 : i32
    %c0_i32_0 = arith.constant 0 : i32
    %c0_i32_1 = arith.constant 0 : i32
    %c0_i32_2 = arith.constant 0 : i32
    return %c0_i32, %c0_i32_0, %c0_i32_1 : i32, i32, i32
  }
  func.func @transform_5(%arg0: i32) -> (i32, i32, i32) {
    %c0_i32 = arith.constant 0 : i32
    %c0_i32_0 = arith.constant 0 : i32
    %c0_i32_1 = arith.constant 0 : i32
    %c0_i32_2 = arith.constant 0 : i32
    return %c0_i32, %c0_i32_0, %c0_i32_1 : i32, i32, i32
  }
  func.func @transform_6(%arg0: i32) -> (i32, i32, i32) {
    %c0_i32 = arith.constant 0 : i32
    %c0_i32_0 = arith.constant 0 : i32
    %c0_i32_1 = arith.constant 0 : i32
    %c0_i32_2 = arith.constant 0 : i32
    return %c0_i32, %c0_i32_0, %c0_i32_1 : i32, i32, i32
  }
  func.func @transform_7(%arg0: i32) -> i32 {
    %c0_i32 = arith.constant 0 : i32
    %c0_i32_0 = arith.constant 0 : i32
    return %c0_i32 : i32
  }
  func.func @transform_8(%arg0: i32) -> (i32, i32, i32) {
    %c0_i32 = arith.constant 0 : i32
    %c0_i32_0 = arith.constant 0 : i32
    %c0_i32_1 = arith.constant 0 : i32
    return %arg0, %c0_i32, %c0_i32_0 : i32, i32, i32
  }
}

</mosaic_0001>

<llo_original>
// kernel: gefm_forward.1
$region0: #{gefm_forward.1}
  #allocation0 [shape = 'u32[]', space=smem, size = 0x4, offset = 0x4, fixed_abs, tag = 'smem constant byte address 0x4 - core index']
  #allocation1 [shape = 'u32[144,128]{1,0:T(1,128)}', space=vmem, size = 0x12000, scoped, tag = 'internal scratch']
  #allocation2 [shape = 'f32[36,256]{1,0:T(8,128)}', space=vmem, size = 0xa000, scoped, tag = 'scratch operand']
  #allocation3 [shape = 'f32[36,256]{1,0:T(8,128)}', space=vmem, size = 0xa000, scoped, tag = 'scratch operand']
  %s0 = inlined_call_operand.vmem [shape: f32[2,4,256], index: 0, kind: input, shape index: {}]
  %s1 = inlined_call_operand.vmem [shape: f32[2,4,256], index: 1, kind: input, shape index: {}]
  %s2 = inlined_call_operand.vmem [shape: f32[9,1,256], index: 2, kind: input, shape index: {}]
  %s3 = inlined_call_operand.vmem [shape: bf16[3,4,36], index: 3, kind: input, shape index: {}]
  %s4 = inlined_call_operand.vmem [shape: bf16[3,4,36], index: 4, kind: input, shape index: {}]
  %s5 = inlined_call_operand.vmem [shape: bf16[2,4,36], index: 5, kind: input, shape index: {}]
  %s6 = inlined_call_operand.vmem [shape: f32[6,4,1], index: 6, kind: input, shape index: {}]
  %s7 = inlined_call_operand.vmem [shape: f32[2], index: 7, kind: input, shape index: {}]
  %s8 = inlined_call_operand.vmem [shape: f32[2,4,256], index: 8, kind: output, shape index: {}]
  %s9 = sld [smem:[#allocation0]]
  $region46: #{gefm_forward.1} parent=0
    _
  %s11 = ssub.s32 1, %s9
  %s12 = scalar_select 0, %s11, %s9
  $region1: #{gefm_forward.1} parent=0
    #allocation4 [shape = 'u8[512]{0}', space=smem, size = 0x200, scoped, tag = 'input window, operand 7, single buffered']
    #allocation5 [shape = 's32[1]{0}', space=sflag, size = 0x4, scoped, tag = 'scoped memory for gefm_forward.1']
    %13 = vsyncpa [#allocation5], 0
    // Predicated region
    $region2: #{gefm_forward.1} parent=1 // pred_check
      _
    $region3: #{gefm_forward.1} parent=1 // pred_check_branch
      %15 = sbr.rel (0) target = $region5
    $region4: #{gefm_forward.1} parent=1 // pred_region
      _
    $region5: #{gefm_forward.1} parent=1 // pred_fallthru
      _
    // Predicated region
    $region6: #{gefm_forward.1} parent=1 // pred_check
      _
    $region7: #{gefm_forward.1} parent=1 // pred_check_branch
      %17 = sbr.rel (0) target = $region9
    $region8: #{gefm_forward.1} parent=1 // pred_region
      _
    $region9: #{gefm_forward.1} parent=1 // pred_fallthru
      _
    // Predicated region
    $region10: #{gefm_forward.1} parent=1 // pred_check
      _
    $region11: #{gefm_forward.1} parent=1 // pred_check_branch
      %19 = sbr.rel (0) target = $region13
    $region12: #{gefm_forward.1} parent=1 // pred_region
      _
    $region13: #{gefm_forward.1} parent=1 // pred_fallthru
      _
    // Predicated region
    $region14: #{gefm_forward.1} parent=1 // pred_check
      _
    $region15: #{gefm_forward.1} parent=1 // pred_check_branch
      %21 = sbr.rel (0) target = $region17
    $region16: #{gefm_forward.1} parent=1 // pred_region
      _
    $region17: #{gefm_forward.1} parent=1 // pred_fallthru
      _
    // Predicated region
    $region18: #{gefm_forward.1} parent=1 // pred_check
      _
    $region19: #{gefm_forward.1} parent=1 // pred_check_branch
      %23 = sbr.rel (0) target = $region21
    $region20: #{gefm_forward.1} parent=1 // pred_region
      _
    $region21: #{gefm_forward.1} parent=1 // pred_fallthru
      _
    // Predicated region
    $region22: #{gefm_forward.1} parent=1 // pred_check
      _
    $region23: #{gefm_forward.1} parent=1 // pred_check_branch
      %25 = sbr.rel (0) target = $region25
    $region24: #{gefm_forward.1} parent=1 // pred_region
      _
    $region25: #{gefm_forward.1} parent=1 // pred_fallthru
      _
    // Predicated region
    $region26: #{gefm_forward.1} parent=1 // pred_check
      _
    $region27: #{gefm_forward.1} parent=1 // pred_check_branch
      %27 = sbr.rel (0) target = $region29
    $region28: #{gefm_forward.1} parent=1 // pred_region
      _
    $region29: #{gefm_forward.1} parent=1 // pred_fallthru
      _
    // Predicated region
    $region30: #{gefm_forward.1} parent=1 // pred_check
      _
    $region31: #{gefm_forward.1} parent=1 // pred_check_branch
      %29 = sbr.rel (0) target = $region33
    $region32: #{gefm_forward.1} parent=1 // pred_region
      %s31 = ssub.s32 16, 16
      %32 = vsyncadd [#allocation5], %s31
      %s34 = sshll.u32 %s7, 4
      %s35 = int_to_ptr.vmem [resolvable:$true] %s34
      %37 = dma.vmem_to_smem %s35, 16, [#allocation4], [#allocation5]
    $region33: #{gefm_forward.1} parent=1 // pred_fallthru
      _
    // Predicated region
    $region34: #{gefm_forward.1} parent=1 // pred_check
      _
    $region35: #{gefm_forward.1} parent=1 // pred_check_branch
      %39 = sbr.rel (0) target = $region37
    $region36: #{gefm_forward.1} parent=1 // pred_region
      %40 = dma.done [#allocation5], 16
    $region37: #{gefm_forward.1} parent=1 // pred_fallthru
      _
    %41 = sfence
    %v43 = vld [vmem:[%s2] sm:$0x3]
    %s44 = scalar_lea.vmem %s2, 2
    %v45 = vld [vmem:[%s44] sm:$0x3]
    %s46 = scalar_lea.vmem %s2, 4
    %v47 = vld [vmem:[%s46] sm:$0x3]
    %s48 = scalar_lea.vmem %s2, 6
    %v49 = vld [vmem:[%s48] sm:$0x3]
    %s50 = scalar_lea.vmem %s2, 10
    %v51 = vld [vmem:[%s50] sm:$0x3]
    %s52 = scalar_lea.vmem %s2, 12
    %v53 = vld [vmem:[%s52] sm:$0x3]
    %s54 = scalar_lea.vmem %s2, 14
    %v55 = vld [vmem:[%s54] sm:$0x3]
    %s56 = scalar_lea.vmem %s2, 16
    %v57 = vld [vmem:[%s56] sm:$0x3]
    %v58 = vld [vmem:[%s0] sm:$0xff]
    %v59 = vld [vmem:[%s1] sm:$0xff]
    %v61 = vcombine.high %v58, %v58
    %63 = vrot.lane.b32.xlu0 %v58, 17
    %v64 = vpop.permute.xlu0 %63
    %65 = vrot.lane.b32.xlu0 %v61, 17
    %v66 = vpop.permute.xlu0 %65
    %v67 = vlaneseq
    %v68 = vand.u32 %v67, 127
    %vm69 = vcmp.lt.s32.totalorder %v68, 17
    %v70 = vsel %vm69, %v64, %v66
    %v71 = vsel %vm69, %v66, %v64
    %v73 = vlaneseq
    %v74 = vshrl.u32 %v73, 7
    %v75 = vsub.s32 0, %v74
    %v76 = vrot.slane %v43, %v75
    %v77 = vlaneseq
    %v78 = vshrl.u32 %v77, 7
    %v79 = vsub.s32 1, %v78
    %v80 = vrot.slane %v43, %v79
    %v83 = vmul.f32 %v71, %v76
    %v84 = vmul.f32 %v70, %v80
    %85 = vst [vmem:[#allocation2] sm:$0xf] %v83
    %86 = vst [vmem:[#allocation2 + $0x8] sm:$0xf] %v84
    %87 = vrot.lane.b32.xlu0 %v58, 16
    %v88 = vpop.permute.xlu0 %87
    %89 = vrot.lane.b32.xlu0 %v61, 16
    %v90 = vpop.permute.xlu0 %89
    %vm91 = vcmp.lt.s32.totalorder %v68, 16
    %v92 = vsel %vm91, %v88, %v90
    %v93 = vsel %vm91, %v90, %v88
    %v95 = vlaneseq
    %v96 = vshrl.u32 %v95, 7
    %v97 = vsub.s32 0, %v96
    %v98 = vrot.slane %v45, %v97
    %v99 = vlaneseq
    %v100 = vshrl.u32 %v99, 7
    %v101 = vsub.s32 1, %v100
    %v102 = vrot.slane %v45, %v101
    %v105 = vmul.f32 %v93, %v98
    %v106 = vmul.f32 %v92, %v102
    %v109 = vrot.slane %v105, 4
    %v110 = vrot.slane %v106, 4
    %113 = vst [vmem:[#allocation2] sm:$0xf0] %v109
    %114 = vst [vmem:[#allocation2 + $0x8] sm:$0xf0] %v110
    %115 = vrot.lane.b32.xlu0 %v58, 15
    %v116 = vpop.permute.xlu0 %115
    %117 = vrot.lane.b32.xlu0 %v61, 15
    %v118 = vpop.permute.xlu0 %117
    %vm119 = vcmp.lt.s32.totalorder %v68, 15
    %v120 = vsel %vm119, %v116, %v118
    %v121 = vsel %vm119, %v118, %v116
    %v123 = vlaneseq
    %v124 = vshrl.u32 %v123, 7
    %v125 = vsub.s32 0, %v124
    %v126 = vrot.slane %v47, %v125
    %v127 = vlaneseq
    %v128 = vshrl.u32 %v127, 7
    %v129 = vsub.s32 1, %v128
    %v130 = vrot.slane %v47, %v129
    %v133 = vmul.f32 %v121, %v126
    %v134 = vmul.f32 %v120, %v130
    %135 = vst [vmem:[#allocation2 + $0x10] sm:$0xf] %v133
    %136 = vst [vmem:[#allocation2 + $0x18] sm:$0xf] %v134
    %137 = vrot.lane.b32.xlu0 %v58, 1
    %v138 = vpop.permute.xlu0 %137
    %139 = vrot.lane.b32.xlu0 %v61, 1
    %v140 = vpop.permute.xlu0 %139
    %vm141 = vcmp.lt.s32.totalorder %v68, 1
    %v142 = vsel %vm141, %v138, %v140
    %v143 = vsel %vm141, %v140, %v138
    %v145 = vlaneseq
    %v146 = vshrl.u32 %v145, 7
    %v147 = vsub.s32 0, %v146
    %v148 = vrot.slane %v49, %v147
    %v149 = vlaneseq
    %v150 = vshrl.u32 %v149, 7
    %v151 = vsub.s32 1, %v150
    %v152 = vrot.slane %v49, %v151
    %v155 = vmul.f32 %v143, %v148
    %v156 = vmul.f32 %v142, %v152
    %v159 = vrot.slane %v155, 4
    %v160 = vrot.slane %v156, 4
    %163 = vst [vmem:[#allocation2 + $0x10] sm:$0xf0] %v159
    %164 = vst [vmem:[#allocation2 + $0x18] sm:$0xf0] %v160
    %165 = vst [vmem:[#allocation2 + $0x20] sm:$0xf] %v58
    %166 = vst [vmem:[#allocation2 + $0x28] sm:$0xf] %v61
    %167 = vrot.lane.b32.xlu0 %v58, 127
    %v168 = vpop.permute.xlu0 %167
    %169 = vrot.lane.b32.xlu0 %v61, 127
    %v170 = vpop.permute.xlu0 %169
    %vm171 = vcmp.lt.s32.totalorder %v68, 127
    %v172 = vsel %vm171, %v168, %v170
    %v173 = vsel %vm171, %v170, %v168
    %v175 = vlaneseq
    %v176 = vshrl.u32 %v175, 7
    %v177 = vsub.s32 0, %v176
    %v178 = vrot.slane %v51, %v177
    %v179 = vlaneseq
    %v180 = vshrl.u32 %v179, 7
    %v181 = vsub.s32 1, %v180
    %v182 = vrot.slane %v51, %v181
    %v185 = vmul.f32 %v172, %v178
    %v186 = vmul.f32 %v173, %v182
    %v189 = vrot.slane %v185, 4
    %v190 = vrot.slane %v186, 4
    %193 = vst [vmem:[#allocation2 + $0x20] sm:$0xf0] %v189
    %194 = vst [vmem:[#allocation2 + $0x28] sm:$0xf0] %v190
    %195 = vrot.lane.b32.xlu0 %v58, 113
    %v196 = vpop.permute.xlu0 %195
    %197 = vrot.lane.b32.xlu0 %v61, 113
    %v198 = vpop.permute.xlu0 %197
    %vm199 = vcmp.lt.s32.totalorder %v68, 113
    %v200 = vsel %vm199, %v196, %v198
    %v201 = vsel %vm199, %v198, %v196
    %v203 = vlaneseq
    %v204 = vshrl.u32 %v203, 7
    %v205 = vsub.s32 0, %v204
    %v206 = vrot.slane %v53, %v205
    %v207 = vlaneseq
    %v208 = vshrl.u32 %v207, 7
    %v209 = vsub.s32 1, %v208
    %v210 = vrot.slane %v53, %v209
    %v213 = vmul.f32 %v200, %v206
    %v214 = vmul.f32 %v201, %v210
    %215 = vst [vmem:[#allocation2 + $0x30] sm:$0xf] %v213
    %216 = vst [vmem:[#allocation2 + $0x38] sm:$0xf] %v214
    %217 = vrot.lane.b32.xlu0 %v58, 112
    %v218 = vpop.permute.xlu0 %217
    %219 = vrot.lane.b32.xlu0 %v61, 112
    %v220 = vpop.permute.xlu0 %219
    %vm221 = vcmp.lt.s32.totalorder %v68, 112
    %v222 = vsel %vm221, %v218, %v220
    %v223 = vsel %vm221, %v220, %v218
    %v225 = vlaneseq
    %v226 = vshrl.u32 %v225, 7
    %v227 = vsub.s32 0, %v226
    %v228 = vrot.slane %v55, %v227
    %v229 = vlaneseq
    %v230 = vshrl.u32 %v229, 7
    %v231 = vsub.s32 1, %v230
    %v232 = vrot.slane %v55, %v231
    %v235 = vmul.f32 %v222, %v228
    %v236 = vmul.f32 %v223, %v232
    %v239 = vrot.slane %v235, 4
    %v240 = vrot.slane %v236, 4
    %243 = vst [vmem:[#allocation2 + $0x30] sm:$0xf0] %v239
    %244 = vst [vmem:[#allocation2 + $0x38] sm:$0xf0] %v240
    %245 = vrot.lane.b32.xlu0 %v58, 111
    %v246 = vpop.permute.xlu0 %245
    %247 = vrot.lane.b32.xlu0 %v61, 111
    %v248 = vpop.permute.xlu0 %247
    %vm249 = vcmp.lt.s32.totalorder %v68, 111
    %v250 = vsel %vm249, %v246, %v248
    %v251 = vsel %vm249, %v248, %v246
    %v253 = vlaneseq
    %v254 = vshrl.u32 %v253, 7
    %v255 = vsub.s32 0, %v254
    %v256 = vrot.slane %v57, %v255
    %v257 = vlaneseq
    %v258 = vshrl.u32 %v257, 7
    %v259 = vsub.s32 1, %v258
    %v260 = vrot.slane %v57, %v259
    %v263 = vmul.f32 %v250, %v256
    %v264 = vmul.f32 %v251, %v260
    %265 = vst [vmem:[#allocation2 + $0x40] sm:$0xf] %v263
    %266 = vst [vmem:[#allocation2 + $0x48] sm:$0xf] %v264
    %v267 = vld [vmem:[#allocation2] sm:$0xff]
    %v268 = vld [vmem:[#allocation2 + $0x8] sm:$0xff]
    %v269 = vld [vmem:[#allocation2 + $0x10] sm:$0xff]
    %v270 = vld [vmem:[#allocation2 + $0x18] sm:$0xff]
    %v271 = vld [vmem:[#allocation2 + $0x20] sm:$0xff]
    %v272 = vld [vmem:[#allocation2 + $0x28] sm:$0xff]
    %v273 = vld [vmem:[#allocation2 + $0x30] sm:$0xff]
    %v274 = vld [vmem:[#allocation2 + $0x38] sm:$0xff]
    %v275 = vld [vmem:[#allocation2 + $0x40] sm:$0xf]
    %v276 = vld [vmem:[#allocation2 + $0x48] sm:$0xf]
    %v277 = vpack.c.bf16 %v269, %v267
    %v278 = vpack.c.bf16 %v270, %v268
    %v279 = vpack.c.bf16 %v273, %v271
    %v280 = vpack.c.bf16 %v274, %v272
    %v281 = vpack.c.bf16 %v275, %v275
    %v282 = vpack.c.bf16 %v276, %v276
    %v284 = vcombine.high %v59, %v59
    %286 = vrot.lane.b32.xlu0 %v59, 17
    %v287 = vpop.permute.xlu0 %286
    %288 = vrot.lane.b32.xlu0 %v284, 17
    %v289 = vpop.permute.xlu0 %288
    %v290 = vsel %vm69, %v287, %v289
    %v291 = vsel %vm69, %v289, %v287
    %v292 = vmul.f32 %v291, %v76
    %v293 = vmul.f32 %v290, %v80
    %294 = vst [vmem:[#allocation3] sm:$0xf] %v292
    %295 = vst [vmem:[#allocation3 + $0x8] sm:$0xf] %v293
    %296 = vrot.lane.b32.xlu0 %v59, 16
    %v297 = vpop.permute.xlu0 %296
    %298 = vrot.lane.b32.xlu0 %v284, 16
    %v299 = vpop.permute.xlu0 %298
    %v300 = vsel %vm91, %v297, %v299
    %v301 = vsel %vm91, %v299, %v297
    %v302 = vmul.f32 %v301, %v98
    %v303 = vmul.f32 %v300, %v102
    %v306 = vrot.slane %v302, 4
    %v307 = vrot.slane %v303, 4
    %310 = vst [vmem:[#allocation3] sm:$0xf0] %v306
    %311 = vst [vmem:[#allocation3 + $0x8] sm:$0xf0] %v307
    %312 = vrot.lane.b32.xlu0 %v59, 15
    %v313 = vpop.permute.xlu0 %312
    %314 = vrot.lane.b32.xlu0 %v284, 15
    %v315 = vpop.permute.xlu0 %314
    %v316 = vsel %vm119, %v313, %v315
    %v317 = vsel %vm119, %v315, %v313
    %v318 = vmul.f32 %v317, %v126
    %v319 = vmul.f32 %v316, %v130
    %320 = vst [vmem:[#allocation3 + $0x10] sm:$0xf] %v318
    %321 = vst [vmem:[#allocation3 + $0x18] sm:$0xf] %v319
    %322 = vrot.lane.b32.xlu0 %v59, 1
    %v323 = vpop.permute.xlu0 %322
    %324 = vrot.lane.b32.xlu0 %v284, 1
    %v325 = vpop.permute.xlu0 %324
    %v326 = vsel %vm141, %v323, %v325
    %v327 = vsel %vm141, %v325, %v323
    %v328 = vmul.f32 %v327, %v148
    %v329 = vmul.f32 %v326, %v152
    %v332 = vrot.slane %v328, 4
    %v333 = vrot.slane %v329, 4
    %336 = vst [vmem:[#allocation3 + $0x10] sm:$0xf0] %v332
    %337 = vst [vmem:[#allocation3 + $0x18] sm:$0xf0] %v333
    %338 = vst [vmem:[#allocation3 + $0x20] sm:$0xf] %v59
    %339 = vst [vmem:[#allocation3 + $0x28] sm:$0xf] %v284
    %340 = vrot.lane.b32.xlu0 %v59, 127
    %v341 = vpop.permute.xlu0 %340
    %342 = vrot.lane.b32.xlu0 %v284, 127
    %v343 = vpop.permute.xlu0 %342
    %v344 = vsel %vm171, %v341, %v343
    %v345 = vsel %vm171, %v343, %v341
    %v346 = vmul.f32 %v344, %v178
    %v347 = vmul.f32 %v345, %v182
    %v350 = vrot.slane %v346, 4
    %v351 = vrot.slane %v347, 4
    %354 = vst [vmem:[#allocation3 + $0x20] sm:$0xf0] %v350
    %355 = vst [vmem:[#allocation3 + $0x28] sm:$0xf0] %v351
    %356 = vrot.lane.b32.xlu0 %v59, 113
    %v357 = vpop.permute.xlu0 %356
    %358 = vrot.lane.b32.xlu0 %v284, 113
    %v359 = vpop.permute.xlu0 %358
    %v360 = vsel %vm199, %v357, %v359
    %v361 = vsel %vm199, %v359, %v357
    %v362 = vmul.f32 %v360, %v206
    %v363 = vmul.f32 %v361, %v210
    %364 = vst [vmem:[#allocation3 + $0x30] sm:$0xf] %v362
    %365 = vst [vmem:[#allocation3 + $0x38] sm:$0xf] %v363
    %366 = vrot.lane.b32.xlu0 %v59, 112
    %v367 = vpop.permute.xlu0 %366
    %368 = vrot.lane.b32.xlu0 %v284, 112
    %v369 = vpop.permute.xlu0 %368
    %v370 = vsel %vm221, %v367, %v369
    %v371 = vsel %vm221, %v369, %v367
    %v372 = vmul.f32 %v370, %v228
    %v373 = vmul.f32 %v371, %v232
    %v376 = vrot.slane %v372, 4
    %v377 = vrot.slane %v373, 4
    %380 = vst [vmem:[#allocation3 + $0x30] sm:$0xf0] %v376
    %381 = vst [vmem:[#allocation3 + $0x38] sm:$0xf0] %v377
    %382 = vrot.lane.b32.xlu0 %v59, 111
    %v383 = vpop.permute.xlu0 %382
    %384 = vrot.lane.b32.xlu0 %v284, 111
    %v385 = vpop.permute.xlu0 %384
    %v386 = vsel %vm249, %v383, %v385
    %v387 = vsel %vm249, %v385, %v383
    %v388 = vmul.f32 %v386, %v256
    %v389 = vmul.f32 %v387, %v260
    %390 = vst [vmem:[#allocation3 + $0x40] sm:$0xf] %v388
    %391 = vst [vmem:[#allocation3 + $0x48] sm:$0xf] %v389
    %v392 = vld [vmem:[#allocation3] sm:$0xff]
    %v393 = vld [vmem:[#allocation3 + $0x8] sm:$0xff]
    %v394 = vld [vmem:[#allocation3 + $0x10] sm:$0xff]
    %v395 = vld [vmem:[#allocation3 + $0x18] sm:$0xff]
    %v396 = vld [vmem:[#allocation3 + $0x20] sm:$0xff]
    %v397 = vld [vmem:[#allocation3 + $0x28] sm:$0xff]
    %v398 = vld [vmem:[#allocation3 + $0x30] sm:$0xff]
    %v399 = vld [vmem:[#allocation3 + $0x38] sm:$0xff]
    %v400 = vld [vmem:[#allocation3 + $0x40] sm:$0xf]
    %v401 = vld [vmem:[#allocation3 + $0x48] sm:$0xf]
    %v402 = vpack.c.bf16 %v394, %v392
    %v403 = vpack.c.bf16 %v395, %v393
    %v404 = vpack.c.bf16 %v398, %v396
    %v405 = vpack.c.bf16 %v399, %v397
    %v406 = vpack.c.bf16 %v400, %v400
    %v407 = vpack.c.bf16 %v401, %v401
    %v408 = vld [vmem:[%s3] sm:$0x3]
    %v409 = vld [vmem:[%s4] sm:$0x3]
    %vm410 = vcmask 293888
    %v412 = vsel %vm410, %v409, 0
    %vm414 = vcmask 1041408
    %v416 = vsel %vm414, %v406, 0
    %v419 = vsel %vm414, %v407, 0
    %421 = vmatprep.subr.bf16.mxu0 0
    %422 = vmatpush1.bf16.msra.mxu0 0
    %423 = vmatprep.subr.bf16.mxu0 0
    %424 = vmatpush1.bf16.msra.mxu0 0
    %425 = vmatprep.subr.bf16.mxu0 0
    %426 = vmatpush1.bf16.msra.mxu0 0
    %427 = vmatprep.subr.bf16.mxu0 0
    %428 = vmatpush1.bf16.msra.mxu0 0
    %429 = vmatprep.subr.bf16.mxu0 0
    %430 = vmatpush1.bf16.msra.mxu0 0
    %431 = vmatprep.subr.bf16.mxu0 %v419
    %432 = vmatpush1.bf16.msra.mxu0 %v416
    %433 = vmatprep.subr.bf16.mxu0 %v405
    %434 = vmatpush1.bf16.msra.mxu0 %v404
    %435 = vmatprep.subr.bf16.mxu0 %v403
    %436 = vmatpush1.bf16.msra.mxu0 %v402
    %437 = vmatprep.subr.bf16.mxu0 0
    %438 = vmatpush2.bf16.msra.mxu0 0
    %439 = vmatprep.subr.bf16.mxu0 0
    %440 = vmatpush2.bf16.msra.mxu0 0
    %441 = vmatprep.subr.bf16.mxu0 0
    %442 = vmatpush2.bf16.msra.mxu0 0
    %443 = vmatprep.subr.bf16.mxu0 0
    %444 = vmatpush2.bf16.msra.mxu0 0
    %445 = vmatprep.subr.bf16.mxu0 0
    %446 = vmatpush2.bf16.msra.mxu0 0
    %447 = vmatprep.subr.bf16.mxu0 0
    %448 = vmatpush2.bf16.msra.mxu0 0
    %449 = vmatprep.subr.bf16.mxu0 0
    %450 = vmatpush2.bf16.msra.mxu0 0
    %451 = vmatprep.subr.bf16.mxu0 0
    %452 = vmatpush2.bf16.msra.mxu0 0
    %453 = vmatprep.mubr.bf16.mxu0 0
    %454 = vmatmul.mubr.bf16.gmra.mxu0 %v412
    %v455 = vpop.f32.mrf.mxu0
    %v456 = vadd.f32 0.0, %v455
    %v457 = vpop.f32.mrf.mxu0
    %v458 = vadd.f32 0.0, %v457
    %v459 = vpop.f32.mrf.mxu0
    %v460 = vpop.f32.mrf.mxu0
    %461 = vdwg.mxu0
    %v463 = vsel %vm410, %v408, 0
    %v466 = vsel %vm414, %v281, 0
    %v469 = vsel %vm414, %v282, 0
    %471 = vmatprep.subr.bf16.mxu0 0
    %472 = vmatpush1.bf16.msra.mxu0 0
    %473 = vmatprep.subr.bf16.mxu0 0
    %474 = vmatpush1.bf16.msra.mxu0 0
    %475 = vmatprep.subr.bf16.mxu0 0
    %476 = vmatpush1.bf16.msra.mxu0 0
    %477 = vmatprep.subr.bf16.mxu0 0
    %478 = vmatpush1.bf16.msra.mxu0 0
    %479 = vmatprep.subr.bf16.mxu0 0
    %480 = vmatpush1.bf16.msra.mxu0 0
    %481 = vmatprep.subr.bf16.mxu0 %v469
    %482 = vmatpush1.bf16.msra.mxu0 %v466
    %483 = vmatprep.subr.bf16.mxu0 %v280
    %484 = vmatpush1.bf16.msra.mxu0 %v279
    %485 = vmatprep.subr.bf16.mxu0 %v278
    %486 = vmatpush1.bf16.msra.mxu0 %v277
    %487 = vmatprep.subr.bf16.mxu0 0
    %488 = vmatpush2.bf16.msra.mxu0 0
    %489 = vmatprep.subr.bf16.mxu0 0
    %490 = vmatpush2.bf16.msra.mxu0 0
    %491 = vmatprep.subr.bf16.mxu0 0
    %492 = vmatpush2.bf16.msra.mxu0 0
    %493 = vmatprep.subr.bf16.mxu0 0
    %494 = vmatpush2.bf16.msra.mxu0 0
    %495 = vmatprep.subr.bf16.mxu0 0
    %496 = vmatpush2.bf16.msra.mxu0 0
    %497 = vmatprep.subr.bf16.mxu0 0
    %498 = vmatpush2.bf16.msra.mxu0 0
    %499 = vmatprep.subr.bf16.mxu0 0
    %500 = vmatpush2.bf16.msra.mxu0 0
    %501 = vmatprep.subr.bf16.mxu0 0
    %502 = vmatpush2.bf16.msra.mxu0 0
    %503 = vmatprep.mubr.bf16.mxu0 0
    %504 = vmatmul.mubr.bf16.gmra.mxu0 %v463
    %v505 = vpop.f32.mrf.mxu0
    %v506 = vadd.f32 %v456, %v505
    %v507 = vpop.f32.mrf.mxu0
    %v508 = vadd.f32 %v458, %v507
    %v509 = vpop.f32.mrf.mxu0
    %v510 = vpop.f32.mrf.mxu0
    %511 = vdwg.mxu0
    %v512 = vld [vmem:[%s6] sm:$0xf]
    %514 = vset.pattern.permute.xlu0 0
    %515 = vperm.xlu0 %514, %v512
    %v516 = vpop.permute.xlu0 %515
    %v518 = vadd.f32 %v506, %v516
    %v519 = vadd.f32 %v508, %v516
    %v520 = vmax.f32 %v518, 0.0
    %v521 = vmax.f32 %v519, 0.0
    %s522 = scalar_lea.vmem %s3, 2
    %v523 = vld [vmem:[%s522] sm:$0x3]
    %s524 = scalar_lea.vmem %s6, 4
    %v525 = vld [vmem:[%s524] sm:$0xf]
    %527 = vset.pattern.permute.xlu0 0
    %528 = vperm.xlu0 %527, %v525
    %v529 = vpop.permute.xlu0 %528
    %v532 = vsel %vm410, %v523, 0
    %534 = vmatprep.subr.bf16.mxu0 0
    %535 = vmatpush1.bf16.msra.mxu0 0
    %536 = vmatprep.subr.bf16.mxu0 0
    %537 = vmatpush1.bf16.msra.mxu0 0
    %538 = vmatprep.subr.bf16.mxu0 0
    %539 = vmatpush1.bf16.msra.mxu0 0
    %540 = vmatprep.subr.bf16.mxu0 0
    %541 = vmatpush1.bf16.msra.mxu0 0
    %542 = vmatprep.subr.bf16.mxu0 0
    %543 = vmatpush1.bf16.msra.mxu0 0
    %544 = vmatprep.subr.bf16.mxu0 %v469
    %545 = vmatpush1.bf16.msra.mxu0 %v466
    %546 = vmatprep.subr.bf16.mxu0 %v280
    %547 = vmatpush1.bf16.msra.mxu0 %v279
    %548 = vmatprep.subr.bf16.mxu0 %v278
    %549 = vmatpush1.bf16.msra.mxu0 %v277
    %550 = vmatprep.subr.bf16.mxu0 0
    %551 = vmatpush2.bf16.msra.mxu0 0
    %552 = vmatprep.subr.bf16.mxu0 0
    %553 = vmatpush2.bf16.msra.mxu0 0
    %554 = vmatprep.subr.bf16.mxu0 0
    %555 = vmatpush2.bf16.msra.mxu0 0
    %556 = vmatprep.subr.bf16.mxu0 0
    %557 = vmatpush2.bf16.msra.mxu0 0
    %558 = vmatprep.subr.bf16.mxu0 0
    %559 = vmatpush2.bf16.msra.mxu0 0
    %560 = vmatprep.subr.bf16.mxu0 0
    %561 = vmatpush2.bf16.msra.mxu0 0
    %562 = vmatprep.subr.bf16.mxu0 0
    %563 = vmatpush2.bf16.msra.mxu0 0
    %564 = vmatprep.subr.bf16.mxu0 0
    %565 = vmatpush2.bf16.msra.mxu0 0
    %566 = vmatprep.mubr.bf16.mxu0 0
    %567 = vmatmul.mubr.bf16.gmra.mxu0 %v532
    %v568 = vpop.f32.mrf.mxu0
    %v569 = vadd.f32 %v529, %v568
    %v570 = vpop.f32.mrf.mxu0
    %v571 = vadd.f32 %v529, %v570
    %v572 = vpop.f32.mrf.mxu0
    %v573 = vpop.f32.mrf.mxu0
    %574 = vdwg.mxu0
    %v575 = vmax.f32 %v569, 0.0
    %v576 = vmax.f32 %v571, 0.0
    %s577 = scalar_lea.vmem %s3, 4
    %v578 = vld [vmem:[%s577] sm:$0x3]
    %s579 = scalar_lea.vmem %s6, 8
    %v580 = vld [vmem:[%s579] sm:$0xf]
    %582 = vset.pattern.permute.xlu0 0
    %583 = vperm.xlu0 %582, %v580
    %v584 = vpop.permute.xlu0 %583
    %v587 = vsel %vm410, %v578, 0
    %589 = vmatprep.subr.bf16.mxu0 0
    %590 = vmatpush1.bf16.msra.mxu0 0
    %591 = vmatprep.subr.bf16.mxu0 0
    %592 = vmatpush1.bf16.msra.mxu0 0
    %593 = vmatprep.subr.bf16.mxu0 0
    %594 = vmatpush1.bf16.msra.mxu0 0
    %595 = vmatprep.subr.bf16.mxu0 0
    %596 = vmatpush1.bf16.msra.mxu0 0
    %597 = vmatprep.subr.bf16.mxu0 0
    %598 = vmatpush1.bf16.msra.mxu0 0
    %599 = vmatprep.subr.bf16.mxu0 %v469
    %600 = vmatpush1.bf16.msra.mxu0 %v466
    %601 = vmatprep.subr.bf16.mxu0 %v280
    %602 = vmatpush1.bf16.msra.mxu0 %v279
    %603 = vmatprep.subr.bf16.mxu0 %v278
    %604 = vmatpush1.bf16.msra.mxu0 %v277
    %605 = vmatprep.subr.bf16.mxu0 0
    %606 = vmatpush2.bf16.msra.mxu0 0
    %607 = vmatprep.subr.bf16.mxu0 0
    %608 = vmatpush2.bf16.msra.mxu0 0
    %609 = vmatprep.subr.bf16.mxu0 0
    %610 = vmatpush2.bf16.msra.mxu0 0
    %611 = vmatprep.subr.bf16.mxu0 0
    %612 = vmatpush2.bf16.msra.mxu0 0
    %613 = vmatprep.subr.bf16.mxu0 0
    %614 = vmatpush2.bf16.msra.mxu0 0
    %615 = vmatprep.subr.bf16.mxu0 0
    %616 = vmatpush2.bf16.msra.mxu0 0
    %617 = vmatprep.subr.bf16.mxu0 0
    %618 = vmatpush2.bf16.msra.mxu0 0
    %619 = vmatprep.subr.bf16.mxu0 0
    %620 = vmatpush2.bf16.msra.mxu0 0
    %621 = vmatprep.mubr.bf16.mxu0 0
    %622 = vmatmul.mubr.bf16.gmra.mxu0 %v587
    %v623 = vpop.f32.mrf.mxu0
    %v624 = vadd.f32 %v584, %v623
    %v625 = vpop.f32.mrf.mxu0
    %v626 = vadd.f32 %v584, %v625
    %v627 = vpop.f32.mrf.mxu0
    %v628 = vpop.f32.mrf.mxu0
    %629 = vdwg.mxu0
    %v630 = vmax.f32 %v624, 0.0
    %v631 = vmax.f32 %v626, 0.0
    %s632 = scalar_lea.vmem %s4, 2
    %v633 = vld [vmem:[%s632] sm:$0x3]
    %s634 = scalar_lea.vmem %s6, 12
    %v635 = vld [vmem:[%s634] sm:$0xf]
    %637 = vset.pattern.permute.xlu0 0
    %638 = vperm.xlu0 %637, %v635
    %v639 = vpop.permute.xlu0 %638
    %v642 = vsel %vm410, %v633, 0
    %644 = vmatprep.subr.bf16.mxu0 0
    %645 = vmatpush1.bf16.msra.mxu0 0
    %646 = vmatprep.subr.bf16.mxu0 0
    %647 = vmatpush1.bf16.msra.mxu0 0
    %648 = vmatprep.subr.bf16.mxu0 0
    %649 = vmatpush1.bf16.msra.mxu0 0
    %650 = vmatprep.subr.bf16.mxu0 0
    %651 = vmatpush1.bf16.msra.mxu0 0
    %652 = vmatprep.subr.bf16.mxu0 0
    %653 = vmatpush1.bf16.msra.mxu0 0
    %654 = vmatprep.subr.bf16.mxu0 %v419
    %655 = vmatpush1.bf16.msra.mxu0 %v416
    %656 = vmatprep.subr.bf16.mxu0 %v405
    %657 = vmatpush1.bf16.msra.mxu0 %v404
    %658 = vmatprep.subr.bf16.mxu0 %v403
    %659 = vmatpush1.bf16.msra.mxu0 %v402
    %660 = vmatprep.subr.bf16.mxu0 0
    %661 = vmatpush2.bf16.msra.mxu0 0
    %662 = vmatprep.subr.bf16.mxu0 0
    %663 = vmatpush2.bf16.msra.mxu0 0
    %664 = vmatprep.subr.bf16.mxu0 0
    %665 = vmatpush2.bf16.msra.mxu0 0
    %666 = vmatprep.subr.bf16.mxu0 0
    %667 = vmatpush2.bf16.msra.mxu0 0
    %668 = vmatprep.subr.bf16.mxu0 0
    %669 = vmatpush2.bf16.msra.mxu0 0
    %670 = vmatprep.subr.bf16.mxu0 0
    %671 = vmatpush2.bf16.msra.mxu0 0
    %672 = vmatprep.subr.bf16.mxu0 0
    %673 = vmatpush2.bf16.msra.mxu0 0
    %674 = vmatprep.subr.bf16.mxu0 0
    %675 = vmatpush2.bf16.msra.mxu0 0
    %676 = vmatprep.mubr.bf16.mxu0 0
    %677 = vmatmul.mubr.bf16.gmra.mxu0 %v642
    %v678 = vpop.f32.mrf.mxu0
    %v679 = vadd.f32 %v639, %v678
    %v680 = vpop.f32.mrf.mxu0
    %v681 = vadd.f32 %v639, %v680
    %v682 = vpop.f32.mrf.mxu0
    %v683 = vpop.f32.mrf.mxu0
    %684 = vdwg.mxu0
    %v685 = vmax.f32 %v679, 0.0
    %v686 = vmax.f32 %v681, 0.0
    %s687 = scalar_lea.vmem %s4, 4
    %v688 = vld [vmem:[%s687] sm:$0x3]
    %s689 = scalar_lea.vmem %s6, 16
    %v690 = vld [vmem:[%s689] sm:$0xf]
    %692 = vset.pattern.permute.xlu0 0
    %693 = vperm.xlu0 %692, %v690
    %v694 = vpop.permute.xlu0 %693
    %v697 = vsel %vm410, %v688, 0
    %699 = vmatprep.subr.bf16.mxu0 0
    %700 = vmatpush1.bf16.msra.mxu0 0
    %701 = vmatprep.subr.bf16.mxu0 0
    %702 = vmatpush1.bf16.msra.mxu0 0
    %703 = vmatprep.subr.bf16.mxu0 0
    %704 = vmatpush1.bf16.msra.mxu0 0
    %705 = vmatprep.subr.bf16.mxu0 0
    %706 = vmatpush1.bf16.msra.mxu0 0
    %707 = vmatprep.subr.bf16.mxu0 0
    %708 = vmatpush1.bf16.msra.mxu0 0
    %709 = vmatprep.subr.bf16.mxu0 %v419
    %710 = vmatpush1.bf16.msra.mxu0 %v416
    %711 = vmatprep.subr.bf16.mxu0 %v405
    %712 = vmatpush1.bf16.msra.mxu0 %v404
    %713 = vmatprep.subr.bf16.mxu0 %v403
    %714 = vmatpush1.bf16.msra.mxu0 %v402
    %715 = vmatprep.subr.bf16.mxu0 0
    %716 = vmatpush2.bf16.msra.mxu0 0
    %717 = vmatprep.subr.bf16.mxu0 0
    %718 = vmatpush2.bf16.msra.mxu0 0
    %719 = vmatprep.subr.bf16.mxu0 0
    %720 = vmatpush2.bf16.msra.mxu0 0
    %721 = vmatprep.subr.bf16.mxu0 0
    %722 = vmatpush2.bf16.msra.mxu0 0
    %723 = vmatprep.subr.bf16.mxu0 0
    %724 = vmatpush2.bf16.msra.mxu0 0
    %725 = vmatprep.subr.bf16.mxu0 0
    %726 = vmatpush2.bf16.msra.mxu0 0
    %727 = vmatprep.subr.bf16.mxu0 0
    %728 = vmatpush2.bf16.msra.mxu0 0
    %729 = vmatprep.subr.bf16.mxu0 0
    %730 = vmatpush2.bf16.msra.mxu0 0
    %731 = vmatprep.mubr.bf16.mxu0 0
    %732 = vmatmul.mubr.bf16.gmra.mxu0 %v697
    %v733 = vpop.f32.mrf.mxu0
    %v734 = vadd.f32 %v694, %v733
    %v735 = vpop.f32.mrf.mxu0
    %v736 = vadd.f32 %v694, %v735
    %v737 = vpop.f32.mrf.mxu0
    %v738 = vpop.f32.mrf.mxu0
    %739 = vdwg.mxu0
    %v740 = vmax.f32 %v734, 0.0
    %v741 = vmax.f32 %v736, 0.0
    %v742 = vpack.c.bf16 %v520, %v520
    %v743 = vpack.c.bf16 %v521, %v521
    %s744 = sld [smem:[#allocation4]]
    %v745 = vpack.c.bf16 %v575, %v575
    %v746 = vpack.c.bf16 %v576, %v576
    %v747 = vpack.c.bf16 %v630, %v630
    %v748 = vpack.c.bf16 %v631, %v631
    %749 = vxpose.xlu0.c.b16.start [1/8] %v745, 128
    %750 = vxpose.xlu0.c.b16.cont [2/8] 0, 128
    %751 = vxpose.xlu0.c.b16.cont [3/8] 0, 128
    %752 = vxpose.xlu0.c.b16.cont [4/8] 0, 128
    %753 = vxpose.xlu0.c.b16.cont [5/8] 0, 128
    %754 = vxpose.xlu0.c.b16.cont [6/8] 0, 128
    %755 = vxpose.xlu0.c.b16.cont [7/8] 0, 128
    %756 = vxpose.xlu0.c.b16.end [8/8] 0, 128
    %v757 = vpop.trf.xlu0
    %v758 = vpop.trf.xlu0
    %v759 = vpop.trf.xlu0
    %v760 = vpop.trf.xlu0
    %v761 = vpop.trf.xlu0
    %v762 = vpop.trf.xlu0
    %v763 = vpop.trf.xlu0
    %v764 = vpop.trf.xlu0
    %765 = vxpose.xlu0.c.b16.start [1/8] %v746, 128
    %766 = vxpose.xlu0.c.b16.cont [2/8] 0, 128
    %767 = vxpose.xlu0.c.b16.cont [3/8] 0, 128
    %768 = vxpose.xlu0.c.b16.cont [4/8] 0, 128
    %769 = vxpose.xlu0.c.b16.cont [5/8] 0, 128
    %770 = vxpose.xlu0.c.b16.cont [6/8] 0, 128
    %771 = vxpose.xlu0.c.b16.cont [7/8] 0, 128
    %772 = vxpose.xlu0.c.b16.end [8/8] 0, 128
    %v773 = vpop.trf.xlu0
    %v774 = vpop.trf.xlu0
    %v775 = vpop.trf.xlu0
    %v776 = vpop.trf.xlu0
    %v777 = vpop.trf.xlu0
    %v778 = vpop.trf.xlu0
    %v779 = vpop.trf.xlu0
    %v780 = vpop.trf.xlu0
    %vm781 = vcmask 31744
    %v783 = vsel %vm781, %v757, 0
    %v786 = vsel %vm781, %v758, 0
    %v789 = vsel %vm781, %v759, 0
    %v792 = vsel %vm781, %v760, 0
    %v795 = vsel %vm781, %v761, 0
    %v798 = vsel %vm781, %v762, 0
    %v801 = vsel %vm781, %v763, 0
    %v804 = vsel %vm781, %v764, 0
    %v807 = vsel %vm781, %v773, 0
    %v810 = vsel %vm781, %v774, 0
    %v813 = vsel %vm781, %v775, 0
    %v816 = vsel %vm781, %v776, 0
    %v819 = vsel %vm781, %v777, 0
    %v822 = vsel %vm781, %v778, 0
    %v825 = vsel %vm781, %v779, 0
    %v828 = vsel %vm781, %v780, 0
    %v831 = vsel %vm414, %v742, 0
    %v834 = vsel %vm414, %v743, 0
    %836 = vmatprep.subr.bf16.mxu0 0
    %837 = vmatpush1.bf16.msra.mxu0 0
    %838 = vmatprep.subr.bf16.mxu0 0
    %839 = vmatpush1.bf16.msra.mxu0 0
    %840 = vmatprep.subr.bf16.mxu0 0
    %841 = vmatpush1.bf16.msra.mxu0 0
    %842 = vmatprep.subr.bf16.mxu0 0
    %843 = vmatpush1.bf16.msra.mxu0 0
    %844 = vmatprep.subr.bf16.mxu0 0
    %845 = vmatpush1.bf16.msra.mxu0 0
    %846 = vmatprep.subr.bf16.mxu0 0
    %847 = vmatpush1.bf16.msra.mxu0 0
    %848 = vmatprep.subr.bf16.mxu0 0
    %849 = vmatpush1.bf16.msra.mxu0 0
    %850 = vmatprep.subr.bf16.mxu0 %v834
    %851 = vmatpush1.bf16.msra.mxu0 %v831
    %852 = vmatprep.subr.bf16.mxu0 0
    %853 = vmatpush2.bf16.msra.mxu0 0
    %854 = vmatprep.subr.bf16.mxu0 0
    %855 = vmatpush2.bf16.msra.mxu0 0
    %856 = vmatprep.subr.bf16.mxu0 0
    %857 = vmatpush2.bf16.msra.mxu0 0
    %858 = vmatprep.subr.bf16.mxu0 0
    %859 = vmatpush2.bf16.msra.mxu0 0
    %860 = vmatprep.subr.bf16.mxu0 0
    %861 = vmatpush2.bf16.msra.mxu0 0
    %862 = vmatprep.subr.bf16.mxu0 0
    %863 = vmatpush2.bf16.msra.mxu0 0
    %864 = vmatprep.subr.bf16.mxu0 0
    %865 = vmatpush2.bf16.msra.mxu0 0
    %866 = vmatprep.subr.bf16.mxu0 0
    %867 = vmatpush2.bf16.msra.mxu0 0
    %868 = vmatprep.mubr.bf16.mxu0 0
    %869 = vmatmul.mubr.bf16.gmra.mxu0 %v783
    %v870 = vpop.f32.mrf.mxu0
    %v871 = vadd.f32 0.0, %v870
    %v872 = vpop.f32.mrf.mxu0
    %v873 = vadd.f32 0.0, %v872
    %v874 = vpop.f32.mrf.mxu0
    %v875 = vadd.f32 0.0, %v874
    %v876 = vpop.f32.mrf.mxu0
    %v877 = vadd.f32 0.0, %v876
    %878 = vmatprep.mubr.bf16.mxu0 0
    %879 = vmatmul.mubr.bf16.gmra.mxu0 %v786
    %v880 = vpop.f32.mrf.mxu0
    %v881 = vadd.f32 0.0, %v880
    %v882 = vpop.f32.mrf.mxu0
    %v883 = vadd.f32 0.0, %v882
    %v884 = vpop.f32.mrf.mxu0
    %v885 = vadd.f32 0.0, %v884
    %v886 = vpop.f32.mrf.mxu0
    %v887 = vadd.f32 0.0, %v886
    %888 = vmatprep.mubr.bf16.mxu0 0
    %889 = vmatmul.mubr.bf16.gmra.mxu0 %v789
    %v890 = vpop.f32.mrf.mxu0
    %v891 = vadd.f32 0.0, %v890
    %v892 = vpop.f32.mrf.mxu0
    %v893 = vadd.f32 0.0, %v892
    %v894 = vpop.f32.mrf.mxu0
    %v895 = vadd.f32 0.0, %v894
    %v896 = vpop.f32.mrf.mxu0
    %v897 = vadd.f32 0.0, %v896
    %898 = vmatprep.mubr.bf16.mxu0 0
    %899 = vmatmul.mubr.bf16.gmra.mxu0 %v792
    %v900 = vpop.f32.mrf.mxu0
    %v901 = vadd.f32 0.0, %v900
    %v902 = vpop.f32.mrf.mxu0
    %v903 = vadd.f32 0.0, %v902
    %v904 = vpop.f32.mrf.mxu0
    %v905 = vadd.f32 0.0, %v904
    %v906 = vpop.f32.mrf.mxu0
    %v907 = vadd.f32 0.0, %v906
    %908 = vmatprep.mubr.bf16.mxu0 0
    %909 = vmatmul.mubr.bf16.gmra.mxu0 %v795
    %v910 = vpop.f32.mrf.mxu0
    %v911 = vadd.f32 0.0, %v910
    %v912 = vpop.f32.mrf.mxu0
    %v913 = vadd.f32 0.0, %v912
    %v914 = vpop.f32.mrf.mxu0
    %v915 = vadd.f32 0.0, %v914
    %v916 = vpop.f32.mrf.mxu0
    %v917 = vadd.f32 0.0, %v916
    %918 = vmatprep.mubr.bf16.mxu0 0
    %919 = vmatmul.mubr.bf16.gmra.mxu0 %v798
    %v920 = vpop.f32.mrf.mxu0
    %v921 = vadd.f32 0.0, %v920
    %v922 = vpop.f32.mrf.mxu0
    %v923 = vadd.f32 0.0, %v922
    %v924 = vpop.f32.mrf.mxu0
    %v925 = vadd.f32 0.0, %v924
    %v926 = vpop.f32.mrf.mxu0
    %v927 = vadd.f32 0.0, %v926
    %928 = vmatprep.mubr.bf16.mxu0 0
    %929 = vmatmul.mubr.bf16.gmra.mxu0 %v801
    %v930 = vpop.f32.mrf.mxu0
    %v931 = vadd.f32 0.0, %v930
    %v932 = vpop.f32.mrf.mxu0
    %v933 = vadd.f32 0.0, %v932
    %v934 = vpop.f32.mrf.mxu0
    %v935 = vadd.f32 0.0, %v934
    %v936 = vpop.f32.mrf.mxu0
    %v937 = vadd.f32 0.0, %v936
    %938 = vmatprep.mubr.bf16.mxu0 0
    %939 = vmatmul.mubr.bf16.gmra.mxu0 %v804
    %v940 = vpop.f32.mrf.mxu0
    %v941 = vadd.f32 0.0, %v940
    %v942 = vpop.f32.mrf.mxu0
    %v943 = vadd.f32 0.0, %v942
    %v944 = vpop.f32.mrf.mxu0
    %v945 = vadd.f32 0.0, %v944
    %v946 = vpop.f32.mrf.mxu0
    %v947 = vadd.f32 0.0, %v946
    %948 = vmatprep.mubr.bf16.mxu0 0
    %949 = vmatmul.mubr.bf16.gmra.mxu0 %v807
    %v950 = vpop.f32.mrf.mxu0
    %v951 = vadd.f32 0.0, %v950
    %v952 = vpop.f32.mrf.mxu0
    %v953 = vadd.f32 0.0, %v952
    %v954 = vpop.f32.mrf.mxu0
    %v955 = vadd.f32 0.0, %v954
    %v956 = vpop.f32.mrf.mxu0
    %v957 = vadd.f32 0.0, %v956
    %958 = vmatprep.mubr.bf16.mxu0 0
    %959 = vmatmul.mubr.bf16.gmra.mxu0 %v810
    %v960 = vpop.f32.mrf.mxu0
    %v961 = vadd.f32 0.0, %v960
    %v962 = vpop.f32.mrf.mxu0
    %v963 = vadd.f32 0.0, %v962
    %v964 = vpop.f32.mrf.mxu0
    %v965 = vadd.f32 0.0, %v964
    %v966 = vpop.f32.mrf.mxu0
    %v967 = vadd.f32 0.0, %v966
    %968 = vmatprep.mubr.bf16.mxu0 0
    %969 = vmatmul.mubr.bf16.gmra.mxu0 %v813
    %v970 = vpop.f32.mrf.mxu0
    %v971 = vadd.f32 0.0, %v970
    %v972 = vpop.f32.mrf.mxu0
    %v973 = vadd.f32 0.0, %v972
    %v974 = vpop.f32.mrf.mxu0
    %v975 = vadd.f32 0.0, %v974
    %v976 = vpop.f32.mrf.mxu0
    %v977 = vadd.f32 0.0, %v976
    %978 = vmatprep.mubr.bf16.mxu0 0
    %979 = vmatmul.mubr.bf16.gmra.mxu0 %v816
    %v980 = vpop.f32.mrf.mxu0
    %v981 = vadd.f32 0.0, %v980
    %v982 = vpop.f32.mrf.mxu0
    %v983 = vadd.f32 0.0, %v982
    %v984 = vpop.f32.mrf.mxu0
    %v985 = vadd.f32 0.0, %v984
    %v986 = vpop.f32.mrf.mxu0
    %v987 = vadd.f32 0.0, %v986
    %988 = vmatprep.mubr.bf16.mxu0 0
    %989 = vmatmul.mubr.bf16.gmra.mxu0 %v819
    %v990 = vpop.f32.mrf.mxu0
    %v991 = vadd.f32 0.0, %v990
    %v992 = vpop.f32.mrf.mxu0
    %v993 = vadd.f32 0.0, %v992
    %v994 = vpop.f32.mrf.mxu0
    %v995 = vadd.f32 0.0, %v994
    %v996 = vpop.f32.mrf.mxu0
    %v997 = vadd.f32 0.0, %v996
    %998 = vmatprep.mubr.bf16.mxu0 0
    %999 = vmatmul.mubr.bf16.gmra.mxu0 %v822
    %v1000 = vpop.f32.mrf.mxu0
    %v1001 = vadd.f32 0.0, %v1000
    %v1002 = vpop.f32.mrf.mxu0
    %v1003 = vadd.f32 0.0, %v1002
    %v1004 = vpop.f32.mrf.mxu0
    %v1005 = vadd.f32 0.0, %v1004
    %v1006 = vpop.f32.mrf.mxu0
    %v1007 = vadd.f32 0.0, %v1006
    %1008 = vmatprep.mubr.bf16.mxu0 0
    %1009 = vmatmul.mubr.bf16.gmra.mxu0 %v825
    %v1010 = vpop.f32.mrf.mxu0
    %v1011 = vadd.f32 0.0, %v1010
    %v1012 = vpop.f32.mrf.mxu0
    %v1013 = vadd.f32 0.0, %v1012
    %v1014 = vpop.f32.mrf.mxu0
    %v1015 = vadd.f32 0.0, %v1014
    %v1016 = vpop.f32.mrf.mxu0
    %v1017 = vadd.f32 0.0, %v1016
    %1018 = vmatprep.mubr.bf16.mxu0 0
    %1019 = vmatmul.mubr.bf16.gmra.mxu0 %v828
    %v1020 = vpop.f32.mrf.mxu0
    %v1021 = vadd.f32 0.0, %v1020
    %v1022 = vpop.f32.mrf.mxu0
    %v1023 = vadd.f32 0.0, %v1022
    %v1024 = vpop.f32.mrf.mxu0
    %v1025 = vadd.f32 0.0, %v1024
    %v1026 = vpop.f32.mrf.mxu0
    %v1027 = vadd.f32 0.0, %v1026
    %1028 = vdwg.mxu0
    %v1029 = vmax.f32 %v871, %v873
    %1030 = vmax.xlane.f32.xlu0 %v1029
    %v1031 = vpop.xlane.xlu0 %1030
    %v1032 = vmax.f32 %v875, %v877
    %1033 = vmax.xlane.f32.xlu0 %v1032
    %v1034 = vpop.xlane.xlu0 %1033
    %v1035 = vmax.f32 %v881, %v883
    %1036 = vmax.xlane.f32.xlu0 %v1035
    %v1037 = vpop.xlane.xlu0 %1036
    %v1038 = vmax.f32 %v885, %v887
    %1039 = vmax.xlane.f32.xlu0 %v1038
    %v1040 = vpop.xlane.xlu0 %1039
    %v1041 = vmax.f32 %v891, %v893
    %1042 = vmax.xlane.f32.xlu0 %v1041
    %v1043 = vpop.xlane.xlu0 %1042
    %v1044 = vmax.f32 %v895, %v897
    %1045 = vmax.xlane.f32.xlu0 %v1044
    %v1046 = vpop.xlane.xlu0 %1045
    %v1047 = vmax.f32 %v901, %v903
    %1048 = vmax.xlane.f32.xlu0 %v1047
    %v1049 = vpop.xlane.xlu0 %1048
    %v1050 = vmax.f32 %v905, %v907
    %1051 = vmax.xlane.f32.xlu0 %v1050
    %v1052 = vpop.xlane.xlu0 %1051
    %v1053 = vmax.f32 %v911, %v913
    %1054 = vmax.xlane.f32.xlu0 %v1053
    %v1055 = vpop.xlane.xlu0 %1054
    %v1056 = vmax.f32 %v915, %v917
    %1057 = vmax.xlane.f32.xlu0 %v1056
    %v1058 = vpop.xlane.xlu0 %1057
    %v1059 = vmax.f32 %v921, %v923
    %1060 = vmax.xlane.f32.xlu0 %v1059
    %v1061 = vpop.xlane.xlu0 %1060
    %v1062 = vmax.f32 %v925, %v927
    %1063 = vmax.xlane.f32.xlu0 %v1062
    %v1064 = vpop.xlane.xlu0 %1063
    %v1065 = vmax.f32 %v931, %v933
    %1066 = vmax.xlane.f32.xlu0 %v1065
    %v1067 = vpop.xlane.xlu0 %1066
    %v1068 = vmax.f32 %v935, %v937
    %1069 = vmax.xlane.f32.xlu0 %v1068
    %v1070 = vpop.xlane.xlu0 %1069
    %v1071 = vmax.f32 %v941, %v943
    %1072 = vmax.xlane.f32.xlu0 %v1071
    %v1073 = vpop.xlane.xlu0 %1072
    %v1074 = vmax.f32 %v945, %v947
    %1075 = vmax.xlane.f32.xlu0 %v1074
    %v1076 = vpop.xlane.xlu0 %1075
    %v1077 = vmax.f32 %v951, %v953
    %1078 = vmax.xlane.f32.xlu0 %v1077
    %v1079 = vpop.xlane.xlu0 %1078
    %v1080 = vmax.f32 %v955, %v957
    %1081 = vmax.xlane.f32.xlu0 %v1080
    %v1082 = vpop.xlane.xlu0 %1081
    %v1083 = vmax.f32 %v961, %v963
    %1084 = vmax.xlane.f32.xlu0 %v1083
    %v1085 = vpop.xlane.xlu0 %1084
    %v1086 = vmax.f32 %v965, %v967
    %1087 = vmax.xlane.f32.xlu0 %v1086
    %v1088 = vpop.xlane.xlu0 %1087
    %v1089 = vmax.f32 %v971, %v973
    %1090 = vmax.xlane.f32.xlu0 %v1089
    %v1091 = vpop.xlane.xlu0 %1090
    %v1092 = vmax.f32 %v975, %v977
    %1093 = vmax.xlane.f32.xlu0 %v1092
    %v1094 = vpop.xlane.xlu0 %1093
    %v1095 = vmax.f32 %v981, %v983
    %1096 = vmax.xlane.f32.xlu0 %v1095
    %v1097 = vpop.xlane.xlu0 %1096
    %v1098 = vmax.f32 %v985, %v987
    %1099 = vmax.xlane.f32.xlu0 %v1098
    %v1100 = vpop.xlane.xlu0 %1099
    %v1101 = vmax.f32 %v991, %v993
    %1102 = vmax.xlane.f32.xlu0 %v1101
    %v1103 = vpop.xlane.xlu0 %1102
    %v1104 = vmax.f32 %v995, %v997
    %1105 = vmax.xlane.f32.xlu0 %v1104
    %v1106 = vpop.xlane.xlu0 %1105
    %v1107 = vmax.f32 %v1001, %v1003
    %1108 = vmax.xlane.f32.xlu0 %v1107
    %v1109 = vpop.xlane.xlu0 %1108
    %v1110 = vmax.f32 %v1005, %v1007
    %1111 = vmax.xlane.f32.xlu0 %v1110
    %v1112 = vpop.xlane.xlu0 %1111
    %v1113 = vmax.f32 %v1011, %v1013
    %1114 = vmax.xlane.f32.xlu0 %v1113
    %v1115 = vpop.xlane.xlu0 %1114
    %v1116 = vmax.f32 %v1015, %v1017
    %1117 = vmax.xlane.f32.xlu0 %v1116
    %v1118 = vpop.xlane.xlu0 %1117
    %v1119 = vmax.f32 %v1021, %v1023
    %1120 = vmax.xlane.f32.xlu0 %v1119
    %v1121 = vpop.xlane.xlu0 %1120
    %v1122 = vmax.f32 %v1025, %v1027
    %1123 = vmax.xlane.f32.xlu0 %v1122
    %v1124 = vpop.xlane.xlu0 %1123
    %v1125 = vsub.f32 %v871, %v1031
    %v1126 = vsub.f32 %v873, %v1031
    %v1127 = vsub.f32 %v875, %v1034
    %v1128 = vsub.f32 %v877, %v1034
    %v1129 = vsub.f32 %v881, %v1037
    %v1130 = vsub.f32 %v883, %v1037
    %v1131 = vsub.f32 %v885, %v1040
    %v1132 = vsub.f32 %v887, %v1040
    %v1133 = vsub.f32 %v891, %v1043
    %v1134 = vsub.f32 %v893, %v1043
    %v1135 = vsub.f32 %v895, %v1046
    %v1136 = vsub.f32 %v897, %v1046
    %v1137 = vsub.f32 %v901, %v1049
    %v1138 = vsub.f32 %v903, %v1049
    %v1139 = vsub.f32 %v905, %v1052
    %v1140 = vsub.f32 %v907, %v1052
    %v1141 = vsub.f32 %v911, %v1055
    %v1142 = vsub.f32 %v913, %v1055
    %v1143 = vsub.f32 %v915, %v1058
    %v1144 = vsub.f32 %v917, %v1058
    %v1145 = vsub.f32 %v921, %v1061
    %v1146 = vsub.f32 %v923, %v1061
    %v1147 = vsub.f32 %v925, %v1064
    %v1148 = vsub.f32 %v927, %v1064
    %v1149 = vsub.f32 %v931, %v1067
    %v1150 = vsub.f32 %v933, %v1067
    %v1151 = vsub.f32 %v935, %v1070
    %v1152 = vsub.f32 %v937, %v1070
    %v1153 = vsub.f32 %v941, %v1073
    %v1154 = vsub.f32 %v943, %v1073
    %v1155 = vsub.f32 %v945, %v1076
    %v1156 = vsub.f32 %v947, %v1076
    %v1157 = vsub.f32 %v951, %v1079
    %v1158 = vsub.f32 %v953, %v1079
    %v1159 = vsub.f32 %v955, %v1082
    %v1160 = vsub.f32 %v957, %v1082
    %v1161 = vsub.f32 %v961, %v1085
    %v1162 = vsub.f32 %v963, %v1085
    %v1163 = vsub.f32 %v965, %v1088
    %v1164 = vsub.f32 %v967, %v1088
    %v1165 = vsub.f32 %v971, %v1091
    %v1166 = vsub.f32 %v973, %v1091
    %v1167 = vsub.f32 %v975, %v1094
    %v1168 = vsub.f32 %v977, %v1094
    %v1169 = vsub.f32 %v981, %v1097
    %v1170 = vsub.f32 %v983, %v1097
    %v1171 = vsub.f32 %v985, %v1100
    %v1172 = vsub.f32 %v987, %v1100
    %v1173 = vsub.f32 %v991, %v1103
    %v1174 = vsub.f32 %v993, %v1103
    %v1175 = vsub.f32 %v995, %v1106
    %v1176 = vsub.f32 %v997, %v1106
    %v1177 = vsub.f32 %v1001, %v1109
    %v1178 = vsub.f32 %v1003, %v1109
    %v1179 = vsub.f32 %v1005, %v1112
    %v1180 = vsub.f32 %v1007, %v1112
    %v1181 = vsub.f32 %v1011, %v1115
    %v1182 = vsub.f32 %v1013, %v1115
    %v1183 = vsub.f32 %v1015, %v1118
    %v1184 = vsub.f32 %v1017, %v1118
    %v1185 = vsub.f32 %v1021, %v1121
    %v1186 = vsub.f32 %v1023, %v1121
    %v1187 = vsub.f32 %v1025, %v1124
    %v1188 = vsub.f32 %v1027, %v1124
    %v1189 = vmul.f32 %v1125, 1.442695
    %v1190 = vpow.pop %v1189
    %v1191 = vmul.f32 %v1126, 1.442695
    %v1192 = vpow.pop %v1191
    %v1193 = vmul.f32 %v1127, 1.442695
    %v1194 = vpow.pop %v1193
    %v1195 = vmul.f32 %v1128, 1.442695
    %v1196 = vpow.pop %v1195
    %v1197 = vmul.f32 %v1129, 1.442695
    %v1198 = vpow.pop %v1197
    %v1199 = vmul.f32 %v1130, 1.442695
    %v1200 = vpow.pop %v1199
    %v1201 = vmul.f32 %v1131, 1.442695
    %v1202 = vpow.pop %v1201
    %v1203 = vmul.f32 %v1132, 1.442695
    %v1204 = vpow.pop %v1203
    %v1205 = vmul.f32 %v1133, 1.442695
    %v1206 = vpow.pop %v1205
    %v1207 = vmul.f32 %v1134, 1.442695
    %v1208 = vpow.pop %v1207
    %v1209 = vmul.f32 %v1135, 1.442695
    %v1210 = vpow.pop %v1209
    %v1211 = vmul.f32 %v1136, 1.442695
    %v1212 = vpow.pop %v1211
    %v1213 = vmul.f32 %v1137, 1.442695
    %v1214 = vpow.pop %v1213
    %v1215 = vmul.f32 %v1138, 1.442695
    %v1216 = vpow.pop %v1215
    %v1217 = vmul.f32 %v1139, 1.442695
    %v1218 = vpow.pop %v1217
    %v1219 = vmul.f32 %v1140, 1.442695
    %v1220 = vpow.pop %v1219
    %v1221 = vmul.f32 %v1141, 1.442695
    %v1222 = vpow.pop %v1221
    %v1223 = vmul.f32 %v1142, 1.442695
    %v1224 = vpow.pop %v1223
    %v1225 = vmul.f32 %v1143, 1.442695
    %v1226 = vpow.pop %v1225
    %v1227 = vmul.f32 %v1144, 1.442695
    %v1228 = vpow.pop %v1227
    %v1229 = vmul.f32 %v1145, 1.442695
    %v1230 = vpow.pop %v1229
    %v1231 = vmul.f32 %v1146, 1.442695
    %v1232 = vpow.pop %v1231
    %v1233 = vmul.f32 %v1147, 1.442695
    %v1234 = vpow.pop %v1233
    %v1235 = vmul.f32 %v1148, 1.442695
    %v1236 = vpow.pop %v1235
    %v1237 = vmul.f32 %v1149, 1.442695
    %v1238 = vpow.pop %v1237
    %v1239 = vmul.f32 %v1150, 1.442695
    %v1240 = vpow.pop %v1239
    %v1241 = vmul.f32 %v1151, 1.442695
    %v1242 = vpow.pop %v1241
    %v1243 = vmul.f32 %v1152, 1.442695
    %v1244 = vpow.pop %v1243
    %v1245 = vmul.f32 %v1153, 1.442695
    %v1246 = vpow.pop %v1245
    %v1247 = vmul.f32 %v1154, 1.442695
    %v1248 = vpow.pop %v1247
    %v1249 = vmul.f32 %v1155, 1.442695
    %v1250 = vpow.pop %v1249
    %v1251 = vmul.f32 %v1156, 1.442695
    %v1252 = vpow.pop %v1251
    %v1253 = vmul.f32 %v1157, 1.442695
    %v1254 = vpow.pop %v1253
    %v1255 = vmul.f32 %v1158, 1.442695
    %v1256 = vpow.pop %v1255
    %v1257 = vmul.f32 %v1159, 1.442695
    %v1258 = vpow.pop %v1257
    %v1259 = vmul.f32 %v1160, 1.442695
    %v1260 = vpow.pop %v1259
    %v1261 = vmul.f32 %v1161, 1.442695
    %v1262 = vpow.pop %v1261
    %v1263 = vmul.f32 %v1162, 1.442695
    %v1264 = vpow.pop %v1263
    %v1265 = vmul.f32 %v1163, 1.442695
    %v1266 = vpow.pop %v1265
    %v1267 = vmul.f32 %v1164, 1.442695
    %v1268 = vpow.pop %v1267
    %v1269 = vmul.f32 %v1165, 1.442695
    %v1270 = vpow.pop %v1269
    %v1271 = vmul.f32 %v1166, 1.442695
    %v1272 = vpow.pop %v1271
    %v1273 = vmul.f32 %v1167, 1.442695
    %v1274 = vpow.pop %v1273
    %v1275 = vmul.f32 %v1168, 1.442695
    %v1276 = vpow.pop %v1275
    %v1277 = vmul.f32 %v1169, 1.442695
    %v1278 = vpow.pop %v1277
    %v1279 = vmul.f32 %v1170, 1.442695
    %v1280 = vpow.pop %v1279
    %v1281 = vmul.f32 %v1171, 1.442695
    %v1282 = vpow.pop %v1281
    %v1283 = vmul.f32 %v1172, 1.442695
    %v1284 = vpow.pop %v1283
    %v1285 = vmul.f32 %v1173, 1.442695
    %v1286 = vpow.pop %v1285
    %v1287 = vmul.f32 %v1174, 1.442695
    %v1288 = vpow.pop %v1287
    %v1289 = vmul.f32 %v1175, 1.442695
    %v1290 = vpow.pop %v1289
    %v1291 = vmul.f32 %v1176, 1.442695
    %v1292 = vpow.pop %v1291
    %v1293 = vmul.f32 %v1177, 1.442695
    %v1294 = vpow.pop %v1293
    %v1295 = vmul.f32 %v1178, 1.442695
    %v1296 = vpow.pop %v1295
    %v1297 = vmul.f32 %v1179, 1.442695
    %v1298 = vpow.pop %v1297
    %v1299 = vmul.f32 %v1180, 1.442695
    %v1300 = vpow.pop %v1299
    %v1301 = vmul.f32 %v1181, 1.442695
    %v1302 = vpow.pop %v1301
    %v1303 = vmul.f32 %v1182, 1.442695
    %v1304 = vpow.pop %v1303
    %v1305 = vmul.f32 %v1183, 1.442695
    %v1306 = vpow.pop %v1305
    %v1307 = vmul.f32 %v1184, 1.442695
    %v1308 = vpow.pop %v1307
    %v1309 = vmul.f32 %v1185, 1.442695
    %v1310 = vpow.pop %v1309
    %v1311 = vmul.f32 %v1186, 1.442695
    %v1312 = vpow.pop %v1311
    %v1313 = vmul.f32 %v1187, 1.442695
    %v1314 = vpow.pop %v1313
    %v1315 = vmul.f32 %v1188, 1.442695
    %v1316 = vpow.pop %v1315
    %v1317 = vadd.f32 %v1190, %v1192
    %1318 = vadd.xlane.f32.xlu0 %v1317
    %v1319 = vpop.xlane.xlu0 %1318
    %v1320 = vadd.f32 %v1194, %v1196
    %1321 = vadd.xlane.f32.xlu0 %v1320
    %v1322 = vpop.xlane.xlu0 %1321
    %v1323 = vadd.f32 %v1198, %v1200
    %1324 = vadd.xlane.f32.xlu0 %v1323
    %v1325 = vpop.xlane.xlu0 %1324
    %v1326 = vadd.f32 %v1202, %v1204
    %1327 = vadd.xlane.f32.xlu0 %v1326
    %v1328 = vpop.xlane.xlu0 %1327
    %v1329 = vadd.f32 %v1206, %v1208
    %1330 = vadd.xlane.f32.xlu0 %v1329
    %v1331 = vpop.xlane.xlu0 %1330
    %v1332 = vadd.f32 %v1210, %v1212
    %1333 = vadd.xlane.f32.xlu0 %v1332
    %v1334 = vpop.xlane.xlu0 %1333
    %v1335 = vadd.f32 %v1214, %v1216
    %1336 = vadd.xlane.f32.xlu0 %v1335
    %v1337 = vpop.xlane.xlu0 %1336
    %v1338 = vadd.f32 %v1218, %v1220
    %1339 = vadd.xlane.f32.xlu0 %v1338
    %v1340 = vpop.xlane.xlu0 %1339
    %v1341 = vadd.f32 %v1222, %v1224
    %1342 = vadd.xlane.f32.xlu0 %v1341
    %v1343 = vpop.xlane.xlu0 %1342
    %v1344 = vadd.f32 %v1226, %v1228
    %1345 = vadd.xlane.f32.xlu0 %v1344
    %v1346 = vpop.xlane.xlu0 %1345
    %v1347 = vadd.f32 %v1230, %v1232
    %1348 = vadd.xlane.f32.xlu0 %v1347
    %v1349 = vpop.xlane.xlu0 %1348
    %v1350 = vadd.f32 %v1234, %v1236
    %1351 = vadd.xlane.f32.xlu0 %v1350
    %v1352 = vpop.xlane.xlu0 %1351
    %v1353 = vadd.f32 %v1238, %v1240
    %1354 = vadd.xlane.f32.xlu0 %v1353
    %v1355 = vpop.xlane.xlu0 %1354
    %v1356 = vadd.f32 %v1242, %v1244
    %1357 = vadd.xlane.f32.xlu0 %v1356
    %v1358 = vpop.xlane.xlu0 %1357
    %v1359 = vadd.f32 %v1246, %v1248
    %1360 = vadd.xlane.f32.xlu0 %v1359
    %v1361 = vpop.xlane.xlu0 %1360
    %v1362 = vadd.f32 %v1250, %v1252
    %1363 = vadd.xlane.f32.xlu0 %v1362
    %v1364 = vpop.xlane.xlu0 %1363
    %v1365 = vadd.f32 %v1254, %v1256
    %1366 = vadd.xlane.f32.xlu0 %v1365
    %v1367 = vpop.xlane.xlu0 %1366
    %v1368 = vadd.f32 %v1258, %v1260
    %1369 = vadd.xlane.f32.xlu0 %v1368
    %v1370 = vpop.xlane.xlu0 %1369
    %v1371 = vadd.f32 %v1262, %v1264
    %1372 = vadd.xlane.f32.xlu0 %v1371
    %v1373 = vpop.xlane.xlu0 %1372
    %v1374 = vadd.f32 %v1266, %v1268
    %1375 = vadd.xlane.f32.xlu0 %v1374
    %v1376 = vpop.xlane.xlu0 %1375
    %v1377 = vadd.f32 %v1270, %v1272
    %1378 = vadd.xlane.f32.xlu0 %v1377
    %v1379 = vpop.xlane.xlu0 %1378
    %v1380 = vadd.f32 %v1274, %v1276
    %1381 = vadd.xlane.f32.xlu0 %v1380
    %v1382 = vpop.xlane.xlu0 %1381
    %v1383 = vadd.f32 %v1278, %v1280
    %1384 = vadd.xlane.f32.xlu0 %v1383
    %v1385 = vpop.xlane.xlu0 %1384
    %v1386 = vadd.f32 %v1282, %v1284
    %1387 = vadd.xlane.f32.xlu0 %v1386
    %v1388 = vpop.xlane.xlu0 %1387
    %v1389 = vadd.f32 %v1286, %v1288
    %1390 = vadd.xlane.f32.xlu0 %v1389
    %v1391 = vpop.xlane.xlu0 %1390
    %v1392 = vadd.f32 %v1290, %v1292
    %1393 = vadd.xlane.f32.xlu0 %v1392
    %v1394 = vpop.xlane.xlu0 %1393
    %v1395 = vadd.f32 %v1294, %v1296
    %1396 = vadd.xlane.f32.xlu0 %v1395
    %v1397 = vpop.xlane.xlu0 %1396
    %v1398 = vadd.f32 %v1298, %v1300
    %1399 = vadd.xlane.f32.xlu0 %v1398
    %v1400 = vpop.xlane.xlu0 %1399
    %v1401 = vadd.f32 %v1302, %v1304
    %1402 = vadd.xlane.f32.xlu0 %v1401
    %v1403 = vpop.xlane.xlu0 %1402
    %v1404 = vadd.f32 %v1306, %v1308
    %1405 = vadd.xlane.f32.xlu0 %v1404
    %v1406 = vpop.xlane.xlu0 %1405
    %v1407 = vadd.f32 %v1310, %v1312
    %1408 = vadd.xlane.f32.xlu0 %v1407
    %v1409 = vpop.xlane.xlu0 %1408
    %v1410 = vadd.f32 %v1314, %v1316
    %1411 = vadd.xlane.f32.xlu0 %v1410
    %v1412 = vpop.xlane.xlu0 %1411
    %v1413 = vrcp.pop %v1319
    %v1414 = vrcp.pop %v1322
    %v1415 = vrcp.pop %v1325
    %v1416 = vrcp.pop %v1328
    %v1417 = vrcp.pop %v1331
    %v1418 = vrcp.pop %v1334
    %v1419 = vrcp.pop %v1337
    %v1420 = vrcp.pop %v1340
    %v1421 = vrcp.pop %v1343
    %v1422 = vrcp.pop %v1346
    %v1423 = vrcp.pop %v1349
    %v1424 = vrcp.pop %v1352
    %v1425 = vrcp.pop %v1355
    %v1426 = vrcp.pop %v1358
    %v1427 = vrcp.pop %v1361
    %v1428 = vrcp.pop %v1364
    %v1429 = vrcp.pop %v1367
    %v1430 = vrcp.pop %v1370
    %v1431 = vrcp.pop %v1373
    %v1432 = vrcp.pop %v1376
    %v1433 = vrcp.pop %v1379
    %v1434 = vrcp.pop %v1382
    %v1435 = vrcp.pop %v1385
    %v1436 = vrcp.pop %v1388
    %v1437 = vrcp.pop %v1391
    %v1438 = vrcp.pop %v1394
    %v1439 = vrcp.pop %v1397
    %v1440 = vrcp.pop %v1400
    %v1441 = vrcp.pop %v1403
    %v1442 = vrcp.pop %v1406
    %v1443 = vrcp.pop %v1409
    %v1444 = vrcp.pop %v1412
    %v1445 = vmul.f32 %v1190, %v1413
    %v1446 = vmul.f32 %v1192, %v1413
    %v1447 = vmul.f32 %v1194, %v1414
    %v1448 = vmul.f32 %v1196, %v1414
    %v1449 = vmul.f32 %v1198, %v1415
    %v1450 = vmul.f32 %v1200, %v1415
    %v1451 = vmul.f32 %v1202, %v1416
    %v1452 = vmul.f32 %v1204, %v1416
    %v1453 = vmul.f32 %v1206, %v1417
    %v1454 = vmul.f32 %v1208, %v1417
    %v1455 = vmul.f32 %v1210, %v1418
    %v1456 = vmul.f32 %v1212, %v1418
    %v1457 = vmul.f32 %v1214, %v1419
    %v1458 = vmul.f32 %v1216, %v1419
    %v1459 = vmul.f32 %v1218, %v1420
    %v1460 = vmul.f32 %v1220, %v1420
    %v1461 = vmul.f32 %v1222, %v1421
    %v1462 = vmul.f32 %v1224, %v1421
    %v1463 = vmul.f32 %v1226, %v1422
    %v1464 = vmul.f32 %v1228, %v1422
    %v1465 = vmul.f32 %v1230, %v1423
    %v1466 = vmul.f32 %v1232, %v1423
    %v1467 = vmul.f32 %v1234, %v1424
    %v1468 = vmul.f32 %v1236, %v1424
    %v1469 = vmul.f32 %v1238, %v1425
    %v1470 = vmul.f32 %v1240, %v1425
    %v1471 = vmul.f32 %v1242, %v1426
    %v1472 = vmul.f32 %v1244, %v1426
    %v1473 = vmul.f32 %v1246, %v1427
    %v1474 = vmul.f32 %v1248, %v1427
    %v1475 = vmul.f32 %v1250, %v1428
    %v1476 = vmul.f32 %v1252, %v1428
    %v1477 = vmul.f32 %v1254, %v1429
    %v1478 = vmul.f32 %v1256, %v1429
    %v1479 = vmul.f32 %v1258, %v1430
    %v1480 = vmul.f32 %v1260, %v1430
    %v1481 = vmul.f32 %v1262, %v1431
    %v1482 = vmul.f32 %v1264, %v1431
    %v1483 = vmul.f32 %v1266, %v1432
    %v1484 = vmul.f32 %v1268, %v1432
    %v1485 = vmul.f32 %v1270, %v1433
    %v1486 = vmul.f32 %v1272, %v1433
    %v1487 = vmul.f32 %v1274, %v1434
    %v1488 = vmul.f32 %v1276, %v1434
    %v1489 = vmul.f32 %v1278, %v1435
    %v1490 = vmul.f32 %v1280, %v1435
    %v1491 = vmul.f32 %v1282, %v1436
    %v1492 = vmul.f32 %v1284, %v1436
    %v1493 = vmul.f32 %v1286, %v1437
    %v1494 = vmul.f32 %v1288, %v1437
    %v1495 = vmul.f32 %v1290, %v1438
    %v1496 = vmul.f32 %v1292, %v1438
    %v1497 = vmul.f32 %v1294, %v1439
    %v1498 = vmul.f32 %v1296, %v1439
    %v1499 = vmul.f32 %v1298, %v1440
    %v1500 = vmul.f32 %v1300, %v1440
    %v1501 = vmul.f32 %v1302, %v1441
    %v1502 = vmul.f32 %v1304, %v1441
    %v1503 = vmul.f32 %v1306, %v1442
    %v1504 = vmul.f32 %v1308, %v1442
    %v1505 = vmul.f32 %v1310, %v1443
    %v1506 = vmul.f32 %v1312, %v1443
    %v1507 = vmul.f32 %v1314, %v1444
    %v1508 = vmul.f32 %v1316, %v1444
    %v1509 = vpack.c.bf16 %v1447, %v1445
    %v1510 = vpack.c.bf16 %v1448, %v1446
    %v1511 = vpack.c.bf16 %v1451, %v1449
    %v1512 = vpack.c.bf16 %v1452, %v1450
    %v1513 = vpack.c.bf16 %v1455, %v1453
    %v1514 = vpack.c.bf16 %v1456, %v1454
    %v1515 = vpack.c.bf16 %v1459, %v1457
    %v1516 = vpack.c.bf16 %v1460, %v1458
    %v1517 = vpack.c.bf16 %v1463, %v1461
    %v1518 = vpack.c.bf16 %v1464, %v1462
    %v1519 = vpack.c.bf16 %v1467, %v1465
    %v1520 = vpack.c.bf16 %v1468, %v1466
    %v1521 = vpack.c.bf16 %v1471, %v1469
    %v1522 = vpack.c.bf16 %v1472, %v1470
    %v1523 = vpack.c.bf16 %v1475, %v1473
    %v1524 = vpack.c.bf16 %v1476, %v1474
    %v1525 = vpack.c.bf16 %v1479, %v1477
    %v1526 = vpack.c.bf16 %v1480, %v1478
    %v1527 = vpack.c.bf16 %v1483, %v1481
    %v1528 = vpack.c.bf16 %v1484, %v1482
    %v1529 = vpack.c.bf16 %v1487, %v1485
    %v1530 = vpack.c.bf16 %v1488, %v1486
    %v1531 = vpack.c.bf16 %v1491, %v1489
    %v1532 = vpack.c.bf16 %v1492, %v1490
    %v1533 = vpack.c.bf16 %v1495, %v1493
    %v1534 = vpack.c.bf16 %v1496, %v1494
    %v1535 = vpack.c.bf16 %v1499, %v1497
    %v1536 = vpack.c.bf16 %v1500, %v1498
    %v1537 = vpack.c.bf16 %v1503, %v1501
    %v1538 = vpack.c.bf16 %v1504, %v1502
    %v1539 = vpack.c.bf16 %v1507, %v1505
    %v1540 = vpack.c.bf16 %v1508, %v1506
    %1541 = vmatprep.subr.bf16.mxu0 %v1524
    %1542 = vmatpush1.bf16.xpose.msra.mxu0 %v1523
    %1543 = vmatprep.subr.bf16.mxu0 %v1522
    %1544 = vmatpush1.bf16.xpose.msra.mxu0 %v1521
    %1545 = vmatprep.subr.bf16.mxu0 %v1520
    %1546 = vmatpush1.bf16.xpose.msra.mxu0 %v1519
    %1547 = vmatprep.subr.bf16.mxu0 %v1518
    %1548 = vmatpush1.bf16.xpose.msra.mxu0 %v1517
    %1549 = vmatprep.subr.bf16.mxu0 %v1516
    %1550 = vmatpush1.bf16.xpose.msra.mxu0 %v1515
    %1551 = vmatprep.subr.bf16.mxu0 %v1514
    %1552 = vmatpush1.bf16.xpose.msra.mxu0 %v1513
    %1553 = vmatprep.subr.bf16.mxu0 %v1512
    %1554 = vmatpush1.bf16.xpose.msra.mxu0 %v1511
    %1555 = vmatprep.subr.bf16.mxu0 %v1510
    %1556 = vmatpush1.bf16.xpose.msra.mxu0 %v1509
    %1557 = vmatprep.subr.bf16.mxu0 %v1540
    %1558 = vmatpush2.bf16.xpose.msra.mxu0 %v1539
    %1559 = vmatprep.subr.bf16.mxu0 %v1538
    %1560 = vmatpush2.bf16.xpose.msra.mxu0 %v1537
    %1561 = vmatprep.subr.bf16.mxu0 %v1536
    %1562 = vmatpush2.bf16.xpose.msra.mxu0 %v1535
    %1563 = vmatprep.subr.bf16.mxu0 %v1534
    %1564 = vmatpush2.bf16.xpose.msra.mxu0 %v1533
    %1565 = vmatprep.subr.bf16.mxu0 %v1532
    %1566 = vmatpush2.bf16.xpose.msra.mxu0 %v1531
    %1567 = vmatprep.subr.bf16.mxu0 %v1530
    %1568 = vmatpush2.bf16.xpose.msra.mxu0 %v1529
    %1569 = vmatprep.subr.bf16.mxu0 %v1528
    %1570 = vmatpush2.bf16.xpose.msra.mxu0 %v1527
    %1571 = vmatprep.subr.bf16.mxu0 %v1526
    %1572 = vmatpush2.bf16.xpose.msra.mxu0 %v1525
    %1573 = vmatprep.mubr.bf16.mxu0 %v748
    %1574 = vmatmul.mubr.bf16.gmra.mxu0 %v747
    %v1575 = vpop.f32.mrf.mxu0
    %v1576 = vadd.f32 0.0, %v1575
    %v1577 = vpop.f32.mrf.mxu0
    %v1578 = vadd.f32 0.0, %v1577
    %v1579 = vpop.f32.mrf.mxu0
    %v1580 = vpop.f32.mrf.mxu0
    %1581 = vdwg.mxu0
    %v1582 = vstv %s744
    %v1583 = vmul.f32 %v1582, %v1576
    %v1584 = vmul.f32 %v1582, %v1578
    %v1585 = vadd.f32 %v1583, %v59
    %v1586 = vadd.f32 %v1584, %v284
    %s1587 = sld [smem:[#allocation4 + $0x1]]
    %v1588 = vpack.c.bf16 %v685, %v685
    %v1589 = vpack.c.bf16 %v686, %v686
    %v1590 = vpack.c.bf16 %v740, %v740
    %v1591 = vpack.c.bf16 %v741, %v741
    %1592 = vxpose.xlu0.c.b16.start [1/8] %v1588, 128
    %1593 = vxpose.xlu0.c.b16.cont [2/8] 0, 128
    %1594 = vxpose.xlu0.c.b16.cont [3/8] 0, 128
    %1595 = vxpose.xlu0.c.b16.cont [4/8] 0, 128
    %1596 = vxpose.xlu0.c.b16.cont [5/8] 0, 128
    %1597 = vxpose.xlu0.c.b16.cont [6/8] 0, 128
    %1598 = vxpose.xlu0.c.b16.cont [7/8] 0, 128
    %1599 = vxpose.xlu0.c.b16.end [8/8] 0, 128
    %v1600 = vpop.trf.xlu0
    %v1601 = vpop.trf.xlu0
    %v1602 = vpop.trf.xlu0
    %v1603 = vpop.trf.xlu0
    %v1604 = vpop.trf.xlu0
    %v1605 = vpop.trf.xlu0
    %v1606 = vpop.trf.xlu0
    %v1607 = vpop.trf.xlu0
    %1608 = vxpose.xlu0.c.b16.start [1/8] %v1589, 128
    %1609 = vxpose.xlu0.c.b16.cont [2/8] 0, 128
    %1610 = vxpose.xlu0.c.b16.cont [3/8] 0, 128
    %1611 = vxpose.xlu0.c.b16.cont [4/8] 0, 128
    %1612 = vxpose.xlu0.c.b16.cont [5/8] 0, 128
    %1613 = vxpose.xlu0.c.b16.cont [6/8] 0, 128
    %1614 = vxpose.xlu0.c.b16.cont [7/8] 0, 128
    %1615 = vxpose.xlu0.c.b16.end [8/8] 0, 128
    %v1616 = vpop.trf.xlu0
    %v1617 = vpop.trf.xlu0
    %v1618 = vpop.trf.xlu0
    %v1619 = vpop.trf.xlu0
    %v1620 = vpop.trf.xlu0
    %v1621 = vpop.trf.xlu0
    %v1622 = vpop.trf.xlu0
    %v1623 = vpop.trf.xlu0
    %v1625 = vsel %vm781, %v1600, 0
    %v1628 = vsel %vm781, %v1601, 0
    %v1631 = vsel %vm781, %v1602, 0
    %v1634 = vsel %vm781, %v1603, 0
    %v1637 = vsel %vm781, %v1604, 0
    %v1640 = vsel %vm781, %v1605, 0
    %v1643 = vsel %vm781, %v1606, 0
    %v1646 = vsel %vm781, %v1607, 0
    %v1649 = vsel %vm781, %v1616, 0
    %v1652 = vsel %vm781, %v1617, 0
    %v1655 = vsel %vm781, %v1618, 0
    %v1658 = vsel %vm781, %v1619, 0
    %v1661 = vsel %vm781, %v1620, 0
    %v1664 = vsel %vm781, %v1621, 0
    %v1667 = vsel %vm781, %v1622, 0
    %v1670 = vsel %vm781, %v1623, 0
    %1672 = vmatprep.subr.bf16.mxu0 0
    %1673 = vmatpush1.bf16.msra.mxu0 0
    %1674 = vmatprep.subr.bf16.mxu0 0
    %1675 = vmatpush1.bf16.msra.mxu0 0
    %1676 = vmatprep.subr.bf16.mxu0 0
    %1677 = vmatpush1.bf16.msra.mxu0 0
    %1678 = vmatprep.subr.bf16.mxu0 0
    %1679 = vmatpush1.bf16.msra.mxu0 0
    %1680 = vmatprep.subr.bf16.mxu0 0
    %1681 = vmatpush1.bf16.msra.mxu0 0
    %1682 = vmatprep.subr.bf16.mxu0 0
    %1683 = vmatpush1.bf16.msra.mxu0 0
    %1684 = vmatprep.subr.bf16.mxu0 0
    %1685 = vmatpush1.bf16.msra.mxu0 0
    %1686 = vmatprep.subr.bf16.mxu0 %v834
    %1687 = vmatpush1.bf16.msra.mxu0 %v831
    %1688 = vmatprep.subr.bf16.mxu0 0
    %1689 = vmatpush2.bf16.msra.mxu0 0
    %1690 = vmatprep.subr.bf16.mxu0 0
    %1691 = vmatpush2.bf16.msra.mxu0 0
    %1692 = vmatprep.subr.bf16.mxu0 0
    %1693 = vmatpush2.bf16.msra.mxu0 0
    %1694 = vmatprep.subr.bf16.mxu0 0
    %1695 = vmatpush2.bf16.msra.mxu0 0
    %1696 = vmatprep.subr.bf16.mxu0 0
    %1697 = vmatpush2.bf16.msra.mxu0 0
    %1698 = vmatprep.subr.bf16.mxu0 0
    %1699 = vmatpush2.bf16.msra.mxu0 0
    %1700 = vmatprep.subr.bf16.mxu0 0
    %1701 = vmatpush2.bf16.msra.mxu0 0
    %1702 = vmatprep.subr.bf16.mxu0 0
    %1703 = vmatpush2.bf16.msra.mxu0 0
    %1704 = vmatprep.mubr.bf16.mxu0 0
    %1705 = vmatmul.mubr.bf16.gmra.mxu0 %v1625
    %v1706 = vpop.f32.mrf.mxu0
    %v1707 = vadd.f32 0.0, %v1706
    %v1708 = vpop.f32.mrf.mxu0
    %v1709 = vadd.f32 0.0, %v1708
    %v1710 = vpop.f32.mrf.mxu0
    %v1711 = vadd.f32 0.0, %v1710
    %v1712 = vpop.f32.mrf.mxu0
    %v1713 = vadd.f32 0.0, %v1712
    %1714 = vmatprep.mubr.bf16.mxu0 0
    %1715 = vmatmul.mubr.bf16.gmra.mxu0 %v1628
    %v1716 = vpop.f32.mrf.mxu0
    %v1717 = vadd.f32 0.0, %v1716
    %v1718 = vpop.f32.mrf.mxu0
    %v1719 = vadd.f32 0.0, %v1718
    %v1720 = vpop.f32.mrf.mxu0
    %v1721 = vadd.f32 0.0, %v1720
    %v1722 = vpop.f32.mrf.mxu0
    %v1723 = vadd.f32 0.0, %v1722
    %1724 = vmatprep.mubr.bf16.mxu0 0
    %1725 = vmatmul.mubr.bf16.gmra.mxu0 %v1631
    %v1726 = vpop.f32.mrf.mxu0
    %v1727 = vadd.f32 0.0, %v1726
    %v1728 = vpop.f32.mrf.mxu0
    %v1729 = vadd.f32 0.0, %v1728
    %v1730 = vpop.f32.mrf.mxu0
    %v1731 = vadd.f32 0.0, %v1730
    %v1732 = vpop.f32.mrf.mxu0
    %v1733 = vadd.f32 0.0, %v1732
    %1734 = vmatprep.mubr.bf16.mxu0 0
    %1735 = vmatmul.mubr.bf16.gmra.mxu0 %v1634
    %v1736 = vpop.f32.mrf.mxu0
    %v1737 = vadd.f32 0.0, %v1736
    %v1738 = vpop.f32.mrf.mxu0
    %v1739 = vadd.f32 0.0, %v1738
    %v1740 = vpop.f32.mrf.mxu0
    %v1741 = vadd.f32 0.0, %v1740
    %v1742 = vpop.f32.mrf.mxu0
    %v1743 = vadd.f32 0.0, %v1742
    %1744 = vmatprep.mubr.bf16.mxu0 0
    %1745 = vmatmul.mubr.bf16.gmra.mxu0 %v1637
    %v1746 = vpop.f32.mrf.mxu0
    %v1747 = vadd.f32 0.0, %v1746
    %v1748 = vpop.f32.mrf.mxu0
    %v1749 = vadd.f32 0.0, %v1748
    %v1750 = vpop.f32.mrf.mxu0
    %v1751 = vadd.f32 0.0, %v1750
    %v1752 = vpop.f32.mrf.mxu0
    %v1753 = vadd.f32 0.0, %v1752
    %1754 = vmatprep.mubr.bf16.mxu0 0
    %1755 = vmatmul.mubr.bf16.gmra.mxu0 %v1640
    %v1756 = vpop.f32.mrf.mxu0
    %v1757 = vadd.f32 0.0, %v1756
    %v1758 = vpop.f32.mrf.mxu0
    %v1759 = vadd.f32 0.0, %v1758
    %v1760 = vpop.f32.mrf.mxu0
    %v1761 = vadd.f32 0.0, %v1760
    %v1762 = vpop.f32.mrf.mxu0
    %v1763 = vadd.f32 0.0, %v1762
    %1764 = vmatprep.mubr.bf16.mxu0 0
    %1765 = vmatmul.mubr.bf16.gmra.mxu0 %v1643
    %v1766 = vpop.f32.mrf.mxu0
    %v1767 = vadd.f32 0.0, %v1766
    %v1768 = vpop.f32.mrf.mxu0
    %v1769 = vadd.f32 0.0, %v1768
    %v1770 = vpop.f32.mrf.mxu0
    %v1771 = vadd.f32 0.0, %v1770
    %v1772 = vpop.f32.mrf.mxu0
    %v1773 = vadd.f32 0.0, %v1772
    %1774 = vmatprep.mubr.bf16.mxu0 0
    %1775 = vmatmul.mubr.bf16.gmra.mxu0 %v1646
    %v1776 = vpop.f32.mrf.mxu0
    %v1777 = vadd.f32 0.0, %v1776
    %v1778 = vpop.f32.mrf.mxu0
    %v1779 = vadd.f32 0.0, %v1778
    %v1780 = vpop.f32.mrf.mxu0
    %v1781 = vadd.f32 0.0, %v1780
    %v1782 = vpop.f32.mrf.mxu0
    %v1783 = vadd.f32 0.0, %v1782
    %1784 = vmatprep.mubr.bf16.mxu0 0
    %1785 = vmatmul.mubr.bf16.gmra.mxu0 %v1649
    %v1786 = vpop.f32.mrf.mxu0
    %v1787 = vadd.f32 0.0, %v1786
    %v1788 = vpop.f32.mrf.mxu0
    %v1789 = vadd.f32 0.0, %v1788
    %v1790 = vpop.f32.mrf.mxu0
    %v1791 = vadd.f32 0.0, %v1790
    %v1792 = vpop.f32.mrf.mxu0
    %v1793 = vadd.f32 0.0, %v1792
    %1794 = vmatprep.mubr.bf16.mxu0 0
    %1795 = vmatmul.mubr.bf16.gmra.mxu0 %v1652
    %v1796 = vpop.f32.mrf.mxu0
    %v1797 = vadd.f32 0.0, %v1796
    %v1798 = vpop.f32.mrf.mxu0
    %v1799 = vadd.f32 0.0, %v1798
    %v1800 = vpop.f32.mrf.mxu0
    %v1801 = vadd.f32 0.0, %v1800
    %v1802 = vpop.f32.mrf.mxu0
    %v1803 = vadd.f32 0.0, %v1802
    %1804 = vmatprep.mubr.bf16.mxu0 0
    %1805 = vmatmul.mubr.bf16.gmra.mxu0 %v1655
    %v1806 = vpop.f32.mrf.mxu0
    %v1807 = vadd.f32 0.0, %v1806
    %v1808 = vpop.f32.mrf.mxu0
    %v1809 = vadd.f32 0.0, %v1808
    %v1810 = vpop.f32.mrf.mxu0
    %v1811 = vadd.f32 0.0, %v1810
    %v1812 = vpop.f32.mrf.mxu0
    %v1813 = vadd.f32 0.0, %v1812
    %1814 = vmatprep.mubr.bf16.mxu0 0
    %1815 = vmatmul.mubr.bf16.gmra.mxu0 %v1658
    %v1816 = vpop.f32.mrf.mxu0
    %v1817 = vadd.f32 0.0, %v1816
    %v1818 = vpop.f32.mrf.mxu0
    %v1819 = vadd.f32 0.0, %v1818
    %v1820 = vpop.f32.mrf.mxu0
    %v1821 = vadd.f32 0.0, %v1820
    %v1822 = vpop.f32.mrf.mxu0
    %v1823 = vadd.f32 0.0, %v1822
    %1824 = vmatprep.mubr.bf16.mxu0 0
    %1825 = vmatmul.mubr.bf16.gmra.mxu0 %v1661
    %v1826 = vpop.f32.mrf.mxu0
    %v1827 = vadd.f32 0.0, %v1826
    %v1828 = vpop.f32.mrf.mxu0
    %v1829 = vadd.f32 0.0, %v1828
    %v1830 = vpop.f32.mrf.mxu0
    %v1831 = vadd.f32 0.0, %v1830
    %v1832 = vpop.f32.mrf.mxu0
    %v1833 = vadd.f32 0.0, %v1832
    %1834 = vmatprep.mubr.bf16.mxu0 0
    %1835 = vmatmul.mubr.bf16.gmra.mxu0 %v1664
    %v1836 = vpop.f32.mrf.mxu0
    %v1837 = vadd.f32 0.0, %v1836
    %v1838 = vpop.f32.mrf.mxu0
    %v1839 = vadd.f32 0.0, %v1838
    %v1840 = vpop.f32.mrf.mxu0
    %v1841 = vadd.f32 0.0, %v1840
    %v1842 = vpop.f32.mrf.mxu0
    %v1843 = vadd.f32 0.0, %v1842
    %1844 = vmatprep.mubr.bf16.mxu0 0
    %1845 = vmatmul.mubr.bf16.gmra.mxu0 %v1667
    %v1846 = vpop.f32.mrf.mxu0
    %v1847 = vadd.f32 0.0, %v1846
    %v1848 = vpop.f32.mrf.mxu0
    %v1849 = vadd.f32 0.0, %v1848
    %v1850 = vpop.f32.mrf.mxu0
    %v1851 = vadd.f32 0.0, %v1850
    %v1852 = vpop.f32.mrf.mxu0
    %v1853 = vadd.f32 0.0, %v1852
    %1854 = vmatprep.mubr.bf16.mxu0 0
    %1855 = vmatmul.mubr.bf16.gmra.mxu0 %v1670
    %v1856 = vpop.f32.mrf.mxu0
    %v1857 = vadd.f32 0.0, %v1856
    %v1858 = vpop.f32.mrf.mxu0
    %v1859 = vadd.f32 0.0, %v1858
    %v1860 = vpop.f32.mrf.mxu0
    %v1861 = vadd.f32 0.0, %v1860
    %v1862 = vpop.f32.mrf.mxu0
    %v1863 = vadd.f32 0.0, %v1862
    %1864 = vdwg.mxu0
    %v1865 = vmax.f32 %v1707, %v1709
    %1866 = vmax.xlane.f32.xlu0 %v1865
    %v1867 = vpop.xlane.xlu0 %1866
    %v1868 = vmax.f32 %v1711, %v1713
    %1869 = vmax.xlane.f32.xlu0 %v1868
    %v1870 = vpop.xlane.xlu0 %1869
    %v1871 = vmax.f32 %v1717, %v1719
    %1872 = vmax.xlane.f32.xlu0 %v1871
    %v1873 = vpop.xlane.xlu0 %1872
    %v1874 = vmax.f32 %v1721, %v1723
    %1875 = vmax.xlane.f32.xlu0 %v1874
    %v1876 = vpop.xlane.xlu0 %1875
    %v1877 = vmax.f32 %v1727, %v1729
    %1878 = vmax.xlane.f32.xlu0 %v1877
    %v1879 = vpop.xlane.xlu0 %1878
    %v1880 = vmax.f32 %v1731, %v1733
    %1881 = vmax.xlane.f32.xlu0 %v1880
    %v1882 = vpop.xlane.xlu0 %1881
    %v1883 = vmax.f32 %v1737, %v1739
    %1884 = vmax.xlane.f32.xlu0 %v1883
    %v1885 = vpop.xlane.xlu0 %1884
    %v1886 = vmax.f32 %v1741, %v1743
    %1887 = vmax.xlane.f32.xlu0 %v1886
    %v1888 = vpop.xlane.xlu0 %1887
    %v1889 = vmax.f32 %v1747, %v1749
    %1890 = vmax.xlane.f32.xlu0 %v1889
    %v1891 = vpop.xlane.xlu0 %1890
    %v1892 = vmax.f32 %v1751, %v1753
    %1893 = vmax.xlane.f32.xlu0 %v1892
    %v1894 = vpop.xlane.xlu0 %1893
    %v1895 = vmax.f32 %v1757, %v1759
    %1896 = vmax.xlane.f32.xlu0 %v1895
    %v1897 = vpop.xlane.xlu0 %1896
    %v1898 = vmax.f32 %v1761, %v1763
    %1899 = vmax.xlane.f32.xlu0 %v1898
    %v1900 = vpop.xlane.xlu0 %1899
    %v1901 = vmax.f32 %v1767, %v1769
    %1902 = vmax.xlane.f32.xlu0 %v1901
    %v1903 = vpop.xlane.xlu0 %1902
    %v1904 = vmax.f32 %v1771, %v1773
    %1905 = vmax.xlane.f32.xlu0 %v1904
    %v1906 = vpop.xlane.xlu0 %1905
    %v1907 = vmax.f32 %v1777, %v1779
    %1908 = vmax.xlane.f32.xlu0 %v1907
    %v1909 = vpop.xlane.xlu0 %1908
    %v1910 = vmax.f32 %v1781, %v1783
    %1911 = vmax.xlane.f32.xlu0 %v1910
    %v1912 = vpop.xlane.xlu0 %1911
    %v1913 = vmax.f32 %v1787, %v1789
    %1914 = vmax.xlane.f32.xlu0 %v1913
    %v1915 = vpop.xlane.xlu0 %1914
    %v1916 = vmax.f32 %v1791, %v1793
    %1917 = vmax.xlane.f32.xlu0 %v1916
    %v1918 = vpop.xlane.xlu0 %1917
    %v1919 = vmax.f32 %v1797, %v1799
    %1920 = vmax.xlane.f32.xlu0 %v1919
    %v1921 = vpop.xlane.xlu0 %1920
    %v1922 = vmax.f32 %v1801, %v1803
    %1923 = vmax.xlane.f32.xlu0 %v1922
    %v1924 = vpop.xlane.xlu0 %1923
    %v1925 = vmax.f32 %v1807, %v1809
    %1926 = vmax.xlane.f32.xlu0 %v1925
    %v1927 = vpop.xlane.xlu0 %1926
    %v1928 = vmax.f32 %v1811, %v1813
    %1929 = vmax.xlane.f32.xlu0 %v1928
    %v1930 = vpop.xlane.xlu0 %1929
    %v1931 = vmax.f32 %v1817, %v1819
    %1932 = vmax.xlane.f32.xlu0 %v1931
    %v1933 = vpop.xlane.xlu0 %1932
    %v1934 = vmax.f32 %v1821, %v1823
    %1935 = vmax.xlane.f32.xlu0 %v1934
    %v1936 = vpop.xlane.xlu0 %1935
    %v1937 = vmax.f32 %v1827, %v1829
    %1938 = vmax.xlane.f32.xlu0 %v1937
    %v1939 = vpop.xlane.xlu0 %1938
    %v1940 = vmax.f32 %v1831, %v1833
    %1941 = vmax.xlane.f32.xlu0 %v1940
    %v1942 = vpop.xlane.xlu0 %1941
    %v1943 = vmax.f32 %v1837, %v1839
    %1944 = vmax.xlane.f32.xlu0 %v1943
    %v1945 = vpop.xlane.xlu0 %1944
    %v1946 = vmax.f32 %v1841, %v1843
    %1947 = vmax.xlane.f32.xlu0 %v1946
    %v1948 = vpop.xlane.xlu0 %1947
    %v1949 = vmax.f32 %v1847, %v1849
    %1950 = vmax.xlane.f32.xlu0 %v1949
    %v1951 = vpop.xlane.xlu0 %1950
    %v1952 = vmax.f32 %v1851, %v1853
    %1953 = vmax.xlane.f32.xlu0 %v1952
    %v1954 = vpop.xlane.xlu0 %1953
    %v1955 = vmax.f32 %v1857, %v1859
    %1956 = vmax.xlane.f32.xlu0 %v1955
    %v1957 = vpop.xlane.xlu0 %1956
    %v1958 = vmax.f32 %v1861, %v1863
    %1959 = vmax.xlane.f32.xlu0 %v1958
    %v1960 = vpop.xlane.xlu0 %1959
    %v1961 = vsub.f32 %v1707, %v1867
    %v1962 = vsub.f32 %v1709, %v1867
    %v1963 = vsub.f32 %v1711, %v1870
    %v1964 = vsub.f32 %v1713, %v1870
    %v1965 = vsub.f32 %v1717, %v1873
    %v1966 = vsub.f32 %v1719, %v1873
    %v1967 = vsub.f32 %v1721, %v1876
    %v1968 = vsub.f32 %v1723, %v1876
    %v1969 = vsub.f32 %v1727, %v1879
    %v1970 = vsub.f32 %v1729, %v1879
    %v1971 = vsub.f32 %v1731, %v1882
    %v1972 = vsub.f32 %v1733, %v1882
    %v1973 = vsub.f32 %v1737, %v1885
    %v1974 = vsub.f32 %v1739, %v1885
    %v1975 = vsub.f32 %v1741, %v1888
    %v1976 = vsub.f32 %v1743, %v1888
    %v1977 = vsub.f32 %v1747, %v1891
    %v1978 = vsub.f32 %v1749, %v1891
    %v1979 = vsub.f32 %v1751, %v1894
    %v1980 = vsub.f32 %v1753, %v1894
    %v1981 = vsub.f32 %v1757, %v1897
    %v1982 = vsub.f32 %v1759, %v1897
    %v1983 = vsub.f32 %v1761, %v1900
    %v1984 = vsub.f32 %v1763, %v1900
    %v1985 = vsub.f32 %v1767, %v1903
    %v1986 = vsub.f32 %v1769, %v1903
    %v1987 = vsub.f32 %v1771, %v1906
    %v1988 = vsub.f32 %v1773, %v1906
    %v1989 = vsub.f32 %v1777, %v1909
    %v1990 = vsub.f32 %v1779, %v1909
    %v1991 = vsub.f32 %v1781, %v1912
    %v1992 = vsub.f32 %v1783, %v1912
    %v1993 = vsub.f32 %v1787, %v1915
    %v1994 = vsub.f32 %v1789, %v1915
    %v1995 = vsub.f32 %v1791, %v1918
    %v1996 = vsub.f32 %v1793, %v1918
    %v1997 = vsub.f32 %v1797, %v1921
    %v1998 = vsub.f32 %v1799, %v1921
    %v1999 = vsub.f32 %v1801, %v1924
    %v2000 = vsub.f32 %v1803, %v1924
    %v2001 = vsub.f32 %v1807, %v1927
    %v2002 = vsub.f32 %v1809, %v1927
    %v2003 = vsub.f32 %v1811, %v1930
    %v2004 = vsub.f32 %v1813, %v1930
    %v2005 = vsub.f32 %v1817, %v1933
    %v2006 = vsub.f32 %v1819, %v1933
    %v2007 = vsub.f32 %v1821, %v1936
    %v2008 = vsub.f32 %v1823, %v1936
    %v2009 = vsub.f32 %v1827, %v1939
    %v2010 = vsub.f32 %v1829, %v1939
    %v2011 = vsub.f32 %v1831, %v1942
    %v2012 = vsub.f32 %v1833, %v1942
    %v2013 = vsub.f32 %v1837, %v1945
    %v2014 = vsub.f32 %v1839, %v1945
    %v2015 = vsub.f32 %v1841, %v1948
    %v2016 = vsub.f32 %v1843, %v1948
    %v2017 = vsub.f32 %v1847, %v1951
    %v2018 = vsub.f32 %v1849, %v1951
    %v2019 = vsub.f32 %v1851, %v1954
    %v2020 = vsub.f32 %v1853, %v1954
    %v2021 = vsub.f32 %v1857, %v1957
    %v2022 = vsub.f32 %v1859, %v1957
    %v2023 = vsub.f32 %v1861, %v1960
    %v2024 = vsub.f32 %v1863, %v1960
    %v2025 = vmul.f32 %v1961, 1.442695
    %v2026 = vpow.pop %v2025
    %v2027 = vmul.f32 %v1962, 1.442695
    %v2028 = vpow.pop %v2027
    %v2029 = vmul.f32 %v1963, 1.442695
    %v2030 = vpow.pop %v2029
    %v2031 = vmul.f32 %v1964, 1.442695
    %v2032 = vpow.pop %v2031
    %v2033 = vmul.f32 %v1965, 1.442695
    %v2034 = vpow.pop %v2033
    %v2035 = vmul.f32 %v1966, 1.442695
    %v2036 = vpow.pop %v2035
    %v2037 = vmul.f32 %v1967, 1.442695
    %v2038 = vpow.pop %v2037
    %v2039 = vmul.f32 %v1968, 1.442695
    %v2040 = vpow.pop %v2039
    %v2041 = vmul.f32 %v1969, 1.442695
    %v2042 = vpow.pop %v2041
    %v2043 = vmul.f32 %v1970, 1.442695
    %v2044 = vpow.pop %v2043
    %v2045 = vmul.f32 %v1971, 1.442695
    %v2046 = vpow.pop %v2045
    %v2047 = vmul.f32 %v1972, 1.442695
    %v2048 = vpow.pop %v2047
    %v2049 = vmul.f32 %v1973, 1.442695
    %v2050 = vpow.pop %v2049
    %v2051 = vmul.f32 %v1974, 1.442695
    %v2052 = vpow.pop %v2051
    %v2053 = vmul.f32 %v1975, 1.442695
    %v2054 = vpow.pop %v2053
    %v2055 = vmul.f32 %v1976, 1.442695
    %v2056 = vpow.pop %v2055
    %v2057 = vmul.f32 %v1977, 1.442695
    %v2058 = vpow.pop %v2057
    %v2059 = vmul.f32 %v1978, 1.442695
    %v2060 = vpow.pop %v2059
    %v2061 = vmul.f32 %v1979, 1.442695
    %v2062 = vpow.pop %v2061
    %v2063 = vmul.f32 %v1980, 1.442695
    %v2064 = vpow.pop %v2063
    %v2065 = vmul.f32 %v1981, 1.442695
    %v2066 = vpow.pop %v2065
    %v2067 = vmul.f32 %v1982, 1.442695
    %v2068 = vpow.pop %v2067
    %v2069 = vmul.f32 %v1983, 1.442695
    %v2070 = vpow.pop %v2069
    %v2071 = vmul.f32 %v1984, 1.442695
    %v2072 = vpow.pop %v2071
    %v2073 = vmul.f32 %v1985, 1.442695
    %v2074 = vpow.pop %v2073
    %v2075 = vmul.f32 %v1986, 1.442695
    %v2076 = vpow.pop %v2075
    %v2077 = vmul.f32 %v1987, 1.442695
    %v2078 = vpow.pop %v2077
    %v2079 = vmul.f32 %v1988, 1.442695
    %v2080 = vpow.pop %v2079
    %v2081 = vmul.f32 %v1989, 1.442695
    %v2082 = vpow.pop %v2081
    %v2083 = vmul.f32 %v1990, 1.442695
    %v2084 = vpow.pop %v2083
    %v2085 = vmul.f32 %v1991, 1.442695
    %v2086 = vpow.pop %v2085
    %v2087 = vmul.f32 %v1992, 1.442695
    %v2088 = vpow.pop %v2087
    %v2089 = vmul.f32 %v1993, 1.442695
    %v2090 = vpow.pop %v2089
    %v2091 = vmul.f32 %v1994, 1.442695
    %v2092 = vpow.pop %v2091
    %v2093 = vmul.f32 %v1995, 1.442695
    %v2094 = vpow.pop %v2093
    %v2095 = vmul.f32 %v1996, 1.442695
    %v2096 = vpow.pop %v2095
    %v2097 = vmul.f32 %v1997, 1.442695
    %v2098 = vpow.pop %v2097
    %v2099 = vmul.f32 %v1998, 1.442695
    %v2100 = vpow.pop %v2099
    %v2101 = vmul.f32 %v1999, 1.442695
    %v2102 = vpow.pop %v2101
    %v2103 = vmul.f32 %v2000, 1.442695
    %v2104 = vpow.pop %v2103
    %v2105 = vmul.f32 %v2001, 1.442695
    %v2106 = vpow.pop %v2105
    %v2107 = vmul.f32 %v2002, 1.442695
    %v2108 = vpow.pop %v2107
    %v2109 = vmul.f32 %v2003, 1.442695
    %v2110 = vpow.pop %v2109
    %v2111 = vmul.f32 %v2004, 1.442695
    %v2112 = vpow.pop %v2111
    %v2113 = vmul.f32 %v2005, 1.442695
    %v2114 = vpow.pop %v2113
    %v2115 = vmul.f32 %v2006, 1.442695
    %v2116 = vpow.pop %v2115
    %v2117 = vmul.f32 %v2007, 1.442695
    %v2118 = vpow.pop %v2117
    %v2119 = vmul.f32 %v2008, 1.442695
    %v2120 = vpow.pop %v2119
    %v2121 = vmul.f32 %v2009, 1.442695
    %v2122 = vpow.pop %v2121
    %v2123 = vmul.f32 %v2010, 1.442695
    %v2124 = vpow.pop %v2123
    %v2125 = vmul.f32 %v2011, 1.442695
    %v2126 = vpow.pop %v2125
    %v2127 = vmul.f32 %v2012, 1.442695
    %v2128 = vpow.pop %v2127
    %v2129 = vmul.f32 %v2013, 1.442695
    %v2130 = vpow.pop %v2129
    %v2131 = vmul.f32 %v2014, 1.442695
    %v2132 = vpow.pop %v2131
    %v2133 = vmul.f32 %v2015, 1.442695
    %v2134 = vpow.pop %v2133
    %v2135 = vmul.f32 %v2016, 1.442695
    %v2136 = vpow.pop %v2135
    %v2137 = vmul.f32 %v2017, 1.442695
    %v2138 = vpow.pop %v2137
    %v2139 = vmul.f32 %v2018, 1.442695
    %v2140 = vpow.pop %v2139
    %v2141 = vmul.f32 %v2019, 1.442695
    %v2142 = vpow.pop %v2141
    %v2143 = vmul.f32 %v2020, 1.442695
    %v2144 = vpow.pop %v2143
    %v2145 = vmul.f32 %v2021, 1.442695
    %v2146 = vpow.pop %v2145
    %v2147 = vmul.f32 %v2022, 1.442695
    %v2148 = vpow.pop %v2147
    %v2149 = vmul.f32 %v2023, 1.442695
    %v2150 = vpow.pop %v2149
    %v2151 = vmul.f32 %v2024, 1.442695
    %v2152 = vpow.pop %v2151
    %v2153 = vadd.f32 %v2026, %v2028
    %2154 = vadd.xlane.f32.xlu0 %v2153
    %v2155 = vpop.xlane.xlu0 %2154
    %v2156 = vadd.f32 %v2030, %v2032
    %2157 = vadd.xlane.f32.xlu0 %v2156
    %v2158 = vpop.xlane.xlu0 %2157
    %v2159 = vadd.f32 %v2034, %v2036
    %2160 = vadd.xlane.f32.xlu0 %v2159
    %v2161 = vpop.xlane.xlu0 %2160
    %v2162 = vadd.f32 %v2038, %v2040
    %2163 = vadd.xlane.f32.xlu0 %v2162
    %v2164 = vpop.xlane.xlu0 %2163
    %v2165 = vadd.f32 %v2042, %v2044
    %2166 = vadd.xlane.f32.xlu0 %v2165
    %v2167 = vpop.xlane.xlu0 %2166
    %v2168 = vadd.f32 %v2046, %v2048
    %2169 = vadd.xlane.f32.xlu0 %v2168
    %v2170 = vpop.xlane.xlu0 %2169
    %v2171 = vadd.f32 %v2050, %v2052
    %2172 = vadd.xlane.f32.xlu0 %v2171
    %v2173 = vpop.xlane.xlu0 %2172
    %v2174 = vadd.f32 %v2054, %v2056
    %2175 = vadd.xlane.f32.xlu0 %v2174
    %v2176 = vpop.xlane.xlu0 %2175
    %v2177 = vadd.f32 %v2058, %v2060
    %2178 = vadd.xlane.f32.xlu0 %v2177
    %v2179 = vpop.xlane.xlu0 %2178
    %v2180 = vadd.f32 %v2062, %v2064
    %2181 = vadd.xlane.f32.xlu0 %v2180
    %v2182 = vpop.xlane.xlu0 %2181
    %v2183 = vadd.f32 %v2066, %v2068
    %2184 = vadd.xlane.f32.xlu0 %v2183
    %v2185 = vpop.xlane.xlu0 %2184
    %v2186 = vadd.f32 %v2070, %v2072
    %2187 = vadd.xlane.f32.xlu0 %v2186
    %v2188 = vpop.xlane.xlu0 %2187
    %v2189 = vadd.f32 %v2074, %v2076
    %2190 = vadd.xlane.f32.xlu0 %v2189
    %v2191 = vpop.xlane.xlu0 %2190
    %v2192 = vadd.f32 %v2078, %v2080
    %2193 = vadd.xlane.f32.xlu0 %v2192
    %v2194 = vpop.xlane.xlu0 %2193
    %v2195 = vadd.f32 %v2082, %v2084
    %2196 = vadd.xlane.f32.xlu0 %v2195
    %v2197 = vpop.xlane.xlu0 %2196
    %v2198 = vadd.f32 %v2086, %v2088
    %2199 = vadd.xlane.f32.xlu0 %v2198
    %v2200 = vpop.xlane.xlu0 %2199
    %v2201 = vadd.f32 %v2090, %v2092
    %2202 = vadd.xlane.f32.xlu0 %v2201
    %v2203 = vpop.xlane.xlu0 %2202
    %v2204 = vadd.f32 %v2094, %v2096
    %2205 = vadd.xlane.f32.xlu0 %v2204
    %v2206 = vpop.xlane.xlu0 %2205
    %v2207 = vadd.f32 %v2098, %v2100
    %2208 = vadd.xlane.f32.xlu0 %v2207
    %v2209 = vpop.xlane.xlu0 %2208
    %v2210 = vadd.f32 %v2102, %v2104
    %2211 = vadd.xlane.f32.xlu0 %v2210
    %v2212 = vpop.xlane.xlu0 %2211
    %v2213 = vadd.f32 %v2106, %v2108
    %2214 = vadd.xlane.f32.xlu0 %v2213
    %v2215 = vpop.xlane.xlu0 %2214
    %v2216 = vadd.f32 %v2110, %v2112
    %2217 = vadd.xlane.f32.xlu0 %v2216
    %v2218 = vpop.xlane.xlu0 %2217
    %v2219 = vadd.f32 %v2114, %v2116
    %2220 = vadd.xlane.f32.xlu0 %v2219
    %v2221 = vpop.xlane.xlu0 %2220
    %v2222 = vadd.f32 %v2118, %v2120
    %2223 = vadd.xlane.f32.xlu0 %v2222
    %v2224 = vpop.xlane.xlu0 %2223
    %v2225 = vadd.f32 %v2122, %v2124
    %2226 = vadd.xlane.f32.xlu0 %v2225
    %v2227 = vpop.xlane.xlu0 %2226
    %v2228 = vadd.f32 %v2126, %v2128
    %2229 = vadd.xlane.f32.xlu0 %v2228
    %v2230 = vpop.xlane.xlu0 %2229
    %v2231 = vadd.f32 %v2130, %v2132
    %2232 = vadd.xlane.f32.xlu0 %v2231
    %v2233 = vpop.xlane.xlu0 %2232
    %v2234 = vadd.f32 %v2134, %v2136
    %2235 = vadd.xlane.f32.xlu0 %v2234
    %v2236 = vpop.xlane.xlu0 %2235
    %v2237 = vadd.f32 %v2138, %v2140
    %2238 = vadd.xlane.f32.xlu0 %v2237
    %v2239 = vpop.xlane.xlu0 %2238
    %v2240 = vadd.f32 %v2142, %v2144
    %2241 = vadd.xlane.f32.xlu0 %v2240
    %v2242 = vpop.xlane.xlu0 %2241
    %v2243 = vadd.f32 %v2146, %v2148
    %2244 = vadd.xlane.f32.xlu0 %v2243
    %v2245 = vpop.xlane.xlu0 %2244
    %v2246 = vadd.f32 %v2150, %v2152
    %2247 = vadd.xlane.f32.xlu0 %v2246
    %v2248 = vpop.xlane.xlu0 %2247
    %v2249 = vrcp.pop %v2155
    %v2250 = vrcp.pop %v2158
    %v2251 = vrcp.pop %v2161
    %v2252 = vrcp.pop %v2164
    %v2253 = vrcp.pop %v2167
    %v2254 = vrcp.pop %v2170
    %v2255 = vrcp.pop %v2173
    %v2256 = vrcp.pop %v2176
    %v2257 = vrcp.pop %v2179
    %v2258 = vrcp.pop %v2182
    %v2259 = vrcp.pop %v2185
    %v2260 = vrcp.pop %v2188
    %v2261 = vrcp.pop %v2191
    %v2262 = vrcp.pop %v2194
    %v2263 = vrcp.pop %v2197
    %v2264 = vrcp.pop %v2200
    %v2265 = vrcp.pop %v2203
    %v2266 = vrcp.pop %v2206
    %v2267 = vrcp.pop %v2209
    %v2268 = vrcp.pop %v2212
    %v2269 = vrcp.pop %v2215
    %v2270 = vrcp.pop %v2218
    %v2271 = vrcp.pop %v2221
    %v2272 = vrcp.pop %v2224
    %v2273 = vrcp.pop %v2227
    %v2274 = vrcp.pop %v2230
    %v2275 = vrcp.pop %v2233
    %v2276 = vrcp.pop %v2236
    %v2277 = vrcp.pop %v2239
    %v2278 = vrcp.pop %v2242
    %v2279 = vrcp.pop %v2245
    %v2280 = vrcp.pop %v2248
    %v2281 = vmul.f32 %v2026, %v2249
    %v2282 = vmul.f32 %v2028, %v2249
    %v2283 = vmul.f32 %v2030, %v2250
    %v2284 = vmul.f32 %v2032, %v2250
    %v2285 = vmul.f32 %v2034, %v2251
    %v2286 = vmul.f32 %v2036, %v2251
    %v2287 = vmul.f32 %v2038, %v2252
    %v2288 = vmul.f32 %v2040, %v2252
    %v2289 = vmul.f32 %v2042, %v2253
    %v2290 = vmul.f32 %v2044, %v2253
    %v2291 = vmul.f32 %v2046, %v2254
    %v2292 = vmul.f32 %v2048, %v2254
    %v2293 = vmul.f32 %v2050, %v2255
    %v2294 = vmul.f32 %v2052, %v2255
    %v2295 = vmul.f32 %v2054, %v2256
    %v2296 = vmul.f32 %v2056, %v2256
    %v2297 = vmul.f32 %v2058, %v2257
    %v2298 = vmul.f32 %v2060, %v2257
    %v2299 = vmul.f32 %v2062, %v2258
    %v2300 = vmul.f32 %v2064, %v2258
    %v2301 = vmul.f32 %v2066, %v2259
    %v2302 = vmul.f32 %v2068, %v2259
    %v2303 = vmul.f32 %v2070, %v2260
    %v2304 = vmul.f32 %v2072, %v2260
    %v2305 = vmul.f32 %v2074, %v2261
    %v2306 = vmul.f32 %v2076, %v2261
    %v2307 = vmul.f32 %v2078, %v2262
    %v2308 = vmul.f32 %v2080, %v2262
    %v2309 = vmul.f32 %v2082, %v2263
    %v2310 = vmul.f32 %v2084, %v2263
    %v2311 = vmul.f32 %v2086, %v2264
    %v2312 = vmul.f32 %v2088, %v2264
    %v2313 = vmul.f32 %v2090, %v2265
    %v2314 = vmul.f32 %v2092, %v2265
    %v2315 = vmul.f32 %v2094, %v2266
    %v2316 = vmul.f32 %v2096, %v2266
    %v2317 = vmul.f32 %v2098, %v2267
    %v2318 = vmul.f32 %v2100, %v2267
    %v2319 = vmul.f32 %v2102, %v2268
    %v2320 = vmul.f32 %v2104, %v2268
    %v2321 = vmul.f32 %v2106, %v2269
    %v2322 = vmul.f32 %v2108, %v2269
    %v2323 = vmul.f32 %v2110, %v2270
    %v2324 = vmul.f32 %v2112, %v2270
    %v2325 = vmul.f32 %v2114, %v2271
    %v2326 = vmul.f32 %v2116, %v2271
    %v2327 = vmul.f32 %v2118, %v2272
    %v2328 = vmul.f32 %v2120, %v2272
    %v2329 = vmul.f32 %v2122, %v2273
    %v2330 = vmul.f32 %v2124, %v2273
    %v2331 = vmul.f32 %v2126, %v2274
    %v2332 = vmul.f32 %v2128, %v2274
    %v2333 = vmul.f32 %v2130, %v2275
    %v2334 = vmul.f32 %v2132, %v2275
    %v2335 = vmul.f32 %v2134, %v2276
    %v2336 = vmul.f32 %v2136, %v2276
    %v2337 = vmul.f32 %v2138, %v2277
    %v2338 = vmul.f32 %v2140, %v2277
    %v2339 = vmul.f32 %v2142, %v2278
    %v2340 = vmul.f32 %v2144, %v2278
    %v2341 = vmul.f32 %v2146, %v2279
    %v2342 = vmul.f32 %v2148, %v2279
    %v2343 = vmul.f32 %v2150, %v2280
    %v2344 = vmul.f32 %v2152, %v2280
    %v2345 = vpack.c.bf16 %v2283, %v2281
    %v2346 = vpack.c.bf16 %v2284, %v2282
    %v2347 = vpack.c.bf16 %v2287, %v2285
    %v2348 = vpack.c.bf16 %v2288, %v2286
    %v2349 = vpack.c.bf16 %v2291, %v2289
    %v2350 = vpack.c.bf16 %v2292, %v2290
    %v2351 = vpack.c.bf16 %v2295, %v2293
    %v2352 = vpack.c.bf16 %v2296, %v2294
    %v2353 = vpack.c.bf16 %v2299, %v2297
    %v2354 = vpack.c.bf16 %v2300, %v2298
    %v2355 = vpack.c.bf16 %v2303, %v2301
    %v2356 = vpack.c.bf16 %v2304, %v2302
    %v2357 = vpack.c.bf16 %v2307, %v2305
    %v2358 = vpack.c.bf16 %v2308, %v2306
    %v2359 = vpack.c.bf16 %v2311, %v2309
    %v2360 = vpack.c.bf16 %v2312, %v2310
    %v2361 = vpack.c.bf16 %v2315, %v2313
    %v2362 = vpack.c.bf16 %v2316, %v2314
    %v2363 = vpack.c.bf16 %v2319, %v2317
    %v2364 = vpack.c.bf16 %v2320, %v2318
    %v2365 = vpack.c.bf16 %v2323, %v2321
    %v2366 = vpack.c.bf16 %v2324, %v2322
    %v2367 = vpack.c.bf16 %v2327, %v2325
    %v2368 = vpack.c.bf16 %v2328, %v2326
    %v2369 = vpack.c.bf16 %v2331, %v2329
    %v2370 = vpack.c.bf16 %v2332, %v2330
    %v2371 = vpack.c.bf16 %v2335, %v2333
    %v2372 = vpack.c.bf16 %v2336, %v2334
    %v2373 = vpack.c.bf16 %v2339, %v2337
    %v2374 = vpack.c.bf16 %v2340, %v2338
    %v2375 = vpack.c.bf16 %v2343, %v2341
    %v2376 = vpack.c.bf16 %v2344, %v2342
    %2377 = vmatprep.subr.bf16.mxu0 %v2360
    %2378 = vmatpush1.bf16.xpose.msra.mxu0 %v2359
    %2379 = vmatprep.subr.bf16.mxu0 %v2358
    %2380 = vmatpush1.bf16.xpose.msra.mxu0 %v2357
    %2381 = vmatprep.subr.bf16.mxu0 %v2356
    %2382 = vmatpush1.bf16.xpose.msra.mxu0 %v2355
    %2383 = vmatprep.subr.bf16.mxu0 %v2354
    %2384 = vmatpush1.bf16.xpose.msra.mxu0 %v2353
    %2385 = vmatprep.subr.bf16.mxu0 %v2352
    %2386 = vmatpush1.bf16.xpose.msra.mxu0 %v2351
    %2387 = vmatprep.subr.bf16.mxu0 %v2350
    %2388 = vmatpush1.bf16.xpose.msra.mxu0 %v2349
    %2389 = vmatprep.subr.bf16.mxu0 %v2348
    %2390 = vmatpush1.bf16.xpose.msra.mxu0 %v2347
    %2391 = vmatprep.subr.bf16.mxu0 %v2346
    %2392 = vmatpush1.bf16.xpose.msra.mxu0 %v2345
    %2393 = vmatprep.subr.bf16.mxu0 %v2376
    %2394 = vmatpush2.bf16.xpose.msra.mxu0 %v2375
    %2395 = vmatprep.subr.bf16.mxu0 %v2374
    %2396 = vmatpush2.bf16.xpose.msra.mxu0 %v2373
    %2397 = vmatprep.subr.bf16.mxu0 %v2372
    %2398 = vmatpush2.bf16.xpose.msra.mxu0 %v2371
    %2399 = vmatprep.subr.bf16.mxu0 %v2370
    %2400 = vmatpush2.bf16.xpose.msra.mxu0 %v2369
    %2401 = vmatprep.subr.bf16.mxu0 %v2368
    %2402 = vmatpush2.bf16.xpose.msra.mxu0 %v2367
    %2403 = vmatprep.subr.bf16.mxu0 %v2366
    %2404 = vmatpush2.bf16.xpose.msra.mxu0 %v2365
    %2405 = vmatprep.subr.bf16.mxu0 %v2364
    %2406 = vmatpush2.bf16.xpose.msra.mxu0 %v2363
    %2407 = vmatprep.subr.bf16.mxu0 %v2362
    %2408 = vmatpush2.bf16.xpose.msra.mxu0 %v2361
    %2409 = vmatprep.mubr.bf16.mxu0 %v1591
    %2410 = vmatmul.mubr.bf16.gmra.mxu0 %v1590
    %v2411 = vpop.f32.mrf.mxu0
    %v2412 = vadd.f32 0.0, %v2411
    %v2413 = vpop.f32.mrf.mxu0
    %v2414 = vadd.f32 0.0, %v2413
    %v2415 = vpop.f32.mrf.mxu0
    %v2416 = vpop.f32.mrf.mxu0
    %2417 = vdwg.mxu0
    %v2418 = vstv %s1587
    %v2419 = vmul.f32 %v2418, %v2412
    %v2420 = vmul.f32 %v2418, %v2414
    %v2421 = vadd.f32 %v2419, %v58
    %v2422 = vadd.f32 %v2420, %v61
    %2423 = vrot.lane.b32.xlu0 %v1585, 17
    %v2424 = vpop.permute.xlu0 %2423
    %2425 = vrot.lane.b32.xlu0 %v1586, 17
    %v2426 = vpop.permute.xlu0 %2425
    %v2427 = vsel %vm69, %v2424, %v2426
    %v2428 = vsel %vm69, %v2426, %v2424
    %v2429 = vmul.f32 %v2428, %v76
    %v2430 = vmul.f32 %v2427, %v80
    %2431 = vst [vmem:[#allocation2] sm:$0xf] %v2429
    %2432 = vst [vmem:[#allocation2 + $0x8] sm:$0xf] %v2430
    %2433 = vrot.lane.b32.xlu0 %v1585, 16
    %v2434 = vpop.permute.xlu0 %2433
    %2435 = vrot.lane.b32.xlu0 %v1586, 16
    %v2436 = vpop.permute.xlu0 %2435
    %v2437 = vsel %vm91, %v2434, %v2436
    %v2438 = vsel %vm91, %v2436, %v2434
    %v2439 = vmul.f32 %v2438, %v98
    %v2440 = vmul.f32 %v2437, %v102
    %v2443 = vrot.slane %v2439, 4
    %v2444 = vrot.slane %v2440, 4
    %2447 = vst [vmem:[#allocation2] sm:$0xf0] %v2443
    %2448 = vst [vmem:[#allocation2 + $0x8] sm:$0xf0] %v2444
    %2449 = vrot.lane.b32.xlu0 %v1585, 15
    %v2450 = vpop.permute.xlu0 %2449
    %2451 = vrot.lane.b32.xlu0 %v1586, 15
    %v2452 = vpop.permute.xlu0 %2451
    %v2453 = vsel %vm119, %v2450, %v2452
    %v2454 = vsel %vm119, %v2452, %v2450
    %v2455 = vmul.f32 %v2454, %v126
    %v2456 = vmul.f32 %v2453, %v130
    %2457 = vst [vmem:[#allocation2 + $0x10] sm:$0xf] %v2455
    %2458 = vst [vmem:[#allocation2 + $0x18] sm:$0xf] %v2456
    %2459 = vrot.lane.b32.xlu0 %v1585, 1
    %v2460 = vpop.permute.xlu0 %2459
    %2461 = vrot.lane.b32.xlu0 %v1586, 1
    %v2462 = vpop.permute.xlu0 %2461
    %v2463 = vsel %vm141, %v2460, %v2462
    %v2464 = vsel %vm141, %v2462, %v2460
    %v2465 = vmul.f32 %v2464, %v148
    %v2466 = vmul.f32 %v2463, %v152
    %v2469 = vrot.slane %v2465, 4
    %v2470 = vrot.slane %v2466, 4
    %2473 = vst [vmem:[#allocation2 + $0x10] sm:$0xf0] %v2469
    %2474 = vst [vmem:[#allocation2 + $0x18] sm:$0xf0] %v2470
    %2475 = vst [vmem:[#allocation2 + $0x20] sm:$0xf] %v1585
    %2476 = vst [vmem:[#allocation2 + $0x28] sm:$0xf] %v1586
    %2477 = vrot.lane.b32.xlu0 %v1585, 127
    %v2478 = vpop.permute.xlu0 %2477
    %2479 = vrot.lane.b32.xlu0 %v1586, 127
    %v2480 = vpop.permute.xlu0 %2479
    %v2481 = vsel %vm171, %v2478, %v2480
    %v2482 = vsel %vm171, %v2480, %v2478
    %v2483 = vmul.f32 %v2481, %v178
    %v2484 = vmul.f32 %v2482, %v182
    %v2487 = vrot.slane %v2483, 4
    %v2488 = vrot.slane %v2484, 4
    %2491 = vst [vmem:[#allocation2 + $0x20] sm:$0xf0] %v2487
    %2492 = vst [vmem:[#allocation2 + $0x28] sm:$0xf0] %v2488
    %2493 = vrot.lane.b32.xlu0 %v1585, 113
    %v2494 = vpop.permute.xlu0 %2493
    %2495 = vrot.lane.b32.xlu0 %v1586, 113
    %v2496 = vpop.permute.xlu0 %2495
    %v2497 = vsel %vm199, %v2494, %v2496
    %v2498 = vsel %vm199, %v2496, %v2494
    %v2499 = vmul.f32 %v2497, %v206
    %v2500 = vmul.f32 %v2498, %v210
    %2501 = vst [vmem:[#allocation2 + $0x30] sm:$0xf] %v2499
    %2502 = vst [vmem:[#allocation2 + $0x38] sm:$0xf] %v2500
    %2503 = vrot.lane.b32.xlu0 %v1585, 112
    %v2504 = vpop.permute.xlu0 %2503
    %2505 = vrot.lane.b32.xlu0 %v1586, 112
    %v2506 = vpop.permute.xlu0 %2505
    %v2507 = vsel %vm221, %v2504, %v2506
    %v2508 = vsel %vm221, %v2506, %v2504
    %v2509 = vmul.f32 %v2507, %v228
    %v2510 = vmul.f32 %v2508, %v232
    %v2513 = vrot.slane %v2509, 4
    %v2514 = vrot.slane %v2510, 4
    %2517 = vst [vmem:[#allocation2 + $0x30] sm:$0xf0] %v2513
    %2518 = vst [vmem:[#allocation2 + $0x38] sm:$0xf0] %v2514
    %2519 = vrot.lane.b32.xlu0 %v1585, 111
    %v2520 = vpop.permute.xlu0 %2519
    %2521 = vrot.lane.b32.xlu0 %v1586, 111
    %v2522 = vpop.permute.xlu0 %2521
    %v2523 = vsel %vm249, %v2520, %v2522
    %v2524 = vsel %vm249, %v2522, %v2520
    %v2525 = vmul.f32 %v2523, %v256
    %v2526 = vmul.f32 %v2524, %v260
    %2527 = vst [vmem:[#allocation2 + $0x40] sm:$0xf] %v2525
    %2528 = vst [vmem:[#allocation2 + $0x48] sm:$0xf] %v2526
    %v2529 = vld [vmem:[#allocation2] sm:$0xff]
    %v2530 = vld [vmem:[#allocation2 + $0x8] sm:$0xff]
    %v2531 = vld [vmem:[#allocation2 + $0x10] sm:$0xff]
    %v2532 = vld [vmem:[#allocation2 + $0x18] sm:$0xff]
    %v2533 = vld [vmem:[#allocation2 + $0x20] sm:$0xff]
    %v2534 = vld [vmem:[#allocation2 + $0x28] sm:$0xff]
    %v2535 = vld [vmem:[#allocation2 + $0x30] sm:$0xff]
    %v2536 = vld [vmem:[#allocation2 + $0x38] sm:$0xff]
    %v2537 = vld [vmem:[#allocation2 + $0x40] sm:$0xf]
    %v2538 = vld [vmem:[#allocation2 + $0x48] sm:$0xf]
    %v2539 = vpack.c.bf16 %v2531, %v2529
    %v2540 = vpack.c.bf16 %v2532, %v2530
    %v2541 = vpack.c.bf16 %v2535, %v2533
    %v2542 = vpack.c.bf16 %v2536, %v2534
    %v2543 = vpack.c.bf16 %v2537, %v2537
    %v2544 = vpack.c.bf16 %v2538, %v2538
    %2545 = vrot.lane.b32.xlu0 %v2421, 17
    %v2546 = vpop.permute.xlu0 %2545
    %2547 = vrot.lane.b32.xlu0 %v2422, 17
    %v2548 = vpop.permute.xlu0 %2547
    %v2549 = vsel %vm69, %v2546, %v2548
    %v2550 = vsel %vm69, %v2548, %v2546
    %v2551 = vmul.f32 %v2550, %v76
    %v2552 = vmul.f32 %v2549, %v80
    %2553 = vst [vmem:[#allocation3] sm:$0xf] %v2551
    %2554 = vst [vmem:[#allocation3 + $0x8] sm:$0xf] %v2552
    %2555 = vrot.lane.b32.xlu0 %v2421, 16
    %v2556 = vpop.permute.xlu0 %2555
    %2557 = vrot.lane.b32.xlu0 %v2422, 16
    %v2558 = vpop.permute.xlu0 %2557
    %v2559 = vsel %vm91, %v2556, %v2558
    %v2560 = vsel %vm91, %v2558, %v2556
    %v2561 = vmul.f32 %v2560, %v98
    %v2562 = vmul.f32 %v2559, %v102
    %v2565 = vrot.slane %v2561, 4
    %v2566 = vrot.slane %v2562, 4
    %2569 = vst [vmem:[#allocation3] sm:$0xf0] %v2565
    %2570 = vst [vmem:[#allocation3 + $0x8] sm:$0xf0] %v2566
    %2571 = vrot.lane.b32.xlu0 %v2421, 15
    %v2572 = vpop.permute.xlu0 %2571
    %2573 = vrot.lane.b32.xlu0 %v2422, 15
    %v2574 = vpop.permute.xlu0 %2573
    %v2575 = vsel %vm119, %v2572, %v2574
    %v2576 = vsel %vm119, %v2574, %v2572
    %v2577 = vmul.f32 %v2576, %v126
    %v2578 = vmul.f32 %v2575, %v130
    %2579 = vst [vmem:[#allocation3 + $0x10] sm:$0xf] %v2577
    %2580 = vst [vmem:[#allocation3 + $0x18] sm:$0xf] %v2578
    %2581 = vrot.lane.b32.xlu0 %v2421, 1
    %v2582 = vpop.permute.xlu0 %2581
    %2583 = vrot.lane.b32.xlu0 %v2422, 1
    %v2584 = vpop.permute.xlu0 %2583
    %v2585 = vsel %vm141, %v2582, %v2584
    %v2586 = vsel %vm141, %v2584, %v2582
    %v2587 = vmul.f32 %v2586, %v148
    %v2588 = vmul.f32 %v2585, %v152
    %v2591 = vrot.slane %v2587, 4
    %v2592 = vrot.slane %v2588, 4
    %2595 = vst [vmem:[#allocation3 + $0x10] sm:$0xf0] %v2591
    %2596 = vst [vmem:[#allocation3 + $0x18] sm:$0xf0] %v2592
    %2597 = vst [vmem:[#allocation3 + $0x20] sm:$0xf] %v2421
    %2598 = vst [vmem:[#allocation3 + $0x28] sm:$0xf] %v2422
    %2599 = vrot.lane.b32.xlu0 %v2421, 127
    %v2600 = vpop.permute.xlu0 %2599
    %2601 = vrot.lane.b32.xlu0 %v2422, 127
    %v2602 = vpop.permute.xlu0 %2601
    %v2603 = vsel %vm171, %v2600, %v2602
    %v2604 = vsel %vm171, %v2602, %v2600
    %v2605 = vmul.f32 %v2603, %v178
    %v2606 = vmul.f32 %v2604, %v182
    %v2609 = vrot.slane %v2605, 4
    %v2610 = vrot.slane %v2606, 4
    %2613 = vst [vmem:[#allocation3 + $0x20] sm:$0xf0] %v2609
    %2614 = vst [vmem:[#allocation3 + $0x28] sm:$0xf0] %v2610
    %2615 = vrot.lane.b32.xlu0 %v2421, 113
    %v2616 = vpop.permute.xlu0 %2615
    %2617 = vrot.lane.b32.xlu0 %v2422, 113
    %v2618 = vpop.permute.xlu0 %2617
    %v2619 = vsel %vm199, %v2616, %v2618
    %v2620 = vsel %vm199, %v2618, %v2616
    %v2621 = vmul.f32 %v2619, %v206
    %v2622 = vmul.f32 %v2620, %v210
    %2623 = vst [vmem:[#allocation3 + $0x30] sm:$0xf] %v2621
    %2624 = vst [vmem:[#allocation3 + $0x38] sm:$0xf] %v2622
    %2625 = vrot.lane.b32.xlu0 %v2421, 112
    %v2626 = vpop.permute.xlu0 %2625
    %2627 = vrot.lane.b32.xlu0 %v2422, 112
    %v2628 = vpop.permute.xlu0 %2627
    %v2629 = vsel %vm221, %v2626, %v2628
    %v2630 = vsel %vm221, %v2628, %v2626
    %v2631 = vmul.f32 %v2629, %v228
    %v2632 = vmul.f32 %v2630, %v232
    %v2635 = vrot.slane %v2631, 4
    %v2636 = vrot.slane %v2632, 4
    %2639 = vst [vmem:[#allocation3 + $0x30] sm:$0xf0] %v2635
    %2640 = vst [vmem:[#allocation3 + $0x38] sm:$0xf0] %v2636
    %2641 = vrot.lane.b32.xlu0 %v2421, 111
    %v2642 = vpop.permute.xlu0 %2641
    %2643 = vrot.lane.b32.xlu0 %v2422, 111
    %v2644 = vpop.permute.xlu0 %2643
    %v2645 = vsel %vm249, %v2642, %v2644
    %v2646 = vsel %vm249, %v2644, %v2642
    %v2647 = vmul.f32 %v2645, %v256
    %v2648 = vmul.f32 %v2646, %v260
    %2649 = vst [vmem:[#allocation3 + $0x40] sm:$0xf] %v2647
    %2650 = vst [vmem:[#allocation3 + $0x48] sm:$0xf] %v2648
    %v2651 = vld [vmem:[#allocation3] sm:$0xff]
    %v2652 = vld [vmem:[#allocation3 + $0x8] sm:$0xff]
    %v2653 = vld [vmem:[#allocation3 + $0x10] sm:$0xff]
    %v2654 = vld [vmem:[#allocation3 + $0x18] sm:$0xff]
    %v2655 = vld [vmem:[#allocation3 + $0x20] sm:$0xff]
    %v2656 = vld [vmem:[#allocation3 + $0x28] sm:$0xff]
    %v2657 = vld [vmem:[#allocation3 + $0x30] sm:$0xff]
    %v2658 = vld [vmem:[#allocation3 + $0x38] sm:$0xff]
    %v2659 = vld [vmem:[#allocation3 + $0x40] sm:$0xf]
    %v2660 = vld [vmem:[#allocation3 + $0x48] sm:$0xf]
    %v2661 = vpack.c.bf16 %v2653, %v2651
    %v2662 = vpack.c.bf16 %v2654, %v2652
    %v2663 = vpack.c.bf16 %v2657, %v2655
    %v2664 = vpack.c.bf16 %v2658, %v2656
    %v2665 = vpack.c.bf16 %v2659, %v2659
    %v2666 = vpack.c.bf16 %v2660, %v2660
    %v2667 = vld [vmem:[%s5] sm:$0x3]
    %s2668 = scalar_lea.vmem %s5, 2
    %v2669 = vld [vmem:[%s2668] sm:$0x3]
    %v2671 = vsel %vm410, %v2669, 0
    %v2674 = vsel %vm414, %v2665, 0
    %v2677 = vsel %vm414, %v2666, 0
    %2679 = vmatprep.subr.bf16.mxu0 0
    %2680 = vmatpush1.bf16.msra.mxu0 0
    %2681 = vmatprep.subr.bf16.mxu0 0
    %2682 = vmatpush1.bf16.msra.mxu0 0
    %2683 = vmatprep.subr.bf16.mxu0 0
    %2684 = vmatpush1.bf16.msra.mxu0 0
    %2685 = vmatprep.subr.bf16.mxu0 0
    %2686 = vmatpush1.bf16.msra.mxu0 0
    %2687 = vmatprep.subr.bf16.mxu0 0
    %2688 = vmatpush1.bf16.msra.mxu0 0
    %2689 = vmatprep.subr.bf16.mxu0 %v2677
    %2690 = vmatpush1.bf16.msra.mxu0 %v2674
    %2691 = vmatprep.subr.bf16.mxu0 %v2664
    %2692 = vmatpush1.bf16.msra.mxu0 %v2663
    %2693 = vmatprep.subr.bf16.mxu0 %v2662
    %2694 = vmatpush1.bf16.msra.mxu0 %v2661
    %2695 = vmatprep.subr.bf16.mxu0 0
    %2696 = vmatpush2.bf16.msra.mxu0 0
    %2697 = vmatprep.subr.bf16.mxu0 0
    %2698 = vmatpush2.bf16.msra.mxu0 0
    %2699 = vmatprep.subr.bf16.mxu0 0
    %2700 = vmatpush2.bf16.msra.mxu0 0
    %2701 = vmatprep.subr.bf16.mxu0 0
    %2702 = vmatpush2.bf16.msra.mxu0 0
    %2703 = vmatprep.subr.bf16.mxu0 0
    %2704 = vmatpush2.bf16.msra.mxu0 0
    %2705 = vmatprep.subr.bf16.mxu0 0
    %2706 = vmatpush2.bf16.msra.mxu0 0
    %2707 = vmatprep.subr.bf16.mxu0 0
    %2708 = vmatpush2.bf16.msra.mxu0 0
    %2709 = vmatprep.subr.bf16.mxu0 0
    %2710 = vmatpush2.bf16.msra.mxu0 0
    %2711 = vmatprep.mubr.bf16.mxu0 0
    %2712 = vmatmul.mubr.bf16.gmra.mxu0 %v2671
    %v2713 = vpop.f32.mrf.mxu0
    %v2714 = vadd.f32 0.0, %v2713
    %v2715 = vpop.f32.mrf.mxu0
    %v2716 = vadd.f32 0.0, %v2715
    %v2717 = vpop.f32.mrf.mxu0
    %v2718 = vpop.f32.mrf.mxu0
    %2719 = vdwg.mxu0
    %v2721 = vsel %vm410, %v2667, 0
    %v2724 = vsel %vm414, %v2543, 0
    %v2727 = vsel %vm414, %v2544, 0
    %2729 = vmatprep.subr.bf16.mxu0 0
    %2730 = vmatpush1.bf16.msra.mxu0 0
    %2731 = vmatprep.subr.bf16.mxu0 0
    %2732 = vmatpush1.bf16.msra.mxu0 0
    %2733 = vmatprep.subr.bf16.mxu0 0
    %2734 = vmatpush1.bf16.msra.mxu0 0
    %2735 = vmatprep.subr.bf16.mxu0 0
    %2736 = vmatpush1.bf16.msra.mxu0 0
    %2737 = vmatprep.subr.bf16.mxu0 0
    %2738 = vmatpush1.bf16.msra.mxu0 0
    %2739 = vmatprep.subr.bf16.mxu0 %v2727
    %2740 = vmatpush1.bf16.msra.mxu0 %v2724
    %2741 = vmatprep.subr.bf16.mxu0 %v2542
    %2742 = vmatpush1.bf16.msra.mxu0 %v2541
    %2743 = vmatprep.subr.bf16.mxu0 %v2540
    %2744 = vmatpush1.bf16.msra.mxu0 %v2539
    %2745 = vmatprep.subr.bf16.mxu0 0
    %2746 = vmatpush2.bf16.msra.mxu0 0
    %2747 = vmatprep.subr.bf16.mxu0 0
    %2748 = vmatpush2.bf16.msra.mxu0 0
    %2749 = vmatprep.subr.bf16.mxu0 0
    %2750 = vmatpush2.bf16.msra.mxu0 0
    %2751 = vmatprep.subr.bf16.mxu0 0
    %2752 = vmatpush2.bf16.msra.mxu0 0
    %2753 = vmatprep.subr.bf16.mxu0 0
    %2754 = vmatpush2.bf16.msra.mxu0 0
    %2755 = vmatprep.subr.bf16.mxu0 0
    %2756 = vmatpush2.bf16.msra.mxu0 0
    %2757 = vmatprep.subr.bf16.mxu0 0
    %2758 = vmatpush2.bf16.msra.mxu0 0
    %2759 = vmatprep.subr.bf16.mxu0 0
    %2760 = vmatpush2.bf16.msra.mxu0 0
    %2761 = vmatprep.mubr.bf16.mxu0 0
    %2762 = vmatmul.mubr.bf16.gmra.mxu0 %v2721
    %v2763 = vpop.f32.mrf.mxu0
    %v2764 = vadd.f32 %v2714, %v2763
    %v2765 = vpop.f32.mrf.mxu0
    %v2766 = vadd.f32 %v2716, %v2765
    %v2767 = vpop.f32.mrf.mxu0
    %v2768 = vpop.f32.mrf.mxu0
    %2769 = vdwg.mxu0
    %s2770 = scalar_lea.vmem %s6, 20
    %v2771 = vld [vmem:[%s2770] sm:$0xf]
    %2773 = vset.pattern.permute.xlu0 0
    %2774 = vperm.xlu0 %2773, %v2771
    %v2775 = vpop.permute.xlu0 %2774
    %v2777 = vadd.f32 %v2764, %v2775
    %v2778 = vadd.f32 %v2766, %v2775
    %v2779 = vmax.f32 %v2777, 0.0
    %v2780 = vmax.f32 %v2778, 0.0
    %v2783 = vcombine.low %v2779, %v2780
    %2785 = vst [vmem:[%s8] sm:$0xff] %v2783
    %s2786 = scalar_lea.vmem %s0, 8
    %v2787 = vld [vmem:[%s2786] sm:$0xff]
    %s2788 = scalar_lea.vmem %s1, 8
    %v2789 = vld [vmem:[%s2788] sm:$0xff]
    %v2791 = vcombine.high %v2787, %v2787
    %2793 = vrot.lane.b32.xlu0 %v2787, 17
    %v2794 = vpop.permute.xlu0 %2793
    %2795 = vrot.lane.b32.xlu0 %v2791, 17
    %v2796 = vpop.permute.xlu0 %2795
    %v2797 = vsel %vm69, %v2794, %v2796
    %v2798 = vsel %vm69, %v2796, %v2794
    %v2799 = vmul.f32 %v2798, %v76
    %v2800 = vmul.f32 %v2797, %v80
    %2801 = vst [vmem:[#allocation2] sm:$0xf] %v2799
    %2802 = vst [vmem:[#allocation2 + $0x8] sm:$0xf] %v2800
    %2803 = vrot.lane.b32.xlu0 %v2787, 16
    %v2804 = vpop.permute.xlu0 %2803
    %2805 = vrot.lane.b32.xlu0 %v2791, 16
    %v2806 = vpop.permute.xlu0 %2805
    %v2807 = vsel %vm91, %v2804, %v2806
    %v2808 = vsel %vm91, %v2806, %v2804
    %v2809 = vmul.f32 %v2808, %v98
    %v2810 = vmul.f32 %v2807, %v102
    %v2813 = vrot.slane %v2809, 4
    %v2814 = vrot.slane %v2810, 4
    %2817 = vst [vmem:[#allocation2] sm:$0xf0] %v2813
    %2818 = vst [vmem:[#allocation2 + $0x8] sm:$0xf0] %v2814
    %2819 = vrot.lane.b32.xlu0 %v2787, 15
    %v2820 = vpop.permute.xlu0 %2819
    %2821 = vrot.lane.b32.xlu0 %v2791, 15
    %v2822 = vpop.permute.xlu0 %2821
    %v2823 = vsel %vm119, %v2820, %v2822
    %v2824 = vsel %vm119, %v2822, %v2820
    %v2825 = vmul.f32 %v2824, %v126
    %v2826 = vmul.f32 %v2823, %v130
    %2827 = vst [vmem:[#allocation2 + $0x10] sm:$0xf] %v2825
    %2828 = vst [vmem:[#allocation2 + $0x18] sm:$0xf] %v2826
    %2829 = vrot.lane.b32.xlu0 %v2787, 1
    %v2830 = vpop.permute.xlu0 %2829
    %2831 = vrot.lane.b32.xlu0 %v2791, 1
    %v2832 = vpop.permute.xlu0 %2831
    %v2833 = vsel %vm141, %v2830, %v2832
    %v2834 = vsel %vm141, %v2832, %v2830
    %v2835 = vmul.f32 %v2834, %v148
    %v2836 = vmul.f32 %v2833, %v152
    %v2839 = vrot.slane %v2835, 4
    %v2840 = vrot.slane %v2836, 4
    %2843 = vst [vmem:[#allocation2 + $0x10] sm:$0xf0] %v2839
    %2844 = vst [vmem:[#allocation2 + $0x18] sm:$0xf0] %v2840
    %2845 = vst [vmem:[#allocation2 + $0x20] sm:$0xf] %v2787
    %2846 = vst [vmem:[#allocation2 + $0x28] sm:$0xf] %v2791
    %2847 = vrot.lane.b32.xlu0 %v2787, 127
    %v2848 = vpop.permute.xlu0 %2847
    %2849 = vrot.lane.b32.xlu0 %v2791, 127
    %v2850 = vpop.permute.xlu0 %2849
    %v2851 = vsel %vm171, %v2848, %v2850
    %v2852 = vsel %vm171, %v2850, %v2848
    %v2853 = vmul.f32 %v2851, %v178
    %v2854 = vmul.f32 %v2852, %v182
    %v2857 = vrot.slane %v2853, 4
    %v2858 = vrot.slane %v2854, 4
    %2861 = vst [vmem:[#allocation2 + $0x20] sm:$0xf0] %v2857
    %2862 = vst [vmem:[#allocation2 + $0x28] sm:$0xf0] %v2858
    %2863 = vrot.lane.b32.xlu0 %v2787, 113
    %v2864 = vpop.permute.xlu0 %2863
    %2865 = vrot.lane.b32.xlu0 %v2791, 113
    %v2866 = vpop.permute.xlu0 %2865
    %v2867 = vsel %vm199, %v2864, %v2866
    %v2868 = vsel %vm199, %v2866, %v2864
    %v2869 = vmul.f32 %v2867, %v206
    %v2870 = vmul.f32 %v2868, %v210
    %2871 = vst [vmem:[#allocation2 + $0x30] sm:$0xf] %v2869
    %2872 = vst [vmem:[#allocation2 + $0x38] sm:$0xf] %v2870
    %2873 = vrot.lane.b32.xlu0 %v2787, 112
    %v2874 = vpop.permute.xlu0 %2873
    %2875 = vrot.lane.b32.xlu0 %v2791, 112
    %v2876 = vpop.permute.xlu0 %2875
    %v2877 = vsel %vm221, %v2874, %v2876
    %v2878 = vsel %vm221, %v2876, %v2874
    %v2879 = vmul.f32 %v2877, %v228
    %v2880 = vmul.f32 %v2878, %v232
    %v2883 = vrot.slane %v2879, 4
    %v2884 = vrot.slane %v2880, 4
    %2887 = vst [vmem:[#allocation2 + $0x30] sm:$0xf0] %v2883
    %2888 = vst [vmem:[#allocation2 + $0x38] sm:$0xf0] %v2884
    %2889 = vrot.lane.b32.xlu0 %v2787, 111
    %v2890 = vpop.permute.xlu0 %2889
    %2891 = vrot.lane.b32.xlu0 %v2791, 111
    %v2892 = vpop.permute.xlu0 %2891
    %v2893 = vsel %vm249, %v2890, %v2892
    %v2894 = vsel %vm249, %v2892, %v2890
    %v2895 = vmul.f32 %v2893, %v256
    %v2896 = vmul.f32 %v2894, %v260
    %2897 = vst [vmem:[#allocation2 + $0x40] sm:$0xf] %v2895
    %2898 = vst [vmem:[#allocation2 + $0x48] sm:$0xf] %v2896
    %v2899 = vld [vmem:[#allocation2] sm:$0xff]
    %v2900 = vld [vmem:[#allocation2 + $0x8] sm:$0xff]
    %v2901 = vld [vmem:[#allocation2 + $0x10] sm:$0xff]
    %v2902 = vld [vmem:[#allocation2 + $0x18] sm:$0xff]
    %v2903 = vld [vmem:[#allocation2 + $0x20] sm:$0xff]
    %v2904 = vld [vmem:[#allocation2 + $0x28] sm:$0xff]
    %v2905 = vld [vmem:[#allocation2 + $0x30] sm:$0xff]
    %v2906 = vld [vmem:[#allocation2 + $0x38] sm:$0xff]
    %v2907 = vld [vmem:[#allocation2 + $0x40] sm:$0xf]
    %v2908 = vld [vmem:[#allocation2 + $0x48] sm:$0xf]
    %v2909 = vpack.c.bf16 %v2901, %v2899
    %v2910 = vpack.c.bf16 %v2902, %v2900
    %v2911 = vpack.c.bf16 %v2905, %v2903
    %v2912 = vpack.c.bf16 %v2906, %v2904
    %v2913 = vpack.c.bf16 %v2907, %v2907
    %v2914 = vpack.c.bf16 %v2908, %v2908
    %v2916 = vcombine.high %v2789, %v2789
    %2918 = vrot.lane.b32.xlu0 %v2789, 17
    %v2919 = vpop.permute.xlu0 %2918
    %2920 = vrot.lane.b32.xlu0 %v2916, 17
    %v2921 = vpop.permute.xlu0 %2920
    %v2922 = vsel %vm69, %v2919, %v2921
    %v2923 = vsel %vm69, %v2921, %v2919
    %v2924 = vmul.f32 %v2923, %v76
    %v2925 = vmul.f32 %v2922, %v80
    %2926 = vst [vmem:[#allocation3] sm:$0xf] %v2924
    %2927 = vst [vmem:[#allocation3 + $0x8] sm:$0xf] %v2925
    %2928 = vrot.lane.b32.xlu0 %v2789, 16
    %v2929 = vpop.permute.xlu0 %2928
    %2930 = vrot.lane.b32.xlu0 %v2916, 16
    %v2931 = vpop.permute.xlu0 %2930
    %v2932 = vsel %vm91, %v2929, %v2931
    %v2933 = vsel %vm91, %v2931, %v2929
    %v2934 = vmul.f32 %v2933, %v98
    %v2935 = vmul.f32 %v2932, %v102
    %v2938 = vrot.slane %v2934, 4
    %v2939 = vrot.slane %v2935, 4
    %2942 = vst [vmem:[#allocation3] sm:$0xf0] %v2938
    %2943 = vst [vmem:[#allocation3 + $0x8] sm:$0xf0] %v2939
    %2944 = vrot.lane.b32.xlu0 %v2789, 15
    %v2945 = vpop.permute.xlu0 %2944
    %2946 = vrot.lane.b32.xlu0 %v2916, 15
    %v2947 = vpop.permute.xlu0 %2946
    %v2948 = vsel %vm119, %v2945, %v2947
    %v2949 = vsel %vm119, %v2947, %v2945
    %v2950 = vmul.f32 %v2949, %v126
    %v2951 = vmul.f32 %v2948, %v130
    %2952 = vst [vmem:[#allocation3 + $0x10] sm:$0xf] %v2950
    %2953 = vst [vmem:[#allocation3 + $0x18] sm:$0xf] %v2951
    %2954 = vrot.lane.b32.xlu0 %v2789, 1
    %v2955 = vpop.permute.xlu0 %2954
    %2956 = vrot.lane.b32.xlu0 %v2916, 1
    %v2957 = vpop.permute.xlu0 %2956
    %v2958 = vsel %vm141, %v2955, %v2957
    %v2959 = vsel %vm141, %v2957, %v2955
    %v2960 = vmul.f32 %v2959, %v148
    %v2961 = vmul.f32 %v2958, %v152
    %v2964 = vrot.slane %v2960, 4
    %v2965 = vrot.slane %v2961, 4
    %2968 = vst [vmem:[#allocation3 + $0x10] sm:$0xf0] %v2964
    %2969 = vst [vmem:[#allocation3 + $0x18] sm:$0xf0] %v2965
    %2970 = vst [vmem:[#allocation3 + $0x20] sm:$0xf] %v2789
    %2971 = vst [vmem:[#allocation3 + $0x28] sm:$0xf] %v2916
    %2972 = vrot.lane.b32.xlu0 %v2789, 127
    %v2973 = vpop.permute.xlu0 %2972
    %2974 = vrot.lane.b32.xlu0 %v2916, 127
    %v2975 = vpop.permute.xlu0 %2974
    %v2976 = vsel %vm171, %v2973, %v2975
    %v2977 = vsel %vm171, %v2975, %v2973
    %v2978 = vmul.f32 %v2976, %v178
    %v2979 = vmul.f32 %v2977, %v182
    %v2982 = vrot.slane %v2978, 4
    %v2983 = vrot.slane %v2979, 4
    %2986 = vst [vmem:[#allocation3 + $0x20] sm:$0xf0] %v2982
    %2987 = vst [vmem:[#allocation3 + $0x28] sm:$0xf0] %v2983
    %2988 = vrot.lane.b32.xlu0 %v2789, 113
    %v2989 = vpop.permute.xlu0 %2988
    %2990 = vrot.lane.b32.xlu0 %v2916, 113
    %v2991 = vpop.permute.xlu0 %2990
    %v2992 = vsel %vm199, %v2989, %v2991
    %v2993 = vsel %vm199, %v2991, %v2989
    %v2994 = vmul.f32 %v2992, %v206
    %v2995 = vmul.f32 %v2993, %v210
    %2996 = vst [vmem:[#allocation3 + $0x30] sm:$0xf] %v2994
    %2997 = vst [vmem:[#allocation3 + $0x38] sm:$0xf] %v2995
    %2998 = vrot.lane.b32.xlu0 %v2789, 112
    %v2999 = vpop.permute.xlu0 %2998
    %3000 = vrot.lane.b32.xlu0 %v2916, 112
    %v3001 = vpop.permute.xlu0 %3000
    %v3002 = vsel %vm221, %v2999, %v3001
    %v3003 = vsel %vm221, %v3001, %v2999
    %v3004 = vmul.f32 %v3002, %v228
    %v3005 = vmul.f32 %v3003, %v232
    %v3008 = vrot.slane %v3004, 4
    %v3009 = vrot.slane %v3005, 4
    %3012 = vst [vmem:[#allocation3 + $0x30] sm:$0xf0] %v3008
    %3013 = vst [vmem:[#allocation3 + $0x38] sm:$0xf0] %v3009
    %3014 = vrot.lane.b32.xlu0 %v2789, 111
    %v3015 = vpop.permute.xlu0 %3014
    %3016 = vrot.lane.b32.xlu0 %v2916, 111
    %v3017 = vpop.permute.xlu0 %3016
    %v3018 = vsel %vm249, %v3015, %v3017
    %v3019 = vsel %vm249, %v3017, %v3015
    %v3020 = vmul.f32 %v3018, %v256
    %v3021 = vmul.f32 %v3019, %v260
    %3022 = vst [vmem:[#allocation3 + $0x40] sm:$0xf] %v3020
    %3023 = vst [vmem:[#allocation3 + $0x48] sm:$0xf] %v3021
    %v3024 = vld [vmem:[#allocation3] sm:$0xff]
    %v3025 = vld [vmem:[#allocation3 + $0x8] sm:$0xff]
    %v3026 = vld [vmem:[#allocation3 + $0x10] sm:$0xff]
    %v3027 = vld [vmem:[#allocation3 + $0x18] sm:$0xff]
    %v3028 = vld [vmem:[#allocation3 + $0x20] sm:$0xff]
    %v3029 = vld [vmem:[#allocation3 + $0x28] sm:$0xff]
    %v3030 = vld [vmem:[#allocation3 + $0x30] sm:$0xff]
    %v3031 = vld [vmem:[#allocation3 + $0x38] sm:$0xff]
    %v3032 = vld [vmem:[#allocation3 + $0x40] sm:$0xf]
    %v3033 = vld [vmem:[#allocation3 + $0x48] sm:$0xf]
    %v3034 = vpack.c.bf16 %v3026, %v3024
    %v3035 = vpack.c.bf16 %v3027, %v3025
    %v3036 = vpack.c.bf16 %v3030, %v3028
    %v3037 = vpack.c.bf16 %v3031, %v3029
    %v3038 = vpack.c.bf16 %v3032, %v3032
    %v3039 = vpack.c.bf16 %v3033, %v3033
    %v3040 = vld [vmem:[%s3] sm:$0x3]
    %v3041 = vld [vmem:[%s4] sm:$0x3]
    %v3043 = vsel %vm410, %v3041, 0
    %v3046 = vsel %vm414, %v3038, 0
    %v3049 = vsel %vm414, %v3039, 0
    %3051 = vmatprep.subr.bf16.mxu0 0
    %3052 = vmatpush1.bf16.msra.mxu0 0
    %3053 = vmatprep.subr.bf16.mxu0 0
    %3054 = vmatpush1.bf16.msra.mxu0 0
    %3055 = vmatprep.subr.bf16.mxu0 0
    %3056 = vmatpush1.bf16.msra.mxu0 0
    %3057 = vmatprep.subr.bf16.mxu0 0
    %3058 = vmatpush1.bf16.msra.mxu0 0
    %3059 = vmatprep.subr.bf16.mxu0 0
    %3060 = vmatpush1.bf16.msra.mxu0 0
    %3061 = vmatprep.subr.bf16.mxu0 %v3049
    %3062 = vmatpush1.bf16.msra.mxu0 %v3046
    %3063 = vmatprep.subr.bf16.mxu0 %v3037
    %3064 = vmatpush1.bf16.msra.mxu0 %v3036
    %3065 = vmatprep.subr.bf16.mxu0 %v3035
    %3066 = vmatpush1.bf16.msra.mxu0 %v3034
    %3067 = vmatprep.subr.bf16.mxu0 0
    %3068 = vmatpush2.bf16.msra.mxu0 0
    %3069 = vmatprep.subr.bf16.mxu0 0
    %3070 = vmatpush2.bf16.msra.mxu0 0
    %3071 = vmatprep.subr.bf16.mxu0 0
    %3072 = vmatpush2.bf16.msra.mxu0 0
    %3073 = vmatprep.subr.bf16.mxu0 0
    %3074 = vmatpush2.bf16.msra.mxu0 0
    %3075 = vmatprep.subr.bf16.mxu0 0
    %3076 = vmatpush2.bf16.msra.mxu0 0
    %3077 = vmatprep.subr.bf16.mxu0 0
    %3078 = vmatpush2.bf16.msra.mxu0 0
    %3079 = vmatprep.subr.bf16.mxu0 0
    %3080 = vmatpush2.bf16.msra.mxu0 0
    %3081 = vmatprep.subr.bf16.mxu0 0
    %3082 = vmatpush2.bf16.msra.mxu0 0
    %3083 = vmatprep.mubr.bf16.mxu0 0
    %3084 = vmatmul.mubr.bf16.gmra.mxu0 %v3043
    %v3085 = vpop.f32.mrf.mxu0
    %v3086 = vadd.f32 0.0, %v3085
    %v3087 = vpop.f32.mrf.mxu0
    %v3088 = vadd.f32 0.0, %v3087
    %v3089 = vpop.f32.mrf.mxu0
    %v3090 = vpop.f32.mrf.mxu0
    %3091 = vdwg.mxu0
    %v3093 = vsel %vm410, %v3040, 0
    %v3096 = vsel %vm414, %v2913, 0
    %v3099 = vsel %vm414, %v2914, 0
    %3101 = vmatprep.subr.bf16.mxu0 0
    %3102 = vmatpush1.bf16.msra.mxu0 0
    %3103 = vmatprep.subr.bf16.mxu0 0
    %3104 = vmatpush1.bf16.msra.mxu0 0
    %3105 = vmatprep.subr.bf16.mxu0 0
    %3106 = vmatpush1.bf16.msra.mxu0 0
    %3107 = vmatprep.subr.bf16.mxu0 0
    %3108 = vmatpush1.bf16.msra.mxu0 0
    %3109 = vmatprep.subr.bf16.mxu0 0
    %3110 = vmatpush1.bf16.msra.mxu0 0
    %3111 = vmatprep.subr.bf16.mxu0 %v3099
    %3112 = vmatpush1.bf16.msra.mxu0 %v3096
    %3113 = vmatprep.subr.bf16.mxu0 %v2912
    %3114 = vmatpush1.bf16.msra.mxu0 %v2911
    %3115 = vmatprep.subr.bf16.mxu0 %v2910
    %3116 = vmatpush1.bf16.msra.mxu0 %v2909
    %3117 = vmatprep.subr.bf16.mxu0 0
    %3118 = vmatpush2.bf16.msra.mxu0 0
    %3119 = vmatprep.subr.bf16.mxu0 0
    %3120 = vmatpush2.bf16.msra.mxu0 0
    %3121 = vmatprep.subr.bf16.mxu0 0
    %3122 = vmatpush2.bf16.msra.mxu0 0
    %3123 = vmatprep.subr.bf16.mxu0 0
    %3124 = vmatpush2.bf16.msra.mxu0 0
    %3125 = vmatprep.subr.bf16.mxu0 0
    %3126 = vmatpush2.bf16.msra.mxu0 0
    %3127 = vmatprep.subr.bf16.mxu0 0
    %3128 = vmatpush2.bf16.msra.mxu0 0
    %3129 = vmatprep.subr.bf16.mxu0 0
    %3130 = vmatpush2.bf16.msra.mxu0 0
    %3131 = vmatprep.subr.bf16.mxu0 0
    %3132 = vmatpush2.bf16.msra.mxu0 0
    %3133 = vmatprep.mubr.bf16.mxu0 0
    %3134 = vmatmul.mubr.bf16.gmra.mxu0 %v3093
    %v3135 = vpop.f32.mrf.mxu0
    %v3136 = vadd.f32 %v3086, %v3135
    %v3137 = vpop.f32.mrf.mxu0
    %v3138 = vadd.f32 %v3088, %v3137
    %v3139 = vpop.f32.mrf.mxu0
    %v3140 = vpop.f32.mrf.mxu0
    %3141 = vdwg.mxu0
    %v3142 = vld [vmem:[%s6] sm:$0xf]
    %3144 = vset.pattern.permute.xlu0 0
    %3145 = vperm.xlu0 %3144, %v3142
    %v3146 = vpop.permute.xlu0 %3145
    %v3148 = vadd.f32 %v3136, %v3146
    %v3149 = vadd.f32 %v3138, %v3146
    %v3150 = vmax.f32 %v3148, 0.0
    %v3151 = vmax.f32 %v3149, 0.0
    %v3152 = vld [vmem:[%s522] sm:$0x3]
    %v3153 = vld [vmem:[%s524] sm:$0xf]
    %3155 = vset.pattern.permute.xlu0 0
    %3156 = vperm.xlu0 %3155, %v3153
    %v3157 = vpop.permute.xlu0 %3156
    %v3160 = vsel %vm410, %v3152, 0
    %3162 = vmatprep.subr.bf16.mxu0 0
    %3163 = vmatpush1.bf16.msra.mxu0 0
    %3164 = vmatprep.subr.bf16.mxu0 0
    %3165 = vmatpush1.bf16.msra.mxu0 0
    %3166 = vmatprep.subr.bf16.mxu0 0
    %3167 = vmatpush1.bf16.msra.mxu0 0
    %3168 = vmatprep.subr.bf16.mxu0 0
    %3169 = vmatpush1.bf16.msra.mxu0 0
    %3170 = vmatprep.subr.bf16.mxu0 0
    %3171 = vmatpush1.bf16.msra.mxu0 0
    %3172 = vmatprep.subr.bf16.mxu0 %v3099
    %3173 = vmatpush1.bf16.msra.mxu0 %v3096
    %3174 = vmatprep.subr.bf16.mxu0 %v2912
    %3175 = vmatpush1.bf16.msra.mxu0 %v2911
    %3176 = vmatprep.subr.bf16.mxu0 %v2910
    %3177 = vmatpush1.bf16.msra.mxu0 %v2909
    %3178 = vmatprep.subr.bf16.mxu0 0
    %3179 = vmatpush2.bf16.msra.mxu0 0
    %3180 = vmatprep.subr.bf16.mxu0 0
    %3181 = vmatpush2.bf16.msra.mxu0 0
    %3182 = vmatprep.subr.bf16.mxu0 0
    %3183 = vmatpush2.bf16.msra.mxu0 0
    %3184 = vmatprep.subr.bf16.mxu0 0
    %3185 = vmatpush2.bf16.msra.mxu0 0
    %3186 = vmatprep.subr.bf16.mxu0 0
    %3187 = vmatpush2.bf16.msra.mxu0 0
    %3188 = vmatprep.subr.bf16.mxu0 0
    %3189 = vmatpush2.bf16.msra.mxu0 0
    %3190 = vmatprep.subr.bf16.mxu0 0
    %3191 = vmatpush2.bf16.msra.mxu0 0
    %3192 = vmatprep.subr.bf16.mxu0 0
    %3193 = vmatpush2.bf16.msra.mxu0 0
    %3194 = vmatprep.mubr.bf16.mxu0 0
    %3195 = vmatmul.mubr.bf16.gmra.mxu0 %v3160
    %v3196 = vpop.f32.mrf.mxu0
    %v3197 = vadd.f32 %v3157, %v3196
    %v3198 = vpop.f32.mrf.mxu0
    %v3199 = vadd.f32 %v3157, %v3198
    %v3200 = vpop.f32.mrf.mxu0
    %v3201 = vpop.f32.mrf.mxu0
    %3202 = vdwg.mxu0
    %v3203 = vmax.f32 %v3197, 0.0
    %v3204 = vmax.f32 %v3199, 0.0
    %v3205 = vld [vmem:[%s577] sm:$0x3]
    %v3206 = vld [vmem:[%s579] sm:$0xf]
    %3208 = vset.pattern.permute.xlu0 0
    %3209 = vperm.xlu0 %3208, %v3206
    %v3210 = vpop.permute.xlu0 %3209
    %v3213 = vsel %vm410, %v3205, 0
    %3215 = vmatprep.subr.bf16.mxu0 0
    %3216 = vmatpush1.bf16.msra.mxu0 0
    %3217 = vmatprep.subr.bf16.mxu0 0
    %3218 = vmatpush1.bf16.msra.mxu0 0
    %3219 = vmatprep.subr.bf16.mxu0 0
    %3220 = vmatpush1.bf16.msra.mxu0 0
    %3221 = vmatprep.subr.bf16.mxu0 0
    %3222 = vmatpush1.bf16.msra.mxu0 0
    %3223 = vmatprep.subr.bf16.mxu0 0
    %3224 = vmatpush1.bf16.msra.mxu0 0
    %3225 = vmatprep.subr.bf16.mxu0 %v3099
    %3226 = vmatpush1.bf16.msra.mxu0 %v3096
    %3227 = vmatprep.subr.bf16.mxu0 %v2912
    %3228 = vmatpush1.bf16.msra.mxu0 %v2911
    %3229 = vmatprep.subr.bf16.mxu0 %v2910
    %3230 = vmatpush1.bf16.msra.mxu0 %v2909
    %3231 = vmatprep.subr.bf16.mxu0 0
    %3232 = vmatpush2.bf16.msra.mxu0 0
    %3233 = vmatprep.subr.bf16.mxu0 0
    %3234 = vmatpush2.bf16.msra.mxu0 0
    %3235 = vmatprep.subr.bf16.mxu0 0
    %3236 = vmatpush2.bf16.msra.mxu0 0
    %3237 = vmatprep.subr.bf16.mxu0 0
    %3238 = vmatpush2.bf16.msra.mxu0 0
    %3239 = vmatprep.subr.bf16.mxu0 0
    %3240 = vmatpush2.bf16.msra.mxu0 0
    %3241 = vmatprep.subr.bf16.mxu0 0
    %3242 = vmatpush2.bf16.msra.mxu0 0
    %3243 = vmatprep.subr.bf16.mxu0 0
    %3244 = vmatpush2.bf16.msra.mxu0 0
    %3245 = vmatprep.subr.bf16.mxu0 0
    %3246 = vmatpush2.bf16.msra.mxu0 0
    %3247 = vmatprep.mubr.bf16.mxu0 0
    %3248 = vmatmul.mubr.bf16.gmra.mxu0 %v3213
    %v3249 = vpop.f32.mrf.mxu0
    %v3250 = vadd.f32 %v3210, %v3249
    %v3251 = vpop.f32.mrf.mxu0
    %v3252 = vadd.f32 %v3210, %v3251
    %v3253 = vpop.f32.mrf.mxu0
    %v3254 = vpop.f32.mrf.mxu0
    %3255 = vdwg.mxu0
    %v3256 = vmax.f32 %v3250, 0.0
    %v3257 = vmax.f32 %v3252, 0.0
    %v3258 = vld [vmem:[%s632] sm:$0x3]
    %v3259 = vld [vmem:[%s634] sm:$0xf]
    %3261 = vset.pattern.permute.xlu0 0
    %3262 = vperm.xlu0 %3261, %v3259
    %v3263 = vpop.permute.xlu0 %3262
    %v3266 = vsel %vm410, %v3258, 0
    %3268 = vmatprep.subr.bf16.mxu0 0
    %3269 = vmatpush1.bf16.msra.mxu0 0
    %3270 = vmatprep.subr.bf16.mxu0 0
    %3271 = vmatpush1.bf16.msra.mxu0 0
    %3272 = vmatprep.subr.bf16.mxu0 0
    %3273 = vmatpush1.bf16.msra.mxu0 0
    %3274 = vmatprep.subr.bf16.mxu0 0
    %3275 = vmatpush1.bf16.msra.mxu0 0
    %3276 = vmatprep.subr.bf16.mxu0 0
    %3277 = vmatpush1.bf16.msra.mxu0 0
    %3278 = vmatprep.subr.bf16.mxu0 %v3049
    %3279 = vmatpush1.bf16.msra.mxu0 %v3046
    %3280 = vmatprep.subr.bf16.mxu0 %v3037
    %3281 = vmatpush1.bf16.msra.mxu0 %v3036
    %3282 = vmatprep.subr.bf16.mxu0 %v3035
    %3283 = vmatpush1.bf16.msra.mxu0 %v3034
    %3284 = vmatprep.subr.bf16.mxu0 0
    %3285 = vmatpush2.bf16.msra.mxu0 0
    %3286 = vmatprep.subr.bf16.mxu0 0
    %3287 = vmatpush2.bf16.msra.mxu0 0
    %3288 = vmatprep.subr.bf16.mxu0 0
    %3289 = vmatpush2.bf16.msra.mxu0 0
    %3290 = vmatprep.subr.bf16.mxu0 0
    %3291 = vmatpush2.bf16.msra.mxu0 0
    %3292 = vmatprep.subr.bf16.mxu0 0
    %3293 = vmatpush2.bf16.msra.mxu0 0
    %3294 = vmatprep.subr.bf16.mxu0 0
    %3295 = vmatpush2.bf16.msra.mxu0 0
    %3296 = vmatprep.subr.bf16.mxu0 0
    %3297 = vmatpush2.bf16.msra.mxu0 0
    %3298 = vmatprep.subr.bf16.mxu0 0
    %3299 = vmatpush2.bf16.msra.mxu0 0
    %3300 = vmatprep.mubr.bf16.mxu0 0
    %3301 = vmatmul.mubr.bf16.gmra.mxu0 %v3266
    %v3302 = vpop.f32.mrf.mxu0
    %v3303 = vadd.f32 %v3263, %v3302
    %v3304 = vpop.f32.mrf.mxu0
    %v3305 = vadd.f32 %v3263, %v3304
    %v3306 = vpop.f32.mrf.mxu0
    %v3307 = vpop.f32.mrf.mxu0
    %3308 = vdwg.mxu0
    %v3309 = vmax.f32 %v3303, 0.0
    %v3310 = vmax.f32 %v3305, 0.0
    %v3311 = vld [vmem:[%s687] sm:$0x3]
    %v3312 = vld [vmem:[%s689] sm:$0xf]
    %3314 = vset.pattern.permute.xlu0 0
    %3315 = vperm.xlu0 %3314, %v3312
    %v3316 = vpop.permute.xlu0 %3315
    %v3319 = vsel %vm410, %v3311, 0
    %3321 = vmatprep.subr.bf16.mxu0 0
    %3322 = vmatpush1.bf16.msra.mxu0 0
    %3323 = vmatprep.subr.bf16.mxu0 0
    %3324 = vmatpush1.bf16.msra.mxu0 0
    %3325 = vmatprep.subr.bf16.mxu0 0
    %3326 = vmatpush1.bf16.msra.mxu0 0
    %3327 = vmatprep.subr.bf16.mxu0 0
    %3328 = vmatpush1.bf16.msra.mxu0 0
    %3329 = vmatprep.subr.bf16.mxu0 0
    %3330 = vmatpush1.bf16.msra.mxu0 0
    %3331 = vmatprep.subr.bf16.mxu0 %v3049
    %3332 = vmatpush1.bf16.msra.mxu0 %v3046
    %3333 = vmatprep.subr.bf16.mxu0 %v3037
    %3334 = vmatpush1.bf16.msra.mxu0 %v3036
    %3335 = vmatprep.subr.bf16.mxu0 %v3035
    %3336 = vmatpush1.bf16.msra.mxu0 %v3034
    %3337 = vmatprep.subr.bf16.mxu0 0
    %3338 = vmatpush2.bf16.msra.mxu0 0
    %3339 = vmatprep.subr.bf16.mxu0 0
    %3340 = vmatpush2.bf16.msra.mxu0 0
    %3341 = vmatprep.subr.bf16.mxu0 0
    %3342 = vmatpush2.bf16.msra.mxu0 0
    %3343 = vmatprep.subr.bf16.mxu0 0
    %3344 = vmatpush2.bf16.msra.mxu0 0
    %3345 = vmatprep.subr.bf16.mxu0 0
    %3346 = vmatpush2.bf16.msra.mxu0 0
    %3347 = vmatprep.subr.bf16.mxu0 0
    %3348 = vmatpush2.bf16.msra.mxu0 0
    %3349 = vmatprep.subr.bf16.mxu0 0
    %3350 = vmatpush2.bf16.msra.mxu0 0
    %3351 = vmatprep.subr.bf16.mxu0 0
    %3352 = vmatpush2.bf16.msra.mxu0 0
    %3353 = vmatprep.mubr.bf16.mxu0 0
    %3354 = vmatmul.mubr.bf16.gmra.mxu0 %v3319
    %v3355 = vpop.f32.mrf.mxu0
    %v3356 = vadd.f32 %v3316, %v3355
    %v3357 = vpop.f32.mrf.mxu0
    %v3358 = vadd.f32 %v3316, %v3357
    %v3359 = vpop.f32.mrf.mxu0
    %v3360 = vpop.f32.mrf.mxu0
    %3361 = vdwg.mxu0
    %v3362 = vmax.f32 %v3356, 0.0
    %v3363 = vmax.f32 %v3358, 0.0
    %v3364 = vpack.c.bf16 %v3150, %v3150
    %v3365 = vpack.c.bf16 %v3151, %v3151
    %s3366 = sld [smem:[#allocation4]]
    %v3367 = vpack.c.bf16 %v3203, %v3203
    %v3368 = vpack.c.bf16 %v3204, %v3204
    %v3369 = vpack.c.bf16 %v3256, %v3256
    %v3370 = vpack.c.bf16 %v3257, %v3257
    %3371 = vxpose.xlu0.c.b16.start [1/8] %v3367, 128
    %3372 = vxpose.xlu0.c.b16.cont [2/8] 0, 128
    %3373 = vxpose.xlu0.c.b16.cont [3/8] 0, 128
    %3374 = vxpose.xlu0.c.b16.cont [4/8] 0, 128
    %3375 = vxpose.xlu0.c.b16.cont [5/8] 0, 128
    %3376 = vxpose.xlu0.c.b16.cont [6/8] 0, 128
    %3377 = vxpose.xlu0.c.b16.cont [7/8] 0, 128
    %3378 = vxpose.xlu0.c.b16.end [8/8] 0, 128
    %v3379 = vpop.trf.xlu0
    %v3380 = vpop.trf.xlu0
    %v3381 = vpop.trf.xlu0
    %v3382 = vpop.trf.xlu0
    %v3383 = vpop.trf.xlu0
    %v3384 = vpop.trf.xlu0
    %v3385 = vpop.trf.xlu0
    %v3386 = vpop.trf.xlu0
    %3387 = vxpose.xlu0.c.b16.start [1/8] %v3368, 128
    %3388 = vxpose.xlu0.c.b16.cont [2/8] 0, 128
    %3389 = vxpose.xlu0.c.b16.cont [3/8] 0, 128
    %3390 = vxpose.xlu0.c.b16.cont [4/8] 0, 128
    %3391 = vxpose.xlu0.c.b16.cont [5/8] 0, 128
    %3392 = vxpose.xlu0.c.b16.cont [6/8] 0, 128
    %3393 = vxpose.xlu0.c.b16.cont [7/8] 0, 128
    %3394 = vxpose.xlu0.c.b16.end [8/8] 0, 128
    %v3395 = vpop.trf.xlu0
    %v3396 = vpop.trf.xlu0
    %v3397 = vpop.trf.xlu0
    %v3398 = vpop.trf.xlu0
    %v3399 = vpop.trf.xlu0
    %v3400 = vpop.trf.xlu0
    %v3401 = vpop.trf.xlu0
    %v3402 = vpop.trf.xlu0
    %v3404 = vsel %vm781, %v3379, 0
    %v3407 = vsel %vm781, %v3380, 0
    %v3410 = vsel %vm781, %v3381, 0
    %v3413 = vsel %vm781, %v3382, 0
    %v3416 = vsel %vm781, %v3383, 0
    %v3419 = vsel %vm781, %v3384, 0
    %v3422 = vsel %vm781, %v3385, 0
    %v3425 = vsel %vm781, %v3386, 0
    %v3428 = vsel %vm781, %v3395, 0
    %v3431 = vsel %vm781, %v3396, 0
    %v3434 = vsel %vm781, %v3397, 0
    %v3437 = vsel %vm781, %v3398, 0
    %v3440 = vsel %vm781, %v3399, 0
    %v3443 = vsel %vm781, %v3400, 0
    %v3446 = vsel %vm781, %v3401, 0
    %v3449 = vsel %vm781, %v3402, 0
    %v3452 = vsel %vm414, %v3364, 0
    %v3455 = vsel %vm414, %v3365, 0
    %3457 = vmatprep.subr.bf16.mxu0 0
    %3458 = vmatpush1.bf16.msra.mxu0 0
    %3459 = vmatprep.subr.bf16.mxu0 0
    %3460 = vmatpush1.bf16.msra.mxu0 0
    %3461 = vmatprep.subr.bf16.mxu0 0
    %3462 = vmatpush1.bf16.msra.mxu0 0
    %3463 = vmatprep.subr.bf16.mxu0 0
    %3464 = vmatpush1.bf16.msra.mxu0 0
    %3465 = vmatprep.subr.bf16.mxu0 0
    %3466 = vmatpush1.bf16.msra.mxu0 0
    %3467 = vmatprep.subr.bf16.mxu0 0
    %3468 = vmatpush1.bf16.msra.mxu0 0
    %3469 = vmatprep.subr.bf16.mxu0 0
    %3470 = vmatpush1.bf16.msra.mxu0 0
    %3471 = vmatprep.subr.bf16.mxu0 %v3455
    %3472 = vmatpush1.bf16.msra.mxu0 %v3452
    %3473 = vmatprep.subr.bf16.mxu0 0
    %3474 = vmatpush2.bf16.msra.mxu0 0
    %3475 = vmatprep.subr.bf16.mxu0 0
    %3476 = vmatpush2.bf16.msra.mxu0 0
    %3477 = vmatprep.subr.bf16.mxu0 0
    %3478 = vmatpush2.bf16.msra.mxu0 0
    %3479 = vmatprep.subr.bf16.mxu0 0
    %3480 = vmatpush2.bf16.msra.mxu0 0
    %3481 = vmatprep.subr.bf16.mxu0 0
    %3482 = vmatpush2.bf16.msra.mxu0 0
    %3483 = vmatprep.subr.bf16.mxu0 0
    %3484 = vmatpush2.bf16.msra.mxu0 0
    %3485 = vmatprep.subr.bf16.mxu0 0
    %3486 = vmatpush2.bf16.msra.mxu0 0
    %3487 = vmatprep.subr.bf16.mxu0 0
    %3488 = vmatpush2.bf16.msra.mxu0 0
    %3489 = vmatprep.mubr.bf16.mxu0 0
    %3490 = vmatmul.mubr.bf16.gmra.mxu0 %v3404
    %v3491 = vpop.f32.mrf.mxu0
    %v3492 = vadd.f32 0.0, %v3491
    %v3493 = vpop.f32.mrf.mxu0
    %v3494 = vadd.f32 0.0, %v3493
    %v3495 = vpop.f32.mrf.mxu0
    %v3496 = vadd.f32 0.0, %v3495
    %v3497 = vpop.f32.mrf.mxu0
    %v3498 = vadd.f32 0.0, %v3497
    %3499 = vmatprep.mubr.bf16.mxu0 0
    %3500 = vmatmul.mubr.bf16.gmra.mxu0 %v3407
    %v3501 = vpop.f32.mrf.mxu0
    %v3502 = vadd.f32 0.0, %v3501
    %v3503 = vpop.f32.mrf.mxu0
    %v3504 = vadd.f32 0.0, %v3503
    %v3505 = vpop.f32.mrf.mxu0
    %v3506 = vadd.f32 0.0, %v3505
    %v3507 = vpop.f32.mrf.mxu0
    %v3508 = vadd.f32 0.0, %v3507
    %3509 = vmatprep.mubr.bf16.mxu0 0
    %3510 = vmatmul.mubr.bf16.gmra.mxu0 %v3410
    %v3511 = vpop.f32.mrf.mxu0
    %v3512 = vadd.f32 0.0, %v3511
    %v3513 = vpop.f32.mrf.mxu0
    %v3514 = vadd.f32 0.0, %v3513
    %v3515 = vpop.f32.mrf.mxu0
    %v3516 = vadd.f32 0.0, %v3515
    %v3517 = vpop.f32.mrf.mxu0
    %v3518 = vadd.f32 0.0, %v3517
    %3519 = vmatprep.mubr.bf16.mxu0 0
    %3520 = vmatmul.mubr.bf16.gmra.mxu0 %v3413
    %v3521 = vpop.f32.mrf.mxu0
    %v3522 = vadd.f32 0.0, %v3521
    %v3523 = vpop.f32.mrf.mxu0
    %v3524 = vadd.f32 0.0, %v3523
    %v3525 = vpop.f32.mrf.mxu0
    %v3526 = vadd.f32 0.0, %v3525
    %v3527 = vpop.f32.mrf.mxu0
    %v3528 = vadd.f32 0.0, %v3527
    %3529 = vmatprep.mubr.bf16.mxu0 0
    %3530 = vmatmul.mubr.bf16.gmra.mxu0 %v3416
    %v3531 = vpop.f32.mrf.mxu0
    %v3532 = vadd.f32 0.0, %v3531
    %v3533 = vpop.f32.mrf.mxu0
    %v3534 = vadd.f32 0.0, %v3533
    %v3535 = vpop.f32.mrf.mxu0
    %v3536 = vadd.f32 0.0, %v3535
    %v3537 = vpop.f32.mrf.mxu0
    %v3538 = vadd.f32 0.0, %v3537
    %3539 = vmatprep.mubr.bf16.mxu0 0
    %3540 = vmatmul.mubr.bf16.gmra.mxu0 %v3419
    %v3541 = vpop.f32.mrf.mxu0
    %v3542 = vadd.f32 0.0, %v3541
    %v3543 = vpop.f32.mrf.mxu0
    %v3544 = vadd.f32 0.0, %v3543
    %v3545 = vpop.f32.mrf.mxu0
    %v3546 = vadd.f32 0.0, %v3545
    %v3547 = vpop.f32.mrf.mxu0
    %v3548 = vadd.f32 0.0, %v3547
    %3549 = vmatprep.mubr.bf16.mxu0 0
    %3550 = vmatmul.mubr.bf16.gmra.mxu0 %v3422
    %v3551 = vpop.f32.mrf.mxu0
    %v3552 = vadd.f32 0.0, %v3551
    %v3553 = vpop.f32.mrf.mxu0
    %v3554 = vadd.f32 0.0, %v3553
    %v3555 = vpop.f32.mrf.mxu0
    %v3556 = vadd.f32 0.0, %v3555
    %v3557 = vpop.f32.mrf.mxu0
    %v3558 = vadd.f32 0.0, %v3557
    %3559 = vmatprep.mubr.bf16.mxu0 0
    %3560 = vmatmul.mubr.bf16.gmra.mxu0 %v3425
    %v3561 = vpop.f32.mrf.mxu0
    %v3562 = vadd.f32 0.0, %v3561
    %v3563 = vpop.f32.mrf.mxu0
    %v3564 = vadd.f32 0.0, %v3563
    %v3565 = vpop.f32.mrf.mxu0
    %v3566 = vadd.f32 0.0, %v3565
    %v3567 = vpop.f32.mrf.mxu0
    %v3568 = vadd.f32 0.0, %v3567
    %3569 = vmatprep.mubr.bf16.mxu0 0
    %3570 = vmatmul.mubr.bf16.gmra.mxu0 %v3428
    %v3571 = vpop.f32.mrf.mxu0
    %v3572 = vadd.f32 0.0, %v3571
    %v3573 = vpop.f32.mrf.mxu0
    %v3574 = vadd.f32 0.0, %v3573
    %v3575 = vpop.f32.mrf.mxu0
    %v3576 = vadd.f32 0.0, %v3575
    %v3577 = vpop.f32.mrf.mxu0
    %v3578 = vadd.f32 0.0, %v3577
    %3579 = vmatprep.mubr.bf16.mxu0 0
    %3580 = vmatmul.mubr.bf16.gmra.mxu0 %v3431
    %v3581 = vpop.f32.mrf.mxu0
    %v3582 = vadd.f32 0.0, %v3581
    %v3583 = vpop.f32.mrf.mxu0
    %v3584 = vadd.f32 0.0, %v3583
    %v3585 = vpop.f32.mrf.mxu0
    %v3586 = vadd.f32 0.0, %v3585
    %v3587 = vpop.f32.mrf.mxu0
    %v3588 = vadd.f32 0.0, %v3587
    %3589 = vmatprep.mubr.bf16.mxu0 0
    %3590 = vmatmul.mubr.bf16.gmra.mxu0 %v3434
    %v3591 = vpop.f32.mrf.mxu0
    %v3592 = vadd.f32 0.0, %v3591
    %v3593 = vpop.f32.mrf.mxu0
    %v3594 = vadd.f32 0.0, %v3593
    %v3595 = vpop.f32.mrf.mxu0
    %v3596 = vadd.f32 0.0, %v3595
    %v3597 = vpop.f32.mrf.mxu0
    %v3598 = vadd.f32 0.0, %v3597
    %3599 = vmatprep.mubr.bf16.mxu0 0
    %3600 = vmatmul.mubr.bf16.gmra.mxu0 %v3437
    %v3601 = vpop.f32.mrf.mxu0
    %v3602 = vadd.f32 0.0, %v3601
    %v3603 = vpop.f32.mrf.mxu0
    %v3604 = vadd.f32 0.0, %v3603
    %v3605 = vpop.f32.mrf.mxu0
    %v3606 = vadd.f32 0.0, %v3605
    %v3607 = vpop.f32.mrf.mxu0
    %v3608 = vadd.f32 0.0, %v3607
    %3609 = vmatprep.mubr.bf16.mxu0 0
    %3610 = vmatmul.mubr.bf16.gmra.mxu0 %v3440
    %v3611 = vpop.f32.mrf.mxu0
    %v3612 = vadd.f32 0.0, %v3611
    %v3613 = vpop.f32.mrf.mxu0
    %v3614 = vadd.f32 0.0, %v3613
    %v3615 = vpop.f32.mrf.mxu0
    %v3616 = vadd.f32 0.0, %v3615
    %v3617 = vpop.f32.mrf.mxu0
    %v3618 = vadd.f32 0.0, %v3617
    %3619 = vmatprep.mubr.bf16.mxu0 0
    %3620 = vmatmul.mubr.bf16.gmra.mxu0 %v3443
    %v3621 = vpop.f32.mrf.mxu0
    %v3622 = vadd.f32 0.0, %v3621
    %v3623 = vpop.f32.mrf.mxu0
    %v3624 = vadd.f32 0.0, %v3623
    %v3625 = vpop.f32.mrf.mxu0
    %v3626 = vadd.f32 0.0, %v3625
    %v3627 = vpop.f32.mrf.mxu0
    %v3628 = vadd.f32 0.0, %v3627
    %3629 = vmatprep.mubr.bf16.mxu0 0
    %3630 = vmatmul.mubr.bf16.gmra.mxu0 %v3446
    %v3631 = vpop.f32.mrf.mxu0
    %v3632 = vadd.f32 0.0, %v3631
    %v3633 = vpop.f32.mrf.mxu0
    %v3634 = vadd.f32 0.0, %v3633
    %v3635 = vpop.f32.mrf.mxu0
    %v3636 = vadd.f32 0.0, %v3635
    %v3637 = vpop.f32.mrf.mxu0
    %v3638 = vadd.f32 0.0, %v3637
    %3639 = vmatprep.mubr.bf16.mxu0 0
    %3640 = vmatmul.mubr.bf16.gmra.mxu0 %v3449
    %v3641 = vpop.f32.mrf.mxu0
    %v3642 = vadd.f32 0.0, %v3641
    %v3643 = vpop.f32.mrf.mxu0
    %v3644 = vadd.f32 0.0, %v3643
    %v3645 = vpop.f32.mrf.mxu0
    %v3646 = vadd.f32 0.0, %v3645
    %v3647 = vpop.f32.mrf.mxu0
    %v3648 = vadd.f32 0.0, %v3647
    %3649 = vdwg.mxu0
    %v3650 = vmax.f32 %v3492, %v3494
    %3651 = vmax.xlane.f32.xlu0 %v3650
    %v3652 = vpop.xlane.xlu0 %3651
    %v3653 = vmax.f32 %v3496, %v3498
    %3654 = vmax.xlane.f32.xlu0 %v3653
    %v3655 = vpop.xlane.xlu0 %3654
    %v3656 = vmax.f32 %v3502, %v3504
    %3657 = vmax.xlane.f32.xlu0 %v3656
    %v3658 = vpop.xlane.xlu0 %3657
    %v3659 = vmax.f32 %v3506, %v3508
    %3660 = vmax.xlane.f32.xlu0 %v3659
    %v3661 = vpop.xlane.xlu0 %3660
    %v3662 = vmax.f32 %v3512, %v3514
    %3663 = vmax.xlane.f32.xlu0 %v3662
    %v3664 = vpop.xlane.xlu0 %3663
    %v3665 = vmax.f32 %v3516, %v3518
    %3666 = vmax.xlane.f32.xlu0 %v3665
    %v3667 = vpop.xlane.xlu0 %3666
    %v3668 = vmax.f32 %v3522, %v3524
    %3669 = vmax.xlane.f32.xlu0 %v3668
    %v3670 = vpop.xlane.xlu0 %3669
    %v3671 = vmax.f32 %v3526, %v3528
    %3672 = vmax.xlane.f32.xlu0 %v3671
    %v3673 = vpop.xlane.xlu0 %3672
    %v3674 = vmax.f32 %v3532, %v3534
    %3675 = vmax.xlane.f32.xlu0 %v3674
    %v3676 = vpop.xlane.xlu0 %3675
    %v3677 = vmax.f32 %v3536, %v3538
    %3678 = vmax.xlane.f32.xlu0 %v3677
    %v3679 = vpop.xlane.xlu0 %3678
    %v3680 = vmax.f32 %v3542, %v3544
    %3681 = vmax.xlane.f32.xlu0 %v3680
    %v3682 = vpop.xlane.xlu0 %3681
    %v3683 = vmax.f32 %v3546, %v3548
    %3684 = vmax.xlane.f32.xlu0 %v3683
    %v3685 = vpop.xlane.xlu0 %3684
    %v3686 = vmax.f32 %v3552, %v3554
    %3687 = vmax.xlane.f32.xlu0 %v3686
    %v3688 = vpop.xlane.xlu0 %3687
    %v3689 = vmax.f32 %v3556, %v3558
    %3690 = vmax.xlane.f32.xlu0 %v3689
    %v3691 = vpop.xlane.xlu0 %3690
    %v3692 = vmax.f32 %v3562, %v3564
    %3693 = vmax.xlane.f32.xlu0 %v3692
    %v3694 = vpop.xlane.xlu0 %3693
    %v3695 = vmax.f32 %v3566, %v3568
    %3696 = vmax.xlane.f32.xlu0 %v3695
    %v3697 = vpop.xlane.xlu0 %3696
    %v3698 = vmax.f32 %v3572, %v3574
    %3699 = vmax.xlane.f32.xlu0 %v3698
    %v3700 = vpop.xlane.xlu0 %3699
    %v3701 = vmax.f32 %v3576, %v3578
    %3702 = vmax.xlane.f32.xlu0 %v3701
    %v3703 = vpop.xlane.xlu0 %3702
    %v3704 = vmax.f32 %v3582, %v3584
    %3705 = vmax.xlane.f32.xlu0 %v3704
    %v3706 = vpop.xlane.xlu0 %3705
    %v3707 = vmax.f32 %v3586, %v3588
    %3708 = vmax.xlane.f32.xlu0 %v3707
    %v3709 = vpop.xlane.xlu0 %3708
    %v3710 = vmax.f32 %v3592, %v3594
    %3711 = vmax.xlane.f32.xlu0 %v3710
    %v3712 = vpop.xlane.xlu0 %3711
    %v3713 = vmax.f32 %v3596, %v3598
    %3714 = vmax.xlane.f32.xlu0 %v3713
    %v3715 = vpop.xlane.xlu0 %3714
    %v3716 = vmax.f32 %v3602, %v3604
    %3717 = vmax.xlane.f32.xlu0 %v3716
    %v3718 = vpop.xlane.xlu0 %3717
    %v3719 = vmax.f32 %v3606, %v3608
    %3720 = vmax.xlane.f32.xlu0 %v3719
    %v3721 = vpop.xlane.xlu0 %3720
    %v3722 = vmax.f32 %v3612, %v3614
    %3723 = vmax.xlane.f32.xlu0 %v3722
    %v3724 = vpop.xlane.xlu0 %3723
    %v3725 = vmax.f32 %v3616, %v3618
    %3726 = vmax.xlane.f32.xlu0 %v3725
    %v3727 = vpop.xlane.xlu0 %3726
    %v3728 = vmax.f32 %v3622, %v3624
    %3729 = vmax.xlane.f32.xlu0 %v3728
    %v3730 = vpop.xlane.xlu0 %3729
    %v3731 = vmax.f32 %v3626, %v3628
    %3732 = vmax.xlane.f32.xlu0 %v3731
    %v3733 = vpop.xlane.xlu0 %3732
    %v3734 = vmax.f32 %v3632, %v3634
    %3735 = vmax.xlane.f32.xlu0 %v3734
    %v3736 = vpop.xlane.xlu0 %3735
    %v3737 = vmax.f32 %v3636, %v3638
    %3738 = vmax.xlane.f32.xlu0 %v3737
    %v3739 = vpop.xlane.xlu0 %3738
    %v3740 = vmax.f32 %v3642, %v3644
    %3741 = vmax.xlane.f32.xlu0 %v3740
    %v3742 = vpop.xlane.xlu0 %3741
    %v3743 = vmax.f32 %v3646, %v3648
    %3744 = vmax.xlane.f32.xlu0 %v3743
    %v3745 = vpop.xlane.xlu0 %3744
    %v3746 = vsub.f32 %v3492, %v3652
    %v3747 = vsub.f32 %v3494, %v3652
    %v3748 = vsub.f32 %v3496, %v3655
    %v3749 = vsub.f32 %v3498, %v3655
    %v3750 = vsub.f32 %v3502, %v3658
    %v3751 = vsub.f32 %v3504, %v3658
    %v3752 = vsub.f32 %v3506, %v3661
    %v3753 = vsub.f32 %v3508, %v3661
    %v3754 = vsub.f32 %v3512, %v3664
    %v3755 = vsub.f32 %v3514, %v3664
    %v3756 = vsub.f32 %v3516, %v3667
    %v3757 = vsub.f32 %v3518, %v3667
    %v3758 = vsub.f32 %v3522, %v3670
    %v3759 = vsub.f32 %v3524, %v3670
    %v3760 = vsub.f32 %v3526, %v3673
    %v3761 = vsub.f32 %v3528, %v3673
    %v3762 = vsub.f32 %v3532, %v3676
    %v3763 = vsub.f32 %v3534, %v3676
    %v3764 = vsub.f32 %v3536, %v3679
    %v3765 = vsub.f32 %v3538, %v3679
    %v3766 = vsub.f32 %v3542, %v3682
    %v3767 = vsub.f32 %v3544, %v3682
    %v3768 = vsub.f32 %v3546, %v3685
    %v3769 = vsub.f32 %v3548, %v3685
    %v3770 = vsub.f32 %v3552, %v3688
    %v3771 = vsub.f32 %v3554, %v3688
    %v3772 = vsub.f32 %v3556, %v3691
    %v3773 = vsub.f32 %v3558, %v3691
    %v3774 = vsub.f32 %v3562, %v3694
    %v3775 = vsub.f32 %v3564, %v3694
    %v3776 = vsub.f32 %v3566, %v3697
    %v3777 = vsub.f32 %v3568, %v3697
    %v3778 = vsub.f32 %v3572, %v3700
    %v3779 = vsub.f32 %v3574, %v3700
    %v3780 = vsub.f32 %v3576, %v3703
    %v3781 = vsub.f32 %v3578, %v3703
    %v3782 = vsub.f32 %v3582, %v3706
    %v3783 = vsub.f32 %v3584, %v3706
    %v3784 = vsub.f32 %v3586, %v3709
    %v3785 = vsub.f32 %v3588, %v3709
    %v3786 = vsub.f32 %v3592, %v3712
    %v3787 = vsub.f32 %v3594, %v3712
    %v3788 = vsub.f32 %v3596, %v3715
    %v3789 = vsub.f32 %v3598, %v3715
    %v3790 = vsub.f32 %v3602, %v3718
    %v3791 = vsub.f32 %v3604, %v3718
    %v3792 = vsub.f32 %v3606, %v3721
    %v3793 = vsub.f32 %v3608, %v3721
    %v3794 = vsub.f32 %v3612, %v3724
    %v3795 = vsub.f32 %v3614, %v3724
    %v3796 = vsub.f32 %v3616, %v3727
    %v3797 = vsub.f32 %v3618, %v3727
    %v3798 = vsub.f32 %v3622, %v3730
    %v3799 = vsub.f32 %v3624, %v3730
    %v3800 = vsub.f32 %v3626, %v3733
    %v3801 = vsub.f32 %v3628, %v3733
    %v3802 = vsub.f32 %v3632, %v3736
    %v3803 = vsub.f32 %v3634, %v3736
    %v3804 = vsub.f32 %v3636, %v3739
    %v3805 = vsub.f32 %v3638, %v3739
    %v3806 = vsub.f32 %v3642, %v3742
    %v3807 = vsub.f32 %v3644, %v3742
    %v3808 = vsub.f32 %v3646, %v3745
    %v3809 = vsub.f32 %v3648, %v3745
    %v3810 = vmul.f32 %v3746, 1.442695
    %v3811 = vpow.pop %v3810
    %v3812 = vmul.f32 %v3747, 1.442695
    %v3813 = vpow.pop %v3812
    %v3814 = vmul.f32 %v3748, 1.442695
    %v3815 = vpow.pop %v3814
    %v3816 = vmul.f32 %v3749, 1.442695
    %v3817 = vpow.pop %v3816
    %v3818 = vmul.f32 %v3750, 1.442695
    %v3819 = vpow.pop %v3818
    %v3820 = vmul.f32 %v3751, 1.442695
    %v3821 = vpow.pop %v3820
    %v3822 = vmul.f32 %v3752, 1.442695
    %v3823 = vpow.pop %v3822
    %v3824 = vmul.f32 %v3753, 1.442695
    %v3825 = vpow.pop %v3824
    %v3826 = vmul.f32 %v3754, 1.442695
    %v3827 = vpow.pop %v3826
    %v3828 = vmul.f32 %v3755, 1.442695
    %v3829 = vpow.pop %v3828
    %v3830 = vmul.f32 %v3756, 1.442695
    %v3831 = vpow.pop %v3830
    %v3832 = vmul.f32 %v3757, 1.442695
    %v3833 = vpow.pop %v3832
    %v3834 = vmul.f32 %v3758, 1.442695
    %v3835 = vpow.pop %v3834
    %v3836 = vmul.f32 %v3759, 1.442695
    %v3837 = vpow.pop %v3836
    %v3838 = vmul.f32 %v3760, 1.442695
    %v3839 = vpow.pop %v3838
    %v3840 = vmul.f32 %v3761, 1.442695
    %v3841 = vpow.pop %v3840
    %v3842 = vmul.f32 %v3762, 1.442695
    %v3843 = vpow.pop %v3842
    %v3844 = vmul.f32 %v3763, 1.442695
    %v3845 = vpow.pop %v3844
    %v3846 = vmul.f32 %v3764, 1.442695
    %v3847 = vpow.pop %v3846
    %v3848 = vmul.f32 %v3765, 1.442695
    %v3849 = vpow.pop %v3848
    %v3850 = vmul.f32 %v3766, 1.442695
    %v3851 = vpow.pop %v3850
    %v3852 = vmul.f32 %v3767, 1.442695
    %v3853 = vpow.pop %v3852
    %v3854 = vmul.f32 %v3768, 1.442695
    %v3855 = vpow.pop %v3854
    %v3856 = vmul.f32 %v3769, 1.442695
    %v3857 = vpow.pop %v3856
    %v3858 = vmul.f32 %v3770, 1.442695
    %v3859 = vpow.pop %v3858
    %v3860 = vmul.f32 %v3771, 1.442695
    %v3861 = vpow.pop %v3860
    %v3862 = vmul.f32 %v3772, 1.442695
    %v3863 = vpow.pop %v3862
    %v3864 = vmul.f32 %v3773, 1.442695
    %v3865 = vpow.pop %v3864
    %v3866 = vmul.f32 %v3774, 1.442695
    %v3867 = vpow.pop %v3866
    %v3868 = vmul.f32 %v3775, 1.442695
    %v3869 = vpow.pop %v3868
    %v3870 = vmul.f32 %v3776, 1.442695
    %v3871 = vpow.pop %v3870
    %v3872 = vmul.f32 %v3777, 1.442695
    %v3873 = vpow.pop %v3872
    %v3874 = vmul.f32 %v3778, 1.442695
    %v3875 = vpow.pop %v3874
    %v3876 = vmul.f32 %v3779, 1.442695
    %v3877 = vpow.pop %v3876
    %v3878 = vmul.f32 %v3780, 1.442695
    %v3879 = vpow.pop %v3878
    %v3880 = vmul.f32 %v3781, 1.442695
    %v3881 = vpow.pop %v3880
    %v3882 = vmul.f32 %v3782, 1.442695
    %v3883 = vpow.pop %v3882
    %v3884 = vmul.f32 %v3783, 1.442695
    %v3885 = vpow.pop %v3884
    %v3886 = vmul.f32 %v3784, 1.442695
    %v3887 = vpow.pop %v3886
    %v3888 = vmul.f32 %v3785, 1.442695
    %v3889 = vpow.pop %v3888
    %v3890 = vmul.f32 %v3786, 1.442695
    %v3891 = vpow.pop %v3890
    %v3892 = vmul.f32 %v3787, 1.442695
    %v3893 = vpow.pop %v3892
    %v3894 = vmul.f32 %v3788, 1.442695
    %v3895 = vpow.pop %v3894
    %v3896 = vmul.f32 %v3789, 1.442695
    %v3897 = vpow.pop %v3896
    %v3898 = vmul.f32 %v3790, 1.442695
    %v3899 = vpow.pop %v3898
    %v3900 = vmul.f32 %v3791, 1.442695
    %v3901 = vpow.pop %v3900
    %v3902 = vmul.f32 %v3792, 1.442695
    %v3903 = vpow.pop %v3902
    %v3904 = vmul.f32 %v3793, 1.442695
    %v3905 = vpow.pop %v3904
    %v3906 = vmul.f32 %v3794, 1.442695
    %v3907 = vpow.pop %v3906
    %v3908 = vmul.f32 %v3795, 1.442695
    %v3909 = vpow.pop %v3908
    %v3910 = vmul.f32 %v3796, 1.442695
    %v3911 = vpow.pop %v3910
    %v3912 = vmul.f32 %v3797, 1.442695
    %v3913 = vpow.pop %v3912
    %v3914 = vmul.f32 %v3798, 1.442695
    %v3915 = vpow.pop %v3914
    %v3916 = vmul.f32 %v3799, 1.442695
    %v3917 = vpow.pop %v3916
    %v3918 = vmul.f32 %v3800, 1.442695
    %v3919 = vpow.pop %v3918
    %v3920 = vmul.f32 %v3801, 1.442695
    %v3921 = vpow.pop %v3920
    %v3922 = vmul.f32 %v3802, 1.442695
    %v3923 = vpow.pop %v3922
    %v3924 = vmul.f32 %v3803, 1.442695
    %v3925 = vpow.pop %v3924
    %v3926 = vmul.f32 %v3804, 1.442695
    %v3927 = vpow.pop %v3926
    %v3928 = vmul.f32 %v3805, 1.442695
    %v3929 = vpow.pop %v3928
    %v3930 = vmul.f32 %v3806, 1.442695
    %v3931 = vpow.pop %v3930
    %v3932 = vmul.f32 %v3807, 1.442695
    %v3933 = vpow.pop %v3932
    %v3934 = vmul.f32 %v3808, 1.442695
    %v3935 = vpow.pop %v3934
    %v3936 = vmul.f32 %v3809, 1.442695
    %v3937 = vpow.pop %v3936
    %v3938 = vadd.f32 %v3811, %v3813
    %3939 = vadd.xlane.f32.xlu0 %v3938
    %v3940 = vpop.xlane.xlu0 %3939
    %v3941 = vadd.f32 %v3815, %v3817
    %3942 = vadd.xlane.f32.xlu0 %v3941
    %v3943 = vpop.xlane.xlu0 %3942
    %v3944 = vadd.f32 %v3819, %v3821
    %3945 = vadd.xlane.f32.xlu0 %v3944
    %v3946 = vpop.xlane.xlu0 %3945
    %v3947 = vadd.f32 %v3823, %v3825
    %3948 = vadd.xlane.f32.xlu0 %v3947
    %v3949 = vpop.xlane.xlu0 %3948
    %v3950 = vadd.f32 %v3827, %v3829
    %3951 = vadd.xlane.f32.xlu0 %v3950
    %v3952 = vpop.xlane.xlu0 %3951
    %v3953 = vadd.f32 %v3831, %v3833
    %3954 = vadd.xlane.f32.xlu0 %v3953
    %v3955 = vpop.xlane.xlu0 %3954
    %v3956 = vadd.f32 %v3835, %v3837
    %3957 = vadd.xlane.f32.xlu0 %v3956
    %v3958 = vpop.xlane.xlu0 %3957
    %v3959 = vadd.f32 %v3839, %v3841
    %3960 = vadd.xlane.f32.xlu0 %v3959
    %v3961 = vpop.xlane.xlu0 %3960
    %v3962 = vadd.f32 %v3843, %v3845
    %3963 = vadd.xlane.f32.xlu0 %v3962
    %v3964 = vpop.xlane.xlu0 %3963
    %v3965 = vadd.f32 %v3847, %v3849
    %3966 = vadd.xlane.f32.xlu0 %v3965
    %v3967 = vpop.xlane.xlu0 %3966
    %v3968 = vadd.f32 %v3851, %v3853
    %3969 = vadd.xlane.f32.xlu0 %v3968
    %v3970 = vpop.xlane.xlu0 %3969
    %v3971 = vadd.f32 %v3855, %v3857
    %3972 = vadd.xlane.f32.xlu0 %v3971
    %v3973 = vpop.xlane.xlu0 %3972
    %v3974 = vadd.f32 %v3859, %v3861
    %3975 = vadd.xlane.f32.xlu0 %v3974
    %v3976 = vpop.xlane.xlu0 %3975
    %v3977 = vadd.f32 %v3863, %v3865
    %3978 = vadd.xlane.f32.xlu0 %v3977
    %v3979 = vpop.xlane.xlu0 %3978
    %v3980 = vadd.f32 %v3867, %v3869
    %3981 = vadd.xlane.f32.xlu0 %v3980
    %v3982 = vpop.xlane.xlu0 %3981
    %v3983 = vadd.f32 %v3871, %v3873
    %3984 = vadd.xlane.f32.xlu0 %v3983
    %v3985 = vpop.xlane.xlu0 %3984
    %v3986 = vadd.f32 %v3875, %v3877
    %3987 = vadd.xlane.f32.xlu0 %v3986
    %v3988 = vpop.xlane.xlu0 %3987
    %v3989 = vadd.f32 %v3879, %v3881
    %3990 = vadd.xlane.f32.xlu0 %v3989
    %v3991 = vpop.xlane.xlu0 %3990
    %v3992 = vadd.f32 %v3883, %v3885
    %3993 = vadd.xlane.f32.xlu0 %v3992
    %v3994 = vpop.xlane.xlu0 %3993
    %v3995 = vadd.f32 %v3887, %v3889
    %3996 = vadd.xlane.f32.xlu0 %v3995
    %v3997 = vpop.xlane.xlu0 %3996
    %v3998 = vadd.f32 %v3891, %v3893
    %3999 = vadd.xlane.f32.xlu0 %v3998
    %v4000 = vpop.xlane.xlu0 %3999
    %v4001 = vadd.f32 %v3895, %v3897
    %4002 = vadd.xlane.f32.xlu0 %v4001
    %v4003 = vpop.xlane.xlu0 %4002
    %v4004 = vadd.f32 %v3899, %v3901
    %4005 = vadd.xlane.f32.xlu0 %v4004
    %v4006 = vpop.xlane.xlu0 %4005
    %v4007 = vadd.f32 %v3903, %v3905
    %4008 = vadd.xlane.f32.xlu0 %v4007
    %v4009 = vpop.xlane.xlu0 %4008
    %v4010 = vadd.f32 %v3907, %v3909
    %4011 = vadd.xlane.f32.xlu0 %v4010
    %v4012 = vpop.xlane.xlu0 %4011
    %v4013 = vadd.f32 %v3911, %v3913
    %4014 = vadd.xlane.f32.xlu0 %v4013
    %v4015 = vpop.xlane.xlu0 %4014
    %v4016 = vadd.f32 %v3915, %v3917
    %4017 = vadd.xlane.f32.xlu0 %v4016
    %v4018 = vpop.xlane.xlu0 %4017
    %v4019 = vadd.f32 %v3919, %v3921
    %4020 = vadd.xlane.f32.xlu0 %v4019
    %v4021 = vpop.xlane.xlu0 %4020
    %v4022 = vadd.f32 %v3923, %v3925
    %4023 = vadd.xlane.f32.xlu0 %v4022
    %v4024 = vpop.xlane.xlu0 %4023
    %v4025 = vadd.f32 %v3927, %v3929
    %4026 = vadd.xlane.f32.xlu0 %v4025
    %v4027 = vpop.xlane.xlu0 %4026
    %v4028 = vadd.f32 %v3931, %v3933
    %4029 = vadd.xlane.f32.xlu0 %v4028
    %v4030 = vpop.xlane.xlu0 %4029
    %v4031 = vadd.f32 %v3935, %v3937
    %4032 = vadd.xlane.f32.xlu0 %v4031
    %v4033 = vpop.xlane.xlu0 %4032
    %v4034 = vrcp.pop %v3940
    %v4035 = vrcp.pop %v3943
    %v4036 = vrcp.pop %v3946
    %v4037 = vrcp.pop %v3949
    %v4038 = vrcp.pop %v3952
    %v4039 = vrcp.pop %v3955
    %v4040 = vrcp.pop %v3958
    %v4041 = vrcp.pop %v3961
    %v4042 = vrcp.pop %v3964
    %v4043 = vrcp.pop %v3967
    %v4044 = vrcp.pop %v3970
    %v4045 = vrcp.pop %v3973
    %v4046 = vrcp.pop %v3976
    %v4047 = vrcp.pop %v3979
    %v4048 = vrcp.pop %v3982
    %v4049 = vrcp.pop %v3985
    %v4050 = vrcp.pop %v3988
    %v4051 = vrcp.pop %v3991
    %v4052 = vrcp.pop %v3994
    %v4053 = vrcp.pop %v3997
    %v4054 = vrcp.pop %v4000
    %v4055 = vrcp.pop %v4003
    %v4056 = vrcp.pop %v4006
    %v4057 = vrcp.pop %v4009
    %v4058 = vrcp.pop %v4012
    %v4059 = vrcp.pop %v4015
    %v4060 = vrcp.pop %v4018
    %v4061 = vrcp.pop %v4021
    %v4062 = vrcp.pop %v4024
    %v4063 = vrcp.pop %v4027
    %v4064 = vrcp.pop %v4030
    %v4065 = vrcp.pop %v4033
    %v4066 = vmul.f32 %v3811, %v4034
    %v4067 = vmul.f32 %v3813, %v4034
    %v4068 = vmul.f32 %v3815, %v4035
    %v4069 = vmul.f32 %v3817, %v4035
    %v4070 = vmul.f32 %v3819, %v4036
    %v4071 = vmul.f32 %v3821, %v4036
    %v4072 = vmul.f32 %v3823, %v4037
    %v4073 = vmul.f32 %v3825, %v4037
    %v4074 = vmul.f32 %v3827, %v4038
    %v4075 = vmul.f32 %v3829, %v4038
    %v4076 = vmul.f32 %v3831, %v4039
    %v4077 = vmul.f32 %v3833, %v4039
    %v4078 = vmul.f32 %v3835, %v4040
    %v4079 = vmul.f32 %v3837, %v4040
    %v4080 = vmul.f32 %v3839, %v4041
    %v4081 = vmul.f32 %v3841, %v4041
    %v4082 = vmul.f32 %v3843, %v4042
    %v4083 = vmul.f32 %v3845, %v4042
    %v4084 = vmul.f32 %v3847, %v4043
    %v4085 = vmul.f32 %v3849, %v4043
    %v4086 = vmul.f32 %v3851, %v4044
    %v4087 = vmul.f32 %v3853, %v4044
    %v4088 = vmul.f32 %v3855, %v4045
    %v4089 = vmul.f32 %v3857, %v4045
    %v4090 = vmul.f32 %v3859, %v4046
    %v4091 = vmul.f32 %v3861, %v4046
    %v4092 = vmul.f32 %v3863, %v4047
    %v4093 = vmul.f32 %v3865, %v4047
    %v4094 = vmul.f32 %v3867, %v4048
    %v4095 = vmul.f32 %v3869, %v4048
    %v4096 = vmul.f32 %v3871, %v4049
    %v4097 = vmul.f32 %v3873, %v4049
    %v4098 = vmul.f32 %v3875, %v4050
    %v4099 = vmul.f32 %v3877, %v4050
    %v4100 = vmul.f32 %v3879, %v4051
    %v4101 = vmul.f32 %v3881, %v4051
    %v4102 = vmul.f32 %v3883, %v4052
    %v4103 = vmul.f32 %v3885, %v4052
    %v4104 = vmul.f32 %v3887, %v4053
    %v4105 = vmul.f32 %v3889, %v4053
    %v4106 = vmul.f32 %v3891, %v4054
    %v4107 = vmul.f32 %v3893, %v4054
    %v4108 = vmul.f32 %v3895, %v4055
    %v4109 = vmul.f32 %v3897, %v4055
    %v4110 = vmul.f32 %v3899, %v4056
    %v4111 = vmul.f32 %v3901, %v4056
    %v4112 = vmul.f32 %v3903, %v4057
    %v4113 = vmul.f32 %v3905, %v4057
    %v4114 = vmul.f32 %v3907, %v4058
    %v4115 = vmul.f32 %v3909, %v4058
    %v4116 = vmul.f32 %v3911, %v4059
    %v4117 = vmul.f32 %v3913, %v4059
    %v4118 = vmul.f32 %v3915, %v4060
    %v4119 = vmul.f32 %v3917, %v4060
    %v4120 = vmul.f32 %v3919, %v4061
    %v4121 = vmul.f32 %v3921, %v4061
    %v4122 = vmul.f32 %v3923, %v4062
    %v4123 = vmul.f32 %v3925, %v4062
    %v4124 = vmul.f32 %v3927, %v4063
    %v4125 = vmul.f32 %v3929, %v4063
    %v4126 = vmul.f32 %v3931, %v4064
    %v4127 = vmul.f32 %v3933, %v4064
    %v4128 = vmul.f32 %v3935, %v4065
    %v4129 = vmul.f32 %v3937, %v4065
    %v4130 = vpack.c.bf16 %v4068, %v4066
    %v4131 = vpack.c.bf16 %v4069, %v4067
    %v4132 = vpack.c.bf16 %v4072, %v4070
    %v4133 = vpack.c.bf16 %v4073, %v4071
    %v4134 = vpack.c.bf16 %v4076, %v4074
    %v4135 = vpack.c.bf16 %v4077, %v4075
    %v4136 = vpack.c.bf16 %v4080, %v4078
    %v4137 = vpack.c.bf16 %v4081, %v4079
    %v4138 = vpack.c.bf16 %v4084, %v4082
    %v4139 = vpack.c.bf16 %v4085, %v4083
    %v4140 = vpack.c.bf16 %v4088, %v4086
    %v4141 = vpack.c.bf16 %v4089, %v4087
    %v4142 = vpack.c.bf16 %v4092, %v4090
    %v4143 = vpack.c.bf16 %v4093, %v4091
    %v4144 = vpack.c.bf16 %v4096, %v4094
    %v4145 = vpack.c.bf16 %v4097, %v4095
    %v4146 = vpack.c.bf16 %v4100, %v4098
    %v4147 = vpack.c.bf16 %v4101, %v4099
    %v4148 = vpack.c.bf16 %v4104, %v4102
    %v4149 = vpack.c.bf16 %v4105, %v4103
    %v4150 = vpack.c.bf16 %v4108, %v4106
    %v4151 = vpack.c.bf16 %v4109, %v4107
    %v4152 = vpack.c.bf16 %v4112, %v4110
    %v4153 = vpack.c.bf16 %v4113, %v4111
    %v4154 = vpack.c.bf16 %v4116, %v4114
    %v4155 = vpack.c.bf16 %v4117, %v4115
    %v4156 = vpack.c.bf16 %v4120, %v4118
    %v4157 = vpack.c.bf16 %v4121, %v4119
    %v4158 = vpack.c.bf16 %v4124, %v4122
    %v4159 = vpack.c.bf16 %v4125, %v4123
    %v4160 = vpack.c.bf16 %v4128, %v4126
    %v4161 = vpack.c.bf16 %v4129, %v4127
    %4162 = vmatprep.subr.bf16.mxu0 %v4145
    %4163 = vmatpush1.bf16.xpose.msra.mxu0 %v4144
    %4164 = vmatprep.subr.bf16.mxu0 %v4143
    %4165 = vmatpush1.bf16.xpose.msra.mxu0 %v4142
    %4166 = vmatprep.subr.bf16.mxu0 %v4141
    %4167 = vmatpush1.bf16.xpose.msra.mxu0 %v4140
    %4168 = vmatprep.subr.bf16.mxu0 %v4139
    %4169 = vmatpush1.bf16.xpose.msra.mxu0 %v4138
    %4170 = vmatprep.subr.bf16.mxu0 %v4137
    %4171 = vmatpush1.bf16.xpose.msra.mxu0 %v4136
    %4172 = vmatprep.subr.bf16.mxu0 %v4135
    %4173 = vmatpush1.bf16.xpose.msra.mxu0 %v4134
    %4174 = vmatprep.subr.bf16.mxu0 %v4133
    %4175 = vmatpush1.bf16.xpose.msra.mxu0 %v4132
    %4176 = vmatprep.subr.bf16.mxu0 %v4131
    %4177 = vmatpush1.bf16.xpose.msra.mxu0 %v4130
    %4178 = vmatprep.subr.bf16.mxu0 %v4161
    %4179 = vmatpush2.bf16.xpose.msra.mxu0 %v4160
    %4180 = vmatprep.subr.bf16.mxu0 %v4159
    %4181 = vmatpush2.bf16.xpose.msra.mxu0 %v4158
    %4182 = vmatprep.subr.bf16.mxu0 %v4157
    %4183 = vmatpush2.bf16.xpose.msra.mxu0 %v4156
    %4184 = vmatprep.subr.bf16.mxu0 %v4155
    %4185 = vmatpush2.bf16.xpose.msra.mxu0 %v4154
    %4186 = vmatprep.subr.bf16.mxu0 %v4153
    %4187 = vmatpush2.bf16.xpose.msra.mxu0 %v4152
    %4188 = vmatprep.subr.bf16.mxu0 %v4151
    %4189 = vmatpush2.bf16.xpose.msra.mxu0 %v4150
    %4190 = vmatprep.subr.bf16.mxu0 %v4149
    %4191 = vmatpush2.bf16.xpose.msra.mxu0 %v4148
    %4192 = vmatprep.subr.bf16.mxu0 %v4147
    %4193 = vmatpush2.bf16.xpose.msra.mxu0 %v4146
    %4194 = vmatprep.mubr.bf16.mxu0 %v3370
    %4195 = vmatmul.mubr.bf16.gmra.mxu0 %v3369
    %v4196 = vpop.f32.mrf.mxu0
    %v4197 = vadd.f32 0.0, %v4196
    %v4198 = vpop.f32.mrf.mxu0
    %v4199 = vadd.f32 0.0, %v4198
    %v4200 = vpop.f32.mrf.mxu0
    %v4201 = vpop.f32.mrf.mxu0
    %4202 = vdwg.mxu0
    %v4203 = vstv %s3366
    %v4204 = vmul.f32 %v4203, %v4197
    %v4205 = vmul.f32 %v4203, %v4199
    %v4206 = vadd.f32 %v4204, %v2789
    %v4207 = vadd.f32 %v4205, %v2916
    %s4208 = sld [smem:[#allocation4 + $0x1]]
    %v4209 = vpack.c.bf16 %v3309, %v3309
    %v4210 = vpack.c.bf16 %v3310, %v3310
    %v4211 = vpack.c.bf16 %v3362, %v3362
    %v4212 = vpack.c.bf16 %v3363, %v3363
    %4213 = vxpose.xlu0.c.b16.start [1/8] %v4209, 128
    %4214 = vxpose.xlu0.c.b16.cont [2/8] 0, 128
    %4215 = vxpose.xlu0.c.b16.cont [3/8] 0, 128
    %4216 = vxpose.xlu0.c.b16.cont [4/8] 0, 128
    %4217 = vxpose.xlu0.c.b16.cont [5/8] 0, 128
    %4218 = vxpose.xlu0.c.b16.cont [6/8] 0, 128
    %4219 = vxpose.xlu0.c.b16.cont [7/8] 0, 128
    %4220 = vxpose.xlu0.c.b16.end [8/8] 0, 128
    %v4221 = vpop.trf.xlu0
    %v4222 = vpop.trf.xlu0
    %v4223 = vpop.trf.xlu0
    %v4224 = vpop.trf.xlu0
    %v4225 = vpop.trf.xlu0
    %v4226 = vpop.trf.xlu0
    %v4227 = vpop.trf.xlu0
    %v4228 = vpop.trf.xlu0
    %4229 = vxpose.xlu0.c.b16.start [1/8] %v4210, 128
    %4230 = vxpose.xlu0.c.b16.cont [2/8] 0, 128
    %4231 = vxpose.xlu0.c.b16.cont [3/8] 0, 128
    %4232 = vxpose.xlu0.c.b16.cont [4/8] 0, 128
    %4233 = vxpose.xlu0.c.b16.cont [5/8] 0, 128
    %4234 = vxpose.xlu0.c.b16.cont [6/8] 0, 128
    %4235 = vxpose.xlu0.c.b16.cont [7/8] 0, 128
    %4236 = vxpose.xlu0.c.b16.end [8/8] 0, 128
    %v4237 = vpop.trf.xlu0
    %v4238 = vpop.trf.xlu0
    %v4239 = vpop.trf.xlu0
    %v4240 = vpop.trf.xlu0
    %v4241 = vpop.trf.xlu0
    %v4242 = vpop.trf.xlu0
    %v4243 = vpop.trf.xlu0
    %v4244 = vpop.trf.xlu0
    %v4246 = vsel %vm781, %v4221, 0
    %v4249 = vsel %vm781, %v4222, 0
    %v4252 = vsel %vm781, %v4223, 0
    %v4255 = vsel %vm781, %v4224, 0
    %v4258 = vsel %vm781, %v4225, 0
    %v4261 = vsel %vm781, %v4226, 0
    %v4264 = vsel %vm781, %v4227, 0
    %v4267 = vsel %vm781, %v4228, 0
    %v4270 = vsel %vm781, %v4237, 0
    %v4273 = vsel %vm781, %v4238, 0
    %v4276 = vsel %vm781, %v4239, 0
    %v4279 = vsel %vm781, %v4240, 0
    %v4282 = vsel %vm781, %v4241, 0
    %v4285 = vsel %vm781, %v4242, 0
    %v4288 = vsel %vm781, %v4243, 0
    %v4291 = vsel %vm781, %v4244, 0
    %4293 = vmatprep.subr.bf16.mxu0 0
    %4294 = vmatpush1.bf16.msra.mxu0 0
    %4295 = vmatprep.subr.bf16.mxu0 0
    %4296 = vmatpush1.bf16.msra.mxu0 0
    %4297 = vmatprep.subr.bf16.mxu0 0
    %4298 = vmatpush1.bf16.msra.mxu0 0
    %4299 = vmatprep.subr.bf16.mxu0 0
    %4300 = vmatpush1.bf16.msra.mxu0 0
    %4301 = vmatprep.subr.bf16.mxu0 0
    %4302 = vmatpush1.bf16.msra.mxu0 0
    %4303 = vmatprep.subr.bf16.mxu0 0
    %4304 = vmatpush1.bf16.msra.mxu0 0
    %4305 = vmatprep.subr.bf16.mxu0 0
    %4306 = vmatpush1.bf16.msra.mxu0 0
    %4307 = vmatprep.subr.bf16.mxu0 %v3455
    %4308 = vmatpush1.bf16.msra.mxu0 %v3452
    %4309 = vmatprep.subr.bf16.mxu0 0
    %4310 = vmatpush2.bf16.msra.mxu0 0
    %4311 = vmatprep.subr.bf16.mxu0 0
    %4312 = vmatpush2.bf16.msra.mxu0 0
    %4313 = vmatprep.subr.bf16.mxu0 0
    %4314 = vmatpush2.bf16.msra.mxu0 0
    %4315 = vmatprep.subr.bf16.mxu0 0
    %4316 = vmatpush2.bf16.msra.mxu0 0
    %4317 = vmatprep.subr.bf16.mxu0 0
    %4318 = vmatpush2.bf16.msra.mxu0 0
    %4319 = vmatprep.subr.bf16.mxu0 0
    %4320 = vmatpush2.bf16.msra.mxu0 0
    %4321 = vmatprep.subr.bf16.mxu0 0
    %4322 = vmatpush2.bf16.msra.mxu0 0
    %4323 = vmatprep.subr.bf16.mxu0 0
    %4324 = vmatpush2.bf16.msra.mxu0 0
    %4325 = vmatprep.mubr.bf16.mxu0 0
    %4326 = vmatmul.mubr.bf16.gmra.mxu0 %v4246
    %v4327 = vpop.f32.mrf.mxu0
    %v4328 = vadd.f32 0.0, %v4327
    %v4329 = vpop.f32.mrf.mxu0
    %v4330 = vadd.f32 0.0, %v4329
    %v4331 = vpop.f32.mrf.mxu0
    %v4332 = vadd.f32 0.0, %v4331
    %v4333 = vpop.f32.mrf.mxu0
    %v4334 = vadd.f32 0.0, %v4333
    %4335 = vmatprep.mubr.bf16.mxu0 0
    %4336 = vmatmul.mubr.bf16.gmra.mxu0 %v4249
    %v4337 = vpop.f32.mrf.mxu0
    %v4338 = vadd.f32 0.0, %v4337
    %v4339 = vpop.f32.mrf.mxu0
    %v4340 = vadd.f32 0.0, %v4339
    %v4341 = vpop.f32.mrf.mxu0
    %v4342 = vadd.f32 0.0, %v4341
    %v4343 = vpop.f32.mrf.mxu0
    %v4344 = vadd.f32 0.0, %v4343
    %4345 = vmatprep.mubr.bf16.mxu0 0
    %4346 = vmatmul.mubr.bf16.gmra.mxu0 %v4252
    %v4347 = vpop.f32.mrf.mxu0
    %v4348 = vadd.f32 0.0, %v4347
    %v4349 = vpop.f32.mrf.mxu0
    %v4350 = vadd.f32 0.0, %v4349
    %v4351 = vpop.f32.mrf.mxu0
    %v4352 = vadd.f32 0.0, %v4351
    %v4353 = vpop.f32.mrf.mxu0
    %v4354 = vadd.f32 0.0, %v4353
    %4355 = vmatprep.mubr.bf16.mxu0 0
    %4356 = vmatmul.mubr.bf16.gmra.mxu0 %v4255
    %v4357 = vpop.f32.mrf.mxu0
    %v4358 = vadd.f32 0.0, %v4357
    %v4359 = vpop.f32.mrf.mxu0
    %v4360 = vadd.f32 0.0, %v4359
    %v4361 = vpop.f32.mrf.mxu0
    %v4362 = vadd.f32 0.0, %v4361
    %v4363 = vpop.f32.mrf.mxu0
    %v4364 = vadd.f32 0.0, %v4363
    %4365 = vmatprep.mubr.bf16.mxu0 0
    %4366 = vmatmul.mubr.bf16.gmra.mxu0 %v4258
    %v4367 = vpop.f32.mrf.mxu0
    %v4368 = vadd.f32 0.0, %v4367
    %v4369 = vpop.f32.mrf.mxu0
    %v4370 = vadd.f32 0.0, %v4369
    %v4371 = vpop.f32.mrf.mxu0
    %v4372 = vadd.f32 0.0, %v4371
    %v4373 = vpop.f32.mrf.mxu0
    %v4374 = vadd.f32 0.0, %v4373
    %4375 = vmatprep.mubr.bf16.mxu0 0
    %4376 = vmatmul.mubr.bf16.gmra.mxu0 %v4261
    %v4377 = vpop.f32.mrf.mxu0
    %v4378 = vadd.f32 0.0, %v4377
    %v4379 = vpop.f32.mrf.mxu0
    %v4380 = vadd.f32 0.0, %v4379
    %v4381 = vpop.f32.mrf.mxu0
    %v4382 = vadd.f32 0.0, %v4381
    %v4383 = vpop.f32.mrf.mxu0
    %v4384 = vadd.f32 0.0, %v4383
    %4385 = vmatprep.mubr.bf16.mxu0 0
    %4386 = vmatmul.mubr.bf16.gmra.mxu0 %v4264
    %v4387 = vpop.f32.mrf.mxu0
    %v4388 = vadd.f32 0.0, %v4387
    %v4389 = vpop.f32.mrf.mxu0
    %v4390 = vadd.f32 0.0, %v4389
    %v4391 = vpop.f32.mrf.mxu0
    %v4392 = vadd.f32 0.0, %v4391
    %v4393 = vpop.f32.mrf.mxu0
    %v4394 = vadd.f32 0.0, %v4393
    %4395 = vmatprep.mubr.bf16.mxu0 0
    %4396 = vmatmul.mubr.bf16.gmra.mxu0 %v4267
    %v4397 = vpop.f32.mrf.mxu0
    %v4398 = vadd.f32 0.0, %v4397
    %v4399 = vpop.f32.mrf.mxu0
    %v4400 = vadd.f32 0.0, %v4399
    %v4401 = vpop.f32.mrf.mxu0
    %v4402 = vadd.f32 0.0, %v4401
    %v4403 = vpop.f32.mrf.mxu0
    %v4404 = vadd.f32 0.0, %v4403
    %4405 = vmatprep.mubr.bf16.mxu0 0
    %4406 = vmatmul.mubr.bf16.gmra.mxu0 %v4270
    %v4407 = vpop.f32.mrf.mxu0
    %v4408 = vadd.f32 0.0, %v4407
    %v4409 = vpop.f32.mrf.mxu0
    %v4410 = vadd.f32 0.0, %v4409
    %v4411 = vpop.f32.mrf.mxu0
    %v4412 = vadd.f32 0.0, %v4411
    %v4413 = vpop.f32.mrf.mxu0
    %v4414 = vadd.f32 0.0, %v4413
    %4415 = vmatprep.mubr.bf16.mxu0 0
    %4416 = vmatmul.mubr.bf16.gmra.mxu0 %v4273
    %v4417 = vpop.f32.mrf.mxu0
    %v4418 = vadd.f32 0.0, %v4417
    %v4419 = vpop.f32.mrf.mxu0
    %v4420 = vadd.f32 0.0, %v4419
    %v4421 = vpop.f32.mrf.mxu0
    %v4422 = vadd.f32 0.0, %v4421
    %v4423 = vpop.f32.mrf.mxu0
    %v4424 = vadd.f32 0.0, %v4423
    %4425 = vmatprep.mubr.bf16.mxu0 0
    %4426 = vmatmul.mubr.bf16.gmra.mxu0 %v4276
    %v4427 = vpop.f32.mrf.mxu0
    %v4428 = vadd.f32 0.0, %v4427
    %v4429 = vpop.f32.mrf.mxu0
    %v4430 = vadd.f32 0.0, %v4429
    %v4431 = vpop.f32.mrf.mxu0
    %v4432 = vadd.f32 0.0, %v4431
    %v4433 = vpop.f32.mrf.mxu0
    %v4434 = vadd.f32 0.0, %v4433
    %4435 = vmatprep.mubr.bf16.mxu0 0
    %4436 = vmatmul.mubr.bf16.gmra.mxu0 %v4279
    %v4437 = vpop.f32.mrf.mxu0
    %v4438 = vadd.f32 0.0, %v4437
    %v4439 = vpop.f32.mrf.mxu0
    %v4440 = vadd.f32 0.0, %v4439
    %v4441 = vpop.f32.mrf.mxu0
    %v4442 = vadd.f32 0.0, %v4441
    %v4443 = vpop.f32.mrf.mxu0
    %v4444 = vadd.f32 0.0, %v4443
    %4445 = vmatprep.mubr.bf16.mxu0 0
    %4446 = vmatmul.mubr.bf16.gmra.mxu0 %v4282
    %v4447 = vpop.f32.mrf.mxu0
    %v4448 = vadd.f32 0.0, %v4447
    %v4449 = vpop.f32.mrf.mxu0
    %v4450 = vadd.f32 0.0, %v4449
    %v4451 = vpop.f32.mrf.mxu0
    %v4452 = vadd.f32 0.0, %v4451
    %v4453 = vpop.f32.mrf.mxu0
    %v4454 = vadd.f32 0.0, %v4453
    %4455 = vmatprep.mubr.bf16.mxu0 0
    %4456 = vmatmul.mubr.bf16.gmra.mxu0 %v4285
    %v4457 = vpop.f32.mrf.mxu0
    %v4458 = vadd.f32 0.0, %v4457
    %v4459 = vpop.f32.mrf.mxu0
    %v4460 = vadd.f32 0.0, %v4459
    %v4461 = vpop.f32.mrf.mxu0
    %v4462 = vadd.f32 0.0, %v4461
    %v4463 = vpop.f32.mrf.mxu0
    %v4464 = vadd.f32 0.0, %v4463
    %4465 = vmatprep.mubr.bf16.mxu0 0
    %4466 = vmatmul.mubr.bf16.gmra.mxu0 %v4288
    %v4467 = vpop.f32.mrf.mxu0
    %v4468 = vadd.f32 0.0, %v4467
    %v4469 = vpop.f32.mrf.mxu0
    %v4470 = vadd.f32 0.0, %v4469
    %v4471 = vpop.f32.mrf.mxu0
    %v4472 = vadd.f32 0.0, %v4471
    %v4473 = vpop.f32.mrf.mxu0
    %v4474 = vadd.f32 0.0, %v4473
    %4475 = vmatprep.mubr.bf16.mxu0 0
    %4476 = vmatmul.mubr.bf16.gmra.mxu0 %v4291
    %v4477 = vpop.f32.mrf.mxu0
    %v4478 = vadd.f32 0.0, %v4477
    %v4479 = vpop.f32.mrf.mxu0
    %v4480 = vadd.f32 0.0, %v4479
    %v4481 = vpop.f32.mrf.mxu0
    %v4482 = vadd.f32 0.0, %v4481
    %v4483 = vpop.f32.mrf.mxu0
    %v4484 = vadd.f32 0.0, %v4483
    %4485 = vdwg.mxu0
    %v4486 = vmax.f32 %v4328, %v4330
    %4487 = vmax.xlane.f32.xlu0 %v4486
    %v4488 = vpop.xlane.xlu0 %4487
    %v4489 = vmax.f32 %v4332, %v4334
    %4490 = vmax.xlane.f32.xlu0 %v4489
    %v4491 = vpop.xlane.xlu0 %4490
    %v4492 = vmax.f32 %v4338, %v4340
    %4493 = vmax.xlane.f32.xlu0 %v4492
    %v4494 = vpop.xlane.xlu0 %4493
    %v4495 = vmax.f32 %v4342, %v4344
    %4496 = vmax.xlane.f32.xlu0 %v4495
    %v4497 = vpop.xlane.xlu0 %4496
    %v4498 = vmax.f32 %v4348, %v4350
    %4499 = vmax.xlane.f32.xlu0 %v4498
    %v4500 = vpop.xlane.xlu0 %4499
    %v4501 = vmax.f32 %v4352, %v4354
    %4502 = vmax.xlane.f32.xlu0 %v4501
    %v4503 = vpop.xlane.xlu0 %4502
    %v4504 = vmax.f32 %v4358, %v4360
    %4505 = vmax.xlane.f32.xlu0 %v4504
    %v4506 = vpop.xlane.xlu0 %4505
    %v4507 = vmax.f32 %v4362, %v4364
    %4508 = vmax.xlane.f32.xlu0 %v4507
    %v4509 = vpop.xlane.xlu0 %4508
    %v4510 = vmax.f32 %v4368, %v4370
    %4511 = vmax.xlane.f32.xlu0 %v4510
    %v4512 = vpop.xlane.xlu0 %4511
    %v4513 = vmax.f32 %v4372, %v4374
    %4514 = vmax.xlane.f32.xlu0 %v4513
    %v4515 = vpop.xlane.xlu0 %4514
    %v4516 = vmax.f32 %v4378, %v4380
    %4517 = vmax.xlane.f32.xlu0 %v4516
    %v4518 = vpop.xlane.xlu0 %4517
    %v4519 = vmax.f32 %v4382, %v4384
    %4520 = vmax.xlane.f32.xlu0 %v4519
    %v4521 = vpop.xlane.xlu0 %4520
    %v4522 = vmax.f32 %v4388, %v4390
    %4523 = vmax.xlane.f32.xlu0 %v4522
    %v4524 = vpop.xlane.xlu0 %4523
    %v4525 = vmax.f32 %v4392, %v4394
    %4526 = vmax.xlane.f32.xlu0 %v4525
    %v4527 = vpop.xlane.xlu0 %4526
    %v4528 = vmax.f32 %v4398, %v4400
    %4529 = vmax.xlane.f32.xlu0 %v4528
    %v4530 = vpop.xlane.xlu0 %4529
    %v4531 = vmax.f32 %v4402, %v4404
    %4532 = vmax.xlane.f32.xlu0 %v4531
    %v4533 = vpop.xlane.xlu0 %4532
    %v4534 = vmax.f32 %v4408, %v4410
    %4535 = vmax.xlane.f32.xlu0 %v4534
    %v4536 = vpop.xlane.xlu0 %4535
    %v4537 = vmax.f32 %v4412, %v4414
    %4538 = vmax.xlane.f32.xlu0 %v4537
    %v4539 = vpop.xlane.xlu0 %4538
    %v4540 = vmax.f32 %v4418, %v4420
    %4541 = vmax.xlane.f32.xlu0 %v4540
    %v4542 = vpop.xlane.xlu0 %4541
    %v4543 = vmax.f32 %v4422, %v4424
    %4544 = vmax.xlane.f32.xlu0 %v4543
    %v4545 = vpop.xlane.xlu0 %4544
    %v4546 = vmax.f32 %v4428, %v4430
    %4547 = vmax.xlane.f32.xlu0 %v4546
    %v4548 = vpop.xlane.xlu0 %4547
    %v4549 = vmax.f32 %v4432, %v4434
    %4550 = vmax.xlane.f32.xlu0 %v4549
    %v4551 = vpop.xlane.xlu0 %4550
    %v4552 = vmax.f32 %v4438, %v4440
    %4553 = vmax.xlane.f32.xlu0 %v4552
    %v4554 = vpop.xlane.xlu0 %4553
    %v4555 = vmax.f32 %v4442, %v4444
    %4556 = vmax.xlane.f32.xlu0 %v4555
    %v4557 = vpop.xlane.xlu0 %4556
    %v4558 = vmax.f32 %v4448, %v4450
    %4559 = vmax.xlane.f32.xlu0 %v4558
    %v4560 = vpop.xlane.xlu0 %4559
    %v4561 = vmax.f32 %v4452, %v4454
    %4562 = vmax.xlane.f32.xlu0 %v4561
    %v4563 = vpop.xlane.xlu0 %4562
    %v4564 = vmax.f32 %v4458, %v4460
    %4565 = vmax.xlane.f32.xlu0 %v4564
    %v4566 = vpop.xlane.xlu0 %4565
    %v4567 = vmax.f32 %v4462, %v4464
    %4568 = vmax.xlane.f32.xlu0 %v4567
    %v4569 = vpop.xlane.xlu0 %4568
    %v4570 = vmax.f32 %v4468, %v4470
    %4571 = vmax.xlane.f32.xlu0 %v4570
    %v4572 = vpop.xlane.xlu0 %4571
    %v4573 = vmax.f32 %v4472, %v4474
    %4574 = vmax.xlane.f32.xlu0 %v4573
    %v4575 = vpop.xlane.xlu0 %4574
    %v4576 = vmax.f32 %v4478, %v4480
    %4577 = vmax.xlane.f32.xlu0 %v4576
    %v4578 = vpop.xlane.xlu0 %4577
    %v4579 = vmax.f32 %v4482, %v4484
    %4580 = vmax.xlane.f32.xlu0 %v4579
    %v4581 = vpop.xlane.xlu0 %4580
    %v4582 = vsub.f32 %v4328, %v4488
    %v4583 = vsub.f32 %v4330, %v4488
    %v4584 = vsub.f32 %v4332, %v4491
    %v4585 = vsub.f32 %v4334, %v4491
    %v4586 = vsub.f32 %v4338, %v4494
    %v4587 = vsub.f32 %v4340, %v4494
    %v4588 = vsub.f32 %v4342, %v4497
    %v4589 = vsub.f32 %v4344, %v4497
    %v4590 = vsub.f32 %v4348, %v4500
    %v4591 = vsub.f32 %v4350, %v4500
    %v4592 = vsub.f32 %v4352, %v4503
    %v4593 = vsub.f32 %v4354, %v4503
    %v4594 = vsub.f32 %v4358, %v4506
    %v4595 = vsub.f32 %v4360, %v4506
    %v4596 = vsub.f32 %v4362, %v4509
    %v4597 = vsub.f32 %v4364, %v4509
    %v4598 = vsub.f32 %v4368, %v4512
    %v4599 = vsub.f32 %v4370, %v4512
    %v4600 = vsub.f32 %v4372, %v4515
    %v4601 = vsub.f32 %v4374, %v4515
    %v4602 = vsub.f32 %v4378, %v4518
    %v4603 = vsub.f32 %v4380, %v4518
    %v4604 = vsub.f32 %v4382, %v4521
    %v4605 = vsub.f32 %v4384, %v4521
    %v4606 = vsub.f32 %v4388, %v4524
    %v4607 = vsub.f32 %v4390, %v4524
    %v4608 = vsub.f32 %v4392, %v4527
    %v4609 = vsub.f32 %v4394, %v4527
    %v4610 = vsub.f32 %v4398, %v4530
    %v4611 = vsub.f32 %v4400, %v4530
    %v4612 = vsub.f32 %v4402, %v4533
    %v4613 = vsub.f32 %v4404, %v4533
    %v4614 = vsub.f32 %v4408, %v4536
    %v4615 = vsub.f32 %v4410, %v4536
    %v4616 = vsub.f32 %v4412, %v4539
    %v4617 = vsub.f32 %v4414, %v4539
    %v4618 = vsub.f32 %v4418, %v4542
    %v4619 = vsub.f32 %v4420, %v4542
    %v4620 = vsub.f32 %v4422, %v4545
    %v4621 = vsub.f32 %v4424, %v4545
    %v4622 = vsub.f32 %v4428, %v4548
    %v4623 = vsub.f32 %v4430, %v4548
    %v4624 = vsub.f32 %v4432, %v4551
    %v4625 = vsub.f32 %v4434, %v4551
    %v4626 = vsub.f32 %v4438, %v4554
    %v4627 = vsub.f32 %v4440, %v4554
    %v4628 = vsub.f32 %v4442, %v4557
    %v4629 = vsub.f32 %v4444, %v4557
    %v4630 = vsub.f32 %v4448, %v4560
    %v4631 = vsub.f32 %v4450, %v4560
    %v4632 = vsub.f32 %v4452, %v4563
    %v4633 = vsub.f32 %v4454, %v4563
    %v4634 = vsub.f32 %v4458, %v4566
    %v4635 = vsub.f32 %v4460, %v4566
    %v4636 = vsub.f32 %v4462, %v4569
    %v4637 = vsub.f32 %v4464, %v4569
    %v4638 = vsub.f32 %v4468, %v4572
    %v4639 = vsub.f32 %v4470, %v4572
    %v4640 = vsub.f32 %v4472, %v4575
    %v4641 = vsub.f32 %v4474, %v4575
    %v4642 = vsub.f32 %v4478, %v4578
    %v4643 = vsub.f32 %v4480, %v4578
    %v4644 = vsub.f32 %v4482, %v4581
    %v4645 = vsub.f32 %v4484, %v4581
    %v4646 = vmul.f32 %v4582, 1.442695
    %v4647 = vpow.pop %v4646
    %v4648 = vmul.f32 %v4583, 1.442695
    %v4649 = vpow.pop %v4648
    %v4650 = vmul.f32 %v4584, 1.442695
    %v4651 = vpow.pop %v4650
    %v4652 = vmul.f32 %v4585, 1.442695
    %v4653 = vpow.pop %v4652
    %v4654 = vmul.f32 %v4586, 1.442695
    %v4655 = vpow.pop %v4654
    %v4656 = vmul.f32 %v4587, 1.442695
    %v4657 = vpow.pop %v4656
    %v4658 = vmul.f32 %v4588, 1.442695
    %v4659 = vpow.pop %v4658
    %v4660 = vmul.f32 %v4589, 1.442695
    %v4661 = vpow.pop %v4660
    %v4662 = vmul.f32 %v4590, 1.442695
    %v4663 = vpow.pop %v4662
    %v4664 = vmul.f32 %v4591, 1.442695
    %v4665 = vpow.pop %v4664
    %v4666 = vmul.f32 %v4592, 1.442695
    %v4667 = vpow.pop %v4666
    %v4668 = vmul.f32 %v4593, 1.442695
    %v4669 = vpow.pop %v4668
    %v4670 = vmul.f32 %v4594, 1.442695
    %v4671 = vpow.pop %v4670
    %v4672 = vmul.f32 %v4595, 1.442695
    %v4673 = vpow.pop %v4672
    %v4674 = vmul.f32 %v4596, 1.442695
    %v4675 = vpow.pop %v4674
    %v4676 = vmul.f32 %v4597, 1.442695
    %v4677 = vpow.pop %v4676
    %v4678 = vmul.f32 %v4598, 1.442695
    %v4679 = vpow.pop %v4678
    %v4680 = vmul.f32 %v4599, 1.442695
    %v4681 = vpow.pop %v4680
    %v4682 = vmul.f32 %v4600, 1.442695
    %v4683 = vpow.pop %v4682
    %v4684 = vmul.f32 %v4601, 1.442695
    %v4685 = vpow.pop %v4684
    %v4686 = vmul.f32 %v4602, 1.442695
    %v4687 = vpow.pop %v4686
    %v4688 = vmul.f32 %v4603, 1.442695
    %v4689 = vpow.pop %v4688
    %v4690 = vmul.f32 %v4604, 1.442695
    %v4691 = vpow.pop %v4690
    %v4692 = vmul.f32 %v4605, 1.442695
    %v4693 = vpow.pop %v4692
    %v4694 = vmul.f32 %v4606, 1.442695
    %v4695 = vpow.pop %v4694
    %v4696 = vmul.f32 %v4607, 1.442695
    %v4697 = vpow.pop %v4696
    %v4698 = vmul.f32 %v4608, 1.442695
    %v4699 = vpow.pop %v4698
    %v4700 = vmul.f32 %v4609, 1.442695
    %v4701 = vpow.pop %v4700
    %v4702 = vmul.f32 %v4610, 1.442695
    %v4703 = vpow.pop %v4702
    %v4704 = vmul.f32 %v4611, 1.442695
    %v4705 = vpow.pop %v4704
    %v4706 = vmul.f32 %v4612, 1.442695
    %v4707 = vpow.pop %v4706
    %v4708 = vmul.f32 %v4613, 1.442695
    %v4709 = vpow.pop %v4708
    %v4710 = vmul.f32 %v4614, 1.442695
    %v4711 = vpow.pop %v4710
    %v4712 = vmul.f32 %v4615, 1.442695
    %v4713 = vpow.pop %v4712
    %v4714 = vmul.f32 %v4616, 1.442695
    %v4715 = vpow.pop %v4714
    %v4716 = vmul.f32 %v4617, 1.442695
    %v4717 = vpow.pop %v4716
    %v4718 = vmul.f32 %v4618, 1.442695
    %v4719 = vpow.pop %v4718
    %v4720 = vmul.f32 %v4619, 1.442695
    %v4721 = vpow.pop %v4720
    %v4722 = vmul.f32 %v4620, 1.442695
    %v4723 = vpow.pop %v4722
    %v4724 = vmul.f32 %v4621, 1.442695
    %v4725 = vpow.pop %v4724
    %v4726 = vmul.f32 %v4622, 1.442695
    %v4727 = vpow.pop %v4726
    %v4728 = vmul.f32 %v4623, 1.442695
    %v4729 = vpow.pop %v4728
    %v4730 = vmul.f32 %v4624, 1.442695
    %v4731 = vpow.pop %v4730
    %v4732 = vmul.f32 %v4625, 1.442695
    %v4733 = vpow.pop %v4732
    %v4734 = vmul.f32 %v4626, 1.442695
    %v4735 = vpow.pop %v4734
    %v4736 = vmul.f32 %v4627, 1.442695
    %v4737 = vpow.pop %v4736
    %v4738 = vmul.f32 %v4628, 1.442695
    %v4739 = vpow.pop %v4738
    %v4740 = vmul.f32 %v4629, 1.442695
    %v4741 = vpow.pop %v4740
    %v4742 = vmul.f32 %v4630, 1.442695
    %v4743 = vpow.pop %v4742
    %v4744 = vmul.f32 %v4631, 1.442695
    %v4745 = vpow.pop %v4744
    %v4746 = vmul.f32 %v4632, 1.442695
    %v4747 = vpow.pop %v4746
    %v4748 = vmul.f32 %v4633, 1.442695
    %v4749 = vpow.pop %v4748
    %v4750 = vmul.f32 %v4634, 1.442695
    %v4751 = vpow.pop %v4750
    %v4752 = vmul.f32 %v4635, 1.442695
    %v4753 = vpow.pop %v4752
    %v4754 = vmul.f32 %v4636, 1.442695
    %v4755 = vpow.pop %v4754
    %v4756 = vmul.f32 %v4637, 1.442695
    %v4757 = vpow.pop %v4756
    %v4758 = vmul.f32 %v4638, 1.442695
    %v4759 = vpow.pop %v4758
    %v4760 = vmul.f32 %v4639, 1.442695
    %v4761 = vpow.pop %v4760
    %v4762 = vmul.f32 %v4640, 1.442695
    %v4763 = vpow.pop %v4762
    %v4764 = vmul.f32 %v4641, 1.442695
    %v4765 = vpow.pop %v4764
    %v4766 = vmul.f32 %v4642, 1.442695
    %v4767 = vpow.pop %v4766
    %v4768 = vmul.f32 %v4643, 1.442695
    %v4769 = vpow.pop %v4768
    %v4770 = vmul.f32 %v4644, 1.442695
    %v4771 = vpow.pop %v4770
    %v4772 = vmul.f32 %v4645, 1.442695
    %v4773 = vpow.pop %v4772
    %v4774 = vadd.f32 %v4647, %v4649
    %4775 = vadd.xlane.f32.xlu0 %v4774
    %v4776 = vpop.xlane.xlu0 %4775
    %v4777 = vadd.f32 %v4651, %v4653
    %4778 = vadd.xlane.f32.xlu0 %v4777
    %v4779 = vpop.xlane.xlu0 %4778
    %v4780 = vadd.f32 %v4655, %v4657
    %4781 = vadd.xlane.f32.xlu0 %v4780
    %v4782 = vpop.xlane.xlu0 %4781
    %v4783 = vadd.f32 %v4659, %v4661
    %4784 = vadd.xlane.f32.xlu0 %v4783
    %v4785 = vpop.xlane.xlu0 %4784
    %v4786 = vadd.f32 %v4663, %v4665
    %4787 = vadd.xlane.f32.xlu0 %v4786
    %v4788 = vpop.xlane.xlu0 %4787
    %v4789 = vadd.f32 %v4667, %v4669
    %4790 = vadd.xlane.f32.xlu0 %v4789
    %v4791 = vpop.xlane.xlu0 %4790
    %v4792 = vadd.f32 %v4671, %v4673
    %4793 = vadd.xlane.f32.xlu0 %v4792
    %v4794 = vpop.xlane.xlu0 %4793
    %v4795 = vadd.f32 %v4675, %v4677
    %4796 = vadd.xlane.f32.xlu0 %v4795
    %v4797 = vpop.xlane.xlu0 %4796
    %v4798 = vadd.f32 %v4679, %v4681
    %4799 = vadd.xlane.f32.xlu0 %v4798
    %v4800 = vpop.xlane.xlu0 %4799
    %v4801 = vadd.f32 %v4683, %v4685
    %4802 = vadd.xlane.f32.xlu0 %v4801
    %v4803 = vpop.xlane.xlu0 %4802
    %v4804 = vadd.f32 %v4687, %v4689
    %4805 = vadd.xlane.f32.xlu0 %v4804
    %v4806 = vpop.xlane.xlu0 %4805
    %v4807 = vadd.f32 %v4691, %v4693
    %4808 = vadd.xlane.f32.xlu0 %v4807
    %v4809 = vpop.xlane.xlu0 %4808
    %v4810 = vadd.f32 %v4695, %v4697
    %4811 = vadd.xlane.f32.xlu0 %v4810
    %v4812 = vpop.xlane.xlu0 %4811
    %v4813 = vadd.f32 %v4699, %v4701
    %4814 = vadd.xlane.f32.xlu0 %v4813
    %v4815 = vpop.xlane.xlu0 %4814
    %v4816 = vadd.f32 %v4703, %v4705
    %4817 = vadd.xlane.f32.xlu0 %v4816
    %v4818 = vpop.xlane.xlu0 %4817
    %v4819 = vadd.f32 %v4707, %v4709
    %4820 = vadd.xlane.f32.xlu0 %v4819
    %v4821 = vpop.xlane.xlu0 %4820
    %v4822 = vadd.f32 %v4711, %v4713
    %4823 = vadd.xlane.f32.xlu0 %v4822
    %v4824 = vpop.xlane.xlu0 %4823
    %v4825 = vadd.f32 %v4715, %v4717
    %4826 = vadd.xlane.f32.xlu0 %v4825
    %v4827 = vpop.xlane.xlu0 %4826
    %v4828 = vadd.f32 %v4719, %v4721
    %4829 = vadd.xlane.f32.xlu0 %v4828
    %v4830 = vpop.xlane.xlu0 %4829
    %v4831 = vadd.f32 %v4723, %v4725
    %4832 = vadd.xlane.f32.xlu0 %v4831
    %v4833 = vpop.xlane.xlu0 %4832
    %v4834 = vadd.f32 %v4727, %v4729
    %4835 = vadd.xlane.f32.xlu0 %v4834
    %v4836 = vpop.xlane.xlu0 %4835
    %v4837 = vadd.f32 %v4731, %v4733
    %4838 = vadd.xlane.f32.xlu0 %v4837
    %v4839 = vpop.xlane.xlu0 %4838
    %v4840 = vadd.f32 %v4735, %v4737
    %4841 = vadd.xlane.f32.xlu0 %v4840
    %v4842 = vpop.xlane.xlu0 %4841
    %v4843 = vadd.f32 %v4739, %v4741
    %4844 = vadd.xlane.f32.xlu0 %v4843
    %v4845 = vpop.xlane.xlu0 %4844
    %v4846 = vadd.f32 %v4743, %v4745
    %4847 = vadd.xlane.f32.xlu0 %v4846
    %v4848 = vpop.xlane.xlu0 %4847
    %v4849 = vadd.f32 %v4747, %v4749
    %4850 = vadd.xlane.f32.xlu0 %v4849
    %v4851 = vpop.xlane.xlu0 %4850
    %v4852 = vadd.f32 %v4751, %v4753
    %4853 = vadd.xlane.f32.xlu0 %v4852
    %v4854 = vpop.xlane.xlu0 %4853
    %v4855 = vadd.f32 %v4755, %v4757
    %4856 = vadd.xlane.f32.xlu0 %v4855
    %v4857 = vpop.xlane.xlu0 %4856
    %v4858 = vadd.f32 %v4759, %v4761
    %4859 = vadd.xlane.f32.xlu0 %v4858
    %v4860 = vpop.xlane.xlu0 %4859
    %v4861 = vadd.f32 %v4763, %v4765
    %4862 = vadd.xlane.f32.xlu0 %v4861
    %v4863 = vpop.xlane.xlu0 %4862
    %v4864 = vadd.f32 %v4767, %v4769
    %4865 = vadd.xlane.f32.xlu0 %v4864
    %v4866 = vpop.xlane.xlu0 %4865
    %v4867 = vadd.f32 %v4771, %v4773
    %4868 = vadd.xlane.f32.xlu0 %v4867
    %v4869 = vpop.xlane.xlu0 %4868
    %v4870 = vrcp.pop %v4776
    %v4871 = vrcp.pop %v4779
    %v4872 = vrcp.pop %v4782
    %v4873 = vrcp.pop %v4785
    %v4874 = vrcp.pop %v4788
    %v4875 = vrcp.pop %v4791
    %v4876 = vrcp.pop %v4794
    %v4877 = vrcp.pop %v4797
    %v4878 = vrcp.pop %v4800
    %v4879 = vrcp.pop %v4803
    %v4880 = vrcp.pop %v4806
    %v4881 = vrcp.pop %v4809
    %v4882 = vrcp.pop %v4812
    %v4883 = vrcp.pop %v4815
    %v4884 = vrcp.pop %v4818
    %v4885 = vrcp.pop %v4821
    %v4886 = vrcp.pop %v4824
    %v4887 = vrcp.pop %v4827
    %v4888 = vrcp.pop %v4830
    %v4889 = vrcp.pop %v4833
    %v4890 = vrcp.pop %v4836
    %v4891 = vrcp.pop %v4839
    %v4892 = vrcp.pop %v4842
    %v4893 = vrcp.pop %v4845
    %v4894 = vrcp.pop %v4848
    %v4895 = vrcp.pop %v4851
    %v4896 = vrcp.pop %v4854
    %v4897 = vrcp.pop %v4857
    %v4898 = vrcp.pop %v4860
    %v4899 = vrcp.pop %v4863
    %v4900 = vrcp.pop %v4866
    %v4901 = vrcp.pop %v4869
    %v4902 = vmul.f32 %v4647, %v4870
    %v4903 = vmul.f32 %v4649, %v4870
    %v4904 = vmul.f32 %v4651, %v4871
    %v4905 = vmul.f32 %v4653, %v4871
    %v4906 = vmul.f32 %v4655, %v4872
    %v4907 = vmul.f32 %v4657, %v4872
    %v4908 = vmul.f32 %v4659, %v4873
    %v4909 = vmul.f32 %v4661, %v4873
    %v4910 = vmul.f32 %v4663, %v4874
    %v4911 = vmul.f32 %v4665, %v4874
    %v4912 = vmul.f32 %v4667, %v4875
    %v4913 = vmul.f32 %v4669, %v4875
    %v4914 = vmul.f32 %v4671, %v4876
    %v4915 = vmul.f32 %v4673, %v4876
    %v4916 = vmul.f32 %v4675, %v4877
    %v4917 = vmul.f32 %v4677, %v4877
    %v4918 = vmul.f32 %v4679, %v4878
    %v4919 = vmul.f32 %v4681, %v4878
    %v4920 = vmul.f32 %v4683, %v4879
    %v4921 = vmul.f32 %v4685, %v4879
    %v4922 = vmul.f32 %v4687, %v4880
    %v4923 = vmul.f32 %v4689, %v4880
    %v4924 = vmul.f32 %v4691, %v4881
    %v4925 = vmul.f32 %v4693, %v4881
    %v4926 = vmul.f32 %v4695, %v4882
    %v4927 = vmul.f32 %v4697, %v4882
    %v4928 = vmul.f32 %v4699, %v4883
    %v4929 = vmul.f32 %v4701, %v4883
    %v4930 = vmul.f32 %v4703, %v4884
    %v4931 = vmul.f32 %v4705, %v4884
    %v4932 = vmul.f32 %v4707, %v4885
    %v4933 = vmul.f32 %v4709, %v4885
    %v4934 = vmul.f32 %v4711, %v4886
    %v4935 = vmul.f32 %v4713, %v4886
    %v4936 = vmul.f32 %v4715, %v4887
    %v4937 = vmul.f32 %v4717, %v4887
    %v4938 = vmul.f32 %v4719, %v4888
    %v4939 = vmul.f32 %v4721, %v4888
    %v4940 = vmul.f32 %v4723, %v4889
    %v4941 = vmul.f32 %v4725, %v4889
    %v4942 = vmul.f32 %v4727, %v4890
    %v4943 = vmul.f32 %v4729, %v4890
    %v4944 = vmul.f32 %v4731, %v4891
    %v4945 = vmul.f32 %v4733, %v4891
    %v4946 = vmul.f32 %v4735, %v4892
    %v4947 = vmul.f32 %v4737, %v4892
    %v4948 = vmul.f32 %v4739, %v4893
    %v4949 = vmul.f32 %v4741, %v4893
    %v4950 = vmul.f32 %v4743, %v4894
    %v4951 = vmul.f32 %v4745, %v4894
    %v4952 = vmul.f32 %v4747, %v4895
    %v4953 = vmul.f32 %v4749, %v4895
    %v4954 = vmul.f32 %v4751, %v4896
    %v4955 = vmul.f32 %v4753, %v4896
    %v4956 = vmul.f32 %v4755, %v4897
    %v4957 = vmul.f32 %v4757, %v4897
    %v4958 = vmul.f32 %v4759, %v4898
    %v4959 = vmul.f32 %v4761, %v4898
    %v4960 = vmul.f32 %v4763, %v4899
    %v4961 = vmul.f32 %v4765, %v4899
    %v4962 = vmul.f32 %v4767, %v4900
    %v4963 = vmul.f32 %v4769, %v4900
    %v4964 = vmul.f32 %v4771, %v4901
    %v4965 = vmul.f32 %v4773, %v4901
    %v4966 = vpack.c.bf16 %v4904, %v4902
    %v4967 = vpack.c.bf16 %v4905, %v4903
    %v4968 = vpack.c.bf16 %v4908, %v4906
    %v4969 = vpack.c.bf16 %v4909, %v4907
    %v4970 = vpack.c.bf16 %v4912, %v4910
    %v4971 = vpack.c.bf16 %v4913, %v4911
    %v4972 = vpack.c.bf16 %v4916, %v4914
    %v4973 = vpack.c.bf16 %v4917, %v4915
    %v4974 = vpack.c.bf16 %v4920, %v4918
    %v4975 = vpack.c.bf16 %v4921, %v4919
    %v4976 = vpack.c.bf16 %v4924, %v4922
    %v4977 = vpack.c.bf16 %v4925, %v4923
    %v4978 = vpack.c.bf16 %v4928, %v4926
    %v4979 = vpack.c.bf16 %v4929, %v4927
    %v4980 = vpack.c.bf16 %v4932, %v4930
    %v4981 = vpack.c.bf16 %v4933, %v4931
    %v4982 = vpack.c.bf16 %v4936, %v4934
    %v4983 = vpack.c.bf16 %v4937, %v4935
    %v4984 = vpack.c.bf16 %v4940, %v4938
    %v4985 = vpack.c.bf16 %v4941, %v4939
    %v4986 = vpack.c.bf16 %v4944, %v4942
    %v4987 = vpack.c.bf16 %v4945, %v4943
    %v4988 = vpack.c.bf16 %v4948, %v4946
    %v4989 = vpack.c.bf16 %v4949, %v4947
    %v4990 = vpack.c.bf16 %v4952, %v4950
    %v4991 = vpack.c.bf16 %v4953, %v4951
    %v4992 = vpack.c.bf16 %v4956, %v4954
    %v4993 = vpack.c.bf16 %v4957, %v4955
    %v4994 = vpack.c.bf16 %v4960, %v4958
    %v4995 = vpack.c.bf16 %v4961, %v4959
    %v4996 = vpack.c.bf16 %v4964, %v4962
    %v4997 = vpack.c.bf16 %v4965, %v4963
    %4998 = vmatprep.subr.bf16.mxu0 %v4981
    %4999 = vmatpush1.bf16.xpose.msra.mxu0 %v4980
    %5000 = vmatprep.subr.bf16.mxu0 %v4979
    %5001 = vmatpush1.bf16.xpose.msra.mxu0 %v4978
    %5002 = vmatprep.subr.bf16.mxu0 %v4977
    %5003 = vmatpush1.bf16.xpose.msra.mxu0 %v4976
    %5004 = vmatprep.subr.bf16.mxu0 %v4975
    %5005 = vmatpush1.bf16.xpose.msra.mxu0 %v4974
    %5006 = vmatprep.subr.bf16.mxu0 %v4973
    %5007 = vmatpush1.bf16.xpose.msra.mxu0 %v4972
    %5008 = vmatprep.subr.bf16.mxu0 %v4971
    %5009 = vmatpush1.bf16.xpose.msra.mxu0 %v4970
    %5010 = vmatprep.subr.bf16.mxu0 %v4969
    %5011 = vmatpush1.bf16.xpose.msra.mxu0 %v4968
    %5012 = vmatprep.subr.bf16.mxu0 %v4967
    %5013 = vmatpush1.bf16.xpose.msra.mxu0 %v4966
    %5014 = vmatprep.subr.bf16.mxu0 %v4997
    %5015 = vmatpush2.bf16.xpose.msra.mxu0 %v4996
    %5016 = vmatprep.subr.bf16.mxu0 %v4995
    %5017 = vmatpush2.bf16.xpose.msra.mxu0 %v4994
    %5018 = vmatprep.subr.bf16.mxu0 %v4993
    %5019 = vmatpush2.bf16.xpose.msra.mxu0 %v4992
    %5020 = vmatprep.subr.bf16.mxu0 %v4991
    %5021 = vmatpush2.bf16.xpose.msra.mxu0 %v4990
    %5022 = vmatprep.subr.bf16.mxu0 %v4989
    %5023 = vmatpush2.bf16.xpose.msra.mxu0 %v4988
    %5024 = vmatprep.subr.bf16.mxu0 %v4987
    %5025 = vmatpush2.bf16.xpose.msra.mxu0 %v4986
    %5026 = vmatprep.subr.bf16.mxu0 %v4985
    %5027 = vmatpush2.bf16.xpose.msra.mxu0 %v4984
    %5028 = vmatprep.subr.bf16.mxu0 %v4983
    %5029 = vmatpush2.bf16.xpose.msra.mxu0 %v4982
    %5030 = vmatprep.mubr.bf16.mxu0 %v4212
    %5031 = vmatmul.mubr.bf16.gmra.mxu0 %v4211
    %v5032 = vpop.f32.mrf.mxu0
    %v5033 = vadd.f32 0.0, %v5032
    %v5034 = vpop.f32.mrf.mxu0
    %v5035 = vadd.f32 0.0, %v5034
    %v5036 = vpop.f32.mrf.mxu0
    %v5037 = vpop.f32.mrf.mxu0
    %5038 = vdwg.mxu0
    %v5039 = vstv %s4208
    %v5040 = vmul.f32 %v5039, %v5033
    %v5041 = vmul.f32 %v5039, %v5035
    %v5042 = vadd.f32 %v5040, %v2787
    %v5043 = vadd.f32 %v5041, %v2791
    %5044 = vrot.lane.b32.xlu0 %v4206, 17
    %v5045 = vpop.permute.xlu0 %5044
    %5046 = vrot.lane.b32.xlu0 %v4207, 17
    %v5047 = vpop.permute.xlu0 %5046
    %v5048 = vsel %vm69, %v5045, %v5047
    %v5049 = vsel %vm69, %v5047, %v5045
    %v5050 = vmul.f32 %v5049, %v76
    %v5051 = vmul.f32 %v5048, %v80
    %5052 = vst [vmem:[#allocation2] sm:$0xf] %v5050
    %5053 = vst [vmem:[#allocation2 + $0x8] sm:$0xf] %v5051
    %5054 = vrot.lane.b32.xlu0 %v4206, 16
    %v5055 = vpop.permute.xlu0 %5054
    %5056 = vrot.lane.b32.xlu0 %v4207, 16
    %v5057 = vpop.permute.xlu0 %5056
    %v5058 = vsel %vm91, %v5055, %v5057
    %v5059 = vsel %vm91, %v5057, %v5055
    %v5060 = vmul.f32 %v5059, %v98
    %v5061 = vmul.f32 %v5058, %v102
    %v5064 = vrot.slane %v5060, 4
    %v5065 = vrot.slane %v5061, 4
    %5068 = vst [vmem:[#allocation2] sm:$0xf0] %v5064
    %5069 = vst [vmem:[#allocation2 + $0x8] sm:$0xf0] %v5065
    %5070 = vrot.lane.b32.xlu0 %v4206, 15
    %v5071 = vpop.permute.xlu0 %5070
    %5072 = vrot.lane.b32.xlu0 %v4207, 15
    %v5073 = vpop.permute.xlu0 %5072
    %v5074 = vsel %vm119, %v5071, %v5073
    %v5075 = vsel %vm119, %v5073, %v5071
    %v5076 = vmul.f32 %v5075, %v126
    %v5077 = vmul.f32 %v5074, %v130
    %5078 = vst [vmem:[#allocation2 + $0x10] sm:$0xf] %v5076
    %5079 = vst [vmem:[#allocation2 + $0x18] sm:$0xf] %v5077
    %5080 = vrot.lane.b32.xlu0 %v4206, 1
    %v5081 = vpop.permute.xlu0 %5080
    %5082 = vrot.lane.b32.xlu0 %v4207, 1
    %v5083 = vpop.permute.xlu0 %5082
    %v5084 = vsel %vm141, %v5081, %v5083
    %v5085 = vsel %vm141, %v5083, %v5081
    %v5086 = vmul.f32 %v5085, %v148
    %v5087 = vmul.f32 %v5084, %v152
    %v5090 = vrot.slane %v5086, 4
    %v5091 = vrot.slane %v5087, 4
    %5094 = vst [vmem:[#allocation2 + $0x10] sm:$0xf0] %v5090
    %5095 = vst [vmem:[#allocation2 + $0x18] sm:$0xf0] %v5091
    %5096 = vst [vmem:[#allocation2 + $0x20] sm:$0xf] %v4206
    %5097 = vst [vmem:[#allocation2 + $0x28] sm:$0xf] %v4207
    %5098 = vrot.lane.b32.xlu0 %v4206, 127
    %v5099 = vpop.permute.xlu0 %5098
    %5100 = vrot.lane.b32.xlu0 %v4207, 127
    %v5101 = vpop.permute.xlu0 %5100
    %v5102 = vsel %vm171, %v5099, %v5101
    %v5103 = vsel %vm171, %v5101, %v5099
    %v5104 = vmul.f32 %v5102, %v178
    %v5105 = vmul.f32 %v5103, %v182
    %v5108 = vrot.slane %v5104, 4
    %v5109 = vrot.slane %v5105, 4
    %5112 = vst [vmem:[#allocation2 + $0x20] sm:$0xf0] %v5108
    %5113 = vst [vmem:[#allocation2 + $0x28] sm:$0xf0] %v5109
    %5114 = vrot.lane.b32.xlu0 %v4206, 113
    %v5115 = vpop.permute.xlu0 %5114
    %5116 = vrot.lane.b32.xlu0 %v4207, 113
    %v5117 = vpop.permute.xlu0 %5116
    %v5118 = vsel %vm199, %v5115, %v5117
    %v5119 = vsel %vm199, %v5117, %v5115
    %v5120 = vmul.f32 %v5118, %v206
    %v5121 = vmul.f32 %v5119, %v210
    %5122 = vst [vmem:[#allocation2 + $0x30] sm:$0xf] %v5120
    %5123 = vst [vmem:[#allocation2 + $0x38] sm:$0xf] %v5121
    %5124 = vrot.lane.b32.xlu0 %v4206, 112
    %v5125 = vpop.permute.xlu0 %5124
    %5126 = vrot.lane.b32.xlu0 %v4207, 112
    %v5127 = vpop.permute.xlu0 %5126
    %v5128 = vsel %vm221, %v5125, %v5127
    %v5129 = vsel %vm221, %v5127, %v5125
    %v5130 = vmul.f32 %v5128, %v228
    %v5131 = vmul.f32 %v5129, %v232
    %v5134 = vrot.slane %v5130, 4
    %v5135 = vrot.slane %v5131, 4
    %5138 = vst [vmem:[#allocation2 + $0x30] sm:$0xf0] %v5134
    %5139 = vst [vmem:[#allocation2 + $0x38] sm:$0xf0] %v5135
    %5140 = vrot.lane.b32.xlu0 %v4206, 111
    %v5141 = vpop.permute.xlu0 %5140
    %5142 = vrot.lane.b32.xlu0 %v4207, 111
    %v5143 = vpop.permute.xlu0 %5142
    %v5144 = vsel %vm249, %v5141, %v5143
    %v5145 = vsel %vm249, %v5143, %v5141
    %v5146 = vmul.f32 %v5144, %v256
    %v5147 = vmul.f32 %v5145, %v260
    %5148 = vst [vmem:[#allocation2 + $0x40] sm:$0xf] %v5146
    %5149 = vst [vmem:[#allocation2 + $0x48] sm:$0xf] %v5147
    %v5150 = vld [vmem:[#allocation2] sm:$0xff]
    %v5151 = vld [vmem:[#allocation2 + $0x8] sm:$0xff]
    %v5152 = vld [vmem:[#allocation2 + $0x10] sm:$0xff]
    %v5153 = vld [vmem:[#allocation2 + $0x18] sm:$0xff]
    %v5154 = vld [vmem:[#allocation2 + $0x20] sm:$0xff]
    %v5155 = vld [vmem:[#allocation2 + $0x28] sm:$0xff]
    %v5156 = vld [vmem:[#allocation2 + $0x30] sm:$0xff]
    %v5157 = vld [vmem:[#allocation2 + $0x38] sm:$0xff]
    %v5158 = vld [vmem:[#allocation2 + $0x40] sm:$0xf]
    %v5159 = vld [vmem:[#allocation2 + $0x48] sm:$0xf]
    %v5160 = vpack.c.bf16 %v5152, %v5150
    %v5161 = vpack.c.bf16 %v5153, %v5151
    %v5162 = vpack.c.bf16 %v5156, %v5154
    %v5163 = vpack.c.bf16 %v5157, %v5155
    %v5164 = vpack.c.bf16 %v5158, %v5158
    %v5165 = vpack.c.bf16 %v5159, %v5159
    %5166 = vrot.lane.b32.xlu0 %v5042, 17
    %v5167 = vpop.permute.xlu0 %5166
    %5168 = vrot.lane.b32.xlu0 %v5043, 17
    %v5169 = vpop.permute.xlu0 %5168
    %v5170 = vsel %vm69, %v5167, %v5169
    %v5171 = vsel %vm69, %v5169, %v5167
    %v5172 = vmul.f32 %v5171, %v76
    %v5173 = vmul.f32 %v5170, %v80
    %5174 = vst [vmem:[#allocation3] sm:$0xf] %v5172
    %5175 = vst [vmem:[#allocation3 + $0x8] sm:$0xf] %v5173
    %5176 = vrot.lane.b32.xlu0 %v5042, 16
    %v5177 = vpop.permute.xlu0 %5176
    %5178 = vrot.lane.b32.xlu0 %v5043, 16
    %v5179 = vpop.permute.xlu0 %5178
    %v5180 = vsel %vm91, %v5177, %v5179
    %v5181 = vsel %vm91, %v5179, %v5177
    %v5182 = vmul.f32 %v5181, %v98
    %v5183 = vmul.f32 %v5180, %v102
    %v5186 = vrot.slane %v5182, 4
    %v5187 = vrot.slane %v5183, 4
    %5190 = vst [vmem:[#allocation3] sm:$0xf0] %v5186
    %5191 = vst [vmem:[#allocation3 + $0x8] sm:$0xf0] %v5187
    %5192 = vrot.lane.b32.xlu0 %v5042, 15
    %v5193 = vpop.permute.xlu0 %5192
    %5194 = vrot.lane.b32.xlu0 %v5043, 15
    %v5195 = vpop.permute.xlu0 %5194
    %v5196 = vsel %vm119, %v5193, %v5195
    %v5197 = vsel %vm119, %v5195, %v5193
    %v5198 = vmul.f32 %v5197, %v126
    %v5199 = vmul.f32 %v5196, %v130
    %5200 = vst [vmem:[#allocation3 + $0x10] sm:$0xf] %v5198
    %5201 = vst [vmem:[#allocation3 + $0x18] sm:$0xf] %v5199
    %5202 = vrot.lane.b32.xlu0 %v5042, 1
    %v5203 = vpop.permute.xlu0 %5202
    %5204 = vrot.lane.b32.xlu0 %v5043, 1
    %v5205 = vpop.permute.xlu0 %5204
    %v5206 = vsel %vm141, %v5203, %v5205
    %v5207 = vsel %vm141, %v5205, %v5203
    %v5208 = vmul.f32 %v5207, %v148
    %v5209 = vmul.f32 %v5206, %v152
    %v5212 = vrot.slane %v5208, 4
    %v5213 = vrot.slane %v5209, 4
    %5216 = vst [vmem:[#allocation3 + $0x10] sm:$0xf0] %v5212
    %5217 = vst [vmem:[#allocation3 + $0x18] sm:$0xf0] %v5213
    %5218 = vst [vmem:[#allocation3 + $0x20] sm:$0xf] %v5042
    %5219 = vst [vmem:[#allocation3 + $0x28] sm:$0xf] %v5043
    %5220 = vrot.lane.b32.xlu0 %v5042, 127
    %v5221 = vpop.permute.xlu0 %5220
    %5222 = vrot.lane.b32.xlu0 %v5043, 127
    %v5223 = vpop.permute.xlu0 %5222
    %v5224 = vsel %vm171, %v5221, %v5223
    %v5225 = vsel %vm171, %v5223, %v5221
    %v5226 = vmul.f32 %v5224, %v178
    %v5227 = vmul.f32 %v5225, %v182
    %v5230 = vrot.slane %v5226, 4
    %v5231 = vrot.slane %v5227, 4
    %5234 = vst [vmem:[#allocation3 + $0x20] sm:$0xf0] %v5230
    %5235 = vst [vmem:[#allocation3 + $0x28] sm:$0xf0] %v5231
    %5236 = vrot.lane.b32.xlu0 %v5042, 113
    %v5237 = vpop.permute.xlu0 %5236
    %5238 = vrot.lane.b32.xlu0 %v5043, 113
    %v5239 = vpop.permute.xlu0 %5238
    %v5240 = vsel %vm199, %v5237, %v5239
    %v5241 = vsel %vm199, %v5239, %v5237
    %v5242 = vmul.f32 %v5240, %v206
    %v5243 = vmul.f32 %v5241, %v210
    %5244 = vst [vmem:[#allocation3 + $0x30] sm:$0xf] %v5242
    %5245 = vst [vmem:[#allocation3 + $0x38] sm:$0xf] %v5243
    %5246 = vrot.lane.b32.xlu0 %v5042, 112
    %v5247 = vpop.permute.xlu0 %5246
    %5248 = vrot.lane.b32.xlu0 %v5043, 112
    %v5249 = vpop.permute.xlu0 %5248
    %v5250 = vsel %vm221, %v5247, %v5249
    %v5251 = vsel %vm221, %v5249, %v5247
    %v5252 = vmul.f32 %v5250, %v228
    %v5253 = vmul.f32 %v5251, %v232
    %v5256 = vrot.slane %v5252, 4
    %v5257 = vrot.slane %v5253, 4
    %5260 = vst [vmem:[#allocation3 + $0x30] sm:$0xf0] %v5256
    %5261 = vst [vmem:[#allocation3 + $0x38] sm:$0xf0] %v5257
    %5262 = vrot.lane.b32.xlu0 %v5042, 111
    %v5263 = vpop.permute.xlu0 %5262
    %5264 = vrot.lane.b32.xlu0 %v5043, 111
    %v5265 = vpop.permute.xlu0 %5264
    %v5266 = vsel %vm249, %v5263, %v5265
    %v5267 = vsel %vm249, %v5265, %v5263
    %v5268 = vmul.f32 %v5266, %v256
    %v5269 = vmul.f32 %v5267, %v260
    %5270 = vst [vmem:[#allocation3 + $0x40] sm:$0xf] %v5268
    %5271 = vst [vmem:[#allocation3 + $0x48] sm:$0xf] %v5269
    %v5272 = vld [vmem:[#allocation3] sm:$0xff]
    %v5273 = vld [vmem:[#allocation3 + $0x8] sm:$0xff]
    %v5274 = vld [vmem:[#allocation3 + $0x10] sm:$0xff]
    %v5275 = vld [vmem:[#allocation3 + $0x18] sm:$0xff]
    %v5276 = vld [vmem:[#allocation3 + $0x20] sm:$0xff]
    %v5277 = vld [vmem:[#allocation3 + $0x28] sm:$0xff]
    %v5278 = vld [vmem:[#allocation3 + $0x30] sm:$0xff]
    %v5279 = vld [vmem:[#allocation3 + $0x38] sm:$0xff]
    %v5280 = vld [vmem:[#allocation3 + $0x40] sm:$0xf]
    %v5281 = vld [vmem:[#allocation3 + $0x48] sm:$0xf]
    %v5282 = vpack.c.bf16 %v5274, %v5272
    %v5283 = vpack.c.bf16 %v5275, %v5273
    %v5284 = vpack.c.bf16 %v5278, %v5276
    %v5285 = vpack.c.bf16 %v5279, %v5277
    %v5286 = vpack.c.bf16 %v5280, %v5280
    %v5287 = vpack.c.bf16 %v5281, %v5281
    %v5288 = vld [vmem:[%s5] sm:$0x3]
    %v5289 = vld [vmem:[%s2668] sm:$0x3]
    %v5291 = vsel %vm410, %v5289, 0
    %v5294 = vsel %vm414, %v5286, 0
    %v5297 = vsel %vm414, %v5287, 0
    %5299 = vmatprep.subr.bf16.mxu0 0
    %5300 = vmatpush1.bf16.msra.mxu0 0
    %5301 = vmatprep.subr.bf16.mxu0 0
    %5302 = vmatpush1.bf16.msra.mxu0 0
    %5303 = vmatprep.subr.bf16.mxu0 0
    %5304 = vmatpush1.bf16.msra.mxu0 0
    %5305 = vmatprep.subr.bf16.mxu0 0
    %5306 = vmatpush1.bf16.msra.mxu0 0
    %5307 = vmatprep.subr.bf16.mxu0 0
    %5308 = vmatpush1.bf16.msra.mxu0 0
    %5309 = vmatprep.subr.bf16.mxu0 %v5297
    %5310 = vmatpush1.bf16.msra.mxu0 %v5294
    %5311 = vmatprep.subr.bf16.mxu0 %v5285
    %5312 = vmatpush1.bf16.msra.mxu0 %v5284
    %5313 = vmatprep.subr.bf16.mxu0 %v5283
    %5314 = vmatpush1.bf16.msra.mxu0 %v5282
    %5315 = vmatprep.subr.bf16.mxu0 0
    %5316 = vmatpush2.bf16.msra.mxu0 0
    %5317 = vmatprep.subr.bf16.mxu0 0
    %5318 = vmatpush2.bf16.msra.mxu0 0
    %5319 = vmatprep.subr.bf16.mxu0 0
    %5320 = vmatpush2.bf16.msra.mxu0 0
    %5321 = vmatprep.subr.bf16.mxu0 0
    %5322 = vmatpush2.bf16.msra.mxu0 0
    %5323 = vmatprep.subr.bf16.mxu0 0
    %5324 = vmatpush2.bf16.msra.mxu0 0
    %5325 = vmatprep.subr.bf16.mxu0 0
    %5326 = vmatpush2.bf16.msra.mxu0 0
    %5327 = vmatprep.subr.bf16.mxu0 0
    %5328 = vmatpush2.bf16.msra.mxu0 0
    %5329 = vmatprep.subr.bf16.mxu0 0
    %5330 = vmatpush2.bf16.msra.mxu0 0
    %5331 = vmatprep.mubr.bf16.mxu0 0
    %5332 = vmatmul.mubr.bf16.gmra.mxu0 %v5291
    %v5333 = vpop.f32.mrf.mxu0
    %v5334 = vadd.f32 0.0, %v5333
    %v5335 = vpop.f32.mrf.mxu0
    %v5336 = vadd.f32 0.0, %v5335
    %v5337 = vpop.f32.mrf.mxu0
    %v5338 = vpop.f32.mrf.mxu0
    %5339 = vdwg.mxu0
    %v5341 = vsel %vm410, %v5288, 0
    %v5344 = vsel %vm414, %v5164, 0
    %v5347 = vsel %vm414, %v5165, 0
    %5349 = vmatprep.subr.bf16.mxu0 0
    %5350 = vmatpush1.bf16.msra.mxu0 0
    %5351 = vmatprep.subr.bf16.mxu0 0
    %5352 = vmatpush1.bf16.msra.mxu0 0
    %5353 = vmatprep.subr.bf16.mxu0 0
    %5354 = vmatpush1.bf16.msra.mxu0 0
    %5355 = vmatprep.subr.bf16.mxu0 0
    %5356 = vmatpush1.bf16.msra.mxu0 0
    %5357 = vmatprep.subr.bf16.mxu0 0
    %5358 = vmatpush1.bf16.msra.mxu0 0
    %5359 = vmatprep.subr.bf16.mxu0 %v5347
    %5360 = vmatpush1.bf16.msra.mxu0 %v5344
    %5361 = vmatprep.subr.bf16.mxu0 %v5163
    %5362 = vmatpush1.bf16.msra.mxu0 %v5162
    %5363 = vmatprep.subr.bf16.mxu0 %v5161
    %5364 = vmatpush1.bf16.msra.mxu0 %v5160
    %5365 = vmatprep.subr.bf16.mxu0 0
    %5366 = vmatpush2.bf16.msra.mxu0 0
    %5367 = vmatprep.subr.bf16.mxu0 0
    %5368 = vmatpush2.bf16.msra.mxu0 0
    %5369 = vmatprep.subr.bf16.mxu0 0
    %5370 = vmatpush2.bf16.msra.mxu0 0
    %5371 = vmatprep.subr.bf16.mxu0 0
    %5372 = vmatpush2.bf16.msra.mxu0 0
    %5373 = vmatprep.subr.bf16.mxu0 0
    %5374 = vmatpush2.bf16.msra.mxu0 0
    %5375 = vmatprep.subr.bf16.mxu0 0
    %5376 = vmatpush2.bf16.msra.mxu0 0
    %5377 = vmatprep.subr.bf16.mxu0 0
    %5378 = vmatpush2.bf16.msra.mxu0 0
    %5379 = vmatprep.subr.bf16.mxu0 0
    %5380 = vmatpush2.bf16.msra.mxu0 0
    %5381 = vmatprep.mubr.bf16.mxu0 0
    %5382 = vmatmul.mubr.bf16.gmra.mxu0 %v5341
    %v5383 = vpop.f32.mrf.mxu0
    %v5384 = vadd.f32 %v5334, %v5383
    %v5385 = vpop.f32.mrf.mxu0
    %v5386 = vadd.f32 %v5336, %v5385
    %v5387 = vpop.f32.mrf.mxu0
    %v5388 = vpop.f32.mrf.mxu0
    %5389 = vdwg.mxu0
    %v5390 = vld [vmem:[%s2770] sm:$0xf]
    %5392 = vset.pattern.permute.xlu0 0
    %5393 = vperm.xlu0 %5392, %v5390
    %v5394 = vpop.permute.xlu0 %5393
    %v5396 = vadd.f32 %v5384, %v5394
    %v5397 = vadd.f32 %v5386, %v5394
    %v5398 = vmax.f32 %v5396, 0.0
    %v5399 = vmax.f32 %v5397, 0.0
    %v5402 = vcombine.low %v5398, %v5399
    %s5404 = scalar_lea.vmem %s8, 8
    %5405 = vst [vmem:[%s5404] sm:$0xff] %v5402
    // Predicated region
    $region38: #{gefm_forward.1} parent=1 // pred_check
      _
    $region39: #{gefm_forward.1} parent=1 // pred_check_branch
      %5407 = sbr.rel (0) target = $region41
    $region40: #{gefm_forward.1} parent=1 // pred_region
      _
    $region41: #{gefm_forward.1} parent=1 // pred_fallthru
      _
    // Predicated region
    $region42: #{gefm_forward.1} parent=1 // pred_check
      _
    $region43: #{gefm_forward.1} parent=1 // pred_check_branch
      %5409 = sbr.rel (0) target = $region45
    $region44: #{gefm_forward.1} parent=1 // pred_region
      _
    $region45: #{gefm_forward.1} parent=1 // pred_fallthru
      _
    %5410 = vsyncpa [#allocation5], 1

</llo_original>
